<compile_context>
chip_gen: v7x
topology: tpu7x:2x2x1
jax: 0.10.0
libtpu: 0.0.40
codegen_flags: <defaults>
</compile_context>

<pallas_src>
import functools

import jax
import jax.numpy as jnp
from jax.experimental import pallas as pl
from jax.experimental.pallas import tpu as pltpu

EPS = 1e-5


# ----------------------------- Pallas kernel ------------------------------ #
def _plkc_kernel(nb, H, W, C, Ch,
                 x_ref, vec_ref, wred_ref, wk5_ref, wk33_ref, wexp_ref,
                 o_ref, pad5_ref, pad3_ref):
    HW = H * W
    M = nb * HW
    x2 = x_ref[...]                                  # (M, C)

    # packed per-channel scale / bias rows
    s0 = vec_ref[0:1, :C]
    t0 = vec_ref[1:2, :C]
    bred = vec_ref[2:3, :C + 3 * Ch]
    bk5 = vec_ref[3:4, :Ch]
    bk33 = vec_ref[4:5, :2 * Ch]
    bexp = vec_ref[5:6, :2 * C]

    # ---- one MXU matmul for all four 1x1 convs that read x -------------- #
    # columns: [conv1(C) | reduce5(Ch) | reduce3(Ch) | reduce_res3(Ch)]
    z = jnp.dot(x2, wred_ref[...], preferred_element_type=jnp.float32) + bred
    out12 = (jnp.maximum(x2 * s0 + t0, 0.0)          # out1 : folded BN0 + relu
             + jnp.maximum(z[:, :C], 0.0))           # out2 : conv1+BN + relu

    # zero padded-scratch borders once per grid step (interiors overwritten)
    pad5_ref[...] = jnp.zeros_like(pad5_ref)
    pad3_ref[...] = jnp.zeros_like(pad3_ref)

    def im2col(pad_ref, K, Cin):
        cols = [pad_ref[ky:ky + H, kx:kx + W, :]
                for ky in range(K) for kx in range(K)]
        return jnp.concatenate(cols, axis=-1).reshape(HW, K * K * Cin)

    p5_parts, p3_parts = [], []
    for n in range(nb):                               # static loop (nb small)
        r0 = n * HW
        pad5_ref[2:2 + H, 2:2 + W, :] = z[r0:r0 + HW, C:C + Ch].reshape(H, W, Ch)
        p5_parts.append(im2col(pad5_ref, 5, Ch))
        pad3_ref[1:1 + H, 1:1 + W, :] = z[r0:r0 + HW, C + Ch:].reshape(H, W, 2 * Ch)
        p3_parts.append(im2col(pad3_ref, 3, 2 * Ch))
    p5 = p5_parts[0] if nb == 1 else jnp.concatenate(p5_parts, axis=0)
    p3 = p3_parts[0] if nb == 1 else jnp.concatenate(p3_parts, axis=0)

    # ---- single im2col matmul per kernel size --------------------------- #
    # (the two 3x3 branches share one block-diagonal matmul)
    h2_5 = jnp.maximum(
        jnp.dot(p5, wk5_ref[...], preferred_element_type=jnp.float32) + bk5, 0.0)
    h2_33 = jnp.maximum(
        jnp.dot(p3, wk33_ref[...], preferred_element_type=jnp.float32) + bk33, 0.0)
    h2 = jnp.concatenate([h2_5, h2_33], axis=-1)      # (M, 3*Ch)

    # ---- one matmul for all three expand 1x1 convs ----------------------- #
    # cols [:C] -> out3 pre-relu (conv5 + convres3), cols [C:] -> out4 pre-relu
    oe = jnp.dot(h2, wexp_ref[...], preferred_element_type=jnp.float32) + bexp
    out = out12 + jnp.maximum(oe[:, :C], 0.0) + jnp.maximum(oe[:, C:], 0.0)

    o_ref[...] = out.astype(o_ref.dtype)


def plkc5310_forward(x_nchw, params, nb=1):
    """nb = images per grid step; keep B//nb >= 2 so v7x's two cores stay busy."""
    B, C, H, W = x_nchw.shape
    Ch = params["wk5"].shape[1]
    assert B % nb == 0
    x = jnp.transpose(x_nchw, (0, 2, 3, 1)).reshape(B * H * W, C)  # NCHW->NHWC, flat

    kern = functools.partial(_plkc_kernel, nb, H, W, C, Ch)
    out = pl.pallas_call(
        kern,
        out_shape=jax.ShapeDtypeStruct((B * H * W, C), jnp.float32),
        grid_spec=pltpu.PrefetchScalarGridSpec(
            num_scalar_prefetch=0,
            grid=(B // nb,),
            in_specs=[
                pl.BlockSpec((nb * H * W, C), lambda b: (b, 0)),
                pl.BlockSpec(params["vecs"].shape, lambda b: (0, 0)),
                pl.BlockSpec(params["wred"].shape, lambda b: (0, 0)),
                pl.BlockSpec(params["wk5"].shape, lambda b: (0, 0)),
                pl.BlockSpec(params["wk33"].shape, lambda b: (0, 0)),
                pl.BlockSpec(params["wexp"].shape, lambda b: (0, 0)),
            ],
            out_specs=pl.BlockSpec((nb * H * W, C), lambda b: (b, 0)),
            scratch_shapes=[
                pltpu.VMEM((H + 4, W + 4, Ch), jnp.float32),      # 5x5 pad buffer
                pltpu.VMEM((H + 2, W + 2, 2 * Ch), jnp.float32),  # fused 3x3 pad
            ],
        ),
        compiler_params=pltpu.CompilerParams(
            dimension_semantics=("parallel",)),
    )(x, params["vecs"], params["wred"], params["wk5"],
      params["wk33"], params["wexp"])
    out = out.reshape(B, H, W, C)
    return jnp.transpose(out, (0, 3, 1, 2))           # NHWC -> NCHW


# --------------------------- parameter plumbing ---------------------------- #
def _fold_bn(gamma, beta, mean, var):
    s = gamma / jnp.sqrt(var + EPS)
    t = beta - mean * s
    return s, t


def init_raw_params(key, C, Ch):
    keys = jax.random.split(key, 80)
    it = iter(keys)

    def conv(co, ci, k):
        w = 0.1 * jax.random.normal(next(it), (co, ci, k, k), jnp.float32)
        b = 0.1 * jax.random.normal(next(it), (co,), jnp.float32)
        return (w, b)

    def bn(n):
        gamma = 1.0 + 0.1 * jax.random.normal(next(it), (n,), jnp.float32)
        beta = 0.1 * jax.random.normal(next(it), (n,), jnp.float32)
        mean = 0.1 * jax.random.normal(next(it), (n,), jnp.float32)
        var = 1.0 + 0.1 * jnp.abs(jax.random.normal(next(it), (n,), jnp.float32))
        return (gamma, beta, mean, var)

    def seq(K):
        return dict(c1=conv(Ch, C, 1), bn1=bn(Ch),
                    c2=conv(Ch, Ch, K), bn2=bn(Ch),
                    c3=conv(C, Ch, 1), bn3=bn(C))

    return dict(bn0=bn(C), conv1=(conv(C, C, 1), bn(C)),
                conv3=seq(3), conv5=seq(5), convres3=seq(3))


def fold_params(raw):
    C = raw["bn0"][0].shape[0]
    Ch = raw["conv3"]["c1"][0].shape[0]

    def f1x1(wb, bnp):
        w, b = wb
        s, t = _fold_bn(*bnp)
        return w[:, :, 0, 0].T * s[None, :], b * s + t          # (Ci,Co), (Co,)

    def fkxk(wb, bnp):
        w, b = wb
        s, t = _fold_bn(*bnp)
        w = jnp.transpose(w, (2, 3, 1, 0)) * s[None, None, None, :]  # HWIO
        return w, b * s + t

    s0, t0 = _fold_bn(*raw["bn0"])
    w1, b1 = f1x1(*raw["conv1"])

    wa3, ba3 = f1x1(raw["conv3"]["c1"], raw["conv3"]["bn1"])
    wk3, bk3 = fkxk(raw["conv3"]["c2"], raw["conv3"]["bn2"])
    wc3, bc3 = f1x1(raw["conv3"]["c3"], raw["conv3"]["bn3"])

    wa5, ba5 = f1x1(raw["conv5"]["c1"], raw["conv5"]["bn1"])
    wk5, bk5 = fkxk(raw["conv5"]["c2"], raw["conv5"]["bn2"])
    wc5, bc5 = f1x1(raw["conv5"]["c3"], raw["conv5"]["bn3"])

    war, bar = f1x1(raw["convres3"]["c1"], raw["convres3"]["bn1"])
    wkr, bkr = fkxk(raw["convres3"]["c2"], raw["convres3"]["bn2"])
    wcr, bcr = f1x1(raw["convres3"]["c3"], raw["convres3"]["bn3"])

    # fused 1x1 reduce:  columns [conv1 | reduce5 | reduce3 | reduce_res3]
    wred = jnp.concatenate([w1, wa5, wa3, war], axis=1)          # (C, C+3Ch)
    bred = jnp.concatenate([b1, ba5, ba3, bar])                  # (C+3Ch,)

    # 5x5 im2col weight: flatten (ky, kx, ci) -> rows
    wk5_2d = wk5.reshape(25 * Ch, Ch)                            # (25Ch, Ch)

    # fused 3x3 im2col weight: block-diagonal over the two 3x3 branches
    blk = jnp.zeros((3, 3, 2 * Ch, 2 * Ch), jnp.float32)
    blk = blk.at[:, :, :Ch, :Ch].set(wk3)
    blk = blk.at[:, :, Ch:, Ch:].set(wkr)
    wk33_2d = blk.reshape(9 * 2 * Ch, 2 * Ch)                    # (18Ch, 2Ch)
    bk33 = jnp.concatenate([bk3, bkr])

    # fused expand: rows [h2_5 | h2_3 | h2_r], cols [out3(C) | out4(C)]
    wexp = jnp.zeros((3 * Ch, 2 * C), jnp.float32)
    wexp = wexp.at[:Ch, :C].set(wc5)
    wexp = wexp.at[Ch:2 * Ch, C:].set(wc3)
    wexp = wexp.at[2 * Ch:, :C].set(wcr)
    bexp = jnp.concatenate([bc5 + bcr, bc3])

    # packed per-channel scale/bias vectors -> a single (6, Wv) input
    Wv = max(C + 3 * Ch, 2 * C)
    vecs = jnp.zeros((6, Wv), jnp.float32)
    vecs = vecs.at[0, :C].set(s0)
    vecs = vecs.at[1, :C].set(t0)
    vecs = vecs.at[2, :C + 3 * Ch].set(bred)
    vecs = vecs.at[3, :Ch].set(bk5)
    vecs = vecs.at[4, :2 * Ch].set(bk33)
    vecs = vecs.at[5, :2 * C].set(bexp)

    return dict(vecs=vecs, wred=wred, wk5=wk5_2d, wk33=wk33_2d, wexp=wexp)


# ------------------------------ pure-JAX ref ------------------------------- #
def _conv_nhwc(x, w_oihw, b, pad):
    w = jnp.transpose(w_oihw, (2, 3, 1, 0))  # OIHW -> HWIO
    y = jax.lax.conv_general_dilated(
        x, w, (1, 1), [(pad, pad), (pad, pad)],
        dimension_numbers=("NHWC", "HWIO", "NHWC"))
    return y + b


def reference_forward(x_nchw, raw):
    x = jnp.transpose(x_nchw, (0, 2, 3, 1))

    def bn(y, prm):
        g, b, m, v = prm
        return g * (y - m) / jnp.sqrt(v + EPS) + b

    def seq(y, s, K):
        h = bn(_conv_nhwc(y, *s["c1"], 0), s["bn1"])
        h = jax.nn.relu(bn(_conv_nhwc(h, *s["c2"], K // 2), s["bn2"]))
        return bn(_conv_nhwc(h, *s["c3"], 0), s["bn3"])

    out1 = jax.nn.relu(bn(x, raw["bn0"]))
    wb, bnp = raw["conv1"]
    out2 = jax.nn.relu(bn(_conv_nhwc(x, *wb, 0), bnp))
    out3 = jax.nn.relu(seq(x, raw["conv5"], 5) + seq(x, raw["convres3"], 3))
    out4 = jax.nn.relu(seq(x, raw["conv3"], 3))
    out = out1 + out2 + out3 + out4
    return jnp.transpose(out, (0, 3, 1, 2))


if __name__ == "__main__":
    B, C, H, W = 2, 16, 16, 16
    expands = 2
    Ch = C // expands

    key = jax.random.PRNGKey(0)
    kx, kp = jax.random.split(key)
    x = jax.random.normal(kx, (B, C, H, W), jnp.float32)

    raw = init_raw_params(kp, C, Ch)
    params = fold_params(raw)

    out = plkc5310_forward(x, params, nb=1)   # grid=(2,) -> both v7x cores busy
    out = jax.block_until_ready(out)

    ref = reference_forward(x, raw)
    assert out.shape == (B, C, H, W)
    assert jnp.allclose(out, ref, atol=1e-3, rtol=1e-3), \
        float(jnp.max(jnp.abs(out - ref)))
    print("KERNEL_OK")
</pallas_src>

<mosaic_0001>
module attributes {stable_mosaic.version = 11 : i64} {
  func.func @_plkc_kernel(%arg0: i32, %arg1: memref<256x16xf32, #tpu.memory_space<vmem>>, %arg2: memref<6x40xf32, #tpu.memory_space<vmem>>, %arg3: memref<16x40xf32, #tpu.memory_space<vmem>>, %arg4: memref<200x8xf32, #tpu.memory_space<vmem>>, %arg5: memref<144x16xf32, #tpu.memory_space<vmem>>, %arg6: memref<24x32xf32, #tpu.memory_space<vmem>>, %arg7: memref<256x16xf32, #tpu.memory_space<vmem>>, %arg8: memref<20x20x8xf32, #tpu.memory_space<vmem>>, %arg9: memref<18x18x16xf32, #tpu.memory_space<vmem>>) attributes {dimension_semantics = [#tpu.dimension_semantics<parallel>], iteration_bounds = array<i64: 2>, scalar_prefetch = 0 : i64, scratch_operands = 2 : i64, tpu.core_type = #tpu.core_type<tc>, window_params = [{transform_indices = @transform_0, window_bounds = array<i64: 256, 16>}, {pipeline_mode = #tpu.pipeline_mode<synchronous>, transform_indices = @transform_1, window_bounds = array<i64: 6, 40>}, {pipeline_mode = #tpu.pipeline_mode<synchronous>, transform_indices = @transform_2, window_bounds = array<i64: 16, 40>}, {pipeline_mode = #tpu.pipeline_mode<synchronous>, transform_indices = @transform_3, window_bounds = array<i64: 200, 8>}, {pipeline_mode = #tpu.pipeline_mode<synchronous>, transform_indices = @transform_4, window_bounds = array<i64: 144, 16>}, {pipeline_mode = #tpu.pipeline_mode<synchronous>, transform_indices = @transform_5, window_bounds = array<i64: 24, 32>}, {transform_indices = @transform_6, window_bounds = array<i64: 256, 16>}]} {
    %c0 = arith.constant 0 : index
    %c0_0 = arith.constant 0 : index
    %0 = vector.load %arg1[%c0, %c0_0] : memref<256x16xf32, #tpu.memory_space<vmem>>, vector<256x16xf32>
    %c0_1 = arith.constant 0 : index
    %c0_2 = arith.constant 0 : index
    %1 = vector.load %arg2[%c0_1, %c0_2] : memref<6x40xf32, #tpu.memory_space<vmem>>, vector<1x16xf32>
    %c1 = arith.constant 1 : index
    %c0_3 = arith.constant 0 : index
    %2 = vector.load %arg2[%c1, %c0_3] : memref<6x40xf32, #tpu.memory_space<vmem>>, vector<1x16xf32>
    %c2 = arith.constant 2 : index
    %c0_4 = arith.constant 0 : index
    %3 = vector.load %arg2[%c2, %c0_4] : memref<6x40xf32, #tpu.memory_space<vmem>>, vector<1x40xf32>
    %c3 = arith.constant 3 : index
    %c0_5 = arith.constant 0 : index
    %4 = vector.load %arg2[%c3, %c0_5] : memref<6x40xf32, #tpu.memory_space<vmem>>, vector<1x8xf32>
    %c4 = arith.constant 4 : index
    %c0_6 = arith.constant 0 : index
    %5 = vector.load %arg2[%c4, %c0_6] : memref<6x40xf32, #tpu.memory_space<vmem>>, vector<1x16xf32>
    %c5 = arith.constant 5 : index
    %c0_7 = arith.constant 0 : index
    %6 = vector.load %arg2[%c5, %c0_7] : memref<6x40xf32, #tpu.memory_space<vmem>>, vector<1x32xf32>
    %c0_8 = arith.constant 0 : index
    %c0_9 = arith.constant 0 : index
    %7 = vector.load %arg3[%c0_8, %c0_9] : memref<16x40xf32, #tpu.memory_space<vmem>>, vector<16x40xf32>
    %cst = arith.constant dense<0.000000e+00> : vector<256x40xf32>
    %8 = tpu.matmul %0, %7, %cst {dimension_numbers = #tpu.dot_dimension_numbers<[1], [0], [0], [1], [0, 0, 1, 1], [], []>} : vector<256x16xf32>, vector<16x40xf32>, vector<256x40xf32> -> vector<256x40xf32>
    %9 = vector.broadcast %3 : vector<1x40xf32> to vector<256x40xf32>
    %10 = arith.addf %8, %9 : vector<256x40xf32>
    %11 = vector.broadcast %1 : vector<1x16xf32> to vector<256x16xf32>
    %12 = arith.mulf %0, %11 : vector<256x16xf32>
    %13 = vector.broadcast %2 : vector<1x16xf32> to vector<256x16xf32>
    %14 = arith.addf %12, %13 : vector<256x16xf32>
    %cst_10 = arith.constant 0.000000e+00 : f32
    %15 = vector.broadcast %cst_10 : f32 to vector<256x16xf32>
    %16 = arith.maximumf %14, %15 : vector<256x16xf32>
    %17 = vector.extract_strided_slice %10 {offsets = [0, 0], sizes = [256, 16], strides = [1, 1]} : vector<256x40xf32> to vector<256x16xf32>
    %cst_11 = arith.constant 0.000000e+00 : f32
    %18 = vector.broadcast %cst_11 : f32 to vector<256x16xf32>
    %19 = arith.maximumf %17, %18 : vector<256x16xf32>
    %20 = arith.addf %16, %19 : vector<256x16xf32>
    %cst_12 = arith.constant 0.000000e+00 : f32
    %21 = vector.broadcast %cst_12 : f32 to vector<20x20x8xf32>
    %c0_13 = arith.constant 0 : index
    %c0_14 = arith.constant 0 : index
    %c0_15 = arith.constant 0 : index
    %22 = vector.load %arg8[%c0_13, %c0_14, %c0_15] : memref<20x20x8xf32, #tpu.memory_space<vmem>>, vector<20x20x8xf32>
    tpu.vector_store %arg8[%c0_13, %c0_14, %c0_15], %21 {strides = array<i32>} : memref<20x20x8xf32, #tpu.memory_space<vmem>>, vector<20x20x8xf32>,
    %cst_16 = arith.constant 0.000000e+00 : f32
    %23 = vector.broadcast %cst_16 : f32 to vector<18x18x16xf32>
    %c0_17 = arith.constant 0 : index
    %c0_18 = arith.constant 0 : index
    %c0_19 = arith.constant 0 : index
    %24 = vector.load %arg9[%c0_17, %c0_18, %c0_19] : memref<18x18x16xf32, #tpu.memory_space<vmem>>, vector<18x18x16xf32>
    tpu.vector_store %arg9[%c0_17, %c0_18, %c0_19], %23 {strides = array<i32>} : memref<18x18x16xf32, #tpu.memory_space<vmem>>, vector<18x18x16xf32>,
    %25 = vector.extract_strided_slice %10 {offsets = [0, 16], sizes = [256, 8], strides = [1, 1]} : vector<256x40xf32> to vector<256x8xf32>
    %26 = vector.shape_cast %25 : vector<256x8xf32> to vector<16x16x8xf32>
    %c2_20 = arith.constant 2 : index
    %c2_21 = arith.constant 2 : index
    %c0_22 = arith.constant 0 : index
    %27 = vector.load %arg8[%c2_20, %c2_21, %c0_22] : memref<20x20x8xf32, #tpu.memory_space<vmem>>, vector<16x16x8xf32>
    tpu.vector_store %arg8[%c2_20, %c2_21, %c0_22], %26 {strides = array<i32>} : memref<20x20x8xf32, #tpu.memory_space<vmem>>, vector<16x16x8xf32>,
    %c0_23 = arith.constant 0 : index
    %c0_24 = arith.constant 0 : index
    %c0_25 = arith.constant 0 : index
    %28 = vector.load %arg8[%c0_23, %c0_24, %c0_25] : memref<20x20x8xf32, #tpu.memory_space<vmem>>, vector<16x16x8xf32>
    %c0_26 = arith.constant 0 : index
    %c1_27 = arith.constant 1 : index
    %c0_28 = arith.constant 0 : index
    %29 = vector.load %arg8[%c0_26, %c1_27, %c0_28] : memref<20x20x8xf32, #tpu.memory_space<vmem>>, vector<16x16x8xf32>
    %c0_29 = arith.constant 0 : index
    %c2_30 = arith.constant 2 : index
    %c0_31 = arith.constant 0 : index
    %30 = vector.load %arg8[%c0_29, %c2_30, %c0_31] : memref<20x20x8xf32, #tpu.memory_space<vmem>>, vector<16x16x8xf32>
    %c0_32 = arith.constant 0 : index
    %c3_33 = arith.constant 3 : index
    %c0_34 = arith.constant 0 : index
    %31 = vector.load %arg8[%c0_32, %c3_33, %c0_34] : memref<20x20x8xf32, #tpu.memory_space<vmem>>, vector<16x16x8xf32>
    %c0_35 = arith.constant 0 : index
    %c4_36 = arith.constant 4 : index
    %c0_37 = arith.constant 0 : index
    %32 = vector.load %arg8[%c0_35, %c4_36, %c0_37] : memref<20x20x8xf32, #tpu.memory_space<vmem>>, vector<16x16x8xf32>
    %c1_38 = arith.constant 1 : index
    %c0_39 = arith.constant 0 : index
    %c0_40 = arith.constant 0 : index
    %33 = vector.load %arg8[%c1_38, %c0_39, %c0_40] : memref<20x20x8xf32, #tpu.memory_space<vmem>>, vector<16x16x8xf32>
    %c1_41 = arith.constant 1 : index
    %c1_42 = arith.constant 1 : index
    %c0_43 = arith.constant 0 : index
    %34 = vector.load %arg8[%c1_41, %c1_42, %c0_43] : memref<20x20x8xf32, #tpu.memory_space<vmem>>, vector<16x16x8xf32>
    %c1_44 = arith.constant 1 : index
    %c2_45 = arith.constant 2 : index
    %c0_46 = arith.constant 0 : index
    %35 = vector.load %arg8[%c1_44, %c2_45, %c0_46] : memref<20x20x8xf32, #tpu.memory_space<vmem>>, vector<16x16x8xf32>
    %c1_47 = arith.constant 1 : index
    %c3_48 = arith.constant 3 : index
    %c0_49 = arith.constant 0 : index
    %36 = vector.load %arg8[%c1_47, %c3_48, %c0_49] : memref<20x20x8xf32, #tpu.memory_space<vmem>>, vector<16x16x8xf32>
    %c1_50 = arith.constant 1 : index
    %c4_51 = arith.constant 4 : index
    %c0_52 = arith.constant 0 : index
    %37 = vector.load %arg8[%c1_50, %c4_51, %c0_52] : memref<20x20x8xf32, #tpu.memory_space<vmem>>, vector<16x16x8xf32>
    %c2_53 = arith.constant 2 : index
    %c0_54 = arith.constant 0 : index
    %c0_55 = arith.constant 0 : index
    %38 = vector.load %arg8[%c2_53, %c0_54, %c0_55] : memref<20x20x8xf32, #tpu.memory_space<vmem>>, vector<16x16x8xf32>
    %c2_56 = arith.constant 2 : index
    %c1_57 = arith.constant 1 : index
    %c0_58 = arith.constant 0 : index
    %39 = vector.load %arg8[%c2_56, %c1_57, %c0_58] : memref<20x20x8xf32, #tpu.memory_space<vmem>>, vector<16x16x8xf32>
    %c2_59 = arith.constant 2 : index
    %c2_60 = arith.constant 2 : index
    %c0_61 = arith.constant 0 : index
    %40 = vector.load %arg8[%c2_59, %c2_60, %c0_61] : memref<20x20x8xf32, #tpu.memory_space<vmem>>, vector<16x16x8xf32>
    %c2_62 = arith.constant 2 : index
    %c3_63 = arith.constant 3 : index
    %c0_64 = arith.constant 0 : index
    %41 = vector.load %arg8[%c2_62, %c3_63, %c0_64] : memref<20x20x8xf32, #tpu.memory_space<vmem>>, vector<16x16x8xf32>
    %c2_65 = arith.constant 2 : index
    %c4_66 = arith.constant 4 : index
    %c0_67 = arith.constant 0 : index
    %42 = vector.load %arg8[%c2_65, %c4_66, %c0_67] : memref<20x20x8xf32, #tpu.memory_space<vmem>>, vector<16x16x8xf32>
    %c3_68 = arith.constant 3 : index
    %c0_69 = arith.constant 0 : index
    %c0_70 = arith.constant 0 : index
    %43 = vector.load %arg8[%c3_68, %c0_69, %c0_70] : memref<20x20x8xf32, #tpu.memory_space<vmem>>, vector<16x16x8xf32>
    %c3_71 = arith.constant 3 : index
    %c1_72 = arith.constant 1 : index
    %c0_73 = arith.constant 0 : index
    %44 = vector.load %arg8[%c3_71, %c1_72, %c0_73] : memref<20x20x8xf32, #tpu.memory_space<vmem>>, vector<16x16x8xf32>
    %c3_74 = arith.constant 3 : index
    %c2_75 = arith.constant 2 : index
    %c0_76 = arith.constant 0 : index
    %45 = vector.load %arg8[%c3_74, %c2_75, %c0_76] : memref<20x20x8xf32, #tpu.memory_space<vmem>>, vector<16x16x8xf32>
    %c3_77 = arith.constant 3 : index
    %c3_78 = arith.constant 3 : index
    %c0_79 = arith.constant 0 : index
    %46 = vector.load %arg8[%c3_77, %c3_78, %c0_79] : memref<20x20x8xf32, #tpu.memory_space<vmem>>, vector<16x16x8xf32>
    %c3_80 = arith.constant 3 : index
    %c4_81 = arith.constant 4 : index
    %c0_82 = arith.constant 0 : index
    %47 = vector.load %arg8[%c3_80, %c4_81, %c0_82] : memref<20x20x8xf32, #tpu.memory_space<vmem>>, vector<16x16x8xf32>
    %c4_83 = arith.constant 4 : index
    %c0_84 = arith.constant 0 : index
    %c0_85 = arith.constant 0 : index
    %48 = vector.load %arg8[%c4_83, %c0_84, %c0_85] : memref<20x20x8xf32, #tpu.memory_space<vmem>>, vector<16x16x8xf32>
    %c4_86 = arith.constant 4 : index
    %c1_87 = arith.constant 1 : index
    %c0_88 = arith.constant 0 : index
    %49 = vector.load %arg8[%c4_86, %c1_87, %c0_88] : memref<20x20x8xf32, #tpu.memory_space<vmem>>, vector<16x16x8xf32>
    %c4_89 = arith.constant 4 : index
    %c2_90 = arith.constant 2 : index
    %c0_91 = arith.constant 0 : index
    %50 = vector.load %arg8[%c4_89, %c2_90, %c0_91] : memref<20x20x8xf32, #tpu.memory_space<vmem>>, vector<16x16x8xf32>
    %c4_92 = arith.constant 4 : index
    %c3_93 = arith.constant 3 : index
    %c0_94 = arith.constant 0 : index
    %51 = vector.load %arg8[%c4_92, %c3_93, %c0_94] : memref<20x20x8xf32, #tpu.memory_space<vmem>>, vector<16x16x8xf32>
    %c4_95 = arith.constant 4 : index
    %c4_96 = arith.constant 4 : index
    %c0_97 = arith.constant 0 : index
    %52 = vector.load %arg8[%c4_95, %c4_96, %c0_97] : memref<20x20x8xf32, #tpu.memory_space<vmem>>, vector<16x16x8xf32>
    %53 = tpu.concatenate %28, %29, %30, %31, %32, %33, %34, %35, %36, %37, %38, %39, %40, %41, %42, %43 in 2 : vector<16x16x8xf32>, vector<16x16x8xf32>, vector<16x16x8xf32>, vector<16x16x8xf32>, vector<16x16x8xf32>, vector<16x16x8xf32>, vector<16x16x8xf32>, vector<16x16x8xf32>, vector<16x16x8xf32>, vector<16x16x8xf32>, vector<16x16x8xf32>, vector<16x16x8xf32>, vector<16x16x8xf32>, vector<16x16x8xf32>, vector<16x16x8xf32>, vector<16x16x8xf32> -> vector<16x16x128xf32>
    %54 = tpu.concatenate %44, %45, %46, %47, %48, %49, %50, %51, %52 in 2 : vector<16x16x8xf32>, vector<16x16x8xf32>, vector<16x16x8xf32>, vector<16x16x8xf32>, vector<16x16x8xf32>, vector<16x16x8xf32>, vector<16x16x8xf32>, vector<16x16x8xf32>, vector<16x16x8xf32> -> vector<16x16x72xf32>
    %55 = tpu.concatenate %53, %54 in 2 : vector<16x16x128xf32>, vector<16x16x72xf32> -> vector<16x16x200xf32>
    %56 = vector.shape_cast %55 : vector<16x16x200xf32> to vector<256x200xf32>
    %57 = vector.extract_strided_slice %10 {offsets = [0, 24], sizes = [256, 16], strides = [1, 1]} : vector<256x40xf32> to vector<256x16xf32>
    %58 = vector.shape_cast %57 : vector<256x16xf32> to vector<16x16x16xf32>
    %c1_98 = arith.constant 1 : index
    %c1_99 = arith.constant 1 : index
    %c0_100 = arith.constant 0 : index
    %59 = vector.load %arg9[%c1_98, %c1_99, %c0_100] : memref<18x18x16xf32, #tpu.memory_space<vmem>>, vector<16x16x16xf32>
    tpu.vector_store %arg9[%c1_98, %c1_99, %c0_100], %58 {strides = array<i32>} : memref<18x18x16xf32, #tpu.memory_space<vmem>>, vector<16x16x16xf32>,
    %c0_101 = arith.constant 0 : index
    %c0_102 = arith.constant 0 : index
    %c0_103 = arith.constant 0 : index
    %60 = vector.load %arg9[%c0_101, %c0_102, %c0_103] : memref<18x18x16xf32, #tpu.memory_space<vmem>>, vector<16x16x16xf32>
    %c0_104 = arith.constant 0 : index
    %c1_105 = arith.constant 1 : index
    %c0_106 = arith.constant 0 : index
    %61 = vector.load %arg9[%c0_104, %c1_105, %c0_106] : memref<18x18x16xf32, #tpu.memory_space<vmem>>, vector<16x16x16xf32>
    %c0_107 = arith.constant 0 : index
    %c2_108 = arith.constant 2 : index
    %c0_109 = arith.constant 0 : index
    %62 = vector.load %arg9[%c0_107, %c2_108, %c0_109] : memref<18x18x16xf32, #tpu.memory_space<vmem>>, vector<16x16x16xf32>
    %c1_110 = arith.constant 1 : index
    %c0_111 = arith.constant 0 : index
    %c0_112 = arith.constant 0 : index
    %63 = vector.load %arg9[%c1_110, %c0_111, %c0_112] : memref<18x18x16xf32, #tpu.memory_space<vmem>>, vector<16x16x16xf32>
    %c1_113 = arith.constant 1 : index
    %c1_114 = arith.constant 1 : index
    %c0_115 = arith.constant 0 : index
    %64 = vector.load %arg9[%c1_113, %c1_114, %c0_115] : memref<18x18x16xf32, #tpu.memory_space<vmem>>, vector<16x16x16xf32>
    %c1_116 = arith.constant 1 : index
    %c2_117 = arith.constant 2 : index
    %c0_118 = arith.constant 0 : index
    %65 = vector.load %arg9[%c1_116, %c2_117, %c0_118] : memref<18x18x16xf32, #tpu.memory_space<vmem>>, vector<16x16x16xf32>
    %c2_119 = arith.constant 2 : index
    %c0_120 = arith.constant 0 : index
    %c0_121 = arith.constant 0 : index
    %66 = vector.load %arg9[%c2_119, %c0_120, %c0_121] : memref<18x18x16xf32, #tpu.memory_space<vmem>>, vector<16x16x16xf32>
    %c2_122 = arith.constant 2 : index
    %c1_123 = arith.constant 1 : index
    %c0_124 = arith.constant 0 : index
    %67 = vector.load %arg9[%c2_122, %c1_123, %c0_124] : memref<18x18x16xf32, #tpu.memory_space<vmem>>, vector<16x16x16xf32>
    %c2_125 = arith.constant 2 : index
    %c2_126 = arith.constant 2 : index
    %c0_127 = arith.constant 0 : index
    %68 = vector.load %arg9[%c2_125, %c2_126, %c0_127] : memref<18x18x16xf32, #tpu.memory_space<vmem>>, vector<16x16x16xf32>
    %69 = tpu.concatenate %60, %61, %62, %63, %64, %65, %66, %67, %68 in 2 : vector<16x16x16xf32>, vector<16x16x16xf32>, vector<16x16x16xf32>, vector<16x16x16xf32>, vector<16x16x16xf32>, vector<16x16x16xf32>, vector<16x16x16xf32>, vector<16x16x16xf32>, vector<16x16x16xf32> -> vector<16x16x144xf32>
    %70 = vector.shape_cast %69 : vector<16x16x144xf32> to vector<256x144xf32>
    %c0_128 = arith.constant 0 : index
    %c0_129 = arith.constant 0 : index
    %71 = vector.load %arg4[%c0_128, %c0_129] : memref<200x8xf32, #tpu.memory_space<vmem>>, vector<200x8xf32>
    %cst_130 = arith.constant dense<0.000000e+00> : vector<256x8xf32>
    %72 = tpu.matmul %56, %71, %cst_130 {dimension_numbers = #tpu.dot_dimension_numbers<[1], [0], [0], [1], [0, 0, 1, 1], [], []>} : vector<256x200xf32>, vector<200x8xf32>, vector<256x8xf32> -> vector<256x8xf32>
    %73 = vector.broadcast %4 : vector<1x8xf32> to vector<256x8xf32>
    %74 = arith.addf %72, %73 : vector<256x8xf32>
    %cst_131 = arith.constant 0.000000e+00 : f32
    %75 = vector.broadcast %cst_131 : f32 to vector<256x8xf32>
    %76 = arith.maximumf %74, %75 : vector<256x8xf32>
    %c0_132 = arith.constant 0 : index
    %c0_133 = arith.constant 0 : index
    %77 = vector.load %arg5[%c0_132, %c0_133] : memref<144x16xf32, #tpu.memory_space<vmem>>, vector<144x16xf32>
    %cst_134 = arith.constant dense<0.000000e+00> : vector<256x16xf32>
    %78 = tpu.matmul %70, %77, %cst_134 {dimension_numbers = #tpu.dot_dimension_numbers<[1], [0], [0], [1], [0, 0, 1, 1], [], []>} : vector<256x144xf32>, vector<144x16xf32>, vector<256x16xf32> -> vector<256x16xf32>
    %79 = vector.broadcast %5 : vector<1x16xf32> to vector<256x16xf32>
    %80 = arith.addf %78, %79 : vector<256x16xf32>
    %cst_135 = arith.constant 0.000000e+00 : f32
    %81 = vector.broadcast %cst_135 : f32 to vector<256x16xf32>
    %82 = arith.maximumf %80, %81 : vector<256x16xf32>
    %83 = tpu.concatenate %76, %82 in 1 : vector<256x8xf32>, vector<256x16xf32> -> vector<256x24xf32>
    %c0_136 = arith.constant 0 : index
    %c0_137 = arith.constant 0 : index
    %84 = vector.load %arg6[%c0_136, %c0_137] : memref<24x32xf32, #tpu.memory_space<vmem>>, vector<24x32xf32>
    %cst_138 = arith.constant dense<0.000000e+00> : vector<256x32xf32>
    %85 = tpu.matmul %83, %84, %cst_138 {dimension_numbers = #tpu.dot_dimension_numbers<[1], [0], [0], [1], [0, 0, 1, 1], [], []>} : vector<256x24xf32>, vector<24x32xf32>, vector<256x32xf32> -> vector<256x32xf32>
    %86 = vector.broadcast %6 : vector<1x32xf32> to vector<256x32xf32>
    %87 = arith.addf %85, %86 : vector<256x32xf32>
    %88 = vector.extract_strided_slice %87 {offsets = [0, 0], sizes = [256, 16], strides = [1, 1]} : vector<256x32xf32> to vector<256x16xf32>
    %cst_139 = arith.constant 0.000000e+00 : f32
    %89 = vector.broadcast %cst_139 : f32 to vector<256x16xf32>
    %90 = arith.maximumf %88, %89 : vector<256x16xf32>
    %91 = arith.addf %20, %90 : vector<256x16xf32>
    %92 = vector.extract_strided_slice %87 {offsets = [0, 16], sizes = [256, 16], strides = [1, 1]} : vector<256x32xf32> to vector<256x16xf32>
    %cst_140 = arith.constant 0.000000e+00 : f32
    %93 = vector.broadcast %cst_140 : f32 to vector<256x16xf32>
    %94 = arith.maximumf %92, %93 : vector<256x16xf32>
    %95 = arith.addf %91, %94 : vector<256x16xf32>
    %c0_141 = arith.constant 0 : index
    %c0_142 = arith.constant 0 : index
    %96 = vector.load %arg7[%c0_141, %c0_142] : memref<256x16xf32, #tpu.memory_space<vmem>>, vector<256x16xf32>
    tpu.vector_store %arg7[%c0_141, %c0_142], %95 {strides = array<i32>} : memref<256x16xf32, #tpu.memory_space<vmem>>, vector<256x16xf32>,
    return
  }
  func.func @transform_0(%arg0: i32) -> (i32, i32) {
    %c0_i32 = arith.constant 0 : i32
    %c0_i32_0 = arith.constant 0 : i32
    return %arg0, %c0_i32 : i32, i32
  }
  func.func @transform_1(%arg0: i32) -> (i32, i32) {
    %c0_i32 = arith.constant 0 : i32
    %c0_i32_0 = arith.constant 0 : i32
    %c0_i32_1 = arith.constant 0 : i32
    return %c0_i32, %c0_i32_0 : i32, i32
  }
  func.func @transform_2(%arg0: i32) -> (i32, i32) {
    %c0_i32 = arith.constant 0 : i32
    %c0_i32_0 = arith.constant 0 : i32
    %c0_i32_1 = arith.constant 0 : i32
    return %c0_i32, %c0_i32_0 : i32, i32
  }
  func.func @transform_3(%arg0: i32) -> (i32, i32) {
    %c0_i32 = arith.constant 0 : i32
    %c0_i32_0 = arith.constant 0 : i32
    %c0_i32_1 = arith.constant 0 : i32
    return %c0_i32, %c0_i32_0 : i32, i32
  }
  func.func @transform_4(%arg0: i32) -> (i32, i32) {
    %c0_i32 = arith.constant 0 : i32
    %c0_i32_0 = arith.constant 0 : i32
    %c0_i32_1 = arith.constant 0 : i32
    return %c0_i32, %c0_i32_0 : i32, i32
  }
  func.func @transform_5(%arg0: i32) -> (i32, i32) {
    %c0_i32 = arith.constant 0 : i32
    %c0_i32_0 = arith.constant 0 : i32
    %c0_i32_1 = arith.constant 0 : i32
    return %c0_i32, %c0_i32_0 : i32, i32
  }
  func.func @transform_6(%arg0: i32) -> (i32, i32) {
    %c0_i32 = arith.constant 0 : i32
    %c0_i32_0 = arith.constant 0 : i32
    return %arg0, %c0_i32 : i32, i32
  }
}

</mosaic_0001>

<llo_original>
// kernel: tpu_custom_call.1
$region0: #{tpu_custom_call.1}
  #allocation0 [shape = 'u32[]', space=smem, size = 0x4, offset = 0x4, fixed_abs, tag = 'smem constant byte address 0x4 - core index']
  #allocation1 [shape = 'u32[144,128]{1,0:T(1,128)}', space=vmem, size = 0x12000, scoped, tag = 'internal scratch']
  #allocation2 [shape = 'f32[20,20,8]{2,1,0:T(8,128)}', space=vmem, size = 0x3c000, scoped, tag = 'scratch operand']
  #allocation3 [shape = 'f32[18,18,16]{2,1,0:T(8,128)}', space=vmem, size = 0x36000, scoped, tag = 'scratch operand']
  %s0 = inlined_call_operand.vmem [shape: f32[512,16], index: 0, kind: input, shape index: {}]
  %s1 = inlined_call_operand.vmem [shape: f32[6,40], index: 1, kind: input, shape index: {}]
  %s2 = inlined_call_operand.vmem [shape: f32[16,40], index: 2, kind: input, shape index: {}]
  %s3 = inlined_call_operand.vmem [shape: f32[200,8], index: 3, kind: input, shape index: {}]
  %s4 = inlined_call_operand.vmem [shape: f32[144,16], index: 4, kind: input, shape index: {}]
  %s5 = inlined_call_operand.vmem [shape: f32[24,32], index: 5, kind: input, shape index: {}]
  %s6 = inlined_call_operand.vmem [shape: f32[512,16], index: 6, kind: output, shape index: {}]
  %s7 = sld [smem:[#allocation0]]
  $region57: #{tpu_custom_call.1} parent=0
    _
  %s9 = ssub.s32 1, %s7
  %s10 = scalar_select 0, %s9, %s7
  loop: start=0, step=1, limit=4
  $region2: #{tpu_custom_call.1} parent=0 // loop_pre_header
    _
  $region3: #{tpu_custom_call.1} parent=0 // loop_header
    %s12 = sphi 0, %s16
    %p13 = scmp.ge.s32.totalorder %s12, 4
    %s22 = sphi 0, %s24
    %s25 = sphi 0, %s22
    %s26 = sphi 0, %s25
    %s42 = sphi 0, %s26
    %s46 = sphi 0, %s46
    %s48 = sphi 0, %s46
    %s49 = sphi 0, %s48
    %s63 = sphi 0, %s49
    %s67 = sphi 0, %s67
    %s69 = sphi 0, %s67
    %s70 = sphi 0, %s69
    %s84 = sphi 0, %s70
    %s88 = sphi 0, %s88
    %s90 = sphi 0, %s88
    %s91 = sphi 0, %s90
    %s105 = sphi 0, %s91
    %s109 = sphi 0, %s109
    %s111 = sphi 0, %s109
    %s112 = sphi 0, %s111
    %s126 = sphi 0, %s112
    %s130 = sphi 0, %s130
    %s132 = sphi 0, %s130
    %s133 = sphi 0, %s132
    %s147 = sphi 0, %s133
    %s153 = sphi 0, %s155
    %s156 = sphi 0, %s153
    %s157 = sphi 0, %s156
    %s173 = sphi 0, %s157
  $region4: #{tpu_custom_call.1} parent=0 // loop_header_branch
    %15 = sbr.rel (%p13) target = $region8
  $region5: #{tpu_custom_call.1} parent=0 // loop_body
    %s17 = ssub.s32 %s12, 1
    %s18 = ssub.s32 %s12, 2
    %s19 = sadd.s32 %s12, 1
    %s20 = ssub.s32 %s12, %s19
    %p21 = scmp.eq.s32.totalorder %s20, 0
    %s23 = sadd.s32 %s22, 1
    %s24 = scalar_select %p21, %s22, %s23
    %p27 = pneg %p21
    %p28 = scmp.eq.s32.totalorder %s12, 1
    %p29 = por %p27, %p28
    %p30 = scmp.ne.s32.totalorder %s22, %s25
    %p31 = scmp.eq.s32.totalorder %s12, 0
    %p32 = por %p30, %p31
    %p33 = scmp.ne.s32.totalorder %s22, %s25
    %p34 = scmp.eq.s32.totalorder %s17, 1
    %p35 = por %p33, %p34
    %p36 = scmp.ne.s32.totalorder %s25, %s26
    %p37 = scmp.eq.s32.totalorder %s17, 0
    %p38 = por %p36, %p37
    %p39 = scmp.ne.s32.totalorder %s25, %s26
    %p40 = scmp.eq.s32.totalorder %s18, 1
    %p41 = por %p39, %p40
    %p43 = scmp.ne.s32.totalorder %s26, %s42
    %p44 = scmp.eq.s32.totalorder %s18, 0
    %p45 = por %p43, %p44
    %s47 = sadd.s32 %s46, 1
    %p50 = scmp.eq.s32.totalorder %s12, 1
    %p51 = scmp.ne.s32.totalorder %s46, %s48
    %p52 = scmp.eq.s32.totalorder %s12, 0
    %p53 = por %p51, %p52
    %p54 = scmp.ne.s32.totalorder %s46, %s48
    %p55 = scmp.eq.s32.totalorder %s17, 1
    %p56 = por %p54, %p55
    %p57 = scmp.ne.s32.totalorder %s48, %s49
    %p58 = scmp.eq.s32.totalorder %s17, 0
    %p59 = por %p57, %p58
    %p60 = scmp.ne.s32.totalorder %s48, %s49
    %p61 = scmp.eq.s32.totalorder %s18, 1
    %p62 = por %p60, %p61
    %p64 = scmp.ne.s32.totalorder %s49, %s63
    %p65 = scmp.eq.s32.totalorder %s18, 0
    %p66 = por %p64, %p65
    %s68 = sadd.s32 %s67, 1
    %p71 = scmp.eq.s32.totalorder %s12, 1
    %p72 = scmp.ne.s32.totalorder %s67, %s69
    %p73 = scmp.eq.s32.totalorder %s12, 0
    %p74 = por %p72, %p73
    %p75 = scmp.ne.s32.totalorder %s67, %s69
    %p76 = scmp.eq.s32.totalorder %s17, 1
    %p77 = por %p75, %p76
    %p78 = scmp.ne.s32.totalorder %s69, %s70
    %p79 = scmp.eq.s32.totalorder %s17, 0
    %p80 = por %p78, %p79
    %p81 = scmp.ne.s32.totalorder %s69, %s70
    %p82 = scmp.eq.s32.totalorder %s18, 1
    %p83 = por %p81, %p82
    %p85 = scmp.ne.s32.totalorder %s70, %s84
    %p86 = scmp.eq.s32.totalorder %s18, 0
    %p87 = por %p85, %p86
    %s89 = sadd.s32 %s88, 1
    %p92 = scmp.eq.s32.totalorder %s12, 1
    %p93 = scmp.ne.s32.totalorder %s88, %s90
    %p94 = scmp.eq.s32.totalorder %s12, 0
    %p95 = por %p93, %p94
    %p96 = scmp.ne.s32.totalorder %s88, %s90
    %p97 = scmp.eq.s32.totalorder %s17, 1
    %p98 = por %p96, %p97
    %p99 = scmp.ne.s32.totalorder %s90, %s91
    %p100 = scmp.eq.s32.totalorder %s17, 0
    %p101 = por %p99, %p100
    %p102 = scmp.ne.s32.totalorder %s90, %s91
    %p103 = scmp.eq.s32.totalorder %s18, 1
    %p104 = por %p102, %p103
    %p106 = scmp.ne.s32.totalorder %s91, %s105
    %p107 = scmp.eq.s32.totalorder %s18, 0
    %p108 = por %p106, %p107
    %s110 = sadd.s32 %s109, 1
    %p113 = scmp.eq.s32.totalorder %s12, 1
    %p114 = scmp.ne.s32.totalorder %s109, %s111
    %p115 = scmp.eq.s32.totalorder %s12, 0
    %p116 = por %p114, %p115
    %p117 = scmp.ne.s32.totalorder %s109, %s111
    %p118 = scmp.eq.s32.totalorder %s17, 1
    %p119 = por %p117, %p118
    %p120 = scmp.ne.s32.totalorder %s111, %s112
    %p121 = scmp.eq.s32.totalorder %s17, 0
    %p122 = por %p120, %p121
    %p123 = scmp.ne.s32.totalorder %s111, %s112
    %p124 = scmp.eq.s32.totalorder %s18, 1
    %p125 = por %p123, %p124
    %p127 = scmp.ne.s32.totalorder %s112, %s126
    %p128 = scmp.eq.s32.totalorder %s18, 0
    %p129 = por %p127, %p128
    %s131 = sadd.s32 %s130, 1
    %p134 = scmp.eq.s32.totalorder %s12, 1
    %p135 = scmp.ne.s32.totalorder %s130, %s132
    %p136 = scmp.eq.s32.totalorder %s12, 0
    %p137 = por %p135, %p136
    %p138 = scmp.ne.s32.totalorder %s130, %s132
    %p139 = scmp.eq.s32.totalorder %s17, 1
    %p140 = por %p138, %p139
    %p141 = scmp.ne.s32.totalorder %s132, %s133
    %p142 = scmp.eq.s32.totalorder %s17, 0
    %p143 = por %p141, %p142
    %p144 = scmp.ne.s32.totalorder %s132, %s133
    %p145 = scmp.eq.s32.totalorder %s18, 1
    %p146 = por %p144, %p145
    %p148 = scmp.ne.s32.totalorder %s133, %s147
    %p149 = scmp.eq.s32.totalorder %s18, 0
    %p150 = por %p148, %p149
    %s151 = ssub.s32 %s12, %s19
    %p152 = scmp.eq.s32.totalorder %s151, 0
    %s154 = sadd.s32 %s153, 1
    %s155 = scalar_select %p152, %s153, %s154
    %p158 = pneg %p152
    %p159 = scmp.eq.s32.totalorder %s12, 1
    %p160 = por %p158, %p159
    %p161 = scmp.ne.s32.totalorder %s153, %s156
    %p162 = scmp.eq.s32.totalorder %s12, 0
    %p163 = por %p161, %p162
    %p164 = scmp.ne.s32.totalorder %s153, %s156
    %p165 = scmp.eq.s32.totalorder %s17, 1
    %p166 = por %p164, %p165
    %p167 = scmp.ne.s32.totalorder %s156, %s157
    %p168 = scmp.eq.s32.totalorder %s17, 0
    %p169 = por %p167, %p168
    %p170 = scmp.ne.s32.totalorder %s156, %s157
    %p171 = scmp.eq.s32.totalorder %s18, 1
    %p172 = por %p170, %p171
    %p174 = scmp.ne.s32.totalorder %s157, %s173
    %p175 = scmp.eq.s32.totalorder %s18, 0
    %p176 = por %p174, %p175
    %p177 = scmp.le.s32.totalorder 1, %s12
    %p178 = scmp.lt.s32.totalorder %s12, 3
    %p179 = pnand %p177, %p178
    %p180 = pneg %p179
    // Predicated region
    $region9: #{tpu_custom_call.1} parent=5 // pred_check
      _
    $region10: #{tpu_custom_call.1} parent=5 // pred_check_branch
      %182 = sbr.rel (%p179) target = $region12
    $region11: #{tpu_custom_call.1} parent=5 // pred_region
      %s183 = ssub.s32 %s12, 1
      // Predicated region
      $region13: #{tpu_custom_call.1} parent=11 // pred_check
        %p184 = pneg %p59
      $region14: #{tpu_custom_call.1} parent=11 // pred_check_branch
        %186 = sbr.rel (%p184) target = $region16
      $region15: #{tpu_custom_call.1} parent=11 // pred_region
        _
      $region16: #{tpu_custom_call.1} parent=11 // pred_fallthru
        _
      // Predicated region
      $region17: #{tpu_custom_call.1} parent=11 // pred_check
        %p187 = pneg %p80
      $region18: #{tpu_custom_call.1} parent=11 // pred_check_branch
        %189 = sbr.rel (%p187) target = $region20
      $region19: #{tpu_custom_call.1} parent=11 // pred_region
        _
      $region20: #{tpu_custom_call.1} parent=11 // pred_fallthru
        _
      // Predicated region
      $region21: #{tpu_custom_call.1} parent=11 // pred_check
        %p190 = pneg %p101
      $region22: #{tpu_custom_call.1} parent=11 // pred_check_branch
        %192 = sbr.rel (%p190) target = $region24
      $region23: #{tpu_custom_call.1} parent=11 // pred_region
        _
      $region24: #{tpu_custom_call.1} parent=11 // pred_fallthru
        _
      // Predicated region
      $region25: #{tpu_custom_call.1} parent=11 // pred_check
        %p193 = pneg %p122
      $region26: #{tpu_custom_call.1} parent=11 // pred_check_branch
        %195 = sbr.rel (%p193) target = $region28
      $region27: #{tpu_custom_call.1} parent=11 // pred_region
        _
      $region28: #{tpu_custom_call.1} parent=11 // pred_fallthru
        _
      // Predicated region
      $region29: #{tpu_custom_call.1} parent=11 // pred_check
        %p196 = pneg %p143
      $region30: #{tpu_custom_call.1} parent=11 // pred_check_branch
        %198 = sbr.rel (%p196) target = $region32
      $region31: #{tpu_custom_call.1} parent=11 // pred_region
        _
      $region32: #{tpu_custom_call.1} parent=11 // pred_fallthru
        _
    $region12: #{tpu_custom_call.1} parent=5 // pred_fallthru
      _
    %p199 = scmp.lt.s32.totalorder %s12, 2
    // Predicated region
    $region33: #{tpu_custom_call.1} parent=5 // pred_check
      %p200 = pneg %p199
    $region34: #{tpu_custom_call.1} parent=5 // pred_check_branch
      %202 = sbr.rel (%p200) target = $region36
    $region35: #{tpu_custom_call.1} parent=5 // pred_region
      // Predicated region
      $region37: #{tpu_custom_call.1} parent=35 // pred_check
        %p203 = pneg %p32
      $region38: #{tpu_custom_call.1} parent=35 // pred_check_branch
        %205 = sbr.rel (%p203) target = $region40
      $region39: #{tpu_custom_call.1} parent=35 // pred_region
        %s206 = smul.u32 32, %s12
        %p207 = scmp.lt.s32.totalorder %s206, 63
        %s208 = scalar_select %p207, %s206, 63
        %s209 = smul.addr %s208, 8
        %s210 = scalar_lea.vmem %s0, %s209
        %s211 = smul.u32 32, %s12
      $region40: #{tpu_custom_call.1} parent=35 // pred_fallthru
        _
    $region36: #{tpu_custom_call.1} parent=5 // pred_fallthru
      _
    %p212 = scmp.le.s32.totalorder 1, %s12
    %p213 = scmp.lt.s32.totalorder %s12, 3
    %p214 = pnand %p212, %p213
    %p215 = pneg %p214
    // Predicated region
    $region41: #{tpu_custom_call.1} parent=5 // pred_check
      _
    $region42: #{tpu_custom_call.1} parent=5 // pred_check_branch
      %217 = sbr.rel (%p214) target = $region44
    $region43: #{tpu_custom_call.1} parent=5 // pred_region
      %s218 = ssub.s32 %s12, 1
      %s219 = smul.u32 32, %s17
      %p220 = scmp.lt.s32.totalorder %s219, 63
      %s221 = scalar_select %p220, %s219, 63
      %s222 = smul.addr %s221, 8
      %s223 = scalar_lea.vmem %s0, %s222
      %p224 = pneg %p38
      %p225 = pneg %p35
      %p226 = pneg %p59
      %p227 = pneg %p56
      %p228 = pneg %p80
      %p229 = pneg %p77
      %p230 = pneg %p101
      %p231 = pneg %p98
      %p232 = pneg %p122
      %p233 = pneg %p119
      %p234 = pneg %p143
      %p235 = pneg %p140
      %p236 = pneg %p169
      %p237 = pneg %p166
      %s238 = smul.u32 32, %s17
      %p239 = scmp.lt.s32.totalorder %s238, 63
      %s240 = scalar_select %p239, %s238, 63
      %s241 = smul.addr %s240, 8
      %s242 = scalar_lea.vmem %s6, %s241
      %s243 = smul.u32 32, %s17
      %p244 = scmp.lt.s32.totalorder %s243, 63
      %s245 = scalar_select %p244, %s243, 63
      %s246 = smul.addr %s245, 8
      %s247 = scalar_lea.vmem %s0, %s246
      %s248 = smul.u32 32, %s17
      %s249 = smul.u32 32, %s17
      %p250 = scmp.lt.s32.totalorder %s249, 63
      %s251 = scalar_select %p250, %s249, 63
      %s252 = smul.addr %s251, 8
      %s253 = scalar_lea.vmem %s6, %s252
      %s254 = smul.u32 32, %s17
      %v255 = vld [vmem:[%s247] sm:$0xff]
      %v256 = vld [vmem:[%s247 + $0x8] sm:$0xff]
      %v257 = vld [vmem:[%s247 + $0x10] sm:$0xff]
      %v258 = vld [vmem:[%s247 + $0x18] sm:$0xff]
      %v259 = vld [vmem:[%s247 + $0x20] sm:$0xff]
      %v260 = vld [vmem:[%s247 + $0x28] sm:$0xff]
      %v261 = vld [vmem:[%s247 + $0x30] sm:$0xff]
      %v262 = vld [vmem:[%s247 + $0x38] sm:$0xff]
      %v263 = vld [vmem:[%s247 + $0x40] sm:$0xff]
      %v264 = vld [vmem:[%s247 + $0x48] sm:$0xff]
      %v265 = vld [vmem:[%s247 + $0x50] sm:$0xff]
      %v266 = vld [vmem:[%s247 + $0x58] sm:$0xff]
      %v267 = vld [vmem:[%s247 + $0x60] sm:$0xff]
      %v268 = vld [vmem:[%s247 + $0x68] sm:$0xff]
      %v269 = vld [vmem:[%s247 + $0x70] sm:$0xff]
      %v270 = vld [vmem:[%s247 + $0x78] sm:$0xff]
      %v271 = vld [vmem:[%s247 + $0x80] sm:$0xff]
      %v272 = vld [vmem:[%s247 + $0x88] sm:$0xff]
      %v273 = vld [vmem:[%s247 + $0x90] sm:$0xff]
      %v274 = vld [vmem:[%s247 + $0x98] sm:$0xff]
      %v275 = vld [vmem:[%s247 + $0xa0] sm:$0xff]
      %v276 = vld [vmem:[%s247 + $0xa8] sm:$0xff]
      %v277 = vld [vmem:[%s247 + $0xb0] sm:$0xff]
      %v278 = vld [vmem:[%s247 + $0xb8] sm:$0xff]
      %v279 = vld [vmem:[%s247 + $0xc0] sm:$0xff]
      %v280 = vld [vmem:[%s247 + $0xc8] sm:$0xff]
      %v281 = vld [vmem:[%s247 + $0xd0] sm:$0xff]
      %v282 = vld [vmem:[%s247 + $0xd8] sm:$0xff]
      %v283 = vld [vmem:[%s247 + $0xe0] sm:$0xff]
      %v284 = vld [vmem:[%s247 + $0xe8] sm:$0xff]
      %v285 = vld [vmem:[%s247 + $0xf0] sm:$0xff]
      %v286 = vld [vmem:[%s247 + $0xf8] sm:$0xff]
      %v287 = vld [vmem:[%s1] sm:$0x1]
      %v288 = vld [vmem:[%s1 + $0x1] sm:$0x1]
      %v289 = vld [vmem:[%s1 + $0x2] sm:$0x1]
      %v290 = vld [vmem:[%s1 + $0x3] sm:$0x1]
      %v291 = vld [vmem:[%s1 + $0x4] sm:$0x1]
      %v292 = vld [vmem:[%s1 + $0x5] sm:$0x1]
      %v293 = vld [vmem:[%s2] sm:$0xff]
      %v294 = vld [vmem:[%s2 + $0x8] sm:$0xff]
      %v295 = vlaneseq
      %v296 = vshrl.u32 %v295, 7
      %v297 = vsub.s32 0, %v296
      %v298 = vrot.slane %v289, %v297
      %vm299 = vcmask 130048
      %v301 = vsel %vm299, %v255, 0
      %v304 = vsel %vm299, %v256, 0
      %v307 = vsel %vm299, %v257, 0
      %v310 = vsel %vm299, %v258, 0
      %v313 = vsel %vm299, %v259, 0
      %v316 = vsel %vm299, %v260, 0
      %v319 = vsel %vm299, %v261, 0
      %v322 = vsel %vm299, %v262, 0
      %v325 = vsel %vm299, %v263, 0
      %v328 = vsel %vm299, %v264, 0
      %v331 = vsel %vm299, %v265, 0
      %v334 = vsel %vm299, %v266, 0
      %v337 = vsel %vm299, %v267, 0
      %v340 = vsel %vm299, %v268, 0
      %v343 = vsel %vm299, %v269, 0
      %v346 = vsel %vm299, %v270, 0
      %v349 = vsel %vm299, %v271, 0
      %v352 = vsel %vm299, %v272, 0
      %v355 = vsel %vm299, %v273, 0
      %v358 = vsel %vm299, %v274, 0
      %v361 = vsel %vm299, %v275, 0
      %v364 = vsel %vm299, %v276, 0
      %v367 = vsel %vm299, %v277, 0
      %v370 = vsel %vm299, %v278, 0
      %v373 = vsel %vm299, %v279, 0
      %v376 = vsel %vm299, %v280, 0
      %v379 = vsel %vm299, %v281, 0
      %v382 = vsel %vm299, %v282, 0
      %v385 = vsel %vm299, %v283, 0
      %v388 = vsel %vm299, %v284, 0
      %v391 = vsel %vm299, %v285, 0
      %v394 = vsel %vm299, %v286, 0
      %396 = vmatprep.subr.mxu0 0.0
      %397 = vmatpush1.msra.mxu0 %v293
      %398 = vmatprep.subr.mxu0 0.0
      %399 = vmatpush1.msra.mxu0 %v294
      %400 = vmatprep.subr.mxu0 0.0
      %401 = vmatpush1.msra.mxu0 0.0
      %402 = vmatprep.subr.mxu0 0.0
      %403 = vmatpush1.msra.mxu0 0.0
      %404 = vmatprep.subr.mxu0 0.0
      %405 = vmatpush1.msra.mxu0 0.0
      %406 = vmatprep.subr.mxu0 0.0
      %407 = vmatpush1.msra.mxu0 0.0
      %408 = vmatprep.subr.mxu0 0.0
      %409 = vmatpush1.msra.mxu0 0.0
      %410 = vmatprep.subr.mxu0 0.0
      %411 = vmatpush1.msra.mxu0 0.0
      %412 = vmatprep.subr.mxu0 0.0
      %413 = vmatpush1.msra.mxu0 0.0
      %414 = vmatprep.subr.mxu0 0.0
      %415 = vmatpush1.msra.mxu0 0.0
      %416 = vmatprep.subr.mxu0 0.0
      %417 = vmatpush1.msra.mxu0 0.0
      %418 = vmatprep.subr.mxu0 0.0
      %419 = vmatpush1.msra.mxu0 0.0
      %420 = vmatprep.subr.mxu0 0.0
      %421 = vmatpush1.msra.mxu0 0.0
      %422 = vmatprep.subr.mxu0 0.0
      %423 = vmatpush1.msra.mxu0 0.0
      %424 = vmatprep.subr.mxu0 0.0
      %425 = vmatpush1.msra.mxu0 0.0
      %426 = vmatprep.subr.mxu0 0.0
      %427 = vmatpush1.msra.mxu0 0.0
      %428 = vmatprep.subr.mxu0 0.0
      %429 = vmatpush1.msra.mxu0 0.0
      %430 = vmatprep.subr.mxu0 0.0
      %431 = vmatpush1.msra.mxu0 0.0
      %432 = vmatprep.subr.mxu0 0.0
      %433 = vmatpush1.msra.mxu0 0.0
      %434 = vmatprep.subr.mxu0 0.0
      %435 = vmatpush1.msra.mxu0 0.0
      %436 = vmatprep.subr.mxu0 0.0
      %437 = vmatpush1.msra.mxu0 0.0
      %438 = vmatprep.subr.mxu0 0.0
      %439 = vmatpush1.msra.mxu0 0.0
      %440 = vmatprep.subr.mxu0 0.0
      %441 = vmatpush1.msra.mxu0 0.0
      %442 = vmatprep.subr.mxu0 0.0
      %443 = vmatpush1.msra.mxu0 0.0
      %444 = vmatprep.subr.mxu0 0.0
      %445 = vmatpush1.msra.mxu0 0.0
      %446 = vmatprep.subr.mxu0 0.0
      %447 = vmatpush1.msra.mxu0 0.0
      %448 = vmatprep.subr.mxu0 0.0
      %449 = vmatpush1.msra.mxu0 0.0
      %450 = vmatprep.subr.mxu0 0.0
      %451 = vmatpush1.msra.mxu0 0.0
      %452 = vmatprep.subr.mxu0 0.0
      %453 = vmatpush1.msra.mxu0 0.0
      %454 = vmatprep.subr.mxu0 0.0
      %455 = vmatpush1.msra.mxu0 0.0
      %456 = vmatprep.subr.mxu0 0.0
      %457 = vmatpush1.msra.mxu0 0.0
      %458 = vmatprep.subr.mxu0 0.0
      %459 = vmatpush1.msra.mxu0 0.0
      %460 = vmatprep.mubr.f32.mxu0 0.0
      %461 = vmatmul.mubr.f32.gmra.mrb[0].mxu0 %v301
      %v462 = vpop.f32.mrb[0].mxu0
      %v463 = vadd.f32 %v298, %v462
      %v464 = vpop.f32.mrb[0].mxu0
      %465 = vmatprep.mubr.f32.mxu0 0.0
      %466 = vmatmul.mubr.f32.gmra.mrb[0].mxu0 %v304
      %v467 = vpop.f32.mrb[0].mxu0
      %v468 = vadd.f32 %v298, %v467
      %v469 = vpop.f32.mrb[0].mxu0
      %470 = vmatprep.mubr.f32.mxu0 0.0
      %471 = vmatmul.mubr.f32.gmra.mrb[0].mxu0 %v307
      %v472 = vpop.f32.mrb[0].mxu0
      %v473 = vadd.f32 %v298, %v472
      %v474 = vpop.f32.mrb[0].mxu0
      %475 = vmatprep.mubr.f32.mxu0 0.0
      %476 = vmatmul.mubr.f32.gmra.mrb[0].mxu0 %v310
      %v477 = vpop.f32.mrb[0].mxu0
      %v478 = vadd.f32 %v298, %v477
      %v479 = vpop.f32.mrb[0].mxu0
      %480 = vmatprep.mubr.f32.mxu0 0.0
      %481 = vmatmul.mubr.f32.gmra.mrb[0].mxu0 %v313
      %v482 = vpop.f32.mrb[0].mxu0
      %v483 = vadd.f32 %v298, %v482
      %v484 = vpop.f32.mrb[0].mxu0
      %485 = vmatprep.mubr.f32.mxu0 0.0
      %486 = vmatmul.mubr.f32.gmra.mrb[0].mxu0 %v316
      %v487 = vpop.f32.mrb[0].mxu0
      %v488 = vadd.f32 %v298, %v487
      %v489 = vpop.f32.mrb[0].mxu0
      %490 = vmatprep.mubr.f32.mxu0 0.0
      %491 = vmatmul.mubr.f32.gmra.mrb[0].mxu0 %v319
      %v492 = vpop.f32.mrb[0].mxu0
      %v493 = vadd.f32 %v298, %v492
      %v494 = vpop.f32.mrb[0].mxu0
      %495 = vmatprep.mubr.f32.mxu0 0.0
      %496 = vmatmul.mubr.f32.gmra.mrb[0].mxu0 %v322
      %v497 = vpop.f32.mrb[0].mxu0
      %v498 = vadd.f32 %v298, %v497
      %v499 = vpop.f32.mrb[0].mxu0
      %500 = vmatprep.mubr.f32.mxu0 0.0
      %501 = vmatmul.mubr.f32.gmra.mrb[0].mxu0 %v325
      %v502 = vpop.f32.mrb[0].mxu0
      %v503 = vadd.f32 %v298, %v502
      %v504 = vpop.f32.mrb[0].mxu0
      %505 = vmatprep.mubr.f32.mxu0 0.0
      %506 = vmatmul.mubr.f32.gmra.mrb[0].mxu0 %v328
      %v507 = vpop.f32.mrb[0].mxu0
      %v508 = vadd.f32 %v298, %v507
      %v509 = vpop.f32.mrb[0].mxu0
      %510 = vmatprep.mubr.f32.mxu0 0.0
      %511 = vmatmul.mubr.f32.gmra.mrb[0].mxu0 %v331
      %v512 = vpop.f32.mrb[0].mxu0
      %v513 = vadd.f32 %v298, %v512
      %v514 = vpop.f32.mrb[0].mxu0
      %515 = vmatprep.mubr.f32.mxu0 0.0
      %516 = vmatmul.mubr.f32.gmra.mrb[0].mxu0 %v334
      %v517 = vpop.f32.mrb[0].mxu0
      %v518 = vadd.f32 %v298, %v517
      %v519 = vpop.f32.mrb[0].mxu0
      %520 = vmatprep.mubr.f32.mxu0 0.0
      %521 = vmatmul.mubr.f32.gmra.mrb[0].mxu0 %v337
      %v522 = vpop.f32.mrb[0].mxu0
      %v523 = vadd.f32 %v298, %v522
      %v524 = vpop.f32.mrb[0].mxu0
      %525 = vmatprep.mubr.f32.mxu0 0.0
      %526 = vmatmul.mubr.f32.gmra.mrb[0].mxu0 %v340
      %v527 = vpop.f32.mrb[0].mxu0
      %v528 = vadd.f32 %v298, %v527
      %v529 = vpop.f32.mrb[0].mxu0
      %530 = vmatprep.mubr.f32.mxu0 0.0
      %531 = vmatmul.mubr.f32.gmra.mrb[0].mxu0 %v343
      %v532 = vpop.f32.mrb[0].mxu0
      %v533 = vadd.f32 %v298, %v532
      %v534 = vpop.f32.mrb[0].mxu0
      %535 = vmatprep.mubr.f32.mxu0 0.0
      %536 = vmatmul.mubr.f32.gmra.mrb[0].mxu0 %v346
      %v537 = vpop.f32.mrb[0].mxu0
      %v538 = vadd.f32 %v298, %v537
      %v539 = vpop.f32.mrb[0].mxu0
      %540 = vmatprep.mubr.f32.mxu0 0.0
      %541 = vmatmul.mubr.f32.gmra.mrb[0].mxu0 %v349
      %v542 = vpop.f32.mrb[0].mxu0
      %v543 = vadd.f32 %v298, %v542
      %v544 = vpop.f32.mrb[0].mxu0
      %545 = vmatprep.mubr.f32.mxu0 0.0
      %546 = vmatmul.mubr.f32.gmra.mrb[0].mxu0 %v352
      %v547 = vpop.f32.mrb[0].mxu0
      %v548 = vadd.f32 %v298, %v547
      %v549 = vpop.f32.mrb[0].mxu0
      %550 = vmatprep.mubr.f32.mxu0 0.0
      %551 = vmatmul.mubr.f32.gmra.mrb[0].mxu0 %v355
      %v552 = vpop.f32.mrb[0].mxu0
      %v553 = vadd.f32 %v298, %v552
      %v554 = vpop.f32.mrb[0].mxu0
      %555 = vmatprep.mubr.f32.mxu0 0.0
      %556 = vmatmul.mubr.f32.gmra.mrb[0].mxu0 %v358
      %v557 = vpop.f32.mrb[0].mxu0
      %v558 = vadd.f32 %v298, %v557
      %v559 = vpop.f32.mrb[0].mxu0
      %560 = vmatprep.mubr.f32.mxu0 0.0
      %561 = vmatmul.mubr.f32.gmra.mrb[0].mxu0 %v361
      %v562 = vpop.f32.mrb[0].mxu0
      %v563 = vadd.f32 %v298, %v562
      %v564 = vpop.f32.mrb[0].mxu0
      %565 = vmatprep.mubr.f32.mxu0 0.0
      %566 = vmatmul.mubr.f32.gmra.mrb[0].mxu0 %v364
      %v567 = vpop.f32.mrb[0].mxu0
      %v568 = vadd.f32 %v298, %v567
      %v569 = vpop.f32.mrb[0].mxu0
      %570 = vmatprep.mubr.f32.mxu0 0.0
      %571 = vmatmul.mubr.f32.gmra.mrb[0].mxu0 %v367
      %v572 = vpop.f32.mrb[0].mxu0
      %v573 = vadd.f32 %v298, %v572
      %v574 = vpop.f32.mrb[0].mxu0
      %575 = vmatprep.mubr.f32.mxu0 0.0
      %576 = vmatmul.mubr.f32.gmra.mrb[0].mxu0 %v370
      %v577 = vpop.f32.mrb[0].mxu0
      %v578 = vadd.f32 %v298, %v577
      %v579 = vpop.f32.mrb[0].mxu0
      %580 = vmatprep.mubr.f32.mxu0 0.0
      %581 = vmatmul.mubr.f32.gmra.mrb[0].mxu0 %v373
      %v582 = vpop.f32.mrb[0].mxu0
      %v583 = vadd.f32 %v298, %v582
      %v584 = vpop.f32.mrb[0].mxu0
      %585 = vmatprep.mubr.f32.mxu0 0.0
      %586 = vmatmul.mubr.f32.gmra.mrb[0].mxu0 %v376
      %v587 = vpop.f32.mrb[0].mxu0
      %v588 = vadd.f32 %v298, %v587
      %v589 = vpop.f32.mrb[0].mxu0
      %590 = vmatprep.mubr.f32.mxu0 0.0
      %591 = vmatmul.mubr.f32.gmra.mrb[0].mxu0 %v379
      %v592 = vpop.f32.mrb[0].mxu0
      %v593 = vadd.f32 %v298, %v592
      %v594 = vpop.f32.mrb[0].mxu0
      %595 = vmatprep.mubr.f32.mxu0 0.0
      %596 = vmatmul.mubr.f32.gmra.mrb[0].mxu0 %v382
      %v597 = vpop.f32.mrb[0].mxu0
      %v598 = vadd.f32 %v298, %v597
      %v599 = vpop.f32.mrb[0].mxu0
      %600 = vmatprep.mubr.f32.mxu0 0.0
      %601 = vmatmul.mubr.f32.gmra.mrb[0].mxu0 %v385
      %v602 = vpop.f32.mrb[0].mxu0
      %v603 = vadd.f32 %v298, %v602
      %v604 = vpop.f32.mrb[0].mxu0
      %605 = vmatprep.mubr.f32.mxu0 0.0
      %606 = vmatmul.mubr.f32.gmra.mrb[0].mxu0 %v388
      %v607 = vpop.f32.mrb[0].mxu0
      %v608 = vadd.f32 %v298, %v607
      %v609 = vpop.f32.mrb[0].mxu0
      %610 = vmatprep.mubr.f32.mxu0 0.0
      %611 = vmatmul.mubr.f32.gmra.mrb[0].mxu0 %v391
      %v612 = vpop.f32.mrb[0].mxu0
      %v613 = vadd.f32 %v298, %v612
      %v614 = vpop.f32.mrb[0].mxu0
      %615 = vmatprep.mubr.f32.mxu0 0.0
      %616 = vmatmul.mubr.f32.gmra.mrb[0].mxu0 %v394
      %v617 = vpop.f32.mrb[0].mxu0
      %v618 = vadd.f32 %v298, %v617
      %v619 = vpop.f32.mrb[0].mxu0
      %620 = vdwg.mxu0
      %v621 = vlaneseq
      %v622 = vshrl.u32 %v621, 7
      %v623 = vsub.s32 0, %v622
      %v624 = vrot.slane %v287, %v623
      %v625 = vmul.f32 %v255, %v624
      %v626 = vmul.f32 %v256, %v624
      %v627 = vmul.f32 %v257, %v624
      %v628 = vmul.f32 %v258, %v624
      %v629 = vmul.f32 %v259, %v624
      %v630 = vmul.f32 %v260, %v624
      %v631 = vmul.f32 %v261, %v624
      %v632 = vmul.f32 %v262, %v624
      %v633 = vmul.f32 %v263, %v624
      %v634 = vmul.f32 %v264, %v624
      %v635 = vmul.f32 %v265, %v624
      %v636 = vmul.f32 %v266, %v624
      %v637 = vmul.f32 %v267, %v624
      %v638 = vmul.f32 %v268, %v624
      %v639 = vmul.f32 %v269, %v624
      %v640 = vmul.f32 %v270, %v624
      %v641 = vmul.f32 %v271, %v624
      %v642 = vmul.f32 %v272, %v624
      %v643 = vmul.f32 %v273, %v624
      %v644 = vmul.f32 %v274, %v624
      %v645 = vmul.f32 %v275, %v624
      %v646 = vmul.f32 %v276, %v624
      %v647 = vmul.f32 %v277, %v624
      %v648 = vmul.f32 %v278, %v624
      %v649 = vmul.f32 %v279, %v624
      %v650 = vmul.f32 %v280, %v624
      %v651 = vmul.f32 %v281, %v624
      %v652 = vmul.f32 %v282, %v624
      %v653 = vmul.f32 %v283, %v624
      %v654 = vmul.f32 %v284, %v624
      %v655 = vmul.f32 %v285, %v624
      %v656 = vmul.f32 %v286, %v624
      %v657 = vlaneseq
      %v658 = vshrl.u32 %v657, 7
      %v659 = vsub.s32 0, %v658
      %v660 = vrot.slane %v288, %v659
      %v661 = vadd.f32 %v625, %v660
      %v662 = vadd.f32 %v626, %v660
      %v663 = vadd.f32 %v627, %v660
      %v664 = vadd.f32 %v628, %v660
      %v665 = vadd.f32 %v629, %v660
      %v666 = vadd.f32 %v630, %v660
      %v667 = vadd.f32 %v631, %v660
      %v668 = vadd.f32 %v632, %v660
      %v669 = vadd.f32 %v633, %v660
      %v670 = vadd.f32 %v634, %v660
      %v671 = vadd.f32 %v635, %v660
      %v672 = vadd.f32 %v636, %v660
      %v673 = vadd.f32 %v637, %v660
      %v674 = vadd.f32 %v638, %v660
      %v675 = vadd.f32 %v639, %v660
      %v676 = vadd.f32 %v640, %v660
      %v677 = vadd.f32 %v641, %v660
      %v678 = vadd.f32 %v642, %v660
      %v679 = vadd.f32 %v643, %v660
      %v680 = vadd.f32 %v644, %v660
      %v681 = vadd.f32 %v645, %v660
      %v682 = vadd.f32 %v646, %v660
      %v683 = vadd.f32 %v647, %v660
      %v684 = vadd.f32 %v648, %v660
      %v685 = vadd.f32 %v649, %v660
      %v686 = vadd.f32 %v650, %v660
      %v687 = vadd.f32 %v651, %v660
      %v688 = vadd.f32 %v652, %v660
      %v689 = vadd.f32 %v653, %v660
      %v690 = vadd.f32 %v654, %v660
      %v691 = vadd.f32 %v655, %v660
      %v692 = vadd.f32 %v656, %v660
      %v693 = vmax.f32 %v661, 0.0
      %v694 = vmax.f32 %v662, 0.0
      %v695 = vmax.f32 %v663, 0.0
      %v696 = vmax.f32 %v664, 0.0
      %v697 = vmax.f32 %v665, 0.0
      %v698 = vmax.f32 %v666, 0.0
      %v699 = vmax.f32 %v667, 0.0
      %v700 = vmax.f32 %v668, 0.0
      %v701 = vmax.f32 %v669, 0.0
      %v702 = vmax.f32 %v670, 0.0
      %v703 = vmax.f32 %v671, 0.0
      %v704 = vmax.f32 %v672, 0.0
      %v705 = vmax.f32 %v673, 0.0
      %v706 = vmax.f32 %v674, 0.0
      %v707 = vmax.f32 %v675, 0.0
      %v708 = vmax.f32 %v676, 0.0
      %v709 = vmax.f32 %v677, 0.0
      %v710 = vmax.f32 %v678, 0.0
      %v711 = vmax.f32 %v679, 0.0
      %v712 = vmax.f32 %v680, 0.0
      %v713 = vmax.f32 %v681, 0.0
      %v714 = vmax.f32 %v682, 0.0
      %v715 = vmax.f32 %v683, 0.0
      %v716 = vmax.f32 %v684, 0.0
      %v717 = vmax.f32 %v685, 0.0
      %v718 = vmax.f32 %v686, 0.0
      %v719 = vmax.f32 %v687, 0.0
      %v720 = vmax.f32 %v688, 0.0
      %v721 = vmax.f32 %v689, 0.0
      %v722 = vmax.f32 %v690, 0.0
      %v723 = vmax.f32 %v691, 0.0
      %v724 = vmax.f32 %v692, 0.0
      %v725 = vmax.f32 %v463, 0.0
      %v726 = vmax.f32 %v468, 0.0
      %v727 = vmax.f32 %v473, 0.0
      %v728 = vmax.f32 %v478, 0.0
      %v729 = vmax.f32 %v483, 0.0
      %v730 = vmax.f32 %v488, 0.0
      %v731 = vmax.f32 %v493, 0.0
      %v732 = vmax.f32 %v498, 0.0
      %v733 = vmax.f32 %v503, 0.0
      %v734 = vmax.f32 %v508, 0.0
      %v735 = vmax.f32 %v513, 0.0
      %v736 = vmax.f32 %v518, 0.0
      %v737 = vmax.f32 %v523, 0.0
      %v738 = vmax.f32 %v528, 0.0
      %v739 = vmax.f32 %v533, 0.0
      %v740 = vmax.f32 %v538, 0.0
      %v741 = vmax.f32 %v543, 0.0
      %v742 = vmax.f32 %v548, 0.0
      %v743 = vmax.f32 %v553, 0.0
      %v744 = vmax.f32 %v558, 0.0
      %v745 = vmax.f32 %v563, 0.0
      %v746 = vmax.f32 %v568, 0.0
      %v747 = vmax.f32 %v573, 0.0
      %v748 = vmax.f32 %v578, 0.0
      %v749 = vmax.f32 %v583, 0.0
      %v750 = vmax.f32 %v588, 0.0
      %v751 = vmax.f32 %v593, 0.0
      %v752 = vmax.f32 %v598, 0.0
      %v753 = vmax.f32 %v603, 0.0
      %v754 = vmax.f32 %v608, 0.0
      %v755 = vmax.f32 %v613, 0.0
      %v756 = vmax.f32 %v618, 0.0
      %v757 = vadd.f32 %v693, %v725
      %v758 = vadd.f32 %v694, %v726
      %v759 = vadd.f32 %v695, %v727
      %v760 = vadd.f32 %v696, %v728
      %v761 = vadd.f32 %v697, %v729
      %v762 = vadd.f32 %v698, %v730
      %v763 = vadd.f32 %v699, %v731
      %v764 = vadd.f32 %v700, %v732
      %v765 = vadd.f32 %v701, %v733
      %v766 = vadd.f32 %v702, %v734
      %v767 = vadd.f32 %v703, %v735
      %v768 = vadd.f32 %v704, %v736
      %v769 = vadd.f32 %v705, %v737
      %v770 = vadd.f32 %v706, %v738
      %v771 = vadd.f32 %v707, %v739
      %v772 = vadd.f32 %v708, %v740
      %v773 = vadd.f32 %v709, %v741
      %v774 = vadd.f32 %v710, %v742
      %v775 = vadd.f32 %v711, %v743
      %v776 = vadd.f32 %v712, %v744
      %v777 = vadd.f32 %v713, %v745
      %v778 = vadd.f32 %v714, %v746
      %v779 = vadd.f32 %v715, %v747
      %v780 = vadd.f32 %v716, %v748
      %v781 = vadd.f32 %v717, %v749
      %v782 = vadd.f32 %v718, %v750
      %v783 = vadd.f32 %v719, %v751
      %v784 = vadd.f32 %v720, %v752
      %v785 = vadd.f32 %v721, %v753
      %v786 = vadd.f32 %v722, %v754
      %v787 = vadd.f32 %v723, %v755
      %v788 = vadd.f32 %v724, %v756
      %vm789 = vcmask 64512
      %790 = vst.msk [vmem:[#allocation2] sm:$0xff] %vm789, 0.0
      %791 = vst.msk [vmem:[#allocation2 + $0x8] sm:$0xff] %vm789, 0.0
      %vm792 = vcmask 60416
      %793 = vst.msk [vmem:[#allocation2 + $0x10] sm:$0xf] %vm792, 0.0
      %794 = vst.msk [vmem:[#allocation2 + $0x18] sm:$0xff] %vm789, 0.0
      %795 = vst.msk [vmem:[#allocation2 + $0x20] sm:$0xff] %vm789, 0.0
      %796 = vst.msk [vmem:[#allocation2 + $0x28] sm:$0xf] %vm792, 0.0
      %797 = vst.msk [vmem:[#allocation2 + $0x30] sm:$0xff] %vm789, 0.0
      %798 = vst.msk [vmem:[#allocation2 + $0x38] sm:$0xff] %vm789, 0.0
      %799 = vst.msk [vmem:[#allocation2 + $0x40] sm:$0xf] %vm792, 0.0
      %800 = vst.msk [vmem:[#allocation2 + $0x48] sm:$0xff] %vm789, 0.0
      %801 = vst.msk [vmem:[#allocation2 + $0x50] sm:$0xff] %vm789, 0.0
      %802 = vst.msk [vmem:[#allocation2 + $0x58] sm:$0xf] %vm792, 0.0
      %803 = vst.msk [vmem:[#allocation2 + $0x60] sm:$0xff] %vm789, 0.0
      %804 = vst.msk [vmem:[#allocation2 + $0x68] sm:$0xff] %vm789, 0.0
      %805 = vst.msk [vmem:[#allocation2 + $0x70] sm:$0xf] %vm792, 0.0
      %806 = vst.msk [vmem:[#allocation2 + $0x78] sm:$0xff] %vm789, 0.0
      %807 = vst.msk [vmem:[#allocation2 + $0x80] sm:$0xff] %vm789, 0.0
      %808 = vst.msk [vmem:[#allocation2 + $0x88] sm:$0xf] %vm792, 0.0
      %809 = vst.msk [vmem:[#allocation2 + $0x90] sm:$0xff] %vm789, 0.0
      %810 = vst.msk [vmem:[#allocation2 + $0x98] sm:$0xff] %vm789, 0.0
      %811 = vst.msk [vmem:[#allocation2 + $0xa0] sm:$0xf] %vm792, 0.0
      %812 = vst.msk [vmem:[#allocation2 + $0xa8] sm:$0xff] %vm789, 0.0
      %813 = vst.msk [vmem:[#allocation2 + $0xb0] sm:$0xff] %vm789, 0.0
      %814 = vst.msk [vmem:[#allocation2 + $0xb8] sm:$0xf] %vm792, 0.0
      %815 = vst.msk [vmem:[#allocation2 + $0xc0] sm:$0xff] %vm789, 0.0
      %816 = vst.msk [vmem:[#allocation2 + $0xc8] sm:$0xff] %vm789, 0.0
      %817 = vst.msk [vmem:[#allocation2 + $0xd0] sm:$0xf] %vm792, 0.0
      %818 = vst.msk [vmem:[#allocation2 + $0xd8] sm:$0xff] %vm789, 0.0
      %819 = vst.msk [vmem:[#allocation2 + $0xe0] sm:$0xff] %vm789, 0.0
      %820 = vst.msk [vmem:[#allocation2 + $0xe8] sm:$0xf] %vm792, 0.0
      %821 = vst.msk [vmem:[#allocation2 + $0xf0] sm:$0xff] %vm789, 0.0
      %822 = vst.msk [vmem:[#allocation2 + $0xf8] sm:$0xff] %vm789, 0.0
      %823 = vst.msk [vmem:[#allocation2 + $0x100] sm:$0xf] %vm792, 0.0
      %824 = vst.msk [vmem:[#allocation2 + $0x108] sm:$0xff] %vm789, 0.0
      %825 = vst.msk [vmem:[#allocation2 + $0x110] sm:$0xff] %vm789, 0.0
      %826 = vst.msk [vmem:[#allocation2 + $0x118] sm:$0xf] %vm792, 0.0
      %827 = vst.msk [vmem:[#allocation2 + $0x120] sm:$0xff] %vm789, 0.0
      %828 = vst.msk [vmem:[#allocation2 + $0x128] sm:$0xff] %vm789, 0.0
      %829 = vst.msk [vmem:[#allocation2 + $0x130] sm:$0xf] %vm792, 0.0
      %830 = vst.msk [vmem:[#allocation2 + $0x138] sm:$0xff] %vm789, 0.0
      %831 = vst.msk [vmem:[#allocation2 + $0x140] sm:$0xff] %vm789, 0.0
      %832 = vst.msk [vmem:[#allocation2 + $0x148] sm:$0xf] %vm792, 0.0
      %833 = vst.msk [vmem:[#allocation2 + $0x150] sm:$0xff] %vm789, 0.0
      %834 = vst.msk [vmem:[#allocation2 + $0x158] sm:$0xff] %vm789, 0.0
      %835 = vst.msk [vmem:[#allocation2 + $0x160] sm:$0xf] %vm792, 0.0
      %836 = vst.msk [vmem:[#allocation2 + $0x168] sm:$0xff] %vm789, 0.0
      %837 = vst.msk [vmem:[#allocation2 + $0x170] sm:$0xff] %vm789, 0.0
      %838 = vst.msk [vmem:[#allocation2 + $0x178] sm:$0xf] %vm792, 0.0
      %839 = vst.msk [vmem:[#allocation2 + $0x180] sm:$0xff] %vm789, 0.0
      %840 = vst.msk [vmem:[#allocation2 + $0x188] sm:$0xff] %vm789, 0.0
      %841 = vst.msk [vmem:[#allocation2 + $0x190] sm:$0xf] %vm792, 0.0
      %842 = vst.msk [vmem:[#allocation2 + $0x198] sm:$0xff] %vm789, 0.0
      %843 = vst.msk [vmem:[#allocation2 + $0x1a0] sm:$0xff] %vm789, 0.0
      %844 = vst.msk [vmem:[#allocation2 + $0x1a8] sm:$0xf] %vm792, 0.0
      %845 = vst.msk [vmem:[#allocation2 + $0x1b0] sm:$0xff] %vm789, 0.0
      %846 = vst.msk [vmem:[#allocation2 + $0x1b8] sm:$0xff] %vm789, 0.0
      %847 = vst.msk [vmem:[#allocation2 + $0x1c0] sm:$0xf] %vm792, 0.0
      %848 = vst.msk [vmem:[#allocation2 + $0x1c8] sm:$0xff] %vm789, 0.0
      %849 = vst.msk [vmem:[#allocation2 + $0x1d0] sm:$0xff] %vm789, 0.0
      %850 = vst.msk [vmem:[#allocation2 + $0x1d8] sm:$0xf] %vm792, 0.0
      %851 = vst.msk [vmem:[#allocation3] sm:$0xff] %vm299, 0.0
      %852 = vst.msk [vmem:[#allocation3 + $0x8] sm:$0xff] %vm299, 0.0
      %vm853 = vcmask 123904
      %854 = vst.msk [vmem:[#allocation3 + $0x10] sm:$0x3] %vm853, 0.0
      %855 = vst.msk [vmem:[#allocation3 + $0x18] sm:$0xff] %vm299, 0.0
      %856 = vst.msk [vmem:[#allocation3 + $0x20] sm:$0xff] %vm299, 0.0
      %857 = vst.msk [vmem:[#allocation3 + $0x28] sm:$0x3] %vm853, 0.0
      %858 = vst.msk [vmem:[#allocation3 + $0x30] sm:$0xff] %vm299, 0.0
      %859 = vst.msk [vmem:[#allocation3 + $0x38] sm:$0xff] %vm299, 0.0
      %860 = vst.msk [vmem:[#allocation3 + $0x40] sm:$0x3] %vm853, 0.0
      %861 = vst.msk [vmem:[#allocation3 + $0x48] sm:$0xff] %vm299, 0.0
      %862 = vst.msk [vmem:[#allocation3 + $0x50] sm:$0xff] %vm299, 0.0
      %863 = vst.msk [vmem:[#allocation3 + $0x58] sm:$0x3] %vm853, 0.0
      %864 = vst.msk [vmem:[#allocation3 + $0x60] sm:$0xff] %vm299, 0.0
      %865 = vst.msk [vmem:[#allocation3 + $0x68] sm:$0xff] %vm299, 0.0
      %866 = vst.msk [vmem:[#allocation3 + $0x70] sm:$0x3] %vm853, 0.0
      %867 = vst.msk [vmem:[#allocation3 + $0x78] sm:$0xff] %vm299, 0.0
      %868 = vst.msk [vmem:[#allocation3 + $0x80] sm:$0xff] %vm299, 0.0
      %869 = vst.msk [vmem:[#allocation3 + $0x88] sm:$0x3] %vm853, 0.0
      %870 = vst.msk [vmem:[#allocation3 + $0x90] sm:$0xff] %vm299, 0.0
      %871 = vst.msk [vmem:[#allocation3 + $0x98] sm:$0xff] %vm299, 0.0
      %872 = vst.msk [vmem:[#allocation3 + $0xa0] sm:$0x3] %vm853, 0.0
      %873 = vst.msk [vmem:[#allocation3 + $0xa8] sm:$0xff] %vm299, 0.0
      %874 = vst.msk [vmem:[#allocation3 + $0xb0] sm:$0xff] %vm299, 0.0
      %875 = vst.msk [vmem:[#allocation3 + $0xb8] sm:$0x3] %vm853, 0.0
      %876 = vst.msk [vmem:[#allocation3 + $0xc0] sm:$0xff] %vm299, 0.0
      %877 = vst.msk [vmem:[#allocation3 + $0xc8] sm:$0xff] %vm299, 0.0
      %878 = vst.msk [vmem:[#allocation3 + $0xd0] sm:$0x3] %vm853, 0.0
      %879 = vst.msk [vmem:[#allocation3 + $0xd8] sm:$0xff] %vm299, 0.0
      %880 = vst.msk [vmem:[#allocation3 + $0xe0] sm:$0xff] %vm299, 0.0
      %881 = vst.msk [vmem:[#allocation3 + $0xe8] sm:$0x3] %vm853, 0.0
      %882 = vst.msk [vmem:[#allocation3 + $0xf0] sm:$0xff] %vm299, 0.0
      %883 = vst.msk [vmem:[#allocation3 + $0xf8] sm:$0xff] %vm299, 0.0
      %884 = vst.msk [vmem:[#allocation3 + $0x100] sm:$0x3] %vm853, 0.0
      %885 = vst.msk [vmem:[#allocation3 + $0x108] sm:$0xff] %vm299, 0.0
      %886 = vst.msk [vmem:[#allocation3 + $0x110] sm:$0xff] %vm299, 0.0
      %887 = vst.msk [vmem:[#allocation3 + $0x118] sm:$0x3] %vm853, 0.0
      %888 = vst.msk [vmem:[#allocation3 + $0x120] sm:$0xff] %vm299, 0.0
      %889 = vst.msk [vmem:[#allocation3 + $0x128] sm:$0xff] %vm299, 0.0
      %890 = vst.msk [vmem:[#allocation3 + $0x130] sm:$0x3] %vm853, 0.0
      %891 = vst.msk [vmem:[#allocation3 + $0x138] sm:$0xff] %vm299, 0.0
      %892 = vst.msk [vmem:[#allocation3 + $0x140] sm:$0xff] %vm299, 0.0
      %893 = vst.msk [vmem:[#allocation3 + $0x148] sm:$0x3] %vm853, 0.0
      %894 = vst.msk [vmem:[#allocation3 + $0x150] sm:$0xff] %vm299, 0.0
      %895 = vst.msk [vmem:[#allocation3 + $0x158] sm:$0xff] %vm299, 0.0
      %896 = vst.msk [vmem:[#allocation3 + $0x160] sm:$0x3] %vm853, 0.0
      %897 = vst.msk [vmem:[#allocation3 + $0x168] sm:$0xff] %vm299, 0.0
      %898 = vst.msk [vmem:[#allocation3 + $0x170] sm:$0xff] %vm299, 0.0
      %899 = vst.msk [vmem:[#allocation3 + $0x178] sm:$0x3] %vm853, 0.0
      %900 = vst.msk [vmem:[#allocation3 + $0x180] sm:$0xff] %vm299, 0.0
      %901 = vst.msk [vmem:[#allocation3 + $0x188] sm:$0xff] %vm299, 0.0
      %902 = vst.msk [vmem:[#allocation3 + $0x190] sm:$0x3] %vm853, 0.0
      %903 = vst.msk [vmem:[#allocation3 + $0x198] sm:$0xff] %vm299, 0.0
      %904 = vst.msk [vmem:[#allocation3 + $0x1a0] sm:$0xff] %vm299, 0.0
      %905 = vst.msk [vmem:[#allocation3 + $0x1a8] sm:$0x3] %vm853, 0.0
      %938 = vrot.lane.b32.xlu0 %v463, 112
      %v939 = vpop.permute.xlu0 %938
      %940 = vrot.lane.b32.xlu0 %v468, 112
      %v941 = vpop.permute.xlu0 %940
      %942 = vrot.lane.b32.xlu0 %v473, 112
      %v943 = vpop.permute.xlu0 %942
      %944 = vrot.lane.b32.xlu0 %v478, 112
      %v945 = vpop.permute.xlu0 %944
      %946 = vrot.lane.b32.xlu0 %v483, 112
      %v947 = vpop.permute.xlu0 %946
      %948 = vrot.lane.b32.xlu0 %v488, 112
      %v949 = vpop.permute.xlu0 %948
      %950 = vrot.lane.b32.xlu0 %v493, 112
      %v951 = vpop.permute.xlu0 %950
      %952 = vrot.lane.b32.xlu0 %v498, 112
      %v953 = vpop.permute.xlu0 %952
      %954 = vrot.lane.b32.xlu0 %v503, 112
      %v955 = vpop.permute.xlu0 %954
      %956 = vrot.lane.b32.xlu0 %v508, 112
      %v957 = vpop.permute.xlu0 %956
      %958 = vrot.lane.b32.xlu0 %v513, 112
      %v959 = vpop.permute.xlu0 %958
      %960 = vrot.lane.b32.xlu0 %v518, 112
      %v961 = vpop.permute.xlu0 %960
      %962 = vrot.lane.b32.xlu0 %v523, 112
      %v963 = vpop.permute.xlu0 %962
      %964 = vrot.lane.b32.xlu0 %v528, 112
      %v965 = vpop.permute.xlu0 %964
      %966 = vrot.lane.b32.xlu0 %v533, 112
      %v967 = vpop.permute.xlu0 %966
      %968 = vrot.lane.b32.xlu0 %v538, 112
      %v969 = vpop.permute.xlu0 %968
      %970 = vrot.lane.b32.xlu0 %v543, 112
      %v971 = vpop.permute.xlu0 %970
      %972 = vrot.lane.b32.xlu0 %v548, 112
      %v973 = vpop.permute.xlu0 %972
      %974 = vrot.lane.b32.xlu0 %v553, 112
      %v975 = vpop.permute.xlu0 %974
      %976 = vrot.lane.b32.xlu0 %v558, 112
      %v977 = vpop.permute.xlu0 %976
      %978 = vrot.lane.b32.xlu0 %v563, 112
      %v979 = vpop.permute.xlu0 %978
      %980 = vrot.lane.b32.xlu0 %v568, 112
      %v981 = vpop.permute.xlu0 %980
      %982 = vrot.lane.b32.xlu0 %v573, 112
      %v983 = vpop.permute.xlu0 %982
      %984 = vrot.lane.b32.xlu0 %v578, 112
      %v985 = vpop.permute.xlu0 %984
      %986 = vrot.lane.b32.xlu0 %v583, 112
      %v987 = vpop.permute.xlu0 %986
      %988 = vrot.lane.b32.xlu0 %v588, 112
      %v989 = vpop.permute.xlu0 %988
      %990 = vrot.lane.b32.xlu0 %v593, 112
      %v991 = vpop.permute.xlu0 %990
      %992 = vrot.lane.b32.xlu0 %v598, 112
      %v993 = vpop.permute.xlu0 %992
      %994 = vrot.lane.b32.xlu0 %v603, 112
      %v995 = vpop.permute.xlu0 %994
      %996 = vrot.lane.b32.xlu0 %v608, 112
      %v997 = vpop.permute.xlu0 %996
      %998 = vrot.lane.b32.xlu0 %v613, 112
      %v999 = vpop.permute.xlu0 %998
      %1000 = vrot.lane.b32.xlu0 %v618, 112
      %v1001 = vpop.permute.xlu0 %1000
      %s1034 = scalar_lea.vmem [#allocation2], 48
      %1035 = vst.msk [vmem:[%s1034 + $0x2] sm:$0xff] %vm789, %v939
      %1036 = vst.msk [vmem:[%s1034 + $0xa] sm:$0xff] %vm789, %v941
      %1037 = vst.msk [vmem:[%s1034 + $0x1a] sm:$0xff] %vm789, %v943
      %1038 = vst.msk [vmem:[%s1034 + $0x22] sm:$0xff] %vm789, %v945
      %1039 = vst.msk [vmem:[%s1034 + $0x32] sm:$0xff] %vm789, %v947
      %1040 = vst.msk [vmem:[%s1034 + $0x3a] sm:$0xff] %vm789, %v949
      %1041 = vst.msk [vmem:[%s1034 + $0x4a] sm:$0xff] %vm789, %v951
      %1042 = vst.msk [vmem:[%s1034 + $0x52] sm:$0xff] %vm789, %v953
      %1043 = vst.msk [vmem:[%s1034 + $0x62] sm:$0xff] %vm789, %v955
      %1044 = vst.msk [vmem:[%s1034 + $0x6a] sm:$0xff] %vm789, %v957
      %1045 = vst.msk [vmem:[%s1034 + $0x7a] sm:$0xff] %vm789, %v959
      %1046 = vst.msk [vmem:[%s1034 + $0x82] sm:$0xff] %vm789, %v961
      %1047 = vst.msk [vmem:[%s1034 + $0x92] sm:$0xff] %vm789, %v963
      %1048 = vst.msk [vmem:[%s1034 + $0x9a] sm:$0xff] %vm789, %v965
      %1049 = vst.msk [vmem:[%s1034 + $0xaa] sm:$0xff] %vm789, %v967
      %1050 = vst.msk [vmem:[%s1034 + $0xb2] sm:$0xff] %vm789, %v969
      %1051 = vst.msk [vmem:[%s1034 + $0xc2] sm:$0xff] %vm789, %v971
      %1052 = vst.msk [vmem:[%s1034 + $0xca] sm:$0xff] %vm789, %v973
      %1053 = vst.msk [vmem:[%s1034 + $0xda] sm:$0xff] %vm789, %v975
      %1054 = vst.msk [vmem:[%s1034 + $0xe2] sm:$0xff] %vm789, %v977
      %1055 = vst.msk [vmem:[%s1034 + $0xf2] sm:$0xff] %vm789, %v979
      %1056 = vst.msk [vmem:[%s1034 + $0xfa] sm:$0xff] %vm789, %v981
      %1057 = vst.msk [vmem:[%s1034 + $0x10a] sm:$0xff] %vm789, %v983
      %1058 = vst.msk [vmem:[%s1034 + $0x112] sm:$0xff] %vm789, %v985
      %1059 = vst.msk [vmem:[%s1034 + $0x122] sm:$0xff] %vm789, %v987
      %1060 = vst.msk [vmem:[%s1034 + $0x12a] sm:$0xff] %vm789, %v989
      %1061 = vst.msk [vmem:[%s1034 + $0x13a] sm:$0xff] %vm789, %v991
      %1062 = vst.msk [vmem:[%s1034 + $0x142] sm:$0xff] %vm789, %v993
      %1063 = vst.msk [vmem:[%s1034 + $0x152] sm:$0xff] %vm789, %v995
      %1064 = vst.msk [vmem:[%s1034 + $0x15a] sm:$0xff] %vm789, %v997
      %1065 = vst.msk [vmem:[%s1034 + $0x16a] sm:$0xff] %vm789, %v999
      %1066 = vst.msk [vmem:[%s1034 + $0x172] sm:$0xff] %vm789, %v1001
      %v1067 = vld [vmem:[#allocation2] sm:$0xff]
      %v1068 = vld [vmem:[#allocation2 + $0x8] sm:$0xff]
      %v1069 = vld [vmem:[#allocation2 + $0x18] sm:$0xff]
      %v1070 = vld [vmem:[#allocation2 + $0x20] sm:$0xff]
      %v1071 = vld [vmem:[#allocation2 + $0x30] sm:$0xff]
      %v1072 = vld [vmem:[#allocation2 + $0x38] sm:$0xff]
      %v1073 = vld [vmem:[#allocation2 + $0x48] sm:$0xff]
      %v1074 = vld [vmem:[#allocation2 + $0x50] sm:$0xff]
      %v1075 = vld [vmem:[#allocation2 + $0x60] sm:$0xff]
      %v1076 = vld [vmem:[#allocation2 + $0x68] sm:$0xff]
      %v1077 = vld [vmem:[#allocation2 + $0x78] sm:$0xff]
      %v1078 = vld [vmem:[#allocation2 + $0x80] sm:$0xff]
      %v1079 = vld [vmem:[#allocation2 + $0x90] sm:$0xff]
      %v1080 = vld [vmem:[#allocation2 + $0x98] sm:$0xff]
      %v1081 = vld [vmem:[#allocation2 + $0xa8] sm:$0xff]
      %v1082 = vld [vmem:[#allocation2 + $0xb0] sm:$0xff]
      %v1083 = vld [vmem:[#allocation2 + $0xc0] sm:$0xff]
      %v1084 = vld [vmem:[#allocation2 + $0xc8] sm:$0xff]
      %v1085 = vld [vmem:[#allocation2 + $0xd8] sm:$0xff]
      %v1086 = vld [vmem:[#allocation2 + $0xe0] sm:$0xff]
      %v1087 = vld [vmem:[#allocation2 + $0xf0] sm:$0xff]
      %v1088 = vld [vmem:[#allocation2 + $0xf8] sm:$0xff]
      %v1089 = vld [vmem:[#allocation2 + $0x108] sm:$0xff]
      %v1090 = vld [vmem:[#allocation2 + $0x110] sm:$0xff]
      %v1091 = vld [vmem:[#allocation2 + $0x120] sm:$0xff]
      %v1092 = vld [vmem:[#allocation2 + $0x128] sm:$0xff]
      %v1093 = vld [vmem:[#allocation2 + $0x138] sm:$0xff]
      %v1094 = vld [vmem:[#allocation2 + $0x140] sm:$0xff]
      %v1095 = vld [vmem:[#allocation2 + $0x150] sm:$0xff]
      %v1096 = vld [vmem:[#allocation2 + $0x158] sm:$0xff]
      %v1097 = vld [vmem:[#allocation2 + $0x168] sm:$0xff]
      %v1098 = vld [vmem:[#allocation2 + $0x170] sm:$0xff]
      %v1099 = vld [vmem:[#allocation2 + $0x1] sm:$0xff]
      %v1100 = vld [vmem:[#allocation2 + $0x9] sm:$0xff]
      %v1101 = vld [vmem:[#allocation2 + $0x19] sm:$0xff]
      %v1102 = vld [vmem:[#allocation2 + $0x21] sm:$0xff]
      %v1103 = vld [vmem:[#allocation2 + $0x31] sm:$0xff]
      %v1104 = vld [vmem:[#allocation2 + $0x39] sm:$0xff]
      %v1105 = vld [vmem:[#allocation2 + $0x49] sm:$0xff]
      %v1106 = vld [vmem:[#allocation2 + $0x51] sm:$0xff]
      %v1107 = vld [vmem:[#allocation2 + $0x61] sm:$0xff]
      %v1108 = vld [vmem:[#allocation2 + $0x69] sm:$0xff]
      %v1109 = vld [vmem:[#allocation2 + $0x79] sm:$0xff]
      %v1110 = vld [vmem:[#allocation2 + $0x81] sm:$0xff]
      %v1111 = vld [vmem:[#allocation2 + $0x91] sm:$0xff]
      %v1112 = vld [vmem:[#allocation2 + $0x99] sm:$0xff]
      %v1113 = vld [vmem:[#allocation2 + $0xa9] sm:$0xff]
      %v1114 = vld [vmem:[#allocation2 + $0xb1] sm:$0xff]
      %v1115 = vld [vmem:[#allocation2 + $0xc1] sm:$0xff]
      %v1116 = vld [vmem:[#allocation2 + $0xc9] sm:$0xff]
      %v1117 = vld [vmem:[#allocation2 + $0xd9] sm:$0xff]
      %v1118 = vld [vmem:[#allocation2 + $0xe1] sm:$0xff]
      %v1119 = vld [vmem:[#allocation2 + $0xf1] sm:$0xff]
      %v1120 = vld [vmem:[#allocation2 + $0xf9] sm:$0xff]
      %v1121 = vld [vmem:[#allocation2 + $0x109] sm:$0xff]
      %v1122 = vld [vmem:[#allocation2 + $0x111] sm:$0xff]
      %v1123 = vld [vmem:[#allocation2 + $0x121] sm:$0xff]
      %v1124 = vld [vmem:[#allocation2 + $0x129] sm:$0xff]
      %v1125 = vld [vmem:[#allocation2 + $0x139] sm:$0xff]
      %v1126 = vld [vmem:[#allocation2 + $0x141] sm:$0xff]
      %v1127 = vld [vmem:[#allocation2 + $0x151] sm:$0xff]
      %v1128 = vld [vmem:[#allocation2 + $0x159] sm:$0xff]
      %v1129 = vld [vmem:[#allocation2 + $0x169] sm:$0xff]
      %v1130 = vld [vmem:[#allocation2 + $0x171] sm:$0xff]
      %v1131 = vld [vmem:[#allocation2 + $0x2] sm:$0xff]
      %v1132 = vld [vmem:[#allocation2 + $0xa] sm:$0xff]
      %v1133 = vld [vmem:[#allocation2 + $0x1a] sm:$0xff]
      %v1134 = vld [vmem:[#allocation2 + $0x22] sm:$0xff]
      %v1135 = vld [vmem:[#allocation2 + $0x32] sm:$0xff]
      %v1136 = vld [vmem:[#allocation2 + $0x3a] sm:$0xff]
      %v1137 = vld [vmem:[#allocation2 + $0x4a] sm:$0xff]
      %v1138 = vld [vmem:[#allocation2 + $0x52] sm:$0xff]
      %v1139 = vld [vmem:[#allocation2 + $0x62] sm:$0xff]
      %v1140 = vld [vmem:[#allocation2 + $0x6a] sm:$0xff]
      %v1141 = vld [vmem:[#allocation2 + $0x7a] sm:$0xff]
      %v1142 = vld [vmem:[#allocation2 + $0x82] sm:$0xff]
      %v1143 = vld [vmem:[#allocation2 + $0x92] sm:$0xff]
      %v1144 = vld [vmem:[#allocation2 + $0x9a] sm:$0xff]
      %v1145 = vld [vmem:[#allocation2 + $0xaa] sm:$0xff]
      %v1146 = vld [vmem:[#allocation2 + $0xb2] sm:$0xff]
      %v1147 = vld [vmem:[#allocation2 + $0xc2] sm:$0xff]
      %v1148 = vld [vmem:[#allocation2 + $0xca] sm:$0xff]
      %v1149 = vld [vmem:[#allocation2 + $0xda] sm:$0xff]
      %v1150 = vld [vmem:[#allocation2 + $0xe2] sm:$0xff]
      %v1151 = vld [vmem:[#allocation2 + $0xf2] sm:$0xff]
      %v1152 = vld [vmem:[#allocation2 + $0xfa] sm:$0xff]
      %v1153 = vld [vmem:[#allocation2 + $0x10a] sm:$0xff]
      %v1154 = vld [vmem:[#allocation2 + $0x112] sm:$0xff]
      %v1155 = vld [vmem:[#allocation2 + $0x122] sm:$0xff]
      %v1156 = vld [vmem:[#allocation2 + $0x12a] sm:$0xff]
      %v1157 = vld [vmem:[#allocation2 + $0x13a] sm:$0xff]
      %v1158 = vld [vmem:[#allocation2 + $0x142] sm:$0xff]
      %v1159 = vld [vmem:[#allocation2 + $0x152] sm:$0xff]
      %v1160 = vld [vmem:[#allocation2 + $0x15a] sm:$0xff]
      %v1161 = vld [vmem:[#allocation2 + $0x16a] sm:$0xff]
      %v1162 = vld [vmem:[#allocation2 + $0x172] sm:$0xff]
      %v1163 = vld [vmem:[#allocation2 + $0x3] sm:$0xff]
      %v1164 = vld [vmem:[#allocation2 + $0xb] sm:$0xff]
      %v1165 = vld [vmem:[#allocation2 + $0x1b] sm:$0xff]
      %v1166 = vld [vmem:[#allocation2 + $0x23] sm:$0xff]
      %v1167 = vld [vmem:[#allocation2 + $0x33] sm:$0xff]
      %v1168 = vld [vmem:[#allocation2 + $0x3b] sm:$0xff]
      %v1169 = vld [vmem:[#allocation2 + $0x4b] sm:$0xff]
      %v1170 = vld [vmem:[#allocation2 + $0x53] sm:$0xff]
      %v1171 = vld [vmem:[#allocation2 + $0x63] sm:$0xff]
      %v1172 = vld [vmem:[#allocation2 + $0x6b] sm:$0xff]
      %v1173 = vld [vmem:[#allocation2 + $0x7b] sm:$0xff]
      %v1174 = vld [vmem:[#allocation2 + $0x83] sm:$0xff]
      %v1175 = vld [vmem:[#allocation2 + $0x93] sm:$0xff]
      %v1176 = vld [vmem:[#allocation2 + $0x9b] sm:$0xff]
      %v1177 = vld [vmem:[#allocation2 + $0xab] sm:$0xff]
      %v1178 = vld [vmem:[#allocation2 + $0xb3] sm:$0xff]
      %v1179 = vld [vmem:[#allocation2 + $0xc3] sm:$0xff]
      %v1180 = vld [vmem:[#allocation2 + $0xcb] sm:$0xff]
      %v1181 = vld [vmem:[#allocation2 + $0xdb] sm:$0xff]
      %v1182 = vld [vmem:[#allocation2 + $0xe3] sm:$0xff]
      %v1183 = vld [vmem:[#allocation2 + $0xf3] sm:$0xff]
      %v1184 = vld [vmem:[#allocation2 + $0xfb] sm:$0xff]
      %v1185 = vld [vmem:[#allocation2 + $0x10b] sm:$0xff]
      %v1186 = vld [vmem:[#allocation2 + $0x113] sm:$0xff]
      %v1187 = vld [vmem:[#allocation2 + $0x123] sm:$0xff]
      %v1188 = vld [vmem:[#allocation2 + $0x12b] sm:$0xff]
      %v1189 = vld [vmem:[#allocation2 + $0x13b] sm:$0xff]
      %v1190 = vld [vmem:[#allocation2 + $0x143] sm:$0xff]
      %v1191 = vld [vmem:[#allocation2 + $0x153] sm:$0xff]
      %v1192 = vld [vmem:[#allocation2 + $0x15b] sm:$0xff]
      %v1193 = vld [vmem:[#allocation2 + $0x16b] sm:$0xff]
      %v1194 = vld [vmem:[#allocation2 + $0x173] sm:$0xff]
      %v1195 = vld [vmem:[#allocation2 + $0x4] sm:$0xff]
      %v1196 = vld [vmem:[#allocation2 + $0xc] sm:$0xff]
      %v1197 = vld [vmem:[#allocation2 + $0x1c] sm:$0xff]
      %v1198 = vld [vmem:[#allocation2 + $0x24] sm:$0xff]
      %v1199 = vld [vmem:[#allocation2 + $0x34] sm:$0xff]
      %v1200 = vld [vmem:[#allocation2 + $0x3c] sm:$0xff]
      %v1201 = vld [vmem:[#allocation2 + $0x4c] sm:$0xff]
      %v1202 = vld [vmem:[#allocation2 + $0x54] sm:$0xff]
      %v1203 = vld [vmem:[#allocation2 + $0x64] sm:$0xff]
      %v1204 = vld [vmem:[#allocation2 + $0x6c] sm:$0xff]
      %v1205 = vld [vmem:[#allocation2 + $0x7c] sm:$0xff]
      %v1206 = vld [vmem:[#allocation2 + $0x84] sm:$0xff]
      %v1207 = vld [vmem:[#allocation2 + $0x94] sm:$0xff]
      %v1208 = vld [vmem:[#allocation2 + $0x9c] sm:$0xff]
      %v1209 = vld [vmem:[#allocation2 + $0xac] sm:$0xff]
      %v1210 = vld [vmem:[#allocation2 + $0xb4] sm:$0xff]
      %v1211 = vld [vmem:[#allocation2 + $0xc4] sm:$0xff]
      %v1212 = vld [vmem:[#allocation2 + $0xcc] sm:$0xff]
      %v1213 = vld [vmem:[#allocation2 + $0xdc] sm:$0xff]
      %v1214 = vld [vmem:[#allocation2 + $0xe4] sm:$0xff]
      %v1215 = vld [vmem:[#allocation2 + $0xf4] sm:$0xff]
      %v1216 = vld [vmem:[#allocation2 + $0xfc] sm:$0xff]
      %v1217 = vld [vmem:[#allocation2 + $0x10c] sm:$0xff]
      %v1218 = vld [vmem:[#allocation2 + $0x114] sm:$0xff]
      %v1219 = vld [vmem:[#allocation2 + $0x124] sm:$0xff]
      %v1220 = vld [vmem:[#allocation2 + $0x12c] sm:$0xff]
      %v1221 = vld [vmem:[#allocation2 + $0x13c] sm:$0xff]
      %v1222 = vld [vmem:[#allocation2 + $0x144] sm:$0xff]
      %v1223 = vld [vmem:[#allocation2 + $0x154] sm:$0xff]
      %v1224 = vld [vmem:[#allocation2 + $0x15c] sm:$0xff]
      %v1225 = vld [vmem:[#allocation2 + $0x16c] sm:$0xff]
      %v1226 = vld [vmem:[#allocation2 + $0x174] sm:$0xff]
      %s1227 = scalar_lea.vmem [#allocation2], 24
      %v1228 = vld [vmem:[%s1227] sm:$0xff]
      %v1229 = vld [vmem:[%s1227 + $0x8] sm:$0xff]
      %v1230 = vld [vmem:[%s1227 + $0x18] sm:$0xff]
      %v1231 = vld [vmem:[%s1227 + $0x20] sm:$0xff]
      %v1232 = vld [vmem:[%s1227 + $0x30] sm:$0xff]
      %v1233 = vld [vmem:[%s1227 + $0x38] sm:$0xff]
      %v1234 = vld [vmem:[%s1227 + $0x48] sm:$0xff]
      %v1235 = vld [vmem:[%s1227 + $0x50] sm:$0xff]
      %v1236 = vld [vmem:[%s1227 + $0x60] sm:$0xff]
      %v1237 = vld [vmem:[%s1227 + $0x68] sm:$0xff]
      %v1238 = vld [vmem:[%s1227 + $0x78] sm:$0xff]
      %v1239 = vld [vmem:[%s1227 + $0x80] sm:$0xff]
      %v1240 = vld [vmem:[%s1227 + $0x90] sm:$0xff]
      %v1241 = vld [vmem:[%s1227 + $0x98] sm:$0xff]
      %v1242 = vld [vmem:[%s1227 + $0xa8] sm:$0xff]
      %v1243 = vld [vmem:[%s1227 + $0xb0] sm:$0xff]
      %v1244 = vld [vmem:[%s1227 + $0xc0] sm:$0xff]
      %v1245 = vld [vmem:[%s1227 + $0xc8] sm:$0xff]
      %v1246 = vld [vmem:[%s1227 + $0xd8] sm:$0xff]
      %v1247 = vld [vmem:[%s1227 + $0xe0] sm:$0xff]
      %v1248 = vld [vmem:[%s1227 + $0xf0] sm:$0xff]
      %v1249 = vld [vmem:[%s1227 + $0xf8] sm:$0xff]
      %v1250 = vld [vmem:[%s1227 + $0x108] sm:$0xff]
      %v1251 = vld [vmem:[%s1227 + $0x110] sm:$0xff]
      %v1252 = vld [vmem:[%s1227 + $0x120] sm:$0xff]
      %v1253 = vld [vmem:[%s1227 + $0x128] sm:$0xff]
      %v1254 = vld [vmem:[%s1227 + $0x138] sm:$0xff]
      %v1255 = vld [vmem:[%s1227 + $0x140] sm:$0xff]
      %v1256 = vld [vmem:[%s1227 + $0x150] sm:$0xff]
      %v1257 = vld [vmem:[%s1227 + $0x158] sm:$0xff]
      %v1258 = vld [vmem:[%s1227 + $0x168] sm:$0xff]
      %v1259 = vld [vmem:[%s1227 + $0x170] sm:$0xff]
      %v1260 = vld [vmem:[%s1227 + $0x1] sm:$0xff]
      %v1261 = vld [vmem:[%s1227 + $0x9] sm:$0xff]
      %v1262 = vld [vmem:[%s1227 + $0x19] sm:$0xff]
      %v1263 = vld [vmem:[%s1227 + $0x21] sm:$0xff]
      %v1264 = vld [vmem:[%s1227 + $0x31] sm:$0xff]
      %v1265 = vld [vmem:[%s1227 + $0x39] sm:$0xff]
      %v1266 = vld [vmem:[%s1227 + $0x49] sm:$0xff]
      %v1267 = vld [vmem:[%s1227 + $0x51] sm:$0xff]
      %v1268 = vld [vmem:[%s1227 + $0x61] sm:$0xff]
      %v1269 = vld [vmem:[%s1227 + $0x69] sm:$0xff]
      %v1270 = vld [vmem:[%s1227 + $0x79] sm:$0xff]
      %v1271 = vld [vmem:[%s1227 + $0x81] sm:$0xff]
      %v1272 = vld [vmem:[%s1227 + $0x91] sm:$0xff]
      %v1273 = vld [vmem:[%s1227 + $0x99] sm:$0xff]
      %v1274 = vld [vmem:[%s1227 + $0xa9] sm:$0xff]
      %v1275 = vld [vmem:[%s1227 + $0xb1] sm:$0xff]
      %v1276 = vld [vmem:[%s1227 + $0xc1] sm:$0xff]
      %v1277 = vld [vmem:[%s1227 + $0xc9] sm:$0xff]
      %v1278 = vld [vmem:[%s1227 + $0xd9] sm:$0xff]
      %v1279 = vld [vmem:[%s1227 + $0xe1] sm:$0xff]
      %v1280 = vld [vmem:[%s1227 + $0xf1] sm:$0xff]
      %v1281 = vld [vmem:[%s1227 + $0xf9] sm:$0xff]
      %v1282 = vld [vmem:[%s1227 + $0x109] sm:$0xff]
      %v1283 = vld [vmem:[%s1227 + $0x111] sm:$0xff]
      %v1284 = vld [vmem:[%s1227 + $0x121] sm:$0xff]
      %v1285 = vld [vmem:[%s1227 + $0x129] sm:$0xff]
      %v1286 = vld [vmem:[%s1227 + $0x139] sm:$0xff]
      %v1287 = vld [vmem:[%s1227 + $0x141] sm:$0xff]
      %v1288 = vld [vmem:[%s1227 + $0x151] sm:$0xff]
      %v1289 = vld [vmem:[%s1227 + $0x159] sm:$0xff]
      %v1290 = vld [vmem:[%s1227 + $0x169] sm:$0xff]
      %v1291 = vld [vmem:[%s1227 + $0x171] sm:$0xff]
      %v1292 = vld [vmem:[%s1227 + $0x2] sm:$0xff]
      %v1293 = vld [vmem:[%s1227 + $0xa] sm:$0xff]
      %v1294 = vld [vmem:[%s1227 + $0x1a] sm:$0xff]
      %v1295 = vld [vmem:[%s1227 + $0x22] sm:$0xff]
      %v1296 = vld [vmem:[%s1227 + $0x32] sm:$0xff]
      %v1297 = vld [vmem:[%s1227 + $0x3a] sm:$0xff]
      %v1298 = vld [vmem:[%s1227 + $0x4a] sm:$0xff]
      %v1299 = vld [vmem:[%s1227 + $0x52] sm:$0xff]
      %v1300 = vld [vmem:[%s1227 + $0x62] sm:$0xff]
      %v1301 = vld [vmem:[%s1227 + $0x6a] sm:$0xff]
      %v1302 = vld [vmem:[%s1227 + $0x7a] sm:$0xff]
      %v1303 = vld [vmem:[%s1227 + $0x82] sm:$0xff]
      %v1304 = vld [vmem:[%s1227 + $0x92] sm:$0xff]
      %v1305 = vld [vmem:[%s1227 + $0x9a] sm:$0xff]
      %v1306 = vld [vmem:[%s1227 + $0xaa] sm:$0xff]
      %v1307 = vld [vmem:[%s1227 + $0xb2] sm:$0xff]
      %v1308 = vld [vmem:[%s1227 + $0xc2] sm:$0xff]
      %v1309 = vld [vmem:[%s1227 + $0xca] sm:$0xff]
      %v1310 = vld [vmem:[%s1227 + $0xda] sm:$0xff]
      %v1311 = vld [vmem:[%s1227 + $0xe2] sm:$0xff]
      %v1312 = vld [vmem:[%s1227 + $0xf2] sm:$0xff]
      %v1313 = vld [vmem:[%s1227 + $0xfa] sm:$0xff]
      %v1314 = vld [vmem:[%s1227 + $0x10a] sm:$0xff]
      %v1315 = vld [vmem:[%s1227 + $0x112] sm:$0xff]
      %v1316 = vld [vmem:[%s1227 + $0x122] sm:$0xff]
      %v1317 = vld [vmem:[%s1227 + $0x12a] sm:$0xff]
      %v1318 = vld [vmem:[%s1227 + $0x13a] sm:$0xff]
      %v1319 = vld [vmem:[%s1227 + $0x142] sm:$0xff]
      %v1320 = vld [vmem:[%s1227 + $0x152] sm:$0xff]
      %v1321 = vld [vmem:[%s1227 + $0x15a] sm:$0xff]
      %v1322 = vld [vmem:[%s1227 + $0x16a] sm:$0xff]
      %v1323 = vld [vmem:[%s1227 + $0x172] sm:$0xff]
      %v1324 = vld [vmem:[%s1227 + $0x3] sm:$0xff]
      %v1325 = vld [vmem:[%s1227 + $0xb] sm:$0xff]
      %v1326 = vld [vmem:[%s1227 + $0x1b] sm:$0xff]
      %v1327 = vld [vmem:[%s1227 + $0x23] sm:$0xff]
      %v1328 = vld [vmem:[%s1227 + $0x33] sm:$0xff]
      %v1329 = vld [vmem:[%s1227 + $0x3b] sm:$0xff]
      %v1330 = vld [vmem:[%s1227 + $0x4b] sm:$0xff]
      %v1331 = vld [vmem:[%s1227 + $0x53] sm:$0xff]
      %v1332 = vld [vmem:[%s1227 + $0x63] sm:$0xff]
      %v1333 = vld [vmem:[%s1227 + $0x6b] sm:$0xff]
      %v1334 = vld [vmem:[%s1227 + $0x7b] sm:$0xff]
      %v1335 = vld [vmem:[%s1227 + $0x83] sm:$0xff]
      %v1336 = vld [vmem:[%s1227 + $0x93] sm:$0xff]
      %v1337 = vld [vmem:[%s1227 + $0x9b] sm:$0xff]
      %v1338 = vld [vmem:[%s1227 + $0xab] sm:$0xff]
      %v1339 = vld [vmem:[%s1227 + $0xb3] sm:$0xff]
      %v1340 = vld [vmem:[%s1227 + $0xc3] sm:$0xff]
      %v1341 = vld [vmem:[%s1227 + $0xcb] sm:$0xff]
      %v1342 = vld [vmem:[%s1227 + $0xdb] sm:$0xff]
      %v1343 = vld [vmem:[%s1227 + $0xe3] sm:$0xff]
      %v1344 = vld [vmem:[%s1227 + $0xf3] sm:$0xff]
      %v1345 = vld [vmem:[%s1227 + $0xfb] sm:$0xff]
      %v1346 = vld [vmem:[%s1227 + $0x10b] sm:$0xff]
      %v1347 = vld [vmem:[%s1227 + $0x113] sm:$0xff]
      %v1348 = vld [vmem:[%s1227 + $0x123] sm:$0xff]
      %v1349 = vld [vmem:[%s1227 + $0x12b] sm:$0xff]
      %v1350 = vld [vmem:[%s1227 + $0x13b] sm:$0xff]
      %v1351 = vld [vmem:[%s1227 + $0x143] sm:$0xff]
      %v1352 = vld [vmem:[%s1227 + $0x153] sm:$0xff]
      %v1353 = vld [vmem:[%s1227 + $0x15b] sm:$0xff]
      %v1354 = vld [vmem:[%s1227 + $0x16b] sm:$0xff]
      %v1355 = vld [vmem:[%s1227 + $0x173] sm:$0xff]
      %v1356 = vld [vmem:[%s1227 + $0x4] sm:$0xff]
      %v1357 = vld [vmem:[%s1227 + $0xc] sm:$0xff]
      %v1358 = vld [vmem:[%s1227 + $0x1c] sm:$0xff]
      %v1359 = vld [vmem:[%s1227 + $0x24] sm:$0xff]
      %v1360 = vld [vmem:[%s1227 + $0x34] sm:$0xff]
      %v1361 = vld [vmem:[%s1227 + $0x3c] sm:$0xff]
      %v1362 = vld [vmem:[%s1227 + $0x4c] sm:$0xff]
      %v1363 = vld [vmem:[%s1227 + $0x54] sm:$0xff]
      %v1364 = vld [vmem:[%s1227 + $0x64] sm:$0xff]
      %v1365 = vld [vmem:[%s1227 + $0x6c] sm:$0xff]
      %v1366 = vld [vmem:[%s1227 + $0x7c] sm:$0xff]
      %v1367 = vld [vmem:[%s1227 + $0x84] sm:$0xff]
      %v1368 = vld [vmem:[%s1227 + $0x94] sm:$0xff]
      %v1369 = vld [vmem:[%s1227 + $0x9c] sm:$0xff]
      %v1370 = vld [vmem:[%s1227 + $0xac] sm:$0xff]
      %v1371 = vld [vmem:[%s1227 + $0xb4] sm:$0xff]
      %v1372 = vld [vmem:[%s1227 + $0xc4] sm:$0xff]
      %v1373 = vld [vmem:[%s1227 + $0xcc] sm:$0xff]
      %v1374 = vld [vmem:[%s1227 + $0xdc] sm:$0xff]
      %v1375 = vld [vmem:[%s1227 + $0xe4] sm:$0xff]
      %v1376 = vld [vmem:[%s1227 + $0xf4] sm:$0xff]
      %v1377 = vld [vmem:[%s1227 + $0xfc] sm:$0xff]
      %v1378 = vld [vmem:[%s1227 + $0x10c] sm:$0xff]
      %v1379 = vld [vmem:[%s1227 + $0x114] sm:$0xff]
      %v1380 = vld [vmem:[%s1227 + $0x124] sm:$0xff]
      %v1381 = vld [vmem:[%s1227 + $0x12c] sm:$0xff]
      %v1382 = vld [vmem:[%s1227 + $0x13c] sm:$0xff]
      %v1383 = vld [vmem:[%s1227 + $0x144] sm:$0xff]
      %v1384 = vld [vmem:[%s1227 + $0x154] sm:$0xff]
      %v1385 = vld [vmem:[%s1227 + $0x15c] sm:$0xff]
      %v1386 = vld [vmem:[%s1227 + $0x16c] sm:$0xff]
      %v1387 = vld [vmem:[%s1227 + $0x174] sm:$0xff]
      %v1388 = vld [vmem:[%s1034] sm:$0xff]
      %v1389 = vld [vmem:[%s1034 + $0x8] sm:$0xff]
      %v1390 = vld [vmem:[%s1034 + $0x18] sm:$0xff]
      %v1391 = vld [vmem:[%s1034 + $0x20] sm:$0xff]
      %v1392 = vld [vmem:[%s1034 + $0x30] sm:$0xff]
      %v1393 = vld [vmem:[%s1034 + $0x38] sm:$0xff]
      %v1394 = vld [vmem:[%s1034 + $0x48] sm:$0xff]
      %v1395 = vld [vmem:[%s1034 + $0x50] sm:$0xff]
      %v1396 = vld [vmem:[%s1034 + $0x60] sm:$0xff]
      %v1397 = vld [vmem:[%s1034 + $0x68] sm:$0xff]
      %v1398 = vld [vmem:[%s1034 + $0x78] sm:$0xff]
      %v1399 = vld [vmem:[%s1034 + $0x80] sm:$0xff]
      %v1400 = vld [vmem:[%s1034 + $0x90] sm:$0xff]
      %v1401 = vld [vmem:[%s1034 + $0x98] sm:$0xff]
      %v1402 = vld [vmem:[%s1034 + $0xa8] sm:$0xff]
      %v1403 = vld [vmem:[%s1034 + $0xb0] sm:$0xff]
      %v1404 = vld [vmem:[%s1034 + $0xc0] sm:$0xff]
      %v1405 = vld [vmem:[%s1034 + $0xc8] sm:$0xff]
      %v1406 = vld [vmem:[%s1034 + $0xd8] sm:$0xff]
      %v1407 = vld [vmem:[%s1034 + $0xe0] sm:$0xff]
      %v1408 = vld [vmem:[%s1034 + $0xf0] sm:$0xff]
      %v1409 = vld [vmem:[%s1034 + $0xf8] sm:$0xff]
      %v1410 = vld [vmem:[%s1034 + $0x108] sm:$0xff]
      %v1411 = vld [vmem:[%s1034 + $0x110] sm:$0xff]
      %v1412 = vld [vmem:[%s1034 + $0x120] sm:$0xff]
      %v1413 = vld [vmem:[%s1034 + $0x128] sm:$0xff]
      %v1414 = vld [vmem:[%s1034 + $0x138] sm:$0xff]
      %v1415 = vld [vmem:[%s1034 + $0x140] sm:$0xff]
      %v1416 = vld [vmem:[%s1034 + $0x150] sm:$0xff]
      %v1417 = vld [vmem:[%s1034 + $0x158] sm:$0xff]
      %v1418 = vld [vmem:[%s1034 + $0x168] sm:$0xff]
      %v1419 = vld [vmem:[%s1034 + $0x170] sm:$0xff]
      %v1420 = vld [vmem:[%s1034 + $0x1] sm:$0xff]
      %v1421 = vld [vmem:[%s1034 + $0x9] sm:$0xff]
      %v1422 = vld [vmem:[%s1034 + $0x19] sm:$0xff]
      %v1423 = vld [vmem:[%s1034 + $0x21] sm:$0xff]
      %v1424 = vld [vmem:[%s1034 + $0x31] sm:$0xff]
      %v1425 = vld [vmem:[%s1034 + $0x39] sm:$0xff]
      %v1426 = vld [vmem:[%s1034 + $0x49] sm:$0xff]
      %v1427 = vld [vmem:[%s1034 + $0x51] sm:$0xff]
      %v1428 = vld [vmem:[%s1034 + $0x61] sm:$0xff]
      %v1429 = vld [vmem:[%s1034 + $0x69] sm:$0xff]
      %v1430 = vld [vmem:[%s1034 + $0x79] sm:$0xff]
      %v1431 = vld [vmem:[%s1034 + $0x81] sm:$0xff]
      %v1432 = vld [vmem:[%s1034 + $0x91] sm:$0xff]
      %v1433 = vld [vmem:[%s1034 + $0x99] sm:$0xff]
      %v1434 = vld [vmem:[%s1034 + $0xa9] sm:$0xff]
      %v1435 = vld [vmem:[%s1034 + $0xb1] sm:$0xff]
      %v1436 = vld [vmem:[%s1034 + $0xc1] sm:$0xff]
      %v1437 = vld [vmem:[%s1034 + $0xc9] sm:$0xff]
      %v1438 = vld [vmem:[%s1034 + $0xd9] sm:$0xff]
      %v1439 = vld [vmem:[%s1034 + $0xe1] sm:$0xff]
      %v1440 = vld [vmem:[%s1034 + $0xf1] sm:$0xff]
      %v1441 = vld [vmem:[%s1034 + $0xf9] sm:$0xff]
      %v1442 = vld [vmem:[%s1034 + $0x109] sm:$0xff]
      %v1443 = vld [vmem:[%s1034 + $0x111] sm:$0xff]
      %v1444 = vld [vmem:[%s1034 + $0x121] sm:$0xff]
      %v1445 = vld [vmem:[%s1034 + $0x129] sm:$0xff]
      %v1446 = vld [vmem:[%s1034 + $0x139] sm:$0xff]
      %v1447 = vld [vmem:[%s1034 + $0x141] sm:$0xff]
      %v1448 = vld [vmem:[%s1034 + $0x151] sm:$0xff]
      %v1449 = vld [vmem:[%s1034 + $0x159] sm:$0xff]
      %v1450 = vld [vmem:[%s1034 + $0x169] sm:$0xff]
      %v1451 = vld [vmem:[%s1034 + $0x171] sm:$0xff]
      %v1452 = vld [vmem:[%s1034 + $0x2] sm:$0xff]
      %v1453 = vld [vmem:[%s1034 + $0xa] sm:$0xff]
      %v1454 = vld [vmem:[%s1034 + $0x1a] sm:$0xff]
      %v1455 = vld [vmem:[%s1034 + $0x22] sm:$0xff]
      %v1456 = vld [vmem:[%s1034 + $0x32] sm:$0xff]
      %v1457 = vld [vmem:[%s1034 + $0x3a] sm:$0xff]
      %v1458 = vld [vmem:[%s1034 + $0x4a] sm:$0xff]
      %v1459 = vld [vmem:[%s1034 + $0x52] sm:$0xff]
      %v1460 = vld [vmem:[%s1034 + $0x62] sm:$0xff]
      %v1461 = vld [vmem:[%s1034 + $0x6a] sm:$0xff]
      %v1462 = vld [vmem:[%s1034 + $0x7a] sm:$0xff]
      %v1463 = vld [vmem:[%s1034 + $0x82] sm:$0xff]
      %v1464 = vld [vmem:[%s1034 + $0x92] sm:$0xff]
      %v1465 = vld [vmem:[%s1034 + $0x9a] sm:$0xff]
      %v1466 = vld [vmem:[%s1034 + $0xaa] sm:$0xff]
      %v1467 = vld [vmem:[%s1034 + $0xb2] sm:$0xff]
      %v1468 = vld [vmem:[%s1034 + $0xc2] sm:$0xff]
      %v1469 = vld [vmem:[%s1034 + $0xca] sm:$0xff]
      %v1470 = vld [vmem:[%s1034 + $0xda] sm:$0xff]
      %v1471 = vld [vmem:[%s1034 + $0xe2] sm:$0xff]
      %v1472 = vld [vmem:[%s1034 + $0xf2] sm:$0xff]
      %v1473 = vld [vmem:[%s1034 + $0xfa] sm:$0xff]
      %v1474 = vld [vmem:[%s1034 + $0x10a] sm:$0xff]
      %v1475 = vld [vmem:[%s1034 + $0x112] sm:$0xff]
      %v1476 = vld [vmem:[%s1034 + $0x122] sm:$0xff]
      %v1477 = vld [vmem:[%s1034 + $0x12a] sm:$0xff]
      %v1478 = vld [vmem:[%s1034 + $0x13a] sm:$0xff]
      %v1479 = vld [vmem:[%s1034 + $0x142] sm:$0xff]
      %v1480 = vld [vmem:[%s1034 + $0x152] sm:$0xff]
      %v1481 = vld [vmem:[%s1034 + $0x15a] sm:$0xff]
      %v1482 = vld [vmem:[%s1034 + $0x16a] sm:$0xff]
      %v1483 = vld [vmem:[%s1034 + $0x172] sm:$0xff]
      %v1484 = vld [vmem:[%s1034 + $0x3] sm:$0xff]
      %v1485 = vld [vmem:[%s1034 + $0xb] sm:$0xff]
      %v1486 = vld [vmem:[%s1034 + $0x1b] sm:$0xff]
      %v1487 = vld [vmem:[%s1034 + $0x23] sm:$0xff]
      %v1488 = vld [vmem:[%s1034 + $0x33] sm:$0xff]
      %v1489 = vld [vmem:[%s1034 + $0x3b] sm:$0xff]
      %v1490 = vld [vmem:[%s1034 + $0x4b] sm:$0xff]
      %v1491 = vld [vmem:[%s1034 + $0x53] sm:$0xff]
      %v1492 = vld [vmem:[%s1034 + $0x63] sm:$0xff]
      %v1493 = vld [vmem:[%s1034 + $0x6b] sm:$0xff]
      %v1494 = vld [vmem:[%s1034 + $0x7b] sm:$0xff]
      %v1495 = vld [vmem:[%s1034 + $0x83] sm:$0xff]
      %v1496 = vld [vmem:[%s1034 + $0x93] sm:$0xff]
      %v1497 = vld [vmem:[%s1034 + $0x9b] sm:$0xff]
      %v1498 = vld [vmem:[%s1034 + $0xab] sm:$0xff]
      %v1499 = vld [vmem:[%s1034 + $0xb3] sm:$0xff]
      %v1500 = vld [vmem:[%s1034 + $0xc3] sm:$0xff]
      %v1501 = vld [vmem:[%s1034 + $0xcb] sm:$0xff]
      %v1502 = vld [vmem:[%s1034 + $0xdb] sm:$0xff]
      %v1503 = vld [vmem:[%s1034 + $0xe3] sm:$0xff]
      %v1504 = vld [vmem:[%s1034 + $0xf3] sm:$0xff]
      %v1505 = vld [vmem:[%s1034 + $0xfb] sm:$0xff]
      %v1506 = vld [vmem:[%s1034 + $0x10b] sm:$0xff]
      %v1507 = vld [vmem:[%s1034 + $0x113] sm:$0xff]
      %v1508 = vld [vmem:[%s1034 + $0x123] sm:$0xff]
      %v1509 = vld [vmem:[%s1034 + $0x12b] sm:$0xff]
      %v1510 = vld [vmem:[%s1034 + $0x13b] sm:$0xff]
      %v1511 = vld [vmem:[%s1034 + $0x143] sm:$0xff]
      %v1512 = vld [vmem:[%s1034 + $0x153] sm:$0xff]
      %v1513 = vld [vmem:[%s1034 + $0x15b] sm:$0xff]
      %v1514 = vld [vmem:[%s1034 + $0x16b] sm:$0xff]
      %v1515 = vld [vmem:[%s1034 + $0x173] sm:$0xff]
      %v1516 = vld [vmem:[%s1034 + $0x4] sm:$0xff]
      %v1517 = vld [vmem:[%s1034 + $0xc] sm:$0xff]
      %v1518 = vld [vmem:[%s1034 + $0x1c] sm:$0xff]
      %v1519 = vld [vmem:[%s1034 + $0x24] sm:$0xff]
      %v1520 = vld [vmem:[%s1034 + $0x34] sm:$0xff]
      %v1521 = vld [vmem:[%s1034 + $0x3c] sm:$0xff]
      %v1522 = vld [vmem:[%s1034 + $0x4c] sm:$0xff]
      %v1523 = vld [vmem:[%s1034 + $0x54] sm:$0xff]
      %v1524 = vld [vmem:[%s1034 + $0x64] sm:$0xff]
      %v1525 = vld [vmem:[%s1034 + $0x6c] sm:$0xff]
      %v1526 = vld [vmem:[%s1034 + $0x7c] sm:$0xff]
      %v1527 = vld [vmem:[%s1034 + $0x84] sm:$0xff]
      %v1528 = vld [vmem:[%s1034 + $0x94] sm:$0xff]
      %v1529 = vld [vmem:[%s1034 + $0x9c] sm:$0xff]
      %v1530 = vld [vmem:[%s1034 + $0xac] sm:$0xff]
      %v1531 = vld [vmem:[%s1034 + $0xb4] sm:$0xff]
      %v1532 = vld [vmem:[%s1034 + $0xc4] sm:$0xff]
      %v1533 = vld [vmem:[%s1034 + $0xcc] sm:$0xff]
      %v1534 = vld [vmem:[%s1034 + $0xdc] sm:$0xff]
      %v1535 = vld [vmem:[%s1034 + $0xe4] sm:$0xff]
      %v1536 = vld [vmem:[%s1034 + $0xf4] sm:$0xff]
      %v1537 = vld [vmem:[%s1034 + $0xfc] sm:$0xff]
      %v1538 = vld [vmem:[%s1034 + $0x10c] sm:$0xff]
      %v1539 = vld [vmem:[%s1034 + $0x114] sm:$0xff]
      %v1540 = vld [vmem:[%s1034 + $0x124] sm:$0xff]
      %v1541 = vld [vmem:[%s1034 + $0x12c] sm:$0xff]
      %v1542 = vld [vmem:[%s1034 + $0x13c] sm:$0xff]
      %v1543 = vld [vmem:[%s1034 + $0x144] sm:$0xff]
      %v1544 = vld [vmem:[%s1034 + $0x154] sm:$0xff]
      %v1545 = vld [vmem:[%s1034 + $0x15c] sm:$0xff]
      %v1546 = vld [vmem:[%s1034 + $0x16c] sm:$0xff]
      %v1547 = vld [vmem:[%s1034 + $0x174] sm:$0xff]
      %s1548 = scalar_lea.vmem [#allocation2], 72
      %v1549 = vld [vmem:[%s1548] sm:$0xff]
      %v1550 = vld [vmem:[%s1548 + $0x8] sm:$0xff]
      %v1551 = vld [vmem:[%s1548 + $0x18] sm:$0xff]
      %v1552 = vld [vmem:[%s1548 + $0x20] sm:$0xff]
      %v1553 = vld [vmem:[%s1548 + $0x30] sm:$0xff]
      %v1554 = vld [vmem:[%s1548 + $0x38] sm:$0xff]
      %v1555 = vld [vmem:[%s1548 + $0x48] sm:$0xff]
      %v1556 = vld [vmem:[%s1548 + $0x50] sm:$0xff]
      %v1557 = vld [vmem:[%s1548 + $0x60] sm:$0xff]
      %v1558 = vld [vmem:[%s1548 + $0x68] sm:$0xff]
      %v1559 = vld [vmem:[%s1548 + $0x78] sm:$0xff]
      %v1560 = vld [vmem:[%s1548 + $0x80] sm:$0xff]
      %v1561 = vld [vmem:[%s1548 + $0x90] sm:$0xff]
      %v1562 = vld [vmem:[%s1548 + $0x98] sm:$0xff]
      %v1563 = vld [vmem:[%s1548 + $0xa8] sm:$0xff]
      %v1564 = vld [vmem:[%s1548 + $0xb0] sm:$0xff]
      %v1565 = vld [vmem:[%s1548 + $0xc0] sm:$0xff]
      %v1566 = vld [vmem:[%s1548 + $0xc8] sm:$0xff]
      %v1567 = vld [vmem:[%s1548 + $0xd8] sm:$0xff]
      %v1568 = vld [vmem:[%s1548 + $0xe0] sm:$0xff]
      %v1569 = vld [vmem:[%s1548 + $0xf0] sm:$0xff]
      %v1570 = vld [vmem:[%s1548 + $0xf8] sm:$0xff]
      %v1571 = vld [vmem:[%s1548 + $0x108] sm:$0xff]
      %v1572 = vld [vmem:[%s1548 + $0x110] sm:$0xff]
      %v1573 = vld [vmem:[%s1548 + $0x120] sm:$0xff]
      %v1574 = vld [vmem:[%s1548 + $0x128] sm:$0xff]
      %v1575 = vld [vmem:[%s1548 + $0x138] sm:$0xff]
      %v1576 = vld [vmem:[%s1548 + $0x140] sm:$0xff]
      %v1577 = vld [vmem:[%s1548 + $0x150] sm:$0xff]
      %v1578 = vld [vmem:[%s1548 + $0x158] sm:$0xff]
      %v1579 = vld [vmem:[%s1548 + $0x168] sm:$0xff]
      %v1580 = vld [vmem:[%s1548 + $0x170] sm:$0xff]
      %v1581 = vld [vmem:[%s1548 + $0x1] sm:$0xff]
      %v1582 = vld [vmem:[%s1548 + $0x9] sm:$0xff]
      %v1583 = vld [vmem:[%s1548 + $0x19] sm:$0xff]
      %v1584 = vld [vmem:[%s1548 + $0x21] sm:$0xff]
      %v1585 = vld [vmem:[%s1548 + $0x31] sm:$0xff]
      %v1586 = vld [vmem:[%s1548 + $0x39] sm:$0xff]
      %v1587 = vld [vmem:[%s1548 + $0x49] sm:$0xff]
      %v1588 = vld [vmem:[%s1548 + $0x51] sm:$0xff]
      %v1589 = vld [vmem:[%s1548 + $0x61] sm:$0xff]
      %v1590 = vld [vmem:[%s1548 + $0x69] sm:$0xff]
      %v1591 = vld [vmem:[%s1548 + $0x79] sm:$0xff]
      %v1592 = vld [vmem:[%s1548 + $0x81] sm:$0xff]
      %v1593 = vld [vmem:[%s1548 + $0x91] sm:$0xff]
      %v1594 = vld [vmem:[%s1548 + $0x99] sm:$0xff]
      %v1595 = vld [vmem:[%s1548 + $0xa9] sm:$0xff]
      %v1596 = vld [vmem:[%s1548 + $0xb1] sm:$0xff]
      %v1597 = vld [vmem:[%s1548 + $0xc1] sm:$0xff]
      %v1598 = vld [vmem:[%s1548 + $0xc9] sm:$0xff]
      %v1599 = vld [vmem:[%s1548 + $0xd9] sm:$0xff]
      %v1600 = vld [vmem:[%s1548 + $0xe1] sm:$0xff]
      %v1601 = vld [vmem:[%s1548 + $0xf1] sm:$0xff]
      %v1602 = vld [vmem:[%s1548 + $0xf9] sm:$0xff]
      %v1603 = vld [vmem:[%s1548 + $0x109] sm:$0xff]
      %v1604 = vld [vmem:[%s1548 + $0x111] sm:$0xff]
      %v1605 = vld [vmem:[%s1548 + $0x121] sm:$0xff]
      %v1606 = vld [vmem:[%s1548 + $0x129] sm:$0xff]
      %v1607 = vld [vmem:[%s1548 + $0x139] sm:$0xff]
      %v1608 = vld [vmem:[%s1548 + $0x141] sm:$0xff]
      %v1609 = vld [vmem:[%s1548 + $0x151] sm:$0xff]
      %v1610 = vld [vmem:[%s1548 + $0x159] sm:$0xff]
      %v1611 = vld [vmem:[%s1548 + $0x169] sm:$0xff]
      %v1612 = vld [vmem:[%s1548 + $0x171] sm:$0xff]
      %v1613 = vld [vmem:[%s1548 + $0x2] sm:$0xff]
      %v1614 = vld [vmem:[%s1548 + $0xa] sm:$0xff]
      %v1615 = vld [vmem:[%s1548 + $0x1a] sm:$0xff]
      %v1616 = vld [vmem:[%s1548 + $0x22] sm:$0xff]
      %v1617 = vld [vmem:[%s1548 + $0x32] sm:$0xff]
      %v1618 = vld [vmem:[%s1548 + $0x3a] sm:$0xff]
      %v1619 = vld [vmem:[%s1548 + $0x4a] sm:$0xff]
      %v1620 = vld [vmem:[%s1548 + $0x52] sm:$0xff]
      %v1621 = vld [vmem:[%s1548 + $0x62] sm:$0xff]
      %v1622 = vld [vmem:[%s1548 + $0x6a] sm:$0xff]
      %v1623 = vld [vmem:[%s1548 + $0x7a] sm:$0xff]
      %v1624 = vld [vmem:[%s1548 + $0x82] sm:$0xff]
      %v1625 = vld [vmem:[%s1548 + $0x92] sm:$0xff]
      %v1626 = vld [vmem:[%s1548 + $0x9a] sm:$0xff]
      %v1627 = vld [vmem:[%s1548 + $0xaa] sm:$0xff]
      %v1628 = vld [vmem:[%s1548 + $0xb2] sm:$0xff]
      %v1629 = vld [vmem:[%s1548 + $0xc2] sm:$0xff]
      %v1630 = vld [vmem:[%s1548 + $0xca] sm:$0xff]
      %v1631 = vld [vmem:[%s1548 + $0xda] sm:$0xff]
      %v1632 = vld [vmem:[%s1548 + $0xe2] sm:$0xff]
      %v1633 = vld [vmem:[%s1548 + $0xf2] sm:$0xff]
      %v1634 = vld [vmem:[%s1548 + $0xfa] sm:$0xff]
      %v1635 = vld [vmem:[%s1548 + $0x10a] sm:$0xff]
      %v1636 = vld [vmem:[%s1548 + $0x112] sm:$0xff]
      %v1637 = vld [vmem:[%s1548 + $0x122] sm:$0xff]
      %v1638 = vld [vmem:[%s1548 + $0x12a] sm:$0xff]
      %v1639 = vld [vmem:[%s1548 + $0x13a] sm:$0xff]
      %v1640 = vld [vmem:[%s1548 + $0x142] sm:$0xff]
      %v1641 = vld [vmem:[%s1548 + $0x152] sm:$0xff]
      %v1642 = vld [vmem:[%s1548 + $0x15a] sm:$0xff]
      %v1643 = vld [vmem:[%s1548 + $0x16a] sm:$0xff]
      %v1644 = vld [vmem:[%s1548 + $0x172] sm:$0xff]
      %v1645 = vld [vmem:[%s1548 + $0x3] sm:$0xff]
      %v1646 = vld [vmem:[%s1548 + $0xb] sm:$0xff]
      %v1647 = vld [vmem:[%s1548 + $0x1b] sm:$0xff]
      %v1648 = vld [vmem:[%s1548 + $0x23] sm:$0xff]
      %v1649 = vld [vmem:[%s1548 + $0x33] sm:$0xff]
      %v1650 = vld [vmem:[%s1548 + $0x3b] sm:$0xff]
      %v1651 = vld [vmem:[%s1548 + $0x4b] sm:$0xff]
      %v1652 = vld [vmem:[%s1548 + $0x53] sm:$0xff]
      %v1653 = vld [vmem:[%s1548 + $0x63] sm:$0xff]
      %v1654 = vld [vmem:[%s1548 + $0x6b] sm:$0xff]
      %v1655 = vld [vmem:[%s1548 + $0x7b] sm:$0xff]
      %v1656 = vld [vmem:[%s1548 + $0x83] sm:$0xff]
      %v1657 = vld [vmem:[%s1548 + $0x93] sm:$0xff]
      %v1658 = vld [vmem:[%s1548 + $0x9b] sm:$0xff]
      %v1659 = vld [vmem:[%s1548 + $0xab] sm:$0xff]
      %v1660 = vld [vmem:[%s1548 + $0xb3] sm:$0xff]
      %v1661 = vld [vmem:[%s1548 + $0xc3] sm:$0xff]
      %v1662 = vld [vmem:[%s1548 + $0xcb] sm:$0xff]
      %v1663 = vld [vmem:[%s1548 + $0xdb] sm:$0xff]
      %v1664 = vld [vmem:[%s1548 + $0xe3] sm:$0xff]
      %v1665 = vld [vmem:[%s1548 + $0xf3] sm:$0xff]
      %v1666 = vld [vmem:[%s1548 + $0xfb] sm:$0xff]
      %v1667 = vld [vmem:[%s1548 + $0x10b] sm:$0xff]
      %v1668 = vld [vmem:[%s1548 + $0x113] sm:$0xff]
      %v1669 = vld [vmem:[%s1548 + $0x123] sm:$0xff]
      %v1670 = vld [vmem:[%s1548 + $0x12b] sm:$0xff]
      %v1671 = vld [vmem:[%s1548 + $0x13b] sm:$0xff]
      %v1672 = vld [vmem:[%s1548 + $0x143] sm:$0xff]
      %v1673 = vld [vmem:[%s1548 + $0x153] sm:$0xff]
      %v1674 = vld [vmem:[%s1548 + $0x15b] sm:$0xff]
      %v1675 = vld [vmem:[%s1548 + $0x16b] sm:$0xff]
      %v1676 = vld [vmem:[%s1548 + $0x173] sm:$0xff]
      %v1677 = vld [vmem:[%s1548 + $0x4] sm:$0xff]
      %v1678 = vld [vmem:[%s1548 + $0xc] sm:$0xff]
      %v1679 = vld [vmem:[%s1548 + $0x1c] sm:$0xff]
      %v1680 = vld [vmem:[%s1548 + $0x24] sm:$0xff]
      %v1681 = vld [vmem:[%s1548 + $0x34] sm:$0xff]
      %v1682 = vld [vmem:[%s1548 + $0x3c] sm:$0xff]
      %v1683 = vld [vmem:[%s1548 + $0x4c] sm:$0xff]
      %v1684 = vld [vmem:[%s1548 + $0x54] sm:$0xff]
      %v1685 = vld [vmem:[%s1548 + $0x64] sm:$0xff]
      %v1686 = vld [vmem:[%s1548 + $0x6c] sm:$0xff]
      %v1687 = vld [vmem:[%s1548 + $0x7c] sm:$0xff]
      %v1688 = vld [vmem:[%s1548 + $0x84] sm:$0xff]
      %v1689 = vld [vmem:[%s1548 + $0x94] sm:$0xff]
      %v1690 = vld [vmem:[%s1548 + $0x9c] sm:$0xff]
      %v1691 = vld [vmem:[%s1548 + $0xac] sm:$0xff]
      %v1692 = vld [vmem:[%s1548 + $0xb4] sm:$0xff]
      %v1693 = vld [vmem:[%s1548 + $0xc4] sm:$0xff]
      %v1694 = vld [vmem:[%s1548 + $0xcc] sm:$0xff]
      %v1695 = vld [vmem:[%s1548 + $0xdc] sm:$0xff]
      %v1696 = vld [vmem:[%s1548 + $0xe4] sm:$0xff]
      %v1697 = vld [vmem:[%s1548 + $0xf4] sm:$0xff]
      %v1698 = vld [vmem:[%s1548 + $0xfc] sm:$0xff]
      %v1699 = vld [vmem:[%s1548 + $0x10c] sm:$0xff]
      %v1700 = vld [vmem:[%s1548 + $0x114] sm:$0xff]
      %v1701 = vld [vmem:[%s1548 + $0x124] sm:$0xff]
      %v1702 = vld [vmem:[%s1548 + $0x12c] sm:$0xff]
      %v1703 = vld [vmem:[%s1548 + $0x13c] sm:$0xff]
      %v1704 = vld [vmem:[%s1548 + $0x144] sm:$0xff]
      %v1705 = vld [vmem:[%s1548 + $0x154] sm:$0xff]
      %v1706 = vld [vmem:[%s1548 + $0x15c] sm:$0xff]
      %v1707 = vld [vmem:[%s1548 + $0x16c] sm:$0xff]
      %v1708 = vld [vmem:[%s1548 + $0x174] sm:$0xff]
      %s1709 = scalar_lea.vmem [#allocation2], 96
      %v1710 = vld [vmem:[%s1709] sm:$0xff]
      %v1711 = vld [vmem:[%s1709 + $0x8] sm:$0xff]
      %v1712 = vld [vmem:[%s1709 + $0x18] sm:$0xff]
      %v1713 = vld [vmem:[%s1709 + $0x20] sm:$0xff]
      %v1714 = vld [vmem:[%s1709 + $0x30] sm:$0xff]
      %v1715 = vld [vmem:[%s1709 + $0x38] sm:$0xff]
      %v1716 = vld [vmem:[%s1709 + $0x48] sm:$0xff]
      %v1717 = vld [vmem:[%s1709 + $0x50] sm:$0xff]
      %v1718 = vld [vmem:[%s1709 + $0x60] sm:$0xff]
      %v1719 = vld [vmem:[%s1709 + $0x68] sm:$0xff]
      %v1720 = vld [vmem:[%s1709 + $0x78] sm:$0xff]
      %v1721 = vld [vmem:[%s1709 + $0x80] sm:$0xff]
      %v1722 = vld [vmem:[%s1709 + $0x90] sm:$0xff]
      %v1723 = vld [vmem:[%s1709 + $0x98] sm:$0xff]
      %v1724 = vld [vmem:[%s1709 + $0xa8] sm:$0xff]
      %v1725 = vld [vmem:[%s1709 + $0xb0] sm:$0xff]
      %v1726 = vld [vmem:[%s1709 + $0xc0] sm:$0xff]
      %v1727 = vld [vmem:[%s1709 + $0xc8] sm:$0xff]
      %v1728 = vld [vmem:[%s1709 + $0xd8] sm:$0xff]
      %v1729 = vld [vmem:[%s1709 + $0xe0] sm:$0xff]
      %v1730 = vld [vmem:[%s1709 + $0xf0] sm:$0xff]
      %v1731 = vld [vmem:[%s1709 + $0xf8] sm:$0xff]
      %v1732 = vld [vmem:[%s1709 + $0x108] sm:$0xff]
      %v1733 = vld [vmem:[%s1709 + $0x110] sm:$0xff]
      %v1734 = vld [vmem:[%s1709 + $0x120] sm:$0xff]
      %v1735 = vld [vmem:[%s1709 + $0x128] sm:$0xff]
      %v1736 = vld [vmem:[%s1709 + $0x138] sm:$0xff]
      %v1737 = vld [vmem:[%s1709 + $0x140] sm:$0xff]
      %v1738 = vld [vmem:[%s1709 + $0x150] sm:$0xff]
      %v1739 = vld [vmem:[%s1709 + $0x158] sm:$0xff]
      %v1740 = vld [vmem:[%s1709 + $0x168] sm:$0xff]
      %v1741 = vld [vmem:[%s1709 + $0x170] sm:$0xff]
      %v1742 = vld [vmem:[%s1709 + $0x1] sm:$0xff]
      %v1743 = vld [vmem:[%s1709 + $0x9] sm:$0xff]
      %v1744 = vld [vmem:[%s1709 + $0x19] sm:$0xff]
      %v1745 = vld [vmem:[%s1709 + $0x21] sm:$0xff]
      %v1746 = vld [vmem:[%s1709 + $0x31] sm:$0xff]
      %v1747 = vld [vmem:[%s1709 + $0x39] sm:$0xff]
      %v1748 = vld [vmem:[%s1709 + $0x49] sm:$0xff]
      %v1749 = vld [vmem:[%s1709 + $0x51] sm:$0xff]
      %v1750 = vld [vmem:[%s1709 + $0x61] sm:$0xff]
      %v1751 = vld [vmem:[%s1709 + $0x69] sm:$0xff]
      %v1752 = vld [vmem:[%s1709 + $0x79] sm:$0xff]
      %v1753 = vld [vmem:[%s1709 + $0x81] sm:$0xff]
      %v1754 = vld [vmem:[%s1709 + $0x91] sm:$0xff]
      %v1755 = vld [vmem:[%s1709 + $0x99] sm:$0xff]
      %v1756 = vld [vmem:[%s1709 + $0xa9] sm:$0xff]
      %v1757 = vld [vmem:[%s1709 + $0xb1] sm:$0xff]
      %v1758 = vld [vmem:[%s1709 + $0xc1] sm:$0xff]
      %v1759 = vld [vmem:[%s1709 + $0xc9] sm:$0xff]
      %v1760 = vld [vmem:[%s1709 + $0xd9] sm:$0xff]
      %v1761 = vld [vmem:[%s1709 + $0xe1] sm:$0xff]
      %v1762 = vld [vmem:[%s1709 + $0xf1] sm:$0xff]
      %v1763 = vld [vmem:[%s1709 + $0xf9] sm:$0xff]
      %v1764 = vld [vmem:[%s1709 + $0x109] sm:$0xff]
      %v1765 = vld [vmem:[%s1709 + $0x111] sm:$0xff]
      %v1766 = vld [vmem:[%s1709 + $0x121] sm:$0xff]
      %v1767 = vld [vmem:[%s1709 + $0x129] sm:$0xff]
      %v1768 = vld [vmem:[%s1709 + $0x139] sm:$0xff]
      %v1769 = vld [vmem:[%s1709 + $0x141] sm:$0xff]
      %v1770 = vld [vmem:[%s1709 + $0x151] sm:$0xff]
      %v1771 = vld [vmem:[%s1709 + $0x159] sm:$0xff]
      %v1772 = vld [vmem:[%s1709 + $0x169] sm:$0xff]
      %v1773 = vld [vmem:[%s1709 + $0x171] sm:$0xff]
      %v1774 = vld [vmem:[%s1709 + $0x2] sm:$0xff]
      %v1775 = vld [vmem:[%s1709 + $0xa] sm:$0xff]
      %v1776 = vld [vmem:[%s1709 + $0x1a] sm:$0xff]
      %v1777 = vld [vmem:[%s1709 + $0x22] sm:$0xff]
      %v1778 = vld [vmem:[%s1709 + $0x32] sm:$0xff]
      %v1779 = vld [vmem:[%s1709 + $0x3a] sm:$0xff]
      %v1780 = vld [vmem:[%s1709 + $0x4a] sm:$0xff]
      %v1781 = vld [vmem:[%s1709 + $0x52] sm:$0xff]
      %v1782 = vld [vmem:[%s1709 + $0x62] sm:$0xff]
      %v1783 = vld [vmem:[%s1709 + $0x6a] sm:$0xff]
      %v1784 = vld [vmem:[%s1709 + $0x7a] sm:$0xff]
      %v1785 = vld [vmem:[%s1709 + $0x82] sm:$0xff]
      %v1786 = vld [vmem:[%s1709 + $0x92] sm:$0xff]
      %v1787 = vld [vmem:[%s1709 + $0x9a] sm:$0xff]
      %v1788 = vld [vmem:[%s1709 + $0xaa] sm:$0xff]
      %v1789 = vld [vmem:[%s1709 + $0xb2] sm:$0xff]
      %v1790 = vld [vmem:[%s1709 + $0xc2] sm:$0xff]
      %v1791 = vld [vmem:[%s1709 + $0xca] sm:$0xff]
      %v1792 = vld [vmem:[%s1709 + $0xda] sm:$0xff]
      %v1793 = vld [vmem:[%s1709 + $0xe2] sm:$0xff]
      %v1794 = vld [vmem:[%s1709 + $0xf2] sm:$0xff]
      %v1795 = vld [vmem:[%s1709 + $0xfa] sm:$0xff]
      %v1796 = vld [vmem:[%s1709 + $0x10a] sm:$0xff]
      %v1797 = vld [vmem:[%s1709 + $0x112] sm:$0xff]
      %v1798 = vld [vmem:[%s1709 + $0x122] sm:$0xff]
      %v1799 = vld [vmem:[%s1709 + $0x12a] sm:$0xff]
      %v1800 = vld [vmem:[%s1709 + $0x13a] sm:$0xff]
      %v1801 = vld [vmem:[%s1709 + $0x142] sm:$0xff]
      %v1802 = vld [vmem:[%s1709 + $0x152] sm:$0xff]
      %v1803 = vld [vmem:[%s1709 + $0x15a] sm:$0xff]
      %v1804 = vld [vmem:[%s1709 + $0x16a] sm:$0xff]
      %v1805 = vld [vmem:[%s1709 + $0x172] sm:$0xff]
      %v1806 = vld [vmem:[%s1709 + $0x3] sm:$0xff]
      %v1807 = vld [vmem:[%s1709 + $0xb] sm:$0xff]
      %v1808 = vld [vmem:[%s1709 + $0x1b] sm:$0xff]
      %v1809 = vld [vmem:[%s1709 + $0x23] sm:$0xff]
      %v1810 = vld [vmem:[%s1709 + $0x33] sm:$0xff]
      %v1811 = vld [vmem:[%s1709 + $0x3b] sm:$0xff]
      %v1812 = vld [vmem:[%s1709 + $0x4b] sm:$0xff]
      %v1813 = vld [vmem:[%s1709 + $0x53] sm:$0xff]
      %v1814 = vld [vmem:[%s1709 + $0x63] sm:$0xff]
      %v1815 = vld [vmem:[%s1709 + $0x6b] sm:$0xff]
      %v1816 = vld [vmem:[%s1709 + $0x7b] sm:$0xff]
      %v1817 = vld [vmem:[%s1709 + $0x83] sm:$0xff]
      %v1818 = vld [vmem:[%s1709 + $0x93] sm:$0xff]
      %v1819 = vld [vmem:[%s1709 + $0x9b] sm:$0xff]
      %v1820 = vld [vmem:[%s1709 + $0xab] sm:$0xff]
      %v1821 = vld [vmem:[%s1709 + $0xb3] sm:$0xff]
      %v1822 = vld [vmem:[%s1709 + $0xc3] sm:$0xff]
      %v1823 = vld [vmem:[%s1709 + $0xcb] sm:$0xff]
      %v1824 = vld [vmem:[%s1709 + $0xdb] sm:$0xff]
      %v1825 = vld [vmem:[%s1709 + $0xe3] sm:$0xff]
      %v1826 = vld [vmem:[%s1709 + $0xf3] sm:$0xff]
      %v1827 = vld [vmem:[%s1709 + $0xfb] sm:$0xff]
      %v1828 = vld [vmem:[%s1709 + $0x10b] sm:$0xff]
      %v1829 = vld [vmem:[%s1709 + $0x113] sm:$0xff]
      %v1830 = vld [vmem:[%s1709 + $0x123] sm:$0xff]
      %v1831 = vld [vmem:[%s1709 + $0x12b] sm:$0xff]
      %v1832 = vld [vmem:[%s1709 + $0x13b] sm:$0xff]
      %v1833 = vld [vmem:[%s1709 + $0x143] sm:$0xff]
      %v1834 = vld [vmem:[%s1709 + $0x153] sm:$0xff]
      %v1835 = vld [vmem:[%s1709 + $0x15b] sm:$0xff]
      %v1836 = vld [vmem:[%s1709 + $0x16b] sm:$0xff]
      %v1837 = vld [vmem:[%s1709 + $0x173] sm:$0xff]
      %v1838 = vld [vmem:[%s1709 + $0x4] sm:$0xff]
      %v1839 = vld [vmem:[%s1709 + $0xc] sm:$0xff]
      %v1840 = vld [vmem:[%s1709 + $0x1c] sm:$0xff]
      %v1841 = vld [vmem:[%s1709 + $0x24] sm:$0xff]
      %v1842 = vld [vmem:[%s1709 + $0x34] sm:$0xff]
      %v1843 = vld [vmem:[%s1709 + $0x3c] sm:$0xff]
      %v1844 = vld [vmem:[%s1709 + $0x4c] sm:$0xff]
      %v1845 = vld [vmem:[%s1709 + $0x54] sm:$0xff]
      %v1846 = vld [vmem:[%s1709 + $0x64] sm:$0xff]
      %v1847 = vld [vmem:[%s1709 + $0x6c] sm:$0xff]
      %v1848 = vld [vmem:[%s1709 + $0x7c] sm:$0xff]
      %v1849 = vld [vmem:[%s1709 + $0x84] sm:$0xff]
      %v1850 = vld [vmem:[%s1709 + $0x94] sm:$0xff]
      %v1851 = vld [vmem:[%s1709 + $0x9c] sm:$0xff]
      %v1852 = vld [vmem:[%s1709 + $0xac] sm:$0xff]
      %v1853 = vld [vmem:[%s1709 + $0xb4] sm:$0xff]
      %v1854 = vld [vmem:[%s1709 + $0xc4] sm:$0xff]
      %v1855 = vld [vmem:[%s1709 + $0xcc] sm:$0xff]
      %v1856 = vld [vmem:[%s1709 + $0xdc] sm:$0xff]
      %v1857 = vld [vmem:[%s1709 + $0xe4] sm:$0xff]
      %v1858 = vld [vmem:[%s1709 + $0xf4] sm:$0xff]
      %v1859 = vld [vmem:[%s1709 + $0xfc] sm:$0xff]
      %v1860 = vld [vmem:[%s1709 + $0x10c] sm:$0xff]
      %v1861 = vld [vmem:[%s1709 + $0x114] sm:$0xff]
      %v1862 = vld [vmem:[%s1709 + $0x124] sm:$0xff]
      %v1863 = vld [vmem:[%s1709 + $0x12c] sm:$0xff]
      %v1864 = vld [vmem:[%s1709 + $0x13c] sm:$0xff]
      %v1865 = vld [vmem:[%s1709 + $0x144] sm:$0xff]
      %v1866 = vld [vmem:[%s1709 + $0x154] sm:$0xff]
      %v1867 = vld [vmem:[%s1709 + $0x15c] sm:$0xff]
      %v1868 = vld [vmem:[%s1709 + $0x16c] sm:$0xff]
      %v1869 = vld [vmem:[%s1709 + $0x174] sm:$0xff]
      %1902 = vrot.lane.b32.xlu0 %v1099, 8
      %v1903 = vpop.permute.xlu0 %1902
      %1904 = vrot.lane.b32.xlu0 %v1100, 8
      %v1905 = vpop.permute.xlu0 %1904
      %1906 = vrot.lane.b32.xlu0 %v1101, 8
      %v1907 = vpop.permute.xlu0 %1906
      %1908 = vrot.lane.b32.xlu0 %v1102, 8
      %v1909 = vpop.permute.xlu0 %1908
      %1910 = vrot.lane.b32.xlu0 %v1103, 8
      %v1911 = vpop.permute.xlu0 %1910
      %1912 = vrot.lane.b32.xlu0 %v1104, 8
      %v1913 = vpop.permute.xlu0 %1912
      %1914 = vrot.lane.b32.xlu0 %v1105, 8
      %v1915 = vpop.permute.xlu0 %1914
      %1916 = vrot.lane.b32.xlu0 %v1106, 8
      %v1917 = vpop.permute.xlu0 %1916
      %1918 = vrot.lane.b32.xlu0 %v1107, 8
      %v1919 = vpop.permute.xlu0 %1918
      %1920 = vrot.lane.b32.xlu0 %v1108, 8
      %v1921 = vpop.permute.xlu0 %1920
      %1922 = vrot.lane.b32.xlu0 %v1109, 8
      %v1923 = vpop.permute.xlu0 %1922
      %1924 = vrot.lane.b32.xlu0 %v1110, 8
      %v1925 = vpop.permute.xlu0 %1924
      %1926 = vrot.lane.b32.xlu0 %v1111, 8
      %v1927 = vpop.permute.xlu0 %1926
      %1928 = vrot.lane.b32.xlu0 %v1112, 8
      %v1929 = vpop.permute.xlu0 %1928
      %1930 = vrot.lane.b32.xlu0 %v1113, 8
      %v1931 = vpop.permute.xlu0 %1930
      %1932 = vrot.lane.b32.xlu0 %v1114, 8
      %v1933 = vpop.permute.xlu0 %1932
      %1934 = vrot.lane.b32.xlu0 %v1115, 8
      %v1935 = vpop.permute.xlu0 %1934
      %1936 = vrot.lane.b32.xlu0 %v1116, 8
      %v1937 = vpop.permute.xlu0 %1936
      %1938 = vrot.lane.b32.xlu0 %v1117, 8
      %v1939 = vpop.permute.xlu0 %1938
      %1940 = vrot.lane.b32.xlu0 %v1118, 8
      %v1941 = vpop.permute.xlu0 %1940
      %1942 = vrot.lane.b32.xlu0 %v1119, 8
      %v1943 = vpop.permute.xlu0 %1942
      %1944 = vrot.lane.b32.xlu0 %v1120, 8
      %v1945 = vpop.permute.xlu0 %1944
      %1946 = vrot.lane.b32.xlu0 %v1121, 8
      %v1947 = vpop.permute.xlu0 %1946
      %1948 = vrot.lane.b32.xlu0 %v1122, 8
      %v1949 = vpop.permute.xlu0 %1948
      %1950 = vrot.lane.b32.xlu0 %v1123, 8
      %v1951 = vpop.permute.xlu0 %1950
      %1952 = vrot.lane.b32.xlu0 %v1124, 8
      %v1953 = vpop.permute.xlu0 %1952
      %1954 = vrot.lane.b32.xlu0 %v1125, 8
      %v1955 = vpop.permute.xlu0 %1954
      %1956 = vrot.lane.b32.xlu0 %v1126, 8
      %v1957 = vpop.permute.xlu0 %1956
      %1958 = vrot.lane.b32.xlu0 %v1127, 8
      %v1959 = vpop.permute.xlu0 %1958
      %1960 = vrot.lane.b32.xlu0 %v1128, 8
      %v1961 = vpop.permute.xlu0 %1960
      %1962 = vrot.lane.b32.xlu0 %v1129, 8
      %v1963 = vpop.permute.xlu0 %1962
      %1964 = vrot.lane.b32.xlu0 %v1130, 8
      %v1965 = vpop.permute.xlu0 %1964
      %2030 = vrot.lane.b32.xlu0 %v1131, 16
      %v2031 = vpop.permute.xlu0 %2030
      %2032 = vrot.lane.b32.xlu0 %v1132, 16
      %v2033 = vpop.permute.xlu0 %2032
      %2034 = vrot.lane.b32.xlu0 %v1133, 16
      %v2035 = vpop.permute.xlu0 %2034
      %2036 = vrot.lane.b32.xlu0 %v1134, 16
      %v2037 = vpop.permute.xlu0 %2036
      %2038 = vrot.lane.b32.xlu0 %v1135, 16
      %v2039 = vpop.permute.xlu0 %2038
      %2040 = vrot.lane.b32.xlu0 %v1136, 16
      %v2041 = vpop.permute.xlu0 %2040
      %2042 = vrot.lane.b32.xlu0 %v1137, 16
      %v2043 = vpop.permute.xlu0 %2042
      %2044 = vrot.lane.b32.xlu0 %v1138, 16
      %v2045 = vpop.permute.xlu0 %2044
      %2046 = vrot.lane.b32.xlu0 %v1139, 16
      %v2047 = vpop.permute.xlu0 %2046
      %2048 = vrot.lane.b32.xlu0 %v1140, 16
      %v2049 = vpop.permute.xlu0 %2048
      %2050 = vrot.lane.b32.xlu0 %v1141, 16
      %v2051 = vpop.permute.xlu0 %2050
      %2052 = vrot.lane.b32.xlu0 %v1142, 16
      %v2053 = vpop.permute.xlu0 %2052
      %2054 = vrot.lane.b32.xlu0 %v1143, 16
      %v2055 = vpop.permute.xlu0 %2054
      %2056 = vrot.lane.b32.xlu0 %v1144, 16
      %v2057 = vpop.permute.xlu0 %2056
      %2058 = vrot.lane.b32.xlu0 %v1145, 16
      %v2059 = vpop.permute.xlu0 %2058
      %2060 = vrot.lane.b32.xlu0 %v1146, 16
      %v2061 = vpop.permute.xlu0 %2060
      %2062 = vrot.lane.b32.xlu0 %v1147, 16
      %v2063 = vpop.permute.xlu0 %2062
      %2064 = vrot.lane.b32.xlu0 %v1148, 16
      %v2065 = vpop.permute.xlu0 %2064
      %2066 = vrot.lane.b32.xlu0 %v1149, 16
      %v2067 = vpop.permute.xlu0 %2066
      %2068 = vrot.lane.b32.xlu0 %v1150, 16
      %v2069 = vpop.permute.xlu0 %2068
      %2070 = vrot.lane.b32.xlu0 %v1151, 16
      %v2071 = vpop.permute.xlu0 %2070
      %2072 = vrot.lane.b32.xlu0 %v1152, 16
      %v2073 = vpop.permute.xlu0 %2072
      %2074 = vrot.lane.b32.xlu0 %v1153, 16
      %v2075 = vpop.permute.xlu0 %2074
      %2076 = vrot.lane.b32.xlu0 %v1154, 16
      %v2077 = vpop.permute.xlu0 %2076
      %2078 = vrot.lane.b32.xlu0 %v1155, 16
      %v2079 = vpop.permute.xlu0 %2078
      %2080 = vrot.lane.b32.xlu0 %v1156, 16
      %v2081 = vpop.permute.xlu0 %2080
      %2082 = vrot.lane.b32.xlu0 %v1157, 16
      %v2083 = vpop.permute.xlu0 %2082
      %2084 = vrot.lane.b32.xlu0 %v1158, 16
      %v2085 = vpop.permute.xlu0 %2084
      %2086 = vrot.lane.b32.xlu0 %v1159, 16
      %v2087 = vpop.permute.xlu0 %2086
      %2088 = vrot.lane.b32.xlu0 %v1160, 16
      %v2089 = vpop.permute.xlu0 %2088
      %2090 = vrot.lane.b32.xlu0 %v1161, 16
      %v2091 = vpop.permute.xlu0 %2090
      %2092 = vrot.lane.b32.xlu0 %v1162, 16
      %v2093 = vpop.permute.xlu0 %2092
      %2158 = vrot.lane.b32.xlu0 %v1163, 24
      %v2159 = vpop.permute.xlu0 %2158
      %2160 = vrot.lane.b32.xlu0 %v1164, 24
      %v2161 = vpop.permute.xlu0 %2160
      %2162 = vrot.lane.b32.xlu0 %v1165, 24
      %v2163 = vpop.permute.xlu0 %2162
      %2164 = vrot.lane.b32.xlu0 %v1166, 24
      %v2165 = vpop.permute.xlu0 %2164
      %2166 = vrot.lane.b32.xlu0 %v1167, 24
      %v2167 = vpop.permute.xlu0 %2166
      %2168 = vrot.lane.b32.xlu0 %v1168, 24
      %v2169 = vpop.permute.xlu0 %2168
      %2170 = vrot.lane.b32.xlu0 %v1169, 24
      %v2171 = vpop.permute.xlu0 %2170
      %2172 = vrot.lane.b32.xlu0 %v1170, 24
      %v2173 = vpop.permute.xlu0 %2172
      %2174 = vrot.lane.b32.xlu0 %v1171, 24
      %v2175 = vpop.permute.xlu0 %2174
      %2176 = vrot.lane.b32.xlu0 %v1172, 24
      %v2177 = vpop.permute.xlu0 %2176
      %2178 = vrot.lane.b32.xlu0 %v1173, 24
      %v2179 = vpop.permute.xlu0 %2178
      %2180 = vrot.lane.b32.xlu0 %v1174, 24
      %v2181 = vpop.permute.xlu0 %2180
      %2182 = vrot.lane.b32.xlu0 %v1175, 24
      %v2183 = vpop.permute.xlu0 %2182
      %2184 = vrot.lane.b32.xlu0 %v1176, 24
      %v2185 = vpop.permute.xlu0 %2184
      %2186 = vrot.lane.b32.xlu0 %v1177, 24
      %v2187 = vpop.permute.xlu0 %2186
      %2188 = vrot.lane.b32.xlu0 %v1178, 24
      %v2189 = vpop.permute.xlu0 %2188
      %2190 = vrot.lane.b32.xlu0 %v1179, 24
      %v2191 = vpop.permute.xlu0 %2190
      %2192 = vrot.lane.b32.xlu0 %v1180, 24
      %v2193 = vpop.permute.xlu0 %2192
      %2194 = vrot.lane.b32.xlu0 %v1181, 24
      %v2195 = vpop.permute.xlu0 %2194
      %2196 = vrot.lane.b32.xlu0 %v1182, 24
      %v2197 = vpop.permute.xlu0 %2196
      %2198 = vrot.lane.b32.xlu0 %v1183, 24
      %v2199 = vpop.permute.xlu0 %2198
      %2200 = vrot.lane.b32.xlu0 %v1184, 24
      %v2201 = vpop.permute.xlu0 %2200
      %2202 = vrot.lane.b32.xlu0 %v1185, 24
      %v2203 = vpop.permute.xlu0 %2202
      %2204 = vrot.lane.b32.xlu0 %v1186, 24
      %v2205 = vpop.permute.xlu0 %2204
      %2206 = vrot.lane.b32.xlu0 %v1187, 24
      %v2207 = vpop.permute.xlu0 %2206
      %2208 = vrot.lane.b32.xlu0 %v1188, 24
      %v2209 = vpop.permute.xlu0 %2208
      %2210 = vrot.lane.b32.xlu0 %v1189, 24
      %v2211 = vpop.permute.xlu0 %2210
      %2212 = vrot.lane.b32.xlu0 %v1190, 24
      %v2213 = vpop.permute.xlu0 %2212
      %2214 = vrot.lane.b32.xlu0 %v1191, 24
      %v2215 = vpop.permute.xlu0 %2214
      %2216 = vrot.lane.b32.xlu0 %v1192, 24
      %v2217 = vpop.permute.xlu0 %2216
      %2218 = vrot.lane.b32.xlu0 %v1193, 24
      %v2219 = vpop.permute.xlu0 %2218
      %2220 = vrot.lane.b32.xlu0 %v1194, 24
      %v2221 = vpop.permute.xlu0 %2220
      %2286 = vrot.lane.b32.xlu0 %v1195, 32
      %v2287 = vpop.permute.xlu0 %2286
      %2288 = vrot.lane.b32.xlu0 %v1196, 32
      %v2289 = vpop.permute.xlu0 %2288
      %2290 = vrot.lane.b32.xlu0 %v1197, 32
      %v2291 = vpop.permute.xlu0 %2290
      %2292 = vrot.lane.b32.xlu0 %v1198, 32
      %v2293 = vpop.permute.xlu0 %2292
      %2294 = vrot.lane.b32.xlu0 %v1199, 32
      %v2295 = vpop.permute.xlu0 %2294
      %2296 = vrot.lane.b32.xlu0 %v1200, 32
      %v2297 = vpop.permute.xlu0 %2296
      %2298 = vrot.lane.b32.xlu0 %v1201, 32
      %v2299 = vpop.permute.xlu0 %2298
      %2300 = vrot.lane.b32.xlu0 %v1202, 32
      %v2301 = vpop.permute.xlu0 %2300
      %2302 = vrot.lane.b32.xlu0 %v1203, 32
      %v2303 = vpop.permute.xlu0 %2302
      %2304 = vrot.lane.b32.xlu0 %v1204, 32
      %v2305 = vpop.permute.xlu0 %2304
      %2306 = vrot.lane.b32.xlu0 %v1205, 32
      %v2307 = vpop.permute.xlu0 %2306
      %2308 = vrot.lane.b32.xlu0 %v1206, 32
      %v2309 = vpop.permute.xlu0 %2308
      %2310 = vrot.lane.b32.xlu0 %v1207, 32
      %v2311 = vpop.permute.xlu0 %2310
      %2312 = vrot.lane.b32.xlu0 %v1208, 32
      %v2313 = vpop.permute.xlu0 %2312
      %2314 = vrot.lane.b32.xlu0 %v1209, 32
      %v2315 = vpop.permute.xlu0 %2314
      %2316 = vrot.lane.b32.xlu0 %v1210, 32
      %v2317 = vpop.permute.xlu0 %2316
      %2318 = vrot.lane.b32.xlu0 %v1211, 32
      %v2319 = vpop.permute.xlu0 %2318
      %2320 = vrot.lane.b32.xlu0 %v1212, 32
      %v2321 = vpop.permute.xlu0 %2320
      %2322 = vrot.lane.b32.xlu0 %v1213, 32
      %v2323 = vpop.permute.xlu0 %2322
      %2324 = vrot.lane.b32.xlu0 %v1214, 32
      %v2325 = vpop.permute.xlu0 %2324
      %2326 = vrot.lane.b32.xlu0 %v1215, 32
      %v2327 = vpop.permute.xlu0 %2326
      %2328 = vrot.lane.b32.xlu0 %v1216, 32
      %v2329 = vpop.permute.xlu0 %2328
      %2330 = vrot.lane.b32.xlu0 %v1217, 32
      %v2331 = vpop.permute.xlu0 %2330
      %2332 = vrot.lane.b32.xlu0 %v1218, 32
      %v2333 = vpop.permute.xlu0 %2332
      %2334 = vrot.lane.b32.xlu0 %v1219, 32
      %v2335 = vpop.permute.xlu0 %2334
      %2336 = vrot.lane.b32.xlu0 %v1220, 32
      %v2337 = vpop.permute.xlu0 %2336
      %2338 = vrot.lane.b32.xlu0 %v1221, 32
      %v2339 = vpop.permute.xlu0 %2338
      %2340 = vrot.lane.b32.xlu0 %v1222, 32
      %v2341 = vpop.permute.xlu0 %2340
      %2342 = vrot.lane.b32.xlu0 %v1223, 32
      %v2343 = vpop.permute.xlu0 %2342
      %2344 = vrot.lane.b32.xlu0 %v1224, 32
      %v2345 = vpop.permute.xlu0 %2344
      %2346 = vrot.lane.b32.xlu0 %v1225, 32
      %v2347 = vpop.permute.xlu0 %2346
      %2348 = vrot.lane.b32.xlu0 %v1226, 32
      %v2349 = vpop.permute.xlu0 %2348
      %2414 = vrot.lane.b32.xlu0 %v1228, 40
      %v2415 = vpop.permute.xlu0 %2414
      %2416 = vrot.lane.b32.xlu0 %v1229, 40
      %v2417 = vpop.permute.xlu0 %2416
      %2418 = vrot.lane.b32.xlu0 %v1230, 40
      %v2419 = vpop.permute.xlu0 %2418
      %2420 = vrot.lane.b32.xlu0 %v1231, 40
      %v2421 = vpop.permute.xlu0 %2420
      %2422 = vrot.lane.b32.xlu0 %v1232, 40
      %v2423 = vpop.permute.xlu0 %2422
      %2424 = vrot.lane.b32.xlu0 %v1233, 40
      %v2425 = vpop.permute.xlu0 %2424
      %2426 = vrot.lane.b32.xlu0 %v1234, 40
      %v2427 = vpop.permute.xlu0 %2426
      %2428 = vrot.lane.b32.xlu0 %v1235, 40
      %v2429 = vpop.permute.xlu0 %2428
      %2430 = vrot.lane.b32.xlu0 %v1236, 40
      %v2431 = vpop.permute.xlu0 %2430
      %2432 = vrot.lane.b32.xlu0 %v1237, 40
      %v2433 = vpop.permute.xlu0 %2432
      %2434 = vrot.lane.b32.xlu0 %v1238, 40
      %v2435 = vpop.permute.xlu0 %2434
      %2436 = vrot.lane.b32.xlu0 %v1239, 40
      %v2437 = vpop.permute.xlu0 %2436
      %2438 = vrot.lane.b32.xlu0 %v1240, 40
      %v2439 = vpop.permute.xlu0 %2438
      %2440 = vrot.lane.b32.xlu0 %v1241, 40
      %v2441 = vpop.permute.xlu0 %2440
      %2442 = vrot.lane.b32.xlu0 %v1242, 40
      %v2443 = vpop.permute.xlu0 %2442
      %2444 = vrot.lane.b32.xlu0 %v1243, 40
      %v2445 = vpop.permute.xlu0 %2444
      %2446 = vrot.lane.b32.xlu0 %v1244, 40
      %v2447 = vpop.permute.xlu0 %2446
      %2448 = vrot.lane.b32.xlu0 %v1245, 40
      %v2449 = vpop.permute.xlu0 %2448
      %2450 = vrot.lane.b32.xlu0 %v1246, 40
      %v2451 = vpop.permute.xlu0 %2450
      %2452 = vrot.lane.b32.xlu0 %v1247, 40
      %v2453 = vpop.permute.xlu0 %2452
      %2454 = vrot.lane.b32.xlu0 %v1248, 40
      %v2455 = vpop.permute.xlu0 %2454
      %2456 = vrot.lane.b32.xlu0 %v1249, 40
      %v2457 = vpop.permute.xlu0 %2456
      %2458 = vrot.lane.b32.xlu0 %v1250, 40
      %v2459 = vpop.permute.xlu0 %2458
      %2460 = vrot.lane.b32.xlu0 %v1251, 40
      %v2461 = vpop.permute.xlu0 %2460
      %2462 = vrot.lane.b32.xlu0 %v1252, 40
      %v2463 = vpop.permute.xlu0 %2462
      %2464 = vrot.lane.b32.xlu0 %v1253, 40
      %v2465 = vpop.permute.xlu0 %2464
      %2466 = vrot.lane.b32.xlu0 %v1254, 40
      %v2467 = vpop.permute.xlu0 %2466
      %2468 = vrot.lane.b32.xlu0 %v1255, 40
      %v2469 = vpop.permute.xlu0 %2468
      %2470 = vrot.lane.b32.xlu0 %v1256, 40
      %v2471 = vpop.permute.xlu0 %2470
      %2472 = vrot.lane.b32.xlu0 %v1257, 40
      %v2473 = vpop.permute.xlu0 %2472
      %2474 = vrot.lane.b32.xlu0 %v1258, 40
      %v2475 = vpop.permute.xlu0 %2474
      %2476 = vrot.lane.b32.xlu0 %v1259, 40
      %v2477 = vpop.permute.xlu0 %2476
      %2542 = vrot.lane.b32.xlu0 %v1260, 48
      %v2543 = vpop.permute.xlu0 %2542
      %2544 = vrot.lane.b32.xlu0 %v1261, 48
      %v2545 = vpop.permute.xlu0 %2544
      %2546 = vrot.lane.b32.xlu0 %v1262, 48
      %v2547 = vpop.permute.xlu0 %2546
      %2548 = vrot.lane.b32.xlu0 %v1263, 48
      %v2549 = vpop.permute.xlu0 %2548
      %2550 = vrot.lane.b32.xlu0 %v1264, 48
      %v2551 = vpop.permute.xlu0 %2550
      %2552 = vrot.lane.b32.xlu0 %v1265, 48
      %v2553 = vpop.permute.xlu0 %2552
      %2554 = vrot.lane.b32.xlu0 %v1266, 48
      %v2555 = vpop.permute.xlu0 %2554
      %2556 = vrot.lane.b32.xlu0 %v1267, 48
      %v2557 = vpop.permute.xlu0 %2556
      %2558 = vrot.lane.b32.xlu0 %v1268, 48
      %v2559 = vpop.permute.xlu0 %2558
      %2560 = vrot.lane.b32.xlu0 %v1269, 48
      %v2561 = vpop.permute.xlu0 %2560
      %2562 = vrot.lane.b32.xlu0 %v1270, 48
      %v2563 = vpop.permute.xlu0 %2562
      %2564 = vrot.lane.b32.xlu0 %v1271, 48
      %v2565 = vpop.permute.xlu0 %2564
      %2566 = vrot.lane.b32.xlu0 %v1272, 48
      %v2567 = vpop.permute.xlu0 %2566
      %2568 = vrot.lane.b32.xlu0 %v1273, 48
      %v2569 = vpop.permute.xlu0 %2568
      %2570 = vrot.lane.b32.xlu0 %v1274, 48
      %v2571 = vpop.permute.xlu0 %2570
      %2572 = vrot.lane.b32.xlu0 %v1275, 48
      %v2573 = vpop.permute.xlu0 %2572
      %2574 = vrot.lane.b32.xlu0 %v1276, 48
      %v2575 = vpop.permute.xlu0 %2574
      %2576 = vrot.lane.b32.xlu0 %v1277, 48
      %v2577 = vpop.permute.xlu0 %2576
      %2578 = vrot.lane.b32.xlu0 %v1278, 48
      %v2579 = vpop.permute.xlu0 %2578
      %2580 = vrot.lane.b32.xlu0 %v1279, 48
      %v2581 = vpop.permute.xlu0 %2580
      %2582 = vrot.lane.b32.xlu0 %v1280, 48
      %v2583 = vpop.permute.xlu0 %2582
      %2584 = vrot.lane.b32.xlu0 %v1281, 48
      %v2585 = vpop.permute.xlu0 %2584
      %2586 = vrot.lane.b32.xlu0 %v1282, 48
      %v2587 = vpop.permute.xlu0 %2586
      %2588 = vrot.lane.b32.xlu0 %v1283, 48
      %v2589 = vpop.permute.xlu0 %2588
      %2590 = vrot.lane.b32.xlu0 %v1284, 48
      %v2591 = vpop.permute.xlu0 %2590
      %2592 = vrot.lane.b32.xlu0 %v1285, 48
      %v2593 = vpop.permute.xlu0 %2592
      %2594 = vrot.lane.b32.xlu0 %v1286, 48
      %v2595 = vpop.permute.xlu0 %2594
      %2596 = vrot.lane.b32.xlu0 %v1287, 48
      %v2597 = vpop.permute.xlu0 %2596
      %2598 = vrot.lane.b32.xlu0 %v1288, 48
      %v2599 = vpop.permute.xlu0 %2598
      %2600 = vrot.lane.b32.xlu0 %v1289, 48
      %v2601 = vpop.permute.xlu0 %2600
      %2602 = vrot.lane.b32.xlu0 %v1290, 48
      %v2603 = vpop.permute.xlu0 %2602
      %2604 = vrot.lane.b32.xlu0 %v1291, 48
      %v2605 = vpop.permute.xlu0 %2604
      %2670 = vrot.lane.b32.xlu0 %v1292, 56
      %v2671 = vpop.permute.xlu0 %2670
      %2672 = vrot.lane.b32.xlu0 %v1293, 56
      %v2673 = vpop.permute.xlu0 %2672
      %2674 = vrot.lane.b32.xlu0 %v1294, 56
      %v2675 = vpop.permute.xlu0 %2674
      %2676 = vrot.lane.b32.xlu0 %v1295, 56
      %v2677 = vpop.permute.xlu0 %2676
      %2678 = vrot.lane.b32.xlu0 %v1296, 56
      %v2679 = vpop.permute.xlu0 %2678
      %2680 = vrot.lane.b32.xlu0 %v1297, 56
      %v2681 = vpop.permute.xlu0 %2680
      %2682 = vrot.lane.b32.xlu0 %v1298, 56
      %v2683 = vpop.permute.xlu0 %2682
      %2684 = vrot.lane.b32.xlu0 %v1299, 56
      %v2685 = vpop.permute.xlu0 %2684
      %2686 = vrot.lane.b32.xlu0 %v1300, 56
      %v2687 = vpop.permute.xlu0 %2686
      %2688 = vrot.lane.b32.xlu0 %v1301, 56
      %v2689 = vpop.permute.xlu0 %2688
      %2690 = vrot.lane.b32.xlu0 %v1302, 56
      %v2691 = vpop.permute.xlu0 %2690
      %2692 = vrot.lane.b32.xlu0 %v1303, 56
      %v2693 = vpop.permute.xlu0 %2692
      %2694 = vrot.lane.b32.xlu0 %v1304, 56
      %v2695 = vpop.permute.xlu0 %2694
      %2696 = vrot.lane.b32.xlu0 %v1305, 56
      %v2697 = vpop.permute.xlu0 %2696
      %2698 = vrot.lane.b32.xlu0 %v1306, 56
      %v2699 = vpop.permute.xlu0 %2698
      %2700 = vrot.lane.b32.xlu0 %v1307, 56
      %v2701 = vpop.permute.xlu0 %2700
      %2702 = vrot.lane.b32.xlu0 %v1308, 56
      %v2703 = vpop.permute.xlu0 %2702
      %2704 = vrot.lane.b32.xlu0 %v1309, 56
      %v2705 = vpop.permute.xlu0 %2704
      %2706 = vrot.lane.b32.xlu0 %v1310, 56
      %v2707 = vpop.permute.xlu0 %2706
      %2708 = vrot.lane.b32.xlu0 %v1311, 56
      %v2709 = vpop.permute.xlu0 %2708
      %2710 = vrot.lane.b32.xlu0 %v1312, 56
      %v2711 = vpop.permute.xlu0 %2710
      %2712 = vrot.lane.b32.xlu0 %v1313, 56
      %v2713 = vpop.permute.xlu0 %2712
      %2714 = vrot.lane.b32.xlu0 %v1314, 56
      %v2715 = vpop.permute.xlu0 %2714
      %2716 = vrot.lane.b32.xlu0 %v1315, 56
      %v2717 = vpop.permute.xlu0 %2716
      %2718 = vrot.lane.b32.xlu0 %v1316, 56
      %v2719 = vpop.permute.xlu0 %2718
      %2720 = vrot.lane.b32.xlu0 %v1317, 56
      %v2721 = vpop.permute.xlu0 %2720
      %2722 = vrot.lane.b32.xlu0 %v1318, 56
      %v2723 = vpop.permute.xlu0 %2722
      %2724 = vrot.lane.b32.xlu0 %v1319, 56
      %v2725 = vpop.permute.xlu0 %2724
      %2726 = vrot.lane.b32.xlu0 %v1320, 56
      %v2727 = vpop.permute.xlu0 %2726
      %2728 = vrot.lane.b32.xlu0 %v1321, 56
      %v2729 = vpop.permute.xlu0 %2728
      %2730 = vrot.lane.b32.xlu0 %v1322, 56
      %v2731 = vpop.permute.xlu0 %2730
      %2732 = vrot.lane.b32.xlu0 %v1323, 56
      %v2733 = vpop.permute.xlu0 %2732
      %2798 = vrot.lane.b32.xlu0 %v1324, 64
      %v2799 = vpop.permute.xlu0 %2798
      %2800 = vrot.lane.b32.xlu0 %v1325, 64
      %v2801 = vpop.permute.xlu0 %2800
      %2802 = vrot.lane.b32.xlu0 %v1326, 64
      %v2803 = vpop.permute.xlu0 %2802
      %2804 = vrot.lane.b32.xlu0 %v1327, 64
      %v2805 = vpop.permute.xlu0 %2804
      %2806 = vrot.lane.b32.xlu0 %v1328, 64
      %v2807 = vpop.permute.xlu0 %2806
      %2808 = vrot.lane.b32.xlu0 %v1329, 64
      %v2809 = vpop.permute.xlu0 %2808
      %2810 = vrot.lane.b32.xlu0 %v1330, 64
      %v2811 = vpop.permute.xlu0 %2810
      %2812 = vrot.lane.b32.xlu0 %v1331, 64
      %v2813 = vpop.permute.xlu0 %2812
      %2814 = vrot.lane.b32.xlu0 %v1332, 64
      %v2815 = vpop.permute.xlu0 %2814
      %2816 = vrot.lane.b32.xlu0 %v1333, 64
      %v2817 = vpop.permute.xlu0 %2816
      %2818 = vrot.lane.b32.xlu0 %v1334, 64
      %v2819 = vpop.permute.xlu0 %2818
      %2820 = vrot.lane.b32.xlu0 %v1335, 64
      %v2821 = vpop.permute.xlu0 %2820
      %2822 = vrot.lane.b32.xlu0 %v1336, 64
      %v2823 = vpop.permute.xlu0 %2822
      %2824 = vrot.lane.b32.xlu0 %v1337, 64
      %v2825 = vpop.permute.xlu0 %2824
      %2826 = vrot.lane.b32.xlu0 %v1338, 64
      %v2827 = vpop.permute.xlu0 %2826
      %2828 = vrot.lane.b32.xlu0 %v1339, 64
      %v2829 = vpop.permute.xlu0 %2828
      %2830 = vrot.lane.b32.xlu0 %v1340, 64
      %v2831 = vpop.permute.xlu0 %2830
      %2832 = vrot.lane.b32.xlu0 %v1341, 64
      %v2833 = vpop.permute.xlu0 %2832
      %2834 = vrot.lane.b32.xlu0 %v1342, 64
      %v2835 = vpop.permute.xlu0 %2834
      %2836 = vrot.lane.b32.xlu0 %v1343, 64
      %v2837 = vpop.permute.xlu0 %2836
      %2838 = vrot.lane.b32.xlu0 %v1344, 64
      %v2839 = vpop.permute.xlu0 %2838
      %2840 = vrot.lane.b32.xlu0 %v1345, 64
      %v2841 = vpop.permute.xlu0 %2840
      %2842 = vrot.lane.b32.xlu0 %v1346, 64
      %v2843 = vpop.permute.xlu0 %2842
      %2844 = vrot.lane.b32.xlu0 %v1347, 64
      %v2845 = vpop.permute.xlu0 %2844
      %2846 = vrot.lane.b32.xlu0 %v1348, 64
      %v2847 = vpop.permute.xlu0 %2846
      %2848 = vrot.lane.b32.xlu0 %v1349, 64
      %v2849 = vpop.permute.xlu0 %2848
      %2850 = vrot.lane.b32.xlu0 %v1350, 64
      %v2851 = vpop.permute.xlu0 %2850
      %2852 = vrot.lane.b32.xlu0 %v1351, 64
      %v2853 = vpop.permute.xlu0 %2852
      %2854 = vrot.lane.b32.xlu0 %v1352, 64
      %v2855 = vpop.permute.xlu0 %2854
      %2856 = vrot.lane.b32.xlu0 %v1353, 64
      %v2857 = vpop.permute.xlu0 %2856
      %2858 = vrot.lane.b32.xlu0 %v1354, 64
      %v2859 = vpop.permute.xlu0 %2858
      %2860 = vrot.lane.b32.xlu0 %v1355, 64
      %v2861 = vpop.permute.xlu0 %2860
      %2926 = vrot.lane.b32.xlu0 %v1356, 72
      %v2927 = vpop.permute.xlu0 %2926
      %2928 = vrot.lane.b32.xlu0 %v1357, 72
      %v2929 = vpop.permute.xlu0 %2928
      %2930 = vrot.lane.b32.xlu0 %v1358, 72
      %v2931 = vpop.permute.xlu0 %2930
      %2932 = vrot.lane.b32.xlu0 %v1359, 72
      %v2933 = vpop.permute.xlu0 %2932
      %2934 = vrot.lane.b32.xlu0 %v1360, 72
      %v2935 = vpop.permute.xlu0 %2934
      %2936 = vrot.lane.b32.xlu0 %v1361, 72
      %v2937 = vpop.permute.xlu0 %2936
      %2938 = vrot.lane.b32.xlu0 %v1362, 72
      %v2939 = vpop.permute.xlu0 %2938
      %2940 = vrot.lane.b32.xlu0 %v1363, 72
      %v2941 = vpop.permute.xlu0 %2940
      %2942 = vrot.lane.b32.xlu0 %v1364, 72
      %v2943 = vpop.permute.xlu0 %2942
      %2944 = vrot.lane.b32.xlu0 %v1365, 72
      %v2945 = vpop.permute.xlu0 %2944
      %2946 = vrot.lane.b32.xlu0 %v1366, 72
      %v2947 = vpop.permute.xlu0 %2946
      %2948 = vrot.lane.b32.xlu0 %v1367, 72
      %v2949 = vpop.permute.xlu0 %2948
      %2950 = vrot.lane.b32.xlu0 %v1368, 72
      %v2951 = vpop.permute.xlu0 %2950
      %2952 = vrot.lane.b32.xlu0 %v1369, 72
      %v2953 = vpop.permute.xlu0 %2952
      %2954 = vrot.lane.b32.xlu0 %v1370, 72
      %v2955 = vpop.permute.xlu0 %2954
      %2956 = vrot.lane.b32.xlu0 %v1371, 72
      %v2957 = vpop.permute.xlu0 %2956
      %2958 = vrot.lane.b32.xlu0 %v1372, 72
      %v2959 = vpop.permute.xlu0 %2958
      %2960 = vrot.lane.b32.xlu0 %v1373, 72
      %v2961 = vpop.permute.xlu0 %2960
      %2962 = vrot.lane.b32.xlu0 %v1374, 72
      %v2963 = vpop.permute.xlu0 %2962
      %2964 = vrot.lane.b32.xlu0 %v1375, 72
      %v2965 = vpop.permute.xlu0 %2964
      %2966 = vrot.lane.b32.xlu0 %v1376, 72
      %v2967 = vpop.permute.xlu0 %2966
      %2968 = vrot.lane.b32.xlu0 %v1377, 72
      %v2969 = vpop.permute.xlu0 %2968
      %2970 = vrot.lane.b32.xlu0 %v1378, 72
      %v2971 = vpop.permute.xlu0 %2970
      %2972 = vrot.lane.b32.xlu0 %v1379, 72
      %v2973 = vpop.permute.xlu0 %2972
      %2974 = vrot.lane.b32.xlu0 %v1380, 72
      %v2975 = vpop.permute.xlu0 %2974
      %2976 = vrot.lane.b32.xlu0 %v1381, 72
      %v2977 = vpop.permute.xlu0 %2976
      %2978 = vrot.lane.b32.xlu0 %v1382, 72
      %v2979 = vpop.permute.xlu0 %2978
      %2980 = vrot.lane.b32.xlu0 %v1383, 72
      %v2981 = vpop.permute.xlu0 %2980
      %2982 = vrot.lane.b32.xlu0 %v1384, 72
      %v2983 = vpop.permute.xlu0 %2982
      %2984 = vrot.lane.b32.xlu0 %v1385, 72
      %v2985 = vpop.permute.xlu0 %2984
      %2986 = vrot.lane.b32.xlu0 %v1386, 72
      %v2987 = vpop.permute.xlu0 %2986
      %2988 = vrot.lane.b32.xlu0 %v1387, 72
      %v2989 = vpop.permute.xlu0 %2988
      %3054 = vrot.lane.b32.xlu0 %v1388, 80
      %v3055 = vpop.permute.xlu0 %3054
      %3056 = vrot.lane.b32.xlu0 %v1389, 80
      %v3057 = vpop.permute.xlu0 %3056
      %3058 = vrot.lane.b32.xlu0 %v1390, 80
      %v3059 = vpop.permute.xlu0 %3058
      %3060 = vrot.lane.b32.xlu0 %v1391, 80
      %v3061 = vpop.permute.xlu0 %3060
      %3062 = vrot.lane.b32.xlu0 %v1392, 80
      %v3063 = vpop.permute.xlu0 %3062
      %3064 = vrot.lane.b32.xlu0 %v1393, 80
      %v3065 = vpop.permute.xlu0 %3064
      %3066 = vrot.lane.b32.xlu0 %v1394, 80
      %v3067 = vpop.permute.xlu0 %3066
      %3068 = vrot.lane.b32.xlu0 %v1395, 80
      %v3069 = vpop.permute.xlu0 %3068
      %3070 = vrot.lane.b32.xlu0 %v1396, 80
      %v3071 = vpop.permute.xlu0 %3070
      %3072 = vrot.lane.b32.xlu0 %v1397, 80
      %v3073 = vpop.permute.xlu0 %3072
      %3074 = vrot.lane.b32.xlu0 %v1398, 80
      %v3075 = vpop.permute.xlu0 %3074
      %3076 = vrot.lane.b32.xlu0 %v1399, 80
      %v3077 = vpop.permute.xlu0 %3076
      %3078 = vrot.lane.b32.xlu0 %v1400, 80
      %v3079 = vpop.permute.xlu0 %3078
      %3080 = vrot.lane.b32.xlu0 %v1401, 80
      %v3081 = vpop.permute.xlu0 %3080
      %3082 = vrot.lane.b32.xlu0 %v1402, 80
      %v3083 = vpop.permute.xlu0 %3082
      %3084 = vrot.lane.b32.xlu0 %v1403, 80
      %v3085 = vpop.permute.xlu0 %3084
      %3086 = vrot.lane.b32.xlu0 %v1404, 80
      %v3087 = vpop.permute.xlu0 %3086
      %3088 = vrot.lane.b32.xlu0 %v1405, 80
      %v3089 = vpop.permute.xlu0 %3088
      %3090 = vrot.lane.b32.xlu0 %v1406, 80
      %v3091 = vpop.permute.xlu0 %3090
      %3092 = vrot.lane.b32.xlu0 %v1407, 80
      %v3093 = vpop.permute.xlu0 %3092
      %3094 = vrot.lane.b32.xlu0 %v1408, 80
      %v3095 = vpop.permute.xlu0 %3094
      %3096 = vrot.lane.b32.xlu0 %v1409, 80
      %v3097 = vpop.permute.xlu0 %3096
      %3098 = vrot.lane.b32.xlu0 %v1410, 80
      %v3099 = vpop.permute.xlu0 %3098
      %3100 = vrot.lane.b32.xlu0 %v1411, 80
      %v3101 = vpop.permute.xlu0 %3100
      %3102 = vrot.lane.b32.xlu0 %v1412, 80
      %v3103 = vpop.permute.xlu0 %3102
      %3104 = vrot.lane.b32.xlu0 %v1413, 80
      %v3105 = vpop.permute.xlu0 %3104
      %3106 = vrot.lane.b32.xlu0 %v1414, 80
      %v3107 = vpop.permute.xlu0 %3106
      %3108 = vrot.lane.b32.xlu0 %v1415, 80
      %v3109 = vpop.permute.xlu0 %3108
      %3110 = vrot.lane.b32.xlu0 %v1416, 80
      %v3111 = vpop.permute.xlu0 %3110
      %3112 = vrot.lane.b32.xlu0 %v1417, 80
      %v3113 = vpop.permute.xlu0 %3112
      %3114 = vrot.lane.b32.xlu0 %v1418, 80
      %v3115 = vpop.permute.xlu0 %3114
      %3116 = vrot.lane.b32.xlu0 %v1419, 80
      %v3117 = vpop.permute.xlu0 %3116
      %3182 = vrot.lane.b32.xlu0 %v1420, 88
      %v3183 = vpop.permute.xlu0 %3182
      %3184 = vrot.lane.b32.xlu0 %v1421, 88
      %v3185 = vpop.permute.xlu0 %3184
      %3186 = vrot.lane.b32.xlu0 %v1422, 88
      %v3187 = vpop.permute.xlu0 %3186
      %3188 = vrot.lane.b32.xlu0 %v1423, 88
      %v3189 = vpop.permute.xlu0 %3188
      %3190 = vrot.lane.b32.xlu0 %v1424, 88
      %v3191 = vpop.permute.xlu0 %3190
      %3192 = vrot.lane.b32.xlu0 %v1425, 88
      %v3193 = vpop.permute.xlu0 %3192
      %3194 = vrot.lane.b32.xlu0 %v1426, 88
      %v3195 = vpop.permute.xlu0 %3194
      %3196 = vrot.lane.b32.xlu0 %v1427, 88
      %v3197 = vpop.permute.xlu0 %3196
      %3198 = vrot.lane.b32.xlu0 %v1428, 88
      %v3199 = vpop.permute.xlu0 %3198
      %3200 = vrot.lane.b32.xlu0 %v1429, 88
      %v3201 = vpop.permute.xlu0 %3200
      %3202 = vrot.lane.b32.xlu0 %v1430, 88
      %v3203 = vpop.permute.xlu0 %3202
      %3204 = vrot.lane.b32.xlu0 %v1431, 88
      %v3205 = vpop.permute.xlu0 %3204
      %3206 = vrot.lane.b32.xlu0 %v1432, 88
      %v3207 = vpop.permute.xlu0 %3206
      %3208 = vrot.lane.b32.xlu0 %v1433, 88
      %v3209 = vpop.permute.xlu0 %3208
      %3210 = vrot.lane.b32.xlu0 %v1434, 88
      %v3211 = vpop.permute.xlu0 %3210
      %3212 = vrot.lane.b32.xlu0 %v1435, 88
      %v3213 = vpop.permute.xlu0 %3212
      %3214 = vrot.lane.b32.xlu0 %v1436, 88
      %v3215 = vpop.permute.xlu0 %3214
      %3216 = vrot.lane.b32.xlu0 %v1437, 88
      %v3217 = vpop.permute.xlu0 %3216
      %3218 = vrot.lane.b32.xlu0 %v1438, 88
      %v3219 = vpop.permute.xlu0 %3218
      %3220 = vrot.lane.b32.xlu0 %v1439, 88
      %v3221 = vpop.permute.xlu0 %3220
      %3222 = vrot.lane.b32.xlu0 %v1440, 88
      %v3223 = vpop.permute.xlu0 %3222
      %3224 = vrot.lane.b32.xlu0 %v1441, 88
      %v3225 = vpop.permute.xlu0 %3224
      %3226 = vrot.lane.b32.xlu0 %v1442, 88
      %v3227 = vpop.permute.xlu0 %3226
      %3228 = vrot.lane.b32.xlu0 %v1443, 88
      %v3229 = vpop.permute.xlu0 %3228
      %3230 = vrot.lane.b32.xlu0 %v1444, 88
      %v3231 = vpop.permute.xlu0 %3230
      %3232 = vrot.lane.b32.xlu0 %v1445, 88
      %v3233 = vpop.permute.xlu0 %3232
      %3234 = vrot.lane.b32.xlu0 %v1446, 88
      %v3235 = vpop.permute.xlu0 %3234
      %3236 = vrot.lane.b32.xlu0 %v1447, 88
      %v3237 = vpop.permute.xlu0 %3236
      %3238 = vrot.lane.b32.xlu0 %v1448, 88
      %v3239 = vpop.permute.xlu0 %3238
      %3240 = vrot.lane.b32.xlu0 %v1449, 88
      %v3241 = vpop.permute.xlu0 %3240
      %3242 = vrot.lane.b32.xlu0 %v1450, 88
      %v3243 = vpop.permute.xlu0 %3242
      %3244 = vrot.lane.b32.xlu0 %v1451, 88
      %v3245 = vpop.permute.xlu0 %3244
      %3310 = vrot.lane.b32.xlu0 %v1452, 96
      %v3311 = vpop.permute.xlu0 %3310
      %3312 = vrot.lane.b32.xlu0 %v1453, 96
      %v3313 = vpop.permute.xlu0 %3312
      %3314 = vrot.lane.b32.xlu0 %v1454, 96
      %v3315 = vpop.permute.xlu0 %3314
      %3316 = vrot.lane.b32.xlu0 %v1455, 96
      %v3317 = vpop.permute.xlu0 %3316
      %3318 = vrot.lane.b32.xlu0 %v1456, 96
      %v3319 = vpop.permute.xlu0 %3318
      %3320 = vrot.lane.b32.xlu0 %v1457, 96
      %v3321 = vpop.permute.xlu0 %3320
      %3322 = vrot.lane.b32.xlu0 %v1458, 96
      %v3323 = vpop.permute.xlu0 %3322
      %3324 = vrot.lane.b32.xlu0 %v1459, 96
      %v3325 = vpop.permute.xlu0 %3324
      %3326 = vrot.lane.b32.xlu0 %v1460, 96
      %v3327 = vpop.permute.xlu0 %3326
      %3328 = vrot.lane.b32.xlu0 %v1461, 96
      %v3329 = vpop.permute.xlu0 %3328
      %3330 = vrot.lane.b32.xlu0 %v1462, 96
      %v3331 = vpop.permute.xlu0 %3330
      %3332 = vrot.lane.b32.xlu0 %v1463, 96
      %v3333 = vpop.permute.xlu0 %3332
      %3334 = vrot.lane.b32.xlu0 %v1464, 96
      %v3335 = vpop.permute.xlu0 %3334
      %3336 = vrot.lane.b32.xlu0 %v1465, 96
      %v3337 = vpop.permute.xlu0 %3336
      %3338 = vrot.lane.b32.xlu0 %v1466, 96
      %v3339 = vpop.permute.xlu0 %3338
      %3340 = vrot.lane.b32.xlu0 %v1467, 96
      %v3341 = vpop.permute.xlu0 %3340
      %3342 = vrot.lane.b32.xlu0 %v1468, 96
      %v3343 = vpop.permute.xlu0 %3342
      %3344 = vrot.lane.b32.xlu0 %v1469, 96
      %v3345 = vpop.permute.xlu0 %3344
      %3346 = vrot.lane.b32.xlu0 %v1470, 96
      %v3347 = vpop.permute.xlu0 %3346
      %3348 = vrot.lane.b32.xlu0 %v1471, 96
      %v3349 = vpop.permute.xlu0 %3348
      %3350 = vrot.lane.b32.xlu0 %v1472, 96
      %v3351 = vpop.permute.xlu0 %3350
      %3352 = vrot.lane.b32.xlu0 %v1473, 96
      %v3353 = vpop.permute.xlu0 %3352
      %3354 = vrot.lane.b32.xlu0 %v1474, 96
      %v3355 = vpop.permute.xlu0 %3354
      %3356 = vrot.lane.b32.xlu0 %v1475, 96
      %v3357 = vpop.permute.xlu0 %3356
      %3358 = vrot.lane.b32.xlu0 %v1476, 96
      %v3359 = vpop.permute.xlu0 %3358
      %3360 = vrot.lane.b32.xlu0 %v1477, 96
      %v3361 = vpop.permute.xlu0 %3360
      %3362 = vrot.lane.b32.xlu0 %v1478, 96
      %v3363 = vpop.permute.xlu0 %3362
      %3364 = vrot.lane.b32.xlu0 %v1479, 96
      %v3365 = vpop.permute.xlu0 %3364
      %3366 = vrot.lane.b32.xlu0 %v1480, 96
      %v3367 = vpop.permute.xlu0 %3366
      %3368 = vrot.lane.b32.xlu0 %v1481, 96
      %v3369 = vpop.permute.xlu0 %3368
      %3370 = vrot.lane.b32.xlu0 %v1482, 96
      %v3371 = vpop.permute.xlu0 %3370
      %3372 = vrot.lane.b32.xlu0 %v1483, 96
      %v3373 = vpop.permute.xlu0 %3372
      %3438 = vrot.lane.b32.xlu0 %v1484, 104
      %v3439 = vpop.permute.xlu0 %3438
      %3440 = vrot.lane.b32.xlu0 %v1485, 104
      %v3441 = vpop.permute.xlu0 %3440
      %3442 = vrot.lane.b32.xlu0 %v1486, 104
      %v3443 = vpop.permute.xlu0 %3442
      %3444 = vrot.lane.b32.xlu0 %v1487, 104
      %v3445 = vpop.permute.xlu0 %3444
      %3446 = vrot.lane.b32.xlu0 %v1488, 104
      %v3447 = vpop.permute.xlu0 %3446
      %3448 = vrot.lane.b32.xlu0 %v1489, 104
      %v3449 = vpop.permute.xlu0 %3448
      %3450 = vrot.lane.b32.xlu0 %v1490, 104
      %v3451 = vpop.permute.xlu0 %3450
      %3452 = vrot.lane.b32.xlu0 %v1491, 104
      %v3453 = vpop.permute.xlu0 %3452
      %3454 = vrot.lane.b32.xlu0 %v1492, 104
      %v3455 = vpop.permute.xlu0 %3454
      %3456 = vrot.lane.b32.xlu0 %v1493, 104
      %v3457 = vpop.permute.xlu0 %3456
      %3458 = vrot.lane.b32.xlu0 %v1494, 104
      %v3459 = vpop.permute.xlu0 %3458
      %3460 = vrot.lane.b32.xlu0 %v1495, 104
      %v3461 = vpop.permute.xlu0 %3460
      %3462 = vrot.lane.b32.xlu0 %v1496, 104
      %v3463 = vpop.permute.xlu0 %3462
      %3464 = vrot.lane.b32.xlu0 %v1497, 104
      %v3465 = vpop.permute.xlu0 %3464
      %3466 = vrot.lane.b32.xlu0 %v1498, 104
      %v3467 = vpop.permute.xlu0 %3466
      %3468 = vrot.lane.b32.xlu0 %v1499, 104
      %v3469 = vpop.permute.xlu0 %3468
      %3470 = vrot.lane.b32.xlu0 %v1500, 104
      %v3471 = vpop.permute.xlu0 %3470
      %3472 = vrot.lane.b32.xlu0 %v1501, 104
      %v3473 = vpop.permute.xlu0 %3472
      %3474 = vrot.lane.b32.xlu0 %v1502, 104
      %v3475 = vpop.permute.xlu0 %3474
      %3476 = vrot.lane.b32.xlu0 %v1503, 104
      %v3477 = vpop.permute.xlu0 %3476
      %3478 = vrot.lane.b32.xlu0 %v1504, 104
      %v3479 = vpop.permute.xlu0 %3478
      %3480 = vrot.lane.b32.xlu0 %v1505, 104
      %v3481 = vpop.permute.xlu0 %3480
      %3482 = vrot.lane.b32.xlu0 %v1506, 104
      %v3483 = vpop.permute.xlu0 %3482
      %3484 = vrot.lane.b32.xlu0 %v1507, 104
      %v3485 = vpop.permute.xlu0 %3484
      %3486 = vrot.lane.b32.xlu0 %v1508, 104
      %v3487 = vpop.permute.xlu0 %3486
      %3488 = vrot.lane.b32.xlu0 %v1509, 104
      %v3489 = vpop.permute.xlu0 %3488
      %3490 = vrot.lane.b32.xlu0 %v1510, 104
      %v3491 = vpop.permute.xlu0 %3490
      %3492 = vrot.lane.b32.xlu0 %v1511, 104
      %v3493 = vpop.permute.xlu0 %3492
      %3494 = vrot.lane.b32.xlu0 %v1512, 104
      %v3495 = vpop.permute.xlu0 %3494
      %3496 = vrot.lane.b32.xlu0 %v1513, 104
      %v3497 = vpop.permute.xlu0 %3496
      %3498 = vrot.lane.b32.xlu0 %v1514, 104
      %v3499 = vpop.permute.xlu0 %3498
      %3500 = vrot.lane.b32.xlu0 %v1515, 104
      %v3501 = vpop.permute.xlu0 %3500
      %3566 = vrot.lane.b32.xlu0 %v1516, 112
      %v3567 = vpop.permute.xlu0 %3566
      %3568 = vrot.lane.b32.xlu0 %v1517, 112
      %v3569 = vpop.permute.xlu0 %3568
      %3570 = vrot.lane.b32.xlu0 %v1518, 112
      %v3571 = vpop.permute.xlu0 %3570
      %3572 = vrot.lane.b32.xlu0 %v1519, 112
      %v3573 = vpop.permute.xlu0 %3572
      %3574 = vrot.lane.b32.xlu0 %v1520, 112
      %v3575 = vpop.permute.xlu0 %3574
      %3576 = vrot.lane.b32.xlu0 %v1521, 112
      %v3577 = vpop.permute.xlu0 %3576
      %3578 = vrot.lane.b32.xlu0 %v1522, 112
      %v3579 = vpop.permute.xlu0 %3578
      %3580 = vrot.lane.b32.xlu0 %v1523, 112
      %v3581 = vpop.permute.xlu0 %3580
      %3582 = vrot.lane.b32.xlu0 %v1524, 112
      %v3583 = vpop.permute.xlu0 %3582
      %3584 = vrot.lane.b32.xlu0 %v1525, 112
      %v3585 = vpop.permute.xlu0 %3584
      %3586 = vrot.lane.b32.xlu0 %v1526, 112
      %v3587 = vpop.permute.xlu0 %3586
      %3588 = vrot.lane.b32.xlu0 %v1527, 112
      %v3589 = vpop.permute.xlu0 %3588
      %3590 = vrot.lane.b32.xlu0 %v1528, 112
      %v3591 = vpop.permute.xlu0 %3590
      %3592 = vrot.lane.b32.xlu0 %v1529, 112
      %v3593 = vpop.permute.xlu0 %3592
      %3594 = vrot.lane.b32.xlu0 %v1530, 112
      %v3595 = vpop.permute.xlu0 %3594
      %3596 = vrot.lane.b32.xlu0 %v1531, 112
      %v3597 = vpop.permute.xlu0 %3596
      %3598 = vrot.lane.b32.xlu0 %v1532, 112
      %v3599 = vpop.permute.xlu0 %3598
      %3600 = vrot.lane.b32.xlu0 %v1533, 112
      %v3601 = vpop.permute.xlu0 %3600
      %3602 = vrot.lane.b32.xlu0 %v1534, 112
      %v3603 = vpop.permute.xlu0 %3602
      %3604 = vrot.lane.b32.xlu0 %v1535, 112
      %v3605 = vpop.permute.xlu0 %3604
      %3606 = vrot.lane.b32.xlu0 %v1536, 112
      %v3607 = vpop.permute.xlu0 %3606
      %3608 = vrot.lane.b32.xlu0 %v1537, 112
      %v3609 = vpop.permute.xlu0 %3608
      %3610 = vrot.lane.b32.xlu0 %v1538, 112
      %v3611 = vpop.permute.xlu0 %3610
      %3612 = vrot.lane.b32.xlu0 %v1539, 112
      %v3613 = vpop.permute.xlu0 %3612
      %3614 = vrot.lane.b32.xlu0 %v1540, 112
      %v3615 = vpop.permute.xlu0 %3614
      %3616 = vrot.lane.b32.xlu0 %v1541, 112
      %v3617 = vpop.permute.xlu0 %3616
      %3618 = vrot.lane.b32.xlu0 %v1542, 112
      %v3619 = vpop.permute.xlu0 %3618
      %3620 = vrot.lane.b32.xlu0 %v1543, 112
      %v3621 = vpop.permute.xlu0 %3620
      %3622 = vrot.lane.b32.xlu0 %v1544, 112
      %v3623 = vpop.permute.xlu0 %3622
      %3624 = vrot.lane.b32.xlu0 %v1545, 112
      %v3625 = vpop.permute.xlu0 %3624
      %3626 = vrot.lane.b32.xlu0 %v1546, 112
      %v3627 = vpop.permute.xlu0 %3626
      %3628 = vrot.lane.b32.xlu0 %v1547, 112
      %v3629 = vpop.permute.xlu0 %3628
      %3694 = vrot.lane.b32.xlu0 %v1549, 120
      %v3695 = vpop.permute.xlu0 %3694
      %3696 = vrot.lane.b32.xlu0 %v1550, 120
      %v3697 = vpop.permute.xlu0 %3696
      %3698 = vrot.lane.b32.xlu0 %v1551, 120
      %v3699 = vpop.permute.xlu0 %3698
      %3700 = vrot.lane.b32.xlu0 %v1552, 120
      %v3701 = vpop.permute.xlu0 %3700
      %3702 = vrot.lane.b32.xlu0 %v1553, 120
      %v3703 = vpop.permute.xlu0 %3702
      %3704 = vrot.lane.b32.xlu0 %v1554, 120
      %v3705 = vpop.permute.xlu0 %3704
      %3706 = vrot.lane.b32.xlu0 %v1555, 120
      %v3707 = vpop.permute.xlu0 %3706
      %3708 = vrot.lane.b32.xlu0 %v1556, 120
      %v3709 = vpop.permute.xlu0 %3708
      %3710 = vrot.lane.b32.xlu0 %v1557, 120
      %v3711 = vpop.permute.xlu0 %3710
      %3712 = vrot.lane.b32.xlu0 %v1558, 120
      %v3713 = vpop.permute.xlu0 %3712
      %3714 = vrot.lane.b32.xlu0 %v1559, 120
      %v3715 = vpop.permute.xlu0 %3714
      %3716 = vrot.lane.b32.xlu0 %v1560, 120
      %v3717 = vpop.permute.xlu0 %3716
      %3718 = vrot.lane.b32.xlu0 %v1561, 120
      %v3719 = vpop.permute.xlu0 %3718
      %3720 = vrot.lane.b32.xlu0 %v1562, 120
      %v3721 = vpop.permute.xlu0 %3720
      %3722 = vrot.lane.b32.xlu0 %v1563, 120
      %v3723 = vpop.permute.xlu0 %3722
      %3724 = vrot.lane.b32.xlu0 %v1564, 120
      %v3725 = vpop.permute.xlu0 %3724
      %3726 = vrot.lane.b32.xlu0 %v1565, 120
      %v3727 = vpop.permute.xlu0 %3726
      %3728 = vrot.lane.b32.xlu0 %v1566, 120
      %v3729 = vpop.permute.xlu0 %3728
      %3730 = vrot.lane.b32.xlu0 %v1567, 120
      %v3731 = vpop.permute.xlu0 %3730
      %3732 = vrot.lane.b32.xlu0 %v1568, 120
      %v3733 = vpop.permute.xlu0 %3732
      %3734 = vrot.lane.b32.xlu0 %v1569, 120
      %v3735 = vpop.permute.xlu0 %3734
      %3736 = vrot.lane.b32.xlu0 %v1570, 120
      %v3737 = vpop.permute.xlu0 %3736
      %3738 = vrot.lane.b32.xlu0 %v1571, 120
      %v3739 = vpop.permute.xlu0 %3738
      %3740 = vrot.lane.b32.xlu0 %v1572, 120
      %v3741 = vpop.permute.xlu0 %3740
      %3742 = vrot.lane.b32.xlu0 %v1573, 120
      %v3743 = vpop.permute.xlu0 %3742
      %3744 = vrot.lane.b32.xlu0 %v1574, 120
      %v3745 = vpop.permute.xlu0 %3744
      %3746 = vrot.lane.b32.xlu0 %v1575, 120
      %v3747 = vpop.permute.xlu0 %3746
      %3748 = vrot.lane.b32.xlu0 %v1576, 120
      %v3749 = vpop.permute.xlu0 %3748
      %3750 = vrot.lane.b32.xlu0 %v1577, 120
      %v3751 = vpop.permute.xlu0 %3750
      %3752 = vrot.lane.b32.xlu0 %v1578, 120
      %v3753 = vpop.permute.xlu0 %3752
      %3754 = vrot.lane.b32.xlu0 %v1579, 120
      %v3755 = vpop.permute.xlu0 %3754
      %3756 = vrot.lane.b32.xlu0 %v1580, 120
      %v3757 = vpop.permute.xlu0 %3756
      %v3790 = vsel %vm789, %v1067, %v1903
      %v3791 = vsel %vm789, %v1068, %v1905
      %v3792 = vsel %vm789, %v1069, %v1907
      %v3793 = vsel %vm789, %v1070, %v1909
      %v3794 = vsel %vm789, %v1071, %v1911
      %v3795 = vsel %vm789, %v1072, %v1913
      %v3796 = vsel %vm789, %v1073, %v1915
      %v3797 = vsel %vm789, %v1074, %v1917
      %v3798 = vsel %vm789, %v1075, %v1919
      %v3799 = vsel %vm789, %v1076, %v1921
      %v3800 = vsel %vm789, %v1077, %v1923
      %v3801 = vsel %vm789, %v1078, %v1925
      %v3802 = vsel %vm789, %v1079, %v1927
      %v3803 = vsel %vm789, %v1080, %v1929
      %v3804 = vsel %vm789, %v1081, %v1931
      %v3805 = vsel %vm789, %v1082, %v1933
      %v3806 = vsel %vm789, %v1083, %v1935
      %v3807 = vsel %vm789, %v1084, %v1937
      %v3808 = vsel %vm789, %v1085, %v1939
      %v3809 = vsel %vm789, %v1086, %v1941
      %v3810 = vsel %vm789, %v1087, %v1943
      %v3811 = vsel %vm789, %v1088, %v1945
      %v3812 = vsel %vm789, %v1089, %v1947
      %v3813 = vsel %vm789, %v1090, %v1949
      %v3814 = vsel %vm789, %v1091, %v1951
      %v3815 = vsel %vm789, %v1092, %v1953
      %v3816 = vsel %vm789, %v1093, %v1955
      %v3817 = vsel %vm789, %v1094, %v1957
      %v3818 = vsel %vm789, %v1095, %v1959
      %v3819 = vsel %vm789, %v1096, %v1961
      %v3820 = vsel %vm789, %v1097, %v1963
      %v3821 = vsel %vm789, %v1098, %v1965
      %v3822 = vsel %vm299, %v3790, %v2031
      %v3823 = vsel %vm299, %v3791, %v2033
      %v3824 = vsel %vm299, %v3792, %v2035
      %v3825 = vsel %vm299, %v3793, %v2037
      %v3826 = vsel %vm299, %v3794, %v2039
      %v3827 = vsel %vm299, %v3795, %v2041
      %v3828 = vsel %vm299, %v3796, %v2043
      %v3829 = vsel %vm299, %v3797, %v2045
      %v3830 = vsel %vm299, %v3798, %v2047
      %v3831 = vsel %vm299, %v3799, %v2049
      %v3832 = vsel %vm299, %v3800, %v2051
      %v3833 = vsel %vm299, %v3801, %v2053
      %v3834 = vsel %vm299, %v3802, %v2055
      %v3835 = vsel %vm299, %v3803, %v2057
      %v3836 = vsel %vm299, %v3804, %v2059
      %v3837 = vsel %vm299, %v3805, %v2061
      %v3838 = vsel %vm299, %v3806, %v2063
      %v3839 = vsel %vm299, %v3807, %v2065
      %v3840 = vsel %vm299, %v3808, %v2067
      %v3841 = vsel %vm299, %v3809, %v2069
      %v3842 = vsel %vm299, %v3810, %v2071
      %v3843 = vsel %vm299, %v3811, %v2073
      %v3844 = vsel %vm299, %v3812, %v2075
      %v3845 = vsel %vm299, %v3813, %v2077
      %v3846 = vsel %vm299, %v3814, %v2079
      %v3847 = vsel %vm299, %v3815, %v2081
      %v3848 = vsel %vm299, %v3816, %v2083
      %v3849 = vsel %vm299, %v3817, %v2085
      %v3850 = vsel %vm299, %v3818, %v2087
      %v3851 = vsel %vm299, %v3819, %v2089
      %v3852 = vsel %vm299, %v3820, %v2091
      %v3853 = vsel %vm299, %v3821, %v2093
      %vm3854 = vcmask 195584
      %v3855 = vsel %vm3854, %v3822, %v2159
      %v3856 = vsel %vm3854, %v3823, %v2161
      %v3857 = vsel %vm3854, %v3824, %v2163
      %v3858 = vsel %vm3854, %v3825, %v2165
      %v3859 = vsel %vm3854, %v3826, %v2167
      %v3860 = vsel %vm3854, %v3827, %v2169
      %v3861 = vsel %vm3854, %v3828, %v2171
      %v3862 = vsel %vm3854, %v3829, %v2173
      %v3863 = vsel %vm3854, %v3830, %v2175
      %v3864 = vsel %vm3854, %v3831, %v2177
      %v3865 = vsel %vm3854, %v3832, %v2179
      %v3866 = vsel %vm3854, %v3833, %v2181
      %v3867 = vsel %vm3854, %v3834, %v2183
      %v3868 = vsel %vm3854, %v3835, %v2185
      %v3869 = vsel %vm3854, %v3836, %v2187
      %v3870 = vsel %vm3854, %v3837, %v2189
      %v3871 = vsel %vm3854, %v3838, %v2191
      %v3872 = vsel %vm3854, %v3839, %v2193
      %v3873 = vsel %vm3854, %v3840, %v2195
      %v3874 = vsel %vm3854, %v3841, %v2197
      %v3875 = vsel %vm3854, %v3842, %v2199
      %v3876 = vsel %vm3854, %v3843, %v2201
      %v3877 = vsel %vm3854, %v3844, %v2203
      %v3878 = vsel %vm3854, %v3845, %v2205
      %v3879 = vsel %vm3854, %v3846, %v2207
      %v3880 = vsel %vm3854, %v3847, %v2209
      %v3881 = vsel %vm3854, %v3848, %v2211
      %v3882 = vsel %vm3854, %v3849, %v2213
      %v3883 = vsel %vm3854, %v3850, %v2215
      %v3884 = vsel %vm3854, %v3851, %v2217
      %v3885 = vsel %vm3854, %v3852, %v2219
      %v3886 = vsel %vm3854, %v3853, %v2221
      %vm3887 = vcmask 261120
      %v3888 = vsel %vm3887, %v3855, %v2287
      %v3889 = vsel %vm3887, %v3856, %v2289
      %v3890 = vsel %vm3887, %v3857, %v2291
      %v3891 = vsel %vm3887, %v3858, %v2293
      %v3892 = vsel %vm3887, %v3859, %v2295
      %v3893 = vsel %vm3887, %v3860, %v2297
      %v3894 = vsel %vm3887, %v3861, %v2299
      %v3895 = vsel %vm3887, %v3862, %v2301
      %v3896 = vsel %vm3887, %v3863, %v2303
      %v3897 = vsel %vm3887, %v3864, %v2305
      %v3898 = vsel %vm3887, %v3865, %v2307
      %v3899 = vsel %vm3887, %v3866, %v2309
      %v3900 = vsel %vm3887, %v3867, %v2311
      %v3901 = vsel %vm3887, %v3868, %v2313
      %v3902 = vsel %vm3887, %v3869, %v2315
      %v3903 = vsel %vm3887, %v3870, %v2317
      %v3904 = vsel %vm3887, %v3871, %v2319
      %v3905 = vsel %vm3887, %v3872, %v2321
      %v3906 = vsel %vm3887, %v3873, %v2323
      %v3907 = vsel %vm3887, %v3874, %v2325
      %v3908 = vsel %vm3887, %v3875, %v2327
      %v3909 = vsel %vm3887, %v3876, %v2329
      %v3910 = vsel %vm3887, %v3877, %v2331
      %v3911 = vsel %vm3887, %v3878, %v2333
      %v3912 = vsel %vm3887, %v3879, %v2335
      %v3913 = vsel %vm3887, %v3880, %v2337
      %v3914 = vsel %vm3887, %v3881, %v2339
      %v3915 = vsel %vm3887, %v3882, %v2341
      %v3916 = vsel %vm3887, %v3883, %v2343
      %v3917 = vsel %vm3887, %v3884, %v2345
      %v3918 = vsel %vm3887, %v3885, %v2347
      %v3919 = vsel %vm3887, %v3886, %v2349
      %vm3920 = vcmask 326656
      %v3921 = vsel %vm3920, %v3888, %v2415
      %v3922 = vsel %vm3920, %v3889, %v2417
      %v3923 = vsel %vm3920, %v3890, %v2419
      %v3924 = vsel %vm3920, %v3891, %v2421
      %v3925 = vsel %vm3920, %v3892, %v2423
      %v3926 = vsel %vm3920, %v3893, %v2425
      %v3927 = vsel %vm3920, %v3894, %v2427
      %v3928 = vsel %vm3920, %v3895, %v2429
      %v3929 = vsel %vm3920, %v3896, %v2431
      %v3930 = vsel %vm3920, %v3897, %v2433
      %v3931 = vsel %vm3920, %v3898, %v2435
      %v3932 = vsel %vm3920, %v3899, %v2437
      %v3933 = vsel %vm3920, %v3900, %v2439
      %v3934 = vsel %vm3920, %v3901, %v2441
      %v3935 = vsel %vm3920, %v3902, %v2443
      %v3936 = vsel %vm3920, %v3903, %v2445
      %v3937 = vsel %vm3920, %v3904, %v2447
      %v3938 = vsel %vm3920, %v3905, %v2449
      %v3939 = vsel %vm3920, %v3906, %v2451
      %v3940 = vsel %vm3920, %v3907, %v2453
      %v3941 = vsel %vm3920, %v3908, %v2455
      %v3942 = vsel %vm3920, %v3909, %v2457
      %v3943 = vsel %vm3920, %v3910, %v2459
      %v3944 = vsel %vm3920, %v3911, %v2461
      %v3945 = vsel %vm3920, %v3912, %v2463
      %v3946 = vsel %vm3920, %v3913, %v2465
      %v3947 = vsel %vm3920, %v3914, %v2467
      %v3948 = vsel %vm3920, %v3915, %v2469
      %v3949 = vsel %vm3920, %v3916, %v2471
      %v3950 = vsel %vm3920, %v3917, %v2473
      %v3951 = vsel %vm3920, %v3918, %v2475
      %v3952 = vsel %vm3920, %v3919, %v2477
      %vm3953 = vcmask 392192
      %v3954 = vsel %vm3953, %v3921, %v2543
      %v3955 = vsel %vm3953, %v3922, %v2545
      %v3956 = vsel %vm3953, %v3923, %v2547
      %v3957 = vsel %vm3953, %v3924, %v2549
      %v3958 = vsel %vm3953, %v3925, %v2551
      %v3959 = vsel %vm3953, %v3926, %v2553
      %v3960 = vsel %vm3953, %v3927, %v2555
      %v3961 = vsel %vm3953, %v3928, %v2557
      %v3962 = vsel %vm3953, %v3929, %v2559
      %v3963 = vsel %vm3953, %v3930, %v2561
      %v3964 = vsel %vm3953, %v3931, %v2563
      %v3965 = vsel %vm3953, %v3932, %v2565
      %v3966 = vsel %vm3953, %v3933, %v2567
      %v3967 = vsel %vm3953, %v3934, %v2569
      %v3968 = vsel %vm3953, %v3935, %v2571
      %v3969 = vsel %vm3953, %v3936, %v2573
      %v3970 = vsel %vm3953, %v3937, %v2575
      %v3971 = vsel %vm3953, %v3938, %v2577
      %v3972 = vsel %vm3953, %v3939, %v2579
      %v3973 = vsel %vm3953, %v3940, %v2581
      %v3974 = vsel %vm3953, %v3941, %v2583
      %v3975 = vsel %vm3953, %v3942, %v2585
      %v3976 = vsel %vm3953, %v3943, %v2587
      %v3977 = vsel %vm3953, %v3944, %v2589
      %v3978 = vsel %vm3953, %v3945, %v2591
      %v3979 = vsel %vm3953, %v3946, %v2593
      %v3980 = vsel %vm3953, %v3947, %v2595
      %v3981 = vsel %vm3953, %v3948, %v2597
      %v3982 = vsel %vm3953, %v3949, %v2599
      %v3983 = vsel %vm3953, %v3950, %v2601
      %v3984 = vsel %vm3953, %v3951, %v2603
      %v3985 = vsel %vm3953, %v3952, %v2605
      %vm3986 = vcmask 457728
      %v3987 = vsel %vm3986, %v3954, %v2671
      %v3988 = vsel %vm3986, %v3955, %v2673
      %v3989 = vsel %vm3986, %v3956, %v2675
      %v3990 = vsel %vm3986, %v3957, %v2677
      %v3991 = vsel %vm3986, %v3958, %v2679
      %v3992 = vsel %vm3986, %v3959, %v2681
      %v3993 = vsel %vm3986, %v3960, %v2683
      %v3994 = vsel %vm3986, %v3961, %v2685
      %v3995 = vsel %vm3986, %v3962, %v2687
      %v3996 = vsel %vm3986, %v3963, %v2689
      %v3997 = vsel %vm3986, %v3964, %v2691
      %v3998 = vsel %vm3986, %v3965, %v2693
      %v3999 = vsel %vm3986, %v3966, %v2695
      %v4000 = vsel %vm3986, %v3967, %v2697
      %v4001 = vsel %vm3986, %v3968, %v2699
      %v4002 = vsel %vm3986, %v3969, %v2701
      %v4003 = vsel %vm3986, %v3970, %v2703
      %v4004 = vsel %vm3986, %v3971, %v2705
      %v4005 = vsel %vm3986, %v3972, %v2707
      %v4006 = vsel %vm3986, %v3973, %v2709
      %v4007 = vsel %vm3986, %v3974, %v2711
      %v4008 = vsel %vm3986, %v3975, %v2713
      %v4009 = vsel %vm3986, %v3976, %v2715
      %v4010 = vsel %vm3986, %v3977, %v2717
      %v4011 = vsel %vm3986, %v3978, %v2719
      %v4012 = vsel %vm3986, %v3979, %v2721
      %v4013 = vsel %vm3986, %v3980, %v2723
      %v4014 = vsel %vm3986, %v3981, %v2725
      %v4015 = vsel %vm3986, %v3982, %v2727
      %v4016 = vsel %vm3986, %v3983, %v2729
      %v4017 = vsel %vm3986, %v3984, %v2731
      %v4018 = vsel %vm3986, %v3985, %v2733
      %vm4019 = vcmask 523264
      %v4020 = vsel %vm4019, %v3987, %v2799
      %v4021 = vsel %vm4019, %v3988, %v2801
      %v4022 = vsel %vm4019, %v3989, %v2803
      %v4023 = vsel %vm4019, %v3990, %v2805
      %v4024 = vsel %vm4019, %v3991, %v2807
      %v4025 = vsel %vm4019, %v3992, %v2809
      %v4026 = vsel %vm4019, %v3993, %v2811
      %v4027 = vsel %vm4019, %v3994, %v2813
      %v4028 = vsel %vm4019, %v3995, %v2815
      %v4029 = vsel %vm4019, %v3996, %v2817
      %v4030 = vsel %vm4019, %v3997, %v2819
      %v4031 = vsel %vm4019, %v3998, %v2821
      %v4032 = vsel %vm4019, %v3999, %v2823
      %v4033 = vsel %vm4019, %v4000, %v2825
      %v4034 = vsel %vm4019, %v4001, %v2827
      %v4035 = vsel %vm4019, %v4002, %v2829
      %v4036 = vsel %vm4019, %v4003, %v2831
      %v4037 = vsel %vm4019, %v4004, %v2833
      %v4038 = vsel %vm4019, %v4005, %v2835
      %v4039 = vsel %vm4019, %v4006, %v2837
      %v4040 = vsel %vm4019, %v4007, %v2839
      %v4041 = vsel %vm4019, %v4008, %v2841
      %v4042 = vsel %vm4019, %v4009, %v2843
      %v4043 = vsel %vm4019, %v4010, %v2845
      %v4044 = vsel %vm4019, %v4011, %v2847
      %v4045 = vsel %vm4019, %v4012, %v2849
      %v4046 = vsel %vm4019, %v4013, %v2851
      %v4047 = vsel %vm4019, %v4014, %v2853
      %v4048 = vsel %vm4019, %v4015, %v2855
      %v4049 = vsel %vm4019, %v4016, %v2857
      %v4050 = vsel %vm4019, %v4017, %v2859
      %v4051 = vsel %vm4019, %v4018, %v2861
      %vm4052 = vcmask 588800
      %v4053 = vsel %vm4052, %v4020, %v2927
      %v4054 = vsel %vm4052, %v4021, %v2929
      %v4055 = vsel %vm4052, %v4022, %v2931
      %v4056 = vsel %vm4052, %v4023, %v2933
      %v4057 = vsel %vm4052, %v4024, %v2935
      %v4058 = vsel %vm4052, %v4025, %v2937
      %v4059 = vsel %vm4052, %v4026, %v2939
      %v4060 = vsel %vm4052, %v4027, %v2941
      %v4061 = vsel %vm4052, %v4028, %v2943
      %v4062 = vsel %vm4052, %v4029, %v2945
      %v4063 = vsel %vm4052, %v4030, %v2947
      %v4064 = vsel %vm4052, %v4031, %v2949
      %v4065 = vsel %vm4052, %v4032, %v2951
      %v4066 = vsel %vm4052, %v4033, %v2953
      %v4067 = vsel %vm4052, %v4034, %v2955
      %v4068 = vsel %vm4052, %v4035, %v2957
      %v4069 = vsel %vm4052, %v4036, %v2959
      %v4070 = vsel %vm4052, %v4037, %v2961
      %v4071 = vsel %vm4052, %v4038, %v2963
      %v4072 = vsel %vm4052, %v4039, %v2965
      %v4073 = vsel %vm4052, %v4040, %v2967
      %v4074 = vsel %vm4052, %v4041, %v2969
      %v4075 = vsel %vm4052, %v4042, %v2971
      %v4076 = vsel %vm4052, %v4043, %v2973
      %v4077 = vsel %vm4052, %v4044, %v2975
      %v4078 = vsel %vm4052, %v4045, %v2977
      %v4079 = vsel %vm4052, %v4046, %v2979
      %v4080 = vsel %vm4052, %v4047, %v2981
      %v4081 = vsel %vm4052, %v4048, %v2983
      %v4082 = vsel %vm4052, %v4049, %v2985
      %v4083 = vsel %vm4052, %v4050, %v2987
      %v4084 = vsel %vm4052, %v4051, %v2989
      %vm4085 = vcmask 654336
      %v4086 = vsel %vm4085, %v4053, %v3055
      %v4087 = vsel %vm4085, %v4054, %v3057
      %v4088 = vsel %vm4085, %v4055, %v3059
      %v4089 = vsel %vm4085, %v4056, %v3061
      %v4090 = vsel %vm4085, %v4057, %v3063
      %v4091 = vsel %vm4085, %v4058, %v3065
      %v4092 = vsel %vm4085, %v4059, %v3067
      %v4093 = vsel %vm4085, %v4060, %v3069
      %v4094 = vsel %vm4085, %v4061, %v3071
      %v4095 = vsel %vm4085, %v4062, %v3073
      %v4096 = vsel %vm4085, %v4063, %v3075
      %v4097 = vsel %vm4085, %v4064, %v3077
      %v4098 = vsel %vm4085, %v4065, %v3079
      %v4099 = vsel %vm4085, %v4066, %v3081
      %v4100 = vsel %vm4085, %v4067, %v3083
      %v4101 = vsel %vm4085, %v4068, %v3085
      %v4102 = vsel %vm4085, %v4069, %v3087
      %v4103 = vsel %vm4085, %v4070, %v3089
      %v4104 = vsel %vm4085, %v4071, %v3091
      %v4105 = vsel %vm4085, %v4072, %v3093
      %v4106 = vsel %vm4085, %v4073, %v3095
      %v4107 = vsel %vm4085, %v4074, %v3097
      %v4108 = vsel %vm4085, %v4075, %v3099
      %v4109 = vsel %vm4085, %v4076, %v3101
      %v4110 = vsel %vm4085, %v4077, %v3103
      %v4111 = vsel %vm4085, %v4078, %v3105
      %v4112 = vsel %vm4085, %v4079, %v3107
      %v4113 = vsel %vm4085, %v4080, %v3109
      %v4114 = vsel %vm4085, %v4081, %v3111
      %v4115 = vsel %vm4085, %v4082, %v3113
      %v4116 = vsel %vm4085, %v4083, %v3115
      %v4117 = vsel %vm4085, %v4084, %v3117
      %vm4118 = vcmask 719872
      %v4119 = vsel %vm4118, %v4086, %v3183
      %v4120 = vsel %vm4118, %v4087, %v3185
      %v4121 = vsel %vm4118, %v4088, %v3187
      %v4122 = vsel %vm4118, %v4089, %v3189
      %v4123 = vsel %vm4118, %v4090, %v3191
      %v4124 = vsel %vm4118, %v4091, %v3193
      %v4125 = vsel %vm4118, %v4092, %v3195
      %v4126 = vsel %vm4118, %v4093, %v3197
      %v4127 = vsel %vm4118, %v4094, %v3199
      %v4128 = vsel %vm4118, %v4095, %v3201
      %v4129 = vsel %vm4118, %v4096, %v3203
      %v4130 = vsel %vm4118, %v4097, %v3205
      %v4131 = vsel %vm4118, %v4098, %v3207
      %v4132 = vsel %vm4118, %v4099, %v3209
      %v4133 = vsel %vm4118, %v4100, %v3211
      %v4134 = vsel %vm4118, %v4101, %v3213
      %v4135 = vsel %vm4118, %v4102, %v3215
      %v4136 = vsel %vm4118, %v4103, %v3217
      %v4137 = vsel %vm4118, %v4104, %v3219
      %v4138 = vsel %vm4118, %v4105, %v3221
      %v4139 = vsel %vm4118, %v4106, %v3223
      %v4140 = vsel %vm4118, %v4107, %v3225
      %v4141 = vsel %vm4118, %v4108, %v3227
      %v4142 = vsel %vm4118, %v4109, %v3229
      %v4143 = vsel %vm4118, %v4110, %v3231
      %v4144 = vsel %vm4118, %v4111, %v3233
      %v4145 = vsel %vm4118, %v4112, %v3235
      %v4146 = vsel %vm4118, %v4113, %v3237
      %v4147 = vsel %vm4118, %v4114, %v3239
      %v4148 = vsel %vm4118, %v4115, %v3241
      %v4149 = vsel %vm4118, %v4116, %v3243
      %v4150 = vsel %vm4118, %v4117, %v3245
      %vm4151 = vcmask 785408
      %v4152 = vsel %vm4151, %v4119, %v3311
      %v4153 = vsel %vm4151, %v4120, %v3313
      %v4154 = vsel %vm4151, %v4121, %v3315
      %v4155 = vsel %vm4151, %v4122, %v3317
      %v4156 = vsel %vm4151, %v4123, %v3319
      %v4157 = vsel %vm4151, %v4124, %v3321
      %v4158 = vsel %vm4151, %v4125, %v3323
      %v4159 = vsel %vm4151, %v4126, %v3325
      %v4160 = vsel %vm4151, %v4127, %v3327
      %v4161 = vsel %vm4151, %v4128, %v3329
      %v4162 = vsel %vm4151, %v4129, %v3331
      %v4163 = vsel %vm4151, %v4130, %v3333
      %v4164 = vsel %vm4151, %v4131, %v3335
      %v4165 = vsel %vm4151, %v4132, %v3337
      %v4166 = vsel %vm4151, %v4133, %v3339
      %v4167 = vsel %vm4151, %v4134, %v3341
      %v4168 = vsel %vm4151, %v4135, %v3343
      %v4169 = vsel %vm4151, %v4136, %v3345
      %v4170 = vsel %vm4151, %v4137, %v3347
      %v4171 = vsel %vm4151, %v4138, %v3349
      %v4172 = vsel %vm4151, %v4139, %v3351
      %v4173 = vsel %vm4151, %v4140, %v3353
      %v4174 = vsel %vm4151, %v4141, %v3355
      %v4175 = vsel %vm4151, %v4142, %v3357
      %v4176 = vsel %vm4151, %v4143, %v3359
      %v4177 = vsel %vm4151, %v4144, %v3361
      %v4178 = vsel %vm4151, %v4145, %v3363
      %v4179 = vsel %vm4151, %v4146, %v3365
      %v4180 = vsel %vm4151, %v4147, %v3367
      %v4181 = vsel %vm4151, %v4148, %v3369
      %v4182 = vsel %vm4151, %v4149, %v3371
      %v4183 = vsel %vm4151, %v4150, %v3373
      %vm4184 = vcmask 850944
      %v4185 = vsel %vm4184, %v4152, %v3439
      %v4186 = vsel %vm4184, %v4153, %v3441
      %v4187 = vsel %vm4184, %v4154, %v3443
      %v4188 = vsel %vm4184, %v4155, %v3445
      %v4189 = vsel %vm4184, %v4156, %v3447
      %v4190 = vsel %vm4184, %v4157, %v3449
      %v4191 = vsel %vm4184, %v4158, %v3451
      %v4192 = vsel %vm4184, %v4159, %v3453
      %v4193 = vsel %vm4184, %v4160, %v3455
      %v4194 = vsel %vm4184, %v4161, %v3457
      %v4195 = vsel %vm4184, %v4162, %v3459
      %v4196 = vsel %vm4184, %v4163, %v3461
      %v4197 = vsel %vm4184, %v4164, %v3463
      %v4198 = vsel %vm4184, %v4165, %v3465
      %v4199 = vsel %vm4184, %v4166, %v3467
      %v4200 = vsel %vm4184, %v4167, %v3469
      %v4201 = vsel %vm4184, %v4168, %v3471
      %v4202 = vsel %vm4184, %v4169, %v3473
      %v4203 = vsel %vm4184, %v4170, %v3475
      %v4204 = vsel %vm4184, %v4171, %v3477
      %v4205 = vsel %vm4184, %v4172, %v3479
      %v4206 = vsel %vm4184, %v4173, %v3481
      %v4207 = vsel %vm4184, %v4174, %v3483
      %v4208 = vsel %vm4184, %v4175, %v3485
      %v4209 = vsel %vm4184, %v4176, %v3487
      %v4210 = vsel %vm4184, %v4177, %v3489
      %v4211 = vsel %vm4184, %v4178, %v3491
      %v4212 = vsel %vm4184, %v4179, %v3493
      %v4213 = vsel %vm4184, %v4180, %v3495
      %v4214 = vsel %vm4184, %v4181, %v3497
      %v4215 = vsel %vm4184, %v4182, %v3499
      %v4216 = vsel %vm4184, %v4183, %v3501
      %vm4217 = vcmask 916480
      %v4218 = vsel %vm4217, %v4185, %v3567
      %v4219 = vsel %vm4217, %v4186, %v3569
      %v4220 = vsel %vm4217, %v4187, %v3571
      %v4221 = vsel %vm4217, %v4188, %v3573
      %v4222 = vsel %vm4217, %v4189, %v3575
      %v4223 = vsel %vm4217, %v4190, %v3577
      %v4224 = vsel %vm4217, %v4191, %v3579
      %v4225 = vsel %vm4217, %v4192, %v3581
      %v4226 = vsel %vm4217, %v4193, %v3583
      %v4227 = vsel %vm4217, %v4194, %v3585
      %v4228 = vsel %vm4217, %v4195, %v3587
      %v4229 = vsel %vm4217, %v4196, %v3589
      %v4230 = vsel %vm4217, %v4197, %v3591
      %v4231 = vsel %vm4217, %v4198, %v3593
      %v4232 = vsel %vm4217, %v4199, %v3595
      %v4233 = vsel %vm4217, %v4200, %v3597
      %v4234 = vsel %vm4217, %v4201, %v3599
      %v4235 = vsel %vm4217, %v4202, %v3601
      %v4236 = vsel %vm4217, %v4203, %v3603
      %v4237 = vsel %vm4217, %v4204, %v3605
      %v4238 = vsel %vm4217, %v4205, %v3607
      %v4239 = vsel %vm4217, %v4206, %v3609
      %v4240 = vsel %vm4217, %v4207, %v3611
      %v4241 = vsel %vm4217, %v4208, %v3613
      %v4242 = vsel %vm4217, %v4209, %v3615
      %v4243 = vsel %vm4217, %v4210, %v3617
      %v4244 = vsel %vm4217, %v4211, %v3619
      %v4245 = vsel %vm4217, %v4212, %v3621
      %v4246 = vsel %vm4217, %v4213, %v3623
      %v4247 = vsel %vm4217, %v4214, %v3625
      %v4248 = vsel %vm4217, %v4215, %v3627
      %v4249 = vsel %vm4217, %v4216, %v3629
      %vm4250 = vcmask 982016
      %v4251 = vsel %vm4250, %v4218, %v3695
      %v4252 = vsel %vm4250, %v4219, %v3697
      %v4253 = vsel %vm4250, %v4220, %v3699
      %v4254 = vsel %vm4250, %v4221, %v3701
      %v4255 = vsel %vm4250, %v4222, %v3703
      %v4256 = vsel %vm4250, %v4223, %v3705
      %v4257 = vsel %vm4250, %v4224, %v3707
      %v4258 = vsel %vm4250, %v4225, %v3709
      %v4259 = vsel %vm4250, %v4226, %v3711
      %v4260 = vsel %vm4250, %v4227, %v3713
      %v4261 = vsel %vm4250, %v4228, %v3715
      %v4262 = vsel %vm4250, %v4229, %v3717
      %v4263 = vsel %vm4250, %v4230, %v3719
      %v4264 = vsel %vm4250, %v4231, %v3721
      %v4265 = vsel %vm4250, %v4232, %v3723
      %v4266 = vsel %vm4250, %v4233, %v3725
      %v4267 = vsel %vm4250, %v4234, %v3727
      %v4268 = vsel %vm4250, %v4235, %v3729
      %v4269 = vsel %vm4250, %v4236, %v3731
      %v4270 = vsel %vm4250, %v4237, %v3733
      %v4271 = vsel %vm4250, %v4238, %v3735
      %v4272 = vsel %vm4250, %v4239, %v3737
      %v4273 = vsel %vm4250, %v4240, %v3739
      %v4274 = vsel %vm4250, %v4241, %v3741
      %v4275 = vsel %vm4250, %v4242, %v3743
      %v4276 = vsel %vm4250, %v4243, %v3745
      %v4277 = vsel %vm4250, %v4244, %v3747
      %v4278 = vsel %vm4250, %v4245, %v3749
      %v4279 = vsel %vm4250, %v4246, %v3751
      %v4280 = vsel %vm4250, %v4247, %v3753
      %v4281 = vsel %vm4250, %v4248, %v3755
      %v4282 = vsel %vm4250, %v4249, %v3757
      %4315 = vrot.lane.b32.xlu0 %v1613, 8
      %v4316 = vpop.permute.xlu0 %4315
      %4317 = vrot.lane.b32.xlu0 %v1614, 8
      %v4318 = vpop.permute.xlu0 %4317
      %4319 = vrot.lane.b32.xlu0 %v1615, 8
      %v4320 = vpop.permute.xlu0 %4319
      %4321 = vrot.lane.b32.xlu0 %v1616, 8
      %v4322 = vpop.permute.xlu0 %4321
      %4323 = vrot.lane.b32.xlu0 %v1617, 8
      %v4324 = vpop.permute.xlu0 %4323
      %4325 = vrot.lane.b32.xlu0 %v1618, 8
      %v4326 = vpop.permute.xlu0 %4325
      %4327 = vrot.lane.b32.xlu0 %v1619, 8
      %v4328 = vpop.permute.xlu0 %4327
      %4329 = vrot.lane.b32.xlu0 %v1620, 8
      %v4330 = vpop.permute.xlu0 %4329
      %4331 = vrot.lane.b32.xlu0 %v1621, 8
      %v4332 = vpop.permute.xlu0 %4331
      %4333 = vrot.lane.b32.xlu0 %v1622, 8
      %v4334 = vpop.permute.xlu0 %4333
      %4335 = vrot.lane.b32.xlu0 %v1623, 8
      %v4336 = vpop.permute.xlu0 %4335
      %4337 = vrot.lane.b32.xlu0 %v1624, 8
      %v4338 = vpop.permute.xlu0 %4337
      %4339 = vrot.lane.b32.xlu0 %v1625, 8
      %v4340 = vpop.permute.xlu0 %4339
      %4341 = vrot.lane.b32.xlu0 %v1626, 8
      %v4342 = vpop.permute.xlu0 %4341
      %4343 = vrot.lane.b32.xlu0 %v1627, 8
      %v4344 = vpop.permute.xlu0 %4343
      %4345 = vrot.lane.b32.xlu0 %v1628, 8
      %v4346 = vpop.permute.xlu0 %4345
      %4347 = vrot.lane.b32.xlu0 %v1629, 8
      %v4348 = vpop.permute.xlu0 %4347
      %4349 = vrot.lane.b32.xlu0 %v1630, 8
      %v4350 = vpop.permute.xlu0 %4349
      %4351 = vrot.lane.b32.xlu0 %v1631, 8
      %v4352 = vpop.permute.xlu0 %4351
      %4353 = vrot.lane.b32.xlu0 %v1632, 8
      %v4354 = vpop.permute.xlu0 %4353
      %4355 = vrot.lane.b32.xlu0 %v1633, 8
      %v4356 = vpop.permute.xlu0 %4355
      %4357 = vrot.lane.b32.xlu0 %v1634, 8
      %v4358 = vpop.permute.xlu0 %4357
      %4359 = vrot.lane.b32.xlu0 %v1635, 8
      %v4360 = vpop.permute.xlu0 %4359
      %4361 = vrot.lane.b32.xlu0 %v1636, 8
      %v4362 = vpop.permute.xlu0 %4361
      %4363 = vrot.lane.b32.xlu0 %v1637, 8
      %v4364 = vpop.permute.xlu0 %4363
      %4365 = vrot.lane.b32.xlu0 %v1638, 8
      %v4366 = vpop.permute.xlu0 %4365
      %4367 = vrot.lane.b32.xlu0 %v1639, 8
      %v4368 = vpop.permute.xlu0 %4367
      %4369 = vrot.lane.b32.xlu0 %v1640, 8
      %v4370 = vpop.permute.xlu0 %4369
      %4371 = vrot.lane.b32.xlu0 %v1641, 8
      %v4372 = vpop.permute.xlu0 %4371
      %4373 = vrot.lane.b32.xlu0 %v1642, 8
      %v4374 = vpop.permute.xlu0 %4373
      %4375 = vrot.lane.b32.xlu0 %v1643, 8
      %v4376 = vpop.permute.xlu0 %4375
      %4377 = vrot.lane.b32.xlu0 %v1644, 8
      %v4378 = vpop.permute.xlu0 %4377
      %4443 = vrot.lane.b32.xlu0 %v1645, 16
      %v4444 = vpop.permute.xlu0 %4443
      %4445 = vrot.lane.b32.xlu0 %v1646, 16
      %v4446 = vpop.permute.xlu0 %4445
      %4447 = vrot.lane.b32.xlu0 %v1647, 16
      %v4448 = vpop.permute.xlu0 %4447
      %4449 = vrot.lane.b32.xlu0 %v1648, 16
      %v4450 = vpop.permute.xlu0 %4449
      %4451 = vrot.lane.b32.xlu0 %v1649, 16
      %v4452 = vpop.permute.xlu0 %4451
      %4453 = vrot.lane.b32.xlu0 %v1650, 16
      %v4454 = vpop.permute.xlu0 %4453
      %4455 = vrot.lane.b32.xlu0 %v1651, 16
      %v4456 = vpop.permute.xlu0 %4455
      %4457 = vrot.lane.b32.xlu0 %v1652, 16
      %v4458 = vpop.permute.xlu0 %4457
      %4459 = vrot.lane.b32.xlu0 %v1653, 16
      %v4460 = vpop.permute.xlu0 %4459
      %4461 = vrot.lane.b32.xlu0 %v1654, 16
      %v4462 = vpop.permute.xlu0 %4461
      %4463 = vrot.lane.b32.xlu0 %v1655, 16
      %v4464 = vpop.permute.xlu0 %4463
      %4465 = vrot.lane.b32.xlu0 %v1656, 16
      %v4466 = vpop.permute.xlu0 %4465
      %4467 = vrot.lane.b32.xlu0 %v1657, 16
      %v4468 = vpop.permute.xlu0 %4467
      %4469 = vrot.lane.b32.xlu0 %v1658, 16
      %v4470 = vpop.permute.xlu0 %4469
      %4471 = vrot.lane.b32.xlu0 %v1659, 16
      %v4472 = vpop.permute.xlu0 %4471
      %4473 = vrot.lane.b32.xlu0 %v1660, 16
      %v4474 = vpop.permute.xlu0 %4473
      %4475 = vrot.lane.b32.xlu0 %v1661, 16
      %v4476 = vpop.permute.xlu0 %4475
      %4477 = vrot.lane.b32.xlu0 %v1662, 16
      %v4478 = vpop.permute.xlu0 %4477
      %4479 = vrot.lane.b32.xlu0 %v1663, 16
      %v4480 = vpop.permute.xlu0 %4479
      %4481 = vrot.lane.b32.xlu0 %v1664, 16
      %v4482 = vpop.permute.xlu0 %4481
      %4483 = vrot.lane.b32.xlu0 %v1665, 16
      %v4484 = vpop.permute.xlu0 %4483
      %4485 = vrot.lane.b32.xlu0 %v1666, 16
      %v4486 = vpop.permute.xlu0 %4485
      %4487 = vrot.lane.b32.xlu0 %v1667, 16
      %v4488 = vpop.permute.xlu0 %4487
      %4489 = vrot.lane.b32.xlu0 %v1668, 16
      %v4490 = vpop.permute.xlu0 %4489
      %4491 = vrot.lane.b32.xlu0 %v1669, 16
      %v4492 = vpop.permute.xlu0 %4491
      %4493 = vrot.lane.b32.xlu0 %v1670, 16
      %v4494 = vpop.permute.xlu0 %4493
      %4495 = vrot.lane.b32.xlu0 %v1671, 16
      %v4496 = vpop.permute.xlu0 %4495
      %4497 = vrot.lane.b32.xlu0 %v1672, 16
      %v4498 = vpop.permute.xlu0 %4497
      %4499 = vrot.lane.b32.xlu0 %v1673, 16
      %v4500 = vpop.permute.xlu0 %4499
      %4501 = vrot.lane.b32.xlu0 %v1674, 16
      %v4502 = vpop.permute.xlu0 %4501
      %4503 = vrot.lane.b32.xlu0 %v1675, 16
      %v4504 = vpop.permute.xlu0 %4503
      %4505 = vrot.lane.b32.xlu0 %v1676, 16
      %v4506 = vpop.permute.xlu0 %4505
      %4571 = vrot.lane.b32.xlu0 %v1677, 24
      %v4572 = vpop.permute.xlu0 %4571
      %4573 = vrot.lane.b32.xlu0 %v1678, 24
      %v4574 = vpop.permute.xlu0 %4573
      %4575 = vrot.lane.b32.xlu0 %v1679, 24
      %v4576 = vpop.permute.xlu0 %4575
      %4577 = vrot.lane.b32.xlu0 %v1680, 24
      %v4578 = vpop.permute.xlu0 %4577
      %4579 = vrot.lane.b32.xlu0 %v1681, 24
      %v4580 = vpop.permute.xlu0 %4579
      %4581 = vrot.lane.b32.xlu0 %v1682, 24
      %v4582 = vpop.permute.xlu0 %4581
      %4583 = vrot.lane.b32.xlu0 %v1683, 24
      %v4584 = vpop.permute.xlu0 %4583
      %4585 = vrot.lane.b32.xlu0 %v1684, 24
      %v4586 = vpop.permute.xlu0 %4585
      %4587 = vrot.lane.b32.xlu0 %v1685, 24
      %v4588 = vpop.permute.xlu0 %4587
      %4589 = vrot.lane.b32.xlu0 %v1686, 24
      %v4590 = vpop.permute.xlu0 %4589
      %4591 = vrot.lane.b32.xlu0 %v1687, 24
      %v4592 = vpop.permute.xlu0 %4591
      %4593 = vrot.lane.b32.xlu0 %v1688, 24
      %v4594 = vpop.permute.xlu0 %4593
      %4595 = vrot.lane.b32.xlu0 %v1689, 24
      %v4596 = vpop.permute.xlu0 %4595
      %4597 = vrot.lane.b32.xlu0 %v1690, 24
      %v4598 = vpop.permute.xlu0 %4597
      %4599 = vrot.lane.b32.xlu0 %v1691, 24
      %v4600 = vpop.permute.xlu0 %4599
      %4601 = vrot.lane.b32.xlu0 %v1692, 24
      %v4602 = vpop.permute.xlu0 %4601
      %4603 = vrot.lane.b32.xlu0 %v1693, 24
      %v4604 = vpop.permute.xlu0 %4603
      %4605 = vrot.lane.b32.xlu0 %v1694, 24
      %v4606 = vpop.permute.xlu0 %4605
      %4607 = vrot.lane.b32.xlu0 %v1695, 24
      %v4608 = vpop.permute.xlu0 %4607
      %4609 = vrot.lane.b32.xlu0 %v1696, 24
      %v4610 = vpop.permute.xlu0 %4609
      %4611 = vrot.lane.b32.xlu0 %v1697, 24
      %v4612 = vpop.permute.xlu0 %4611
      %4613 = vrot.lane.b32.xlu0 %v1698, 24
      %v4614 = vpop.permute.xlu0 %4613
      %4615 = vrot.lane.b32.xlu0 %v1699, 24
      %v4616 = vpop.permute.xlu0 %4615
      %4617 = vrot.lane.b32.xlu0 %v1700, 24
      %v4618 = vpop.permute.xlu0 %4617
      %4619 = vrot.lane.b32.xlu0 %v1701, 24
      %v4620 = vpop.permute.xlu0 %4619
      %4621 = vrot.lane.b32.xlu0 %v1702, 24
      %v4622 = vpop.permute.xlu0 %4621
      %4623 = vrot.lane.b32.xlu0 %v1703, 24
      %v4624 = vpop.permute.xlu0 %4623
      %4625 = vrot.lane.b32.xlu0 %v1704, 24
      %v4626 = vpop.permute.xlu0 %4625
      %4627 = vrot.lane.b32.xlu0 %v1705, 24
      %v4628 = vpop.permute.xlu0 %4627
      %4629 = vrot.lane.b32.xlu0 %v1706, 24
      %v4630 = vpop.permute.xlu0 %4629
      %4631 = vrot.lane.b32.xlu0 %v1707, 24
      %v4632 = vpop.permute.xlu0 %4631
      %4633 = vrot.lane.b32.xlu0 %v1708, 24
      %v4634 = vpop.permute.xlu0 %4633
      %4699 = vrot.lane.b32.xlu0 %v1710, 32
      %v4700 = vpop.permute.xlu0 %4699
      %4701 = vrot.lane.b32.xlu0 %v1711, 32
      %v4702 = vpop.permute.xlu0 %4701
      %4703 = vrot.lane.b32.xlu0 %v1712, 32
      %v4704 = vpop.permute.xlu0 %4703
      %4705 = vrot.lane.b32.xlu0 %v1713, 32
      %v4706 = vpop.permute.xlu0 %4705
      %4707 = vrot.lane.b32.xlu0 %v1714, 32
      %v4708 = vpop.permute.xlu0 %4707
      %4709 = vrot.lane.b32.xlu0 %v1715, 32
      %v4710 = vpop.permute.xlu0 %4709
      %4711 = vrot.lane.b32.xlu0 %v1716, 32
      %v4712 = vpop.permute.xlu0 %4711
      %4713 = vrot.lane.b32.xlu0 %v1717, 32
      %v4714 = vpop.permute.xlu0 %4713
      %4715 = vrot.lane.b32.xlu0 %v1718, 32
      %v4716 = vpop.permute.xlu0 %4715
      %4717 = vrot.lane.b32.xlu0 %v1719, 32
      %v4718 = vpop.permute.xlu0 %4717
      %4719 = vrot.lane.b32.xlu0 %v1720, 32
      %v4720 = vpop.permute.xlu0 %4719
      %4721 = vrot.lane.b32.xlu0 %v1721, 32
      %v4722 = vpop.permute.xlu0 %4721
      %4723 = vrot.lane.b32.xlu0 %v1722, 32
      %v4724 = vpop.permute.xlu0 %4723
      %4725 = vrot.lane.b32.xlu0 %v1723, 32
      %v4726 = vpop.permute.xlu0 %4725
      %4727 = vrot.lane.b32.xlu0 %v1724, 32
      %v4728 = vpop.permute.xlu0 %4727
      %4729 = vrot.lane.b32.xlu0 %v1725, 32
      %v4730 = vpop.permute.xlu0 %4729
      %4731 = vrot.lane.b32.xlu0 %v1726, 32
      %v4732 = vpop.permute.xlu0 %4731
      %4733 = vrot.lane.b32.xlu0 %v1727, 32
      %v4734 = vpop.permute.xlu0 %4733
      %4735 = vrot.lane.b32.xlu0 %v1728, 32
      %v4736 = vpop.permute.xlu0 %4735
      %4737 = vrot.lane.b32.xlu0 %v1729, 32
      %v4738 = vpop.permute.xlu0 %4737
      %4739 = vrot.lane.b32.xlu0 %v1730, 32
      %v4740 = vpop.permute.xlu0 %4739
      %4741 = vrot.lane.b32.xlu0 %v1731, 32
      %v4742 = vpop.permute.xlu0 %4741
      %4743 = vrot.lane.b32.xlu0 %v1732, 32
      %v4744 = vpop.permute.xlu0 %4743
      %4745 = vrot.lane.b32.xlu0 %v1733, 32
      %v4746 = vpop.permute.xlu0 %4745
      %4747 = vrot.lane.b32.xlu0 %v1734, 32
      %v4748 = vpop.permute.xlu0 %4747
      %4749 = vrot.lane.b32.xlu0 %v1735, 32
      %v4750 = vpop.permute.xlu0 %4749
      %4751 = vrot.lane.b32.xlu0 %v1736, 32
      %v4752 = vpop.permute.xlu0 %4751
      %4753 = vrot.lane.b32.xlu0 %v1737, 32
      %v4754 = vpop.permute.xlu0 %4753
      %4755 = vrot.lane.b32.xlu0 %v1738, 32
      %v4756 = vpop.permute.xlu0 %4755
      %4757 = vrot.lane.b32.xlu0 %v1739, 32
      %v4758 = vpop.permute.xlu0 %4757
      %4759 = vrot.lane.b32.xlu0 %v1740, 32
      %v4760 = vpop.permute.xlu0 %4759
      %4761 = vrot.lane.b32.xlu0 %v1741, 32
      %v4762 = vpop.permute.xlu0 %4761
      %4827 = vrot.lane.b32.xlu0 %v1742, 40
      %v4828 = vpop.permute.xlu0 %4827
      %4829 = vrot.lane.b32.xlu0 %v1743, 40
      %v4830 = vpop.permute.xlu0 %4829
      %4831 = vrot.lane.b32.xlu0 %v1744, 40
      %v4832 = vpop.permute.xlu0 %4831
      %4833 = vrot.lane.b32.xlu0 %v1745, 40
      %v4834 = vpop.permute.xlu0 %4833
      %4835 = vrot.lane.b32.xlu0 %v1746, 40
      %v4836 = vpop.permute.xlu0 %4835
      %4837 = vrot.lane.b32.xlu0 %v1747, 40
      %v4838 = vpop.permute.xlu0 %4837
      %4839 = vrot.lane.b32.xlu0 %v1748, 40
      %v4840 = vpop.permute.xlu0 %4839
      %4841 = vrot.lane.b32.xlu0 %v1749, 40
      %v4842 = vpop.permute.xlu0 %4841
      %4843 = vrot.lane.b32.xlu0 %v1750, 40
      %v4844 = vpop.permute.xlu0 %4843
      %4845 = vrot.lane.b32.xlu0 %v1751, 40
      %v4846 = vpop.permute.xlu0 %4845
      %4847 = vrot.lane.b32.xlu0 %v1752, 40
      %v4848 = vpop.permute.xlu0 %4847
      %4849 = vrot.lane.b32.xlu0 %v1753, 40
      %v4850 = vpop.permute.xlu0 %4849
      %4851 = vrot.lane.b32.xlu0 %v1754, 40
      %v4852 = vpop.permute.xlu0 %4851
      %4853 = vrot.lane.b32.xlu0 %v1755, 40
      %v4854 = vpop.permute.xlu0 %4853
      %4855 = vrot.lane.b32.xlu0 %v1756, 40
      %v4856 = vpop.permute.xlu0 %4855
      %4857 = vrot.lane.b32.xlu0 %v1757, 40
      %v4858 = vpop.permute.xlu0 %4857
      %4859 = vrot.lane.b32.xlu0 %v1758, 40
      %v4860 = vpop.permute.xlu0 %4859
      %4861 = vrot.lane.b32.xlu0 %v1759, 40
      %v4862 = vpop.permute.xlu0 %4861
      %4863 = vrot.lane.b32.xlu0 %v1760, 40
      %v4864 = vpop.permute.xlu0 %4863
      %4865 = vrot.lane.b32.xlu0 %v1761, 40
      %v4866 = vpop.permute.xlu0 %4865
      %4867 = vrot.lane.b32.xlu0 %v1762, 40
      %v4868 = vpop.permute.xlu0 %4867
      %4869 = vrot.lane.b32.xlu0 %v1763, 40
      %v4870 = vpop.permute.xlu0 %4869
      %4871 = vrot.lane.b32.xlu0 %v1764, 40
      %v4872 = vpop.permute.xlu0 %4871
      %4873 = vrot.lane.b32.xlu0 %v1765, 40
      %v4874 = vpop.permute.xlu0 %4873
      %4875 = vrot.lane.b32.xlu0 %v1766, 40
      %v4876 = vpop.permute.xlu0 %4875
      %4877 = vrot.lane.b32.xlu0 %v1767, 40
      %v4878 = vpop.permute.xlu0 %4877
      %4879 = vrot.lane.b32.xlu0 %v1768, 40
      %v4880 = vpop.permute.xlu0 %4879
      %4881 = vrot.lane.b32.xlu0 %v1769, 40
      %v4882 = vpop.permute.xlu0 %4881
      %4883 = vrot.lane.b32.xlu0 %v1770, 40
      %v4884 = vpop.permute.xlu0 %4883
      %4885 = vrot.lane.b32.xlu0 %v1771, 40
      %v4886 = vpop.permute.xlu0 %4885
      %4887 = vrot.lane.b32.xlu0 %v1772, 40
      %v4888 = vpop.permute.xlu0 %4887
      %4889 = vrot.lane.b32.xlu0 %v1773, 40
      %v4890 = vpop.permute.xlu0 %4889
      %4955 = vrot.lane.b32.xlu0 %v1774, 48
      %v4956 = vpop.permute.xlu0 %4955
      %4957 = vrot.lane.b32.xlu0 %v1775, 48
      %v4958 = vpop.permute.xlu0 %4957
      %4959 = vrot.lane.b32.xlu0 %v1776, 48
      %v4960 = vpop.permute.xlu0 %4959
      %4961 = vrot.lane.b32.xlu0 %v1777, 48
      %v4962 = vpop.permute.xlu0 %4961
      %4963 = vrot.lane.b32.xlu0 %v1778, 48
      %v4964 = vpop.permute.xlu0 %4963
      %4965 = vrot.lane.b32.xlu0 %v1779, 48
      %v4966 = vpop.permute.xlu0 %4965
      %4967 = vrot.lane.b32.xlu0 %v1780, 48
      %v4968 = vpop.permute.xlu0 %4967
      %4969 = vrot.lane.b32.xlu0 %v1781, 48
      %v4970 = vpop.permute.xlu0 %4969
      %4971 = vrot.lane.b32.xlu0 %v1782, 48
      %v4972 = vpop.permute.xlu0 %4971
      %4973 = vrot.lane.b32.xlu0 %v1783, 48
      %v4974 = vpop.permute.xlu0 %4973
      %4975 = vrot.lane.b32.xlu0 %v1784, 48
      %v4976 = vpop.permute.xlu0 %4975
      %4977 = vrot.lane.b32.xlu0 %v1785, 48
      %v4978 = vpop.permute.xlu0 %4977
      %4979 = vrot.lane.b32.xlu0 %v1786, 48
      %v4980 = vpop.permute.xlu0 %4979
      %4981 = vrot.lane.b32.xlu0 %v1787, 48
      %v4982 = vpop.permute.xlu0 %4981
      %4983 = vrot.lane.b32.xlu0 %v1788, 48
      %v4984 = vpop.permute.xlu0 %4983
      %4985 = vrot.lane.b32.xlu0 %v1789, 48
      %v4986 = vpop.permute.xlu0 %4985
      %4987 = vrot.lane.b32.xlu0 %v1790, 48
      %v4988 = vpop.permute.xlu0 %4987
      %4989 = vrot.lane.b32.xlu0 %v1791, 48
      %v4990 = vpop.permute.xlu0 %4989
      %4991 = vrot.lane.b32.xlu0 %v1792, 48
      %v4992 = vpop.permute.xlu0 %4991
      %4993 = vrot.lane.b32.xlu0 %v1793, 48
      %v4994 = vpop.permute.xlu0 %4993
      %4995 = vrot.lane.b32.xlu0 %v1794, 48
      %v4996 = vpop.permute.xlu0 %4995
      %4997 = vrot.lane.b32.xlu0 %v1795, 48
      %v4998 = vpop.permute.xlu0 %4997
      %4999 = vrot.lane.b32.xlu0 %v1796, 48
      %v5000 = vpop.permute.xlu0 %4999
      %5001 = vrot.lane.b32.xlu0 %v1797, 48
      %v5002 = vpop.permute.xlu0 %5001
      %5003 = vrot.lane.b32.xlu0 %v1798, 48
      %v5004 = vpop.permute.xlu0 %5003
      %5005 = vrot.lane.b32.xlu0 %v1799, 48
      %v5006 = vpop.permute.xlu0 %5005
      %5007 = vrot.lane.b32.xlu0 %v1800, 48
      %v5008 = vpop.permute.xlu0 %5007
      %5009 = vrot.lane.b32.xlu0 %v1801, 48
      %v5010 = vpop.permute.xlu0 %5009
      %5011 = vrot.lane.b32.xlu0 %v1802, 48
      %v5012 = vpop.permute.xlu0 %5011
      %5013 = vrot.lane.b32.xlu0 %v1803, 48
      %v5014 = vpop.permute.xlu0 %5013
      %5015 = vrot.lane.b32.xlu0 %v1804, 48
      %v5016 = vpop.permute.xlu0 %5015
      %5017 = vrot.lane.b32.xlu0 %v1805, 48
      %v5018 = vpop.permute.xlu0 %5017
      %5083 = vrot.lane.b32.xlu0 %v1806, 56
      %v5084 = vpop.permute.xlu0 %5083
      %5085 = vrot.lane.b32.xlu0 %v1807, 56
      %v5086 = vpop.permute.xlu0 %5085
      %5087 = vrot.lane.b32.xlu0 %v1808, 56
      %v5088 = vpop.permute.xlu0 %5087
      %5089 = vrot.lane.b32.xlu0 %v1809, 56
      %v5090 = vpop.permute.xlu0 %5089
      %5091 = vrot.lane.b32.xlu0 %v1810, 56
      %v5092 = vpop.permute.xlu0 %5091
      %5093 = vrot.lane.b32.xlu0 %v1811, 56
      %v5094 = vpop.permute.xlu0 %5093
      %5095 = vrot.lane.b32.xlu0 %v1812, 56
      %v5096 = vpop.permute.xlu0 %5095
      %5097 = vrot.lane.b32.xlu0 %v1813, 56
      %v5098 = vpop.permute.xlu0 %5097
      %5099 = vrot.lane.b32.xlu0 %v1814, 56
      %v5100 = vpop.permute.xlu0 %5099
      %5101 = vrot.lane.b32.xlu0 %v1815, 56
      %v5102 = vpop.permute.xlu0 %5101
      %5103 = vrot.lane.b32.xlu0 %v1816, 56
      %v5104 = vpop.permute.xlu0 %5103
      %5105 = vrot.lane.b32.xlu0 %v1817, 56
      %v5106 = vpop.permute.xlu0 %5105
      %5107 = vrot.lane.b32.xlu0 %v1818, 56
      %v5108 = vpop.permute.xlu0 %5107
      %5109 = vrot.lane.b32.xlu0 %v1819, 56
      %v5110 = vpop.permute.xlu0 %5109
      %5111 = vrot.lane.b32.xlu0 %v1820, 56
      %v5112 = vpop.permute.xlu0 %5111
      %5113 = vrot.lane.b32.xlu0 %v1821, 56
      %v5114 = vpop.permute.xlu0 %5113
      %5115 = vrot.lane.b32.xlu0 %v1822, 56
      %v5116 = vpop.permute.xlu0 %5115
      %5117 = vrot.lane.b32.xlu0 %v1823, 56
      %v5118 = vpop.permute.xlu0 %5117
      %5119 = vrot.lane.b32.xlu0 %v1824, 56
      %v5120 = vpop.permute.xlu0 %5119
      %5121 = vrot.lane.b32.xlu0 %v1825, 56
      %v5122 = vpop.permute.xlu0 %5121
      %5123 = vrot.lane.b32.xlu0 %v1826, 56
      %v5124 = vpop.permute.xlu0 %5123
      %5125 = vrot.lane.b32.xlu0 %v1827, 56
      %v5126 = vpop.permute.xlu0 %5125
      %5127 = vrot.lane.b32.xlu0 %v1828, 56
      %v5128 = vpop.permute.xlu0 %5127
      %5129 = vrot.lane.b32.xlu0 %v1829, 56
      %v5130 = vpop.permute.xlu0 %5129
      %5131 = vrot.lane.b32.xlu0 %v1830, 56
      %v5132 = vpop.permute.xlu0 %5131
      %5133 = vrot.lane.b32.xlu0 %v1831, 56
      %v5134 = vpop.permute.xlu0 %5133
      %5135 = vrot.lane.b32.xlu0 %v1832, 56
      %v5136 = vpop.permute.xlu0 %5135
      %5137 = vrot.lane.b32.xlu0 %v1833, 56
      %v5138 = vpop.permute.xlu0 %5137
      %5139 = vrot.lane.b32.xlu0 %v1834, 56
      %v5140 = vpop.permute.xlu0 %5139
      %5141 = vrot.lane.b32.xlu0 %v1835, 56
      %v5142 = vpop.permute.xlu0 %5141
      %5143 = vrot.lane.b32.xlu0 %v1836, 56
      %v5144 = vpop.permute.xlu0 %5143
      %5145 = vrot.lane.b32.xlu0 %v1837, 56
      %v5146 = vpop.permute.xlu0 %5145
      %5211 = vrot.lane.b32.xlu0 %v1838, 64
      %v5212 = vpop.permute.xlu0 %5211
      %5213 = vrot.lane.b32.xlu0 %v1839, 64
      %v5214 = vpop.permute.xlu0 %5213
      %5215 = vrot.lane.b32.xlu0 %v1840, 64
      %v5216 = vpop.permute.xlu0 %5215
      %5217 = vrot.lane.b32.xlu0 %v1841, 64
      %v5218 = vpop.permute.xlu0 %5217
      %5219 = vrot.lane.b32.xlu0 %v1842, 64
      %v5220 = vpop.permute.xlu0 %5219
      %5221 = vrot.lane.b32.xlu0 %v1843, 64
      %v5222 = vpop.permute.xlu0 %5221
      %5223 = vrot.lane.b32.xlu0 %v1844, 64
      %v5224 = vpop.permute.xlu0 %5223
      %5225 = vrot.lane.b32.xlu0 %v1845, 64
      %v5226 = vpop.permute.xlu0 %5225
      %5227 = vrot.lane.b32.xlu0 %v1846, 64
      %v5228 = vpop.permute.xlu0 %5227
      %5229 = vrot.lane.b32.xlu0 %v1847, 64
      %v5230 = vpop.permute.xlu0 %5229
      %5231 = vrot.lane.b32.xlu0 %v1848, 64
      %v5232 = vpop.permute.xlu0 %5231
      %5233 = vrot.lane.b32.xlu0 %v1849, 64
      %v5234 = vpop.permute.xlu0 %5233
      %5235 = vrot.lane.b32.xlu0 %v1850, 64
      %v5236 = vpop.permute.xlu0 %5235
      %5237 = vrot.lane.b32.xlu0 %v1851, 64
      %v5238 = vpop.permute.xlu0 %5237
      %5239 = vrot.lane.b32.xlu0 %v1852, 64
      %v5240 = vpop.permute.xlu0 %5239
      %5241 = vrot.lane.b32.xlu0 %v1853, 64
      %v5242 = vpop.permute.xlu0 %5241
      %5243 = vrot.lane.b32.xlu0 %v1854, 64
      %v5244 = vpop.permute.xlu0 %5243
      %5245 = vrot.lane.b32.xlu0 %v1855, 64
      %v5246 = vpop.permute.xlu0 %5245
      %5247 = vrot.lane.b32.xlu0 %v1856, 64
      %v5248 = vpop.permute.xlu0 %5247
      %5249 = vrot.lane.b32.xlu0 %v1857, 64
      %v5250 = vpop.permute.xlu0 %5249
      %5251 = vrot.lane.b32.xlu0 %v1858, 64
      %v5252 = vpop.permute.xlu0 %5251
      %5253 = vrot.lane.b32.xlu0 %v1859, 64
      %v5254 = vpop.permute.xlu0 %5253
      %5255 = vrot.lane.b32.xlu0 %v1860, 64
      %v5256 = vpop.permute.xlu0 %5255
      %5257 = vrot.lane.b32.xlu0 %v1861, 64
      %v5258 = vpop.permute.xlu0 %5257
      %5259 = vrot.lane.b32.xlu0 %v1862, 64
      %v5260 = vpop.permute.xlu0 %5259
      %5261 = vrot.lane.b32.xlu0 %v1863, 64
      %v5262 = vpop.permute.xlu0 %5261
      %5263 = vrot.lane.b32.xlu0 %v1864, 64
      %v5264 = vpop.permute.xlu0 %5263
      %5265 = vrot.lane.b32.xlu0 %v1865, 64
      %v5266 = vpop.permute.xlu0 %5265
      %5267 = vrot.lane.b32.xlu0 %v1866, 64
      %v5268 = vpop.permute.xlu0 %5267
      %5269 = vrot.lane.b32.xlu0 %v1867, 64
      %v5270 = vpop.permute.xlu0 %5269
      %5271 = vrot.lane.b32.xlu0 %v1868, 64
      %v5272 = vpop.permute.xlu0 %5271
      %5273 = vrot.lane.b32.xlu0 %v1869, 64
      %v5274 = vpop.permute.xlu0 %5273
      %v5307 = vsel %vm789, %v1581, %v4316
      %v5308 = vsel %vm789, %v1582, %v4318
      %v5309 = vsel %vm789, %v1583, %v4320
      %v5310 = vsel %vm789, %v1584, %v4322
      %v5311 = vsel %vm789, %v1585, %v4324
      %v5312 = vsel %vm789, %v1586, %v4326
      %v5313 = vsel %vm789, %v1587, %v4328
      %v5314 = vsel %vm789, %v1588, %v4330
      %v5315 = vsel %vm789, %v1589, %v4332
      %v5316 = vsel %vm789, %v1590, %v4334
      %v5317 = vsel %vm789, %v1591, %v4336
      %v5318 = vsel %vm789, %v1592, %v4338
      %v5319 = vsel %vm789, %v1593, %v4340
      %v5320 = vsel %vm789, %v1594, %v4342
      %v5321 = vsel %vm789, %v1595, %v4344
      %v5322 = vsel %vm789, %v1596, %v4346
      %v5323 = vsel %vm789, %v1597, %v4348
      %v5324 = vsel %vm789, %v1598, %v4350
      %v5325 = vsel %vm789, %v1599, %v4352
      %v5326 = vsel %vm789, %v1600, %v4354
      %v5327 = vsel %vm789, %v1601, %v4356
      %v5328 = vsel %vm789, %v1602, %v4358
      %v5329 = vsel %vm789, %v1603, %v4360
      %v5330 = vsel %vm789, %v1604, %v4362
      %v5331 = vsel %vm789, %v1605, %v4364
      %v5332 = vsel %vm789, %v1606, %v4366
      %v5333 = vsel %vm789, %v1607, %v4368
      %v5334 = vsel %vm789, %v1608, %v4370
      %v5335 = vsel %vm789, %v1609, %v4372
      %v5336 = vsel %vm789, %v1610, %v4374
      %v5337 = vsel %vm789, %v1611, %v4376
      %v5338 = vsel %vm789, %v1612, %v4378
      %v5339 = vsel %vm299, %v5307, %v4444
      %v5340 = vsel %vm299, %v5308, %v4446
      %v5341 = vsel %vm299, %v5309, %v4448
      %v5342 = vsel %vm299, %v5310, %v4450
      %v5343 = vsel %vm299, %v5311, %v4452
      %v5344 = vsel %vm299, %v5312, %v4454
      %v5345 = vsel %vm299, %v5313, %v4456
      %v5346 = vsel %vm299, %v5314, %v4458
      %v5347 = vsel %vm299, %v5315, %v4460
      %v5348 = vsel %vm299, %v5316, %v4462
      %v5349 = vsel %vm299, %v5317, %v4464
      %v5350 = vsel %vm299, %v5318, %v4466
      %v5351 = vsel %vm299, %v5319, %v4468
      %v5352 = vsel %vm299, %v5320, %v4470
      %v5353 = vsel %vm299, %v5321, %v4472
      %v5354 = vsel %vm299, %v5322, %v4474
      %v5355 = vsel %vm299, %v5323, %v4476
      %v5356 = vsel %vm299, %v5324, %v4478
      %v5357 = vsel %vm299, %v5325, %v4480
      %v5358 = vsel %vm299, %v5326, %v4482
      %v5359 = vsel %vm299, %v5327, %v4484
      %v5360 = vsel %vm299, %v5328, %v4486
      %v5361 = vsel %vm299, %v5329, %v4488
      %v5362 = vsel %vm299, %v5330, %v4490
      %v5363 = vsel %vm299, %v5331, %v4492
      %v5364 = vsel %vm299, %v5332, %v4494
      %v5365 = vsel %vm299, %v5333, %v4496
      %v5366 = vsel %vm299, %v5334, %v4498
      %v5367 = vsel %vm299, %v5335, %v4500
      %v5368 = vsel %vm299, %v5336, %v4502
      %v5369 = vsel %vm299, %v5337, %v4504
      %v5370 = vsel %vm299, %v5338, %v4506
      %v5371 = vsel %vm3854, %v5339, %v4572
      %v5372 = vsel %vm3854, %v5340, %v4574
      %v5373 = vsel %vm3854, %v5341, %v4576
      %v5374 = vsel %vm3854, %v5342, %v4578
      %v5375 = vsel %vm3854, %v5343, %v4580
      %v5376 = vsel %vm3854, %v5344, %v4582
      %v5377 = vsel %vm3854, %v5345, %v4584
      %v5378 = vsel %vm3854, %v5346, %v4586
      %v5379 = vsel %vm3854, %v5347, %v4588
      %v5380 = vsel %vm3854, %v5348, %v4590
      %v5381 = vsel %vm3854, %v5349, %v4592
      %v5382 = vsel %vm3854, %v5350, %v4594
      %v5383 = vsel %vm3854, %v5351, %v4596
      %v5384 = vsel %vm3854, %v5352, %v4598
      %v5385 = vsel %vm3854, %v5353, %v4600
      %v5386 = vsel %vm3854, %v5354, %v4602
      %v5387 = vsel %vm3854, %v5355, %v4604
      %v5388 = vsel %vm3854, %v5356, %v4606
      %v5389 = vsel %vm3854, %v5357, %v4608
      %v5390 = vsel %vm3854, %v5358, %v4610
      %v5391 = vsel %vm3854, %v5359, %v4612
      %v5392 = vsel %vm3854, %v5360, %v4614
      %v5393 = vsel %vm3854, %v5361, %v4616
      %v5394 = vsel %vm3854, %v5362, %v4618
      %v5395 = vsel %vm3854, %v5363, %v4620
      %v5396 = vsel %vm3854, %v5364, %v4622
      %v5397 = vsel %vm3854, %v5365, %v4624
      %v5398 = vsel %vm3854, %v5366, %v4626
      %v5399 = vsel %vm3854, %v5367, %v4628
      %v5400 = vsel %vm3854, %v5368, %v4630
      %v5401 = vsel %vm3854, %v5369, %v4632
      %v5402 = vsel %vm3854, %v5370, %v4634
      %v5403 = vsel %vm3887, %v5371, %v4700
      %v5404 = vsel %vm3887, %v5372, %v4702
      %v5405 = vsel %vm3887, %v5373, %v4704
      %v5406 = vsel %vm3887, %v5374, %v4706
      %v5407 = vsel %vm3887, %v5375, %v4708
      %v5408 = vsel %vm3887, %v5376, %v4710
      %v5409 = vsel %vm3887, %v5377, %v4712
      %v5410 = vsel %vm3887, %v5378, %v4714
      %v5411 = vsel %vm3887, %v5379, %v4716
      %v5412 = vsel %vm3887, %v5380, %v4718
      %v5413 = vsel %vm3887, %v5381, %v4720
      %v5414 = vsel %vm3887, %v5382, %v4722
      %v5415 = vsel %vm3887, %v5383, %v4724
      %v5416 = vsel %vm3887, %v5384, %v4726
      %v5417 = vsel %vm3887, %v5385, %v4728
      %v5418 = vsel %vm3887, %v5386, %v4730
      %v5419 = vsel %vm3887, %v5387, %v4732
      %v5420 = vsel %vm3887, %v5388, %v4734
      %v5421 = vsel %vm3887, %v5389, %v4736
      %v5422 = vsel %vm3887, %v5390, %v4738
      %v5423 = vsel %vm3887, %v5391, %v4740
      %v5424 = vsel %vm3887, %v5392, %v4742
      %v5425 = vsel %vm3887, %v5393, %v4744
      %v5426 = vsel %vm3887, %v5394, %v4746
      %v5427 = vsel %vm3887, %v5395, %v4748
      %v5428 = vsel %vm3887, %v5396, %v4750
      %v5429 = vsel %vm3887, %v5397, %v4752
      %v5430 = vsel %vm3887, %v5398, %v4754
      %v5431 = vsel %vm3887, %v5399, %v4756
      %v5432 = vsel %vm3887, %v5400, %v4758
      %v5433 = vsel %vm3887, %v5401, %v4760
      %v5434 = vsel %vm3887, %v5402, %v4762
      %v5435 = vsel %vm3920, %v5403, %v4828
      %v5436 = vsel %vm3920, %v5404, %v4830
      %v5437 = vsel %vm3920, %v5405, %v4832
      %v5438 = vsel %vm3920, %v5406, %v4834
      %v5439 = vsel %vm3920, %v5407, %v4836
      %v5440 = vsel %vm3920, %v5408, %v4838
      %v5441 = vsel %vm3920, %v5409, %v4840
      %v5442 = vsel %vm3920, %v5410, %v4842
      %v5443 = vsel %vm3920, %v5411, %v4844
      %v5444 = vsel %vm3920, %v5412, %v4846
      %v5445 = vsel %vm3920, %v5413, %v4848
      %v5446 = vsel %vm3920, %v5414, %v4850
      %v5447 = vsel %vm3920, %v5415, %v4852
      %v5448 = vsel %vm3920, %v5416, %v4854
      %v5449 = vsel %vm3920, %v5417, %v4856
      %v5450 = vsel %vm3920, %v5418, %v4858
      %v5451 = vsel %vm3920, %v5419, %v4860
      %v5452 = vsel %vm3920, %v5420, %v4862
      %v5453 = vsel %vm3920, %v5421, %v4864
      %v5454 = vsel %vm3920, %v5422, %v4866
      %v5455 = vsel %vm3920, %v5423, %v4868
      %v5456 = vsel %vm3920, %v5424, %v4870
      %v5457 = vsel %vm3920, %v5425, %v4872
      %v5458 = vsel %vm3920, %v5426, %v4874
      %v5459 = vsel %vm3920, %v5427, %v4876
      %v5460 = vsel %vm3920, %v5428, %v4878
      %v5461 = vsel %vm3920, %v5429, %v4880
      %v5462 = vsel %vm3920, %v5430, %v4882
      %v5463 = vsel %vm3920, %v5431, %v4884
      %v5464 = vsel %vm3920, %v5432, %v4886
      %v5465 = vsel %vm3920, %v5433, %v4888
      %v5466 = vsel %vm3920, %v5434, %v4890
      %v5467 = vsel %vm3953, %v5435, %v4956
      %v5468 = vsel %vm3953, %v5436, %v4958
      %v5469 = vsel %vm3953, %v5437, %v4960
      %v5470 = vsel %vm3953, %v5438, %v4962
      %v5471 = vsel %vm3953, %v5439, %v4964
      %v5472 = vsel %vm3953, %v5440, %v4966
      %v5473 = vsel %vm3953, %v5441, %v4968
      %v5474 = vsel %vm3953, %v5442, %v4970
      %v5475 = vsel %vm3953, %v5443, %v4972
      %v5476 = vsel %vm3953, %v5444, %v4974
      %v5477 = vsel %vm3953, %v5445, %v4976
      %v5478 = vsel %vm3953, %v5446, %v4978
      %v5479 = vsel %vm3953, %v5447, %v4980
      %v5480 = vsel %vm3953, %v5448, %v4982
      %v5481 = vsel %vm3953, %v5449, %v4984
      %v5482 = vsel %vm3953, %v5450, %v4986
      %v5483 = vsel %vm3953, %v5451, %v4988
      %v5484 = vsel %vm3953, %v5452, %v4990
      %v5485 = vsel %vm3953, %v5453, %v4992
      %v5486 = vsel %vm3953, %v5454, %v4994
      %v5487 = vsel %vm3953, %v5455, %v4996
      %v5488 = vsel %vm3953, %v5456, %v4998
      %v5489 = vsel %vm3953, %v5457, %v5000
      %v5490 = vsel %vm3953, %v5458, %v5002
      %v5491 = vsel %vm3953, %v5459, %v5004
      %v5492 = vsel %vm3953, %v5460, %v5006
      %v5493 = vsel %vm3953, %v5461, %v5008
      %v5494 = vsel %vm3953, %v5462, %v5010
      %v5495 = vsel %vm3953, %v5463, %v5012
      %v5496 = vsel %vm3953, %v5464, %v5014
      %v5497 = vsel %vm3953, %v5465, %v5016
      %v5498 = vsel %vm3953, %v5466, %v5018
      %v5499 = vsel %vm3986, %v5467, %v5084
      %v5500 = vsel %vm3986, %v5468, %v5086
      %v5501 = vsel %vm3986, %v5469, %v5088
      %v5502 = vsel %vm3986, %v5470, %v5090
      %v5503 = vsel %vm3986, %v5471, %v5092
      %v5504 = vsel %vm3986, %v5472, %v5094
      %v5505 = vsel %vm3986, %v5473, %v5096
      %v5506 = vsel %vm3986, %v5474, %v5098
      %v5507 = vsel %vm3986, %v5475, %v5100
      %v5508 = vsel %vm3986, %v5476, %v5102
      %v5509 = vsel %vm3986, %v5477, %v5104
      %v5510 = vsel %vm3986, %v5478, %v5106
      %v5511 = vsel %vm3986, %v5479, %v5108
      %v5512 = vsel %vm3986, %v5480, %v5110
      %v5513 = vsel %vm3986, %v5481, %v5112
      %v5514 = vsel %vm3986, %v5482, %v5114
      %v5515 = vsel %vm3986, %v5483, %v5116
      %v5516 = vsel %vm3986, %v5484, %v5118
      %v5517 = vsel %vm3986, %v5485, %v5120
      %v5518 = vsel %vm3986, %v5486, %v5122
      %v5519 = vsel %vm3986, %v5487, %v5124
      %v5520 = vsel %vm3986, %v5488, %v5126
      %v5521 = vsel %vm3986, %v5489, %v5128
      %v5522 = vsel %vm3986, %v5490, %v5130
      %v5523 = vsel %vm3986, %v5491, %v5132
      %v5524 = vsel %vm3986, %v5492, %v5134
      %v5525 = vsel %vm3986, %v5493, %v5136
      %v5526 = vsel %vm3986, %v5494, %v5138
      %v5527 = vsel %vm3986, %v5495, %v5140
      %v5528 = vsel %vm3986, %v5496, %v5142
      %v5529 = vsel %vm3986, %v5497, %v5144
      %v5530 = vsel %vm3986, %v5498, %v5146
      %v5531 = vsel %vm4019, %v5499, %v5212
      %v5532 = vsel %vm4019, %v5500, %v5214
      %v5533 = vsel %vm4019, %v5501, %v5216
      %v5534 = vsel %vm4019, %v5502, %v5218
      %v5535 = vsel %vm4019, %v5503, %v5220
      %v5536 = vsel %vm4019, %v5504, %v5222
      %v5537 = vsel %vm4019, %v5505, %v5224
      %v5538 = vsel %vm4019, %v5506, %v5226
      %v5539 = vsel %vm4019, %v5507, %v5228
      %v5540 = vsel %vm4019, %v5508, %v5230
      %v5541 = vsel %vm4019, %v5509, %v5232
      %v5542 = vsel %vm4019, %v5510, %v5234
      %v5543 = vsel %vm4019, %v5511, %v5236
      %v5544 = vsel %vm4019, %v5512, %v5238
      %v5545 = vsel %vm4019, %v5513, %v5240
      %v5546 = vsel %vm4019, %v5514, %v5242
      %v5547 = vsel %vm4019, %v5515, %v5244
      %v5548 = vsel %vm4019, %v5516, %v5246
      %v5549 = vsel %vm4019, %v5517, %v5248
      %v5550 = vsel %vm4019, %v5518, %v5250
      %v5551 = vsel %vm4019, %v5519, %v5252
      %v5552 = vsel %vm4019, %v5520, %v5254
      %v5553 = vsel %vm4019, %v5521, %v5256
      %v5554 = vsel %vm4019, %v5522, %v5258
      %v5555 = vsel %vm4019, %v5523, %v5260
      %v5556 = vsel %vm4019, %v5524, %v5262
      %v5557 = vsel %vm4019, %v5525, %v5264
      %v5558 = vsel %vm4019, %v5526, %v5266
      %v5559 = vsel %vm4019, %v5527, %v5268
      %v5560 = vsel %vm4019, %v5528, %v5270
      %v5561 = vsel %vm4019, %v5529, %v5272
      %v5562 = vsel %vm4019, %v5530, %v5274
      %5563 = vrot.lane.b32.xlu0 %v463, 104
      %v5564 = vpop.permute.xlu0 %5563
      %5565 = vrot.lane.b32.xlu0 %v468, 104
      %v5566 = vpop.permute.xlu0 %5565
      %5567 = vrot.lane.b32.xlu0 %v473, 104
      %v5568 = vpop.permute.xlu0 %5567
      %5569 = vrot.lane.b32.xlu0 %v478, 104
      %v5570 = vpop.permute.xlu0 %5569
      %5571 = vrot.lane.b32.xlu0 %v483, 104
      %v5572 = vpop.permute.xlu0 %5571
      %5573 = vrot.lane.b32.xlu0 %v488, 104
      %v5574 = vpop.permute.xlu0 %5573
      %5575 = vrot.lane.b32.xlu0 %v493, 104
      %v5576 = vpop.permute.xlu0 %5575
      %5577 = vrot.lane.b32.xlu0 %v498, 104
      %v5578 = vpop.permute.xlu0 %5577
      %5579 = vrot.lane.b32.xlu0 %v503, 104
      %v5580 = vpop.permute.xlu0 %5579
      %5581 = vrot.lane.b32.xlu0 %v508, 104
      %v5582 = vpop.permute.xlu0 %5581
      %5583 = vrot.lane.b32.xlu0 %v513, 104
      %v5584 = vpop.permute.xlu0 %5583
      %5585 = vrot.lane.b32.xlu0 %v518, 104
      %v5586 = vpop.permute.xlu0 %5585
      %5587 = vrot.lane.b32.xlu0 %v523, 104
      %v5588 = vpop.permute.xlu0 %5587
      %5589 = vrot.lane.b32.xlu0 %v528, 104
      %v5590 = vpop.permute.xlu0 %5589
      %5591 = vrot.lane.b32.xlu0 %v533, 104
      %v5592 = vpop.permute.xlu0 %5591
      %5593 = vrot.lane.b32.xlu0 %v538, 104
      %v5594 = vpop.permute.xlu0 %5593
      %5595 = vrot.lane.b32.xlu0 %v543, 104
      %v5596 = vpop.permute.xlu0 %5595
      %5597 = vrot.lane.b32.xlu0 %v548, 104
      %v5598 = vpop.permute.xlu0 %5597
      %5599 = vrot.lane.b32.xlu0 %v553, 104
      %v5600 = vpop.permute.xlu0 %5599
      %5601 = vrot.lane.b32.xlu0 %v558, 104
      %v5602 = vpop.permute.xlu0 %5601
      %5603 = vrot.lane.b32.xlu0 %v563, 104
      %v5604 = vpop.permute.xlu0 %5603
      %5605 = vrot.lane.b32.xlu0 %v568, 104
      %v5606 = vpop.permute.xlu0 %5605
      %5607 = vrot.lane.b32.xlu0 %v573, 104
      %v5608 = vpop.permute.xlu0 %5607
      %5609 = vrot.lane.b32.xlu0 %v578, 104
      %v5610 = vpop.permute.xlu0 %5609
      %5611 = vrot.lane.b32.xlu0 %v583, 104
      %v5612 = vpop.permute.xlu0 %5611
      %5613 = vrot.lane.b32.xlu0 %v588, 104
      %v5614 = vpop.permute.xlu0 %5613
      %5615 = vrot.lane.b32.xlu0 %v593, 104
      %v5616 = vpop.permute.xlu0 %5615
      %5617 = vrot.lane.b32.xlu0 %v598, 104
      %v5618 = vpop.permute.xlu0 %5617
      %5619 = vrot.lane.b32.xlu0 %v603, 104
      %v5620 = vpop.permute.xlu0 %5619
      %5621 = vrot.lane.b32.xlu0 %v608, 104
      %v5622 = vpop.permute.xlu0 %5621
      %5623 = vrot.lane.b32.xlu0 %v613, 104
      %v5624 = vpop.permute.xlu0 %5623
      %5625 = vrot.lane.b32.xlu0 %v618, 104
      %v5626 = vpop.permute.xlu0 %5625
      %s5659 = scalar_lea.vmem [#allocation3], 24
      %5660 = vst.msk [vmem:[%s5659 + $0x1] sm:$0xff] %vm299, %v5564
      %5661 = vst.msk [vmem:[%s5659 + $0x9] sm:$0xff] %vm299, %v5566
      %5662 = vst.msk [vmem:[%s5659 + $0x19] sm:$0xff] %vm299, %v5568
      %5663 = vst.msk [vmem:[%s5659 + $0x21] sm:$0xff] %vm299, %v5570
      %5664 = vst.msk [vmem:[%s5659 + $0x31] sm:$0xff] %vm299, %v5572
      %5665 = vst.msk [vmem:[%s5659 + $0x39] sm:$0xff] %vm299, %v5574
      %5666 = vst.msk [vmem:[%s5659 + $0x49] sm:$0xff] %vm299, %v5576
      %5667 = vst.msk [vmem:[%s5659 + $0x51] sm:$0xff] %vm299, %v5578
      %5668 = vst.msk [vmem:[%s5659 + $0x61] sm:$0xff] %vm299, %v5580
      %5669 = vst.msk [vmem:[%s5659 + $0x69] sm:$0xff] %vm299, %v5582
      %5670 = vst.msk [vmem:[%s5659 + $0x79] sm:$0xff] %vm299, %v5584
      %5671 = vst.msk [vmem:[%s5659 + $0x81] sm:$0xff] %vm299, %v5586
      %5672 = vst.msk [vmem:[%s5659 + $0x91] sm:$0xff] %vm299, %v5588
      %5673 = vst.msk [vmem:[%s5659 + $0x99] sm:$0xff] %vm299, %v5590
      %5674 = vst.msk [vmem:[%s5659 + $0xa9] sm:$0xff] %vm299, %v5592
      %5675 = vst.msk [vmem:[%s5659 + $0xb1] sm:$0xff] %vm299, %v5594
      %5676 = vst.msk [vmem:[%s5659 + $0xc1] sm:$0xff] %vm299, %v5596
      %5677 = vst.msk [vmem:[%s5659 + $0xc9] sm:$0xff] %vm299, %v5598
      %5678 = vst.msk [vmem:[%s5659 + $0xd9] sm:$0xff] %vm299, %v5600
      %5679 = vst.msk [vmem:[%s5659 + $0xe1] sm:$0xff] %vm299, %v5602
      %5680 = vst.msk [vmem:[%s5659 + $0xf1] sm:$0xff] %vm299, %v5604
      %5681 = vst.msk [vmem:[%s5659 + $0xf9] sm:$0xff] %vm299, %v5606
      %5682 = vst.msk [vmem:[%s5659 + $0x109] sm:$0xff] %vm299, %v5608
      %5683 = vst.msk [vmem:[%s5659 + $0x111] sm:$0xff] %vm299, %v5610
      %5684 = vst.msk [vmem:[%s5659 + $0x121] sm:$0xff] %vm299, %v5612
      %5685 = vst.msk [vmem:[%s5659 + $0x129] sm:$0xff] %vm299, %v5614
      %5686 = vst.msk [vmem:[%s5659 + $0x139] sm:$0xff] %vm299, %v5616
      %5687 = vst.msk [vmem:[%s5659 + $0x141] sm:$0xff] %vm299, %v5618
      %5688 = vst.msk [vmem:[%s5659 + $0x151] sm:$0xff] %vm299, %v5620
      %5689 = vst.msk [vmem:[%s5659 + $0x159] sm:$0xff] %vm299, %v5622
      %5690 = vst.msk [vmem:[%s5659 + $0x169] sm:$0xff] %vm299, %v5624
      %5691 = vst.msk [vmem:[%s5659 + $0x171] sm:$0xff] %vm299, %v5626
      %v5692 = vld [vmem:[#allocation3] sm:$0xff]
      %v5693 = vld [vmem:[#allocation3 + $0x8] sm:$0xff]
      %v5694 = vld [vmem:[#allocation3 + $0x18] sm:$0xff]
      %v5695 = vld [vmem:[#allocation3 + $0x20] sm:$0xff]
      %v5696 = vld [vmem:[#allocation3 + $0x30] sm:$0xff]
      %v5697 = vld [vmem:[#allocation3 + $0x38] sm:$0xff]
      %v5698 = vld [vmem:[#allocation3 + $0x48] sm:$0xff]
      %v5699 = vld [vmem:[#allocation3 + $0x50] sm:$0xff]
      %v5700 = vld [vmem:[#allocation3 + $0x60] sm:$0xff]
      %v5701 = vld [vmem:[#allocation3 + $0x68] sm:$0xff]
      %v5702 = vld [vmem:[#allocation3 + $0x78] sm:$0xff]
      %v5703 = vld [vmem:[#allocation3 + $0x80] sm:$0xff]
      %v5704 = vld [vmem:[#allocation3 + $0x90] sm:$0xff]
      %v5705 = vld [vmem:[#allocation3 + $0x98] sm:$0xff]
      %v5706 = vld [vmem:[#allocation3 + $0xa8] sm:$0xff]
      %v5707 = vld [vmem:[#allocation3 + $0xb0] sm:$0xff]
      %v5708 = vld [vmem:[#allocation3 + $0xc0] sm:$0xff]
      %v5709 = vld [vmem:[#allocation3 + $0xc8] sm:$0xff]
      %v5710 = vld [vmem:[#allocation3 + $0xd8] sm:$0xff]
      %v5711 = vld [vmem:[#allocation3 + $0xe0] sm:$0xff]
      %v5712 = vld [vmem:[#allocation3 + $0xf0] sm:$0xff]
      %v5713 = vld [vmem:[#allocation3 + $0xf8] sm:$0xff]
      %v5714 = vld [vmem:[#allocation3 + $0x108] sm:$0xff]
      %v5715 = vld [vmem:[#allocation3 + $0x110] sm:$0xff]
      %v5716 = vld [vmem:[#allocation3 + $0x120] sm:$0xff]
      %v5717 = vld [vmem:[#allocation3 + $0x128] sm:$0xff]
      %v5718 = vld [vmem:[#allocation3 + $0x138] sm:$0xff]
      %v5719 = vld [vmem:[#allocation3 + $0x140] sm:$0xff]
      %v5720 = vld [vmem:[#allocation3 + $0x150] sm:$0xff]
      %v5721 = vld [vmem:[#allocation3 + $0x158] sm:$0xff]
      %v5722 = vld [vmem:[#allocation3 + $0x168] sm:$0xff]
      %v5723 = vld [vmem:[#allocation3 + $0x170] sm:$0xff]
      %v5724 = vld [vmem:[#allocation3 + $0x1] sm:$0xff]
      %v5725 = vld [vmem:[#allocation3 + $0x9] sm:$0xff]
      %v5726 = vld [vmem:[#allocation3 + $0x19] sm:$0xff]
      %v5727 = vld [vmem:[#allocation3 + $0x21] sm:$0xff]
      %v5728 = vld [vmem:[#allocation3 + $0x31] sm:$0xff]
      %v5729 = vld [vmem:[#allocation3 + $0x39] sm:$0xff]
      %v5730 = vld [vmem:[#allocation3 + $0x49] sm:$0xff]
      %v5731 = vld [vmem:[#allocation3 + $0x51] sm:$0xff]
      %v5732 = vld [vmem:[#allocation3 + $0x61] sm:$0xff]
      %v5733 = vld [vmem:[#allocation3 + $0x69] sm:$0xff]
      %v5734 = vld [vmem:[#allocation3 + $0x79] sm:$0xff]
      %v5735 = vld [vmem:[#allocation3 + $0x81] sm:$0xff]
      %v5736 = vld [vmem:[#allocation3 + $0x91] sm:$0xff]
      %v5737 = vld [vmem:[#allocation3 + $0x99] sm:$0xff]
      %v5738 = vld [vmem:[#allocation3 + $0xa9] sm:$0xff]
      %v5739 = vld [vmem:[#allocation3 + $0xb1] sm:$0xff]
      %v5740 = vld [vmem:[#allocation3 + $0xc1] sm:$0xff]
      %v5741 = vld [vmem:[#allocation3 + $0xc9] sm:$0xff]
      %v5742 = vld [vmem:[#allocation3 + $0xd9] sm:$0xff]
      %v5743 = vld [vmem:[#allocation3 + $0xe1] sm:$0xff]
      %v5744 = vld [vmem:[#allocation3 + $0xf1] sm:$0xff]
      %v5745 = vld [vmem:[#allocation3 + $0xf9] sm:$0xff]
      %v5746 = vld [vmem:[#allocation3 + $0x109] sm:$0xff]
      %v5747 = vld [vmem:[#allocation3 + $0x111] sm:$0xff]
      %v5748 = vld [vmem:[#allocation3 + $0x121] sm:$0xff]
      %v5749 = vld [vmem:[#allocation3 + $0x129] sm:$0xff]
      %v5750 = vld [vmem:[#allocation3 + $0x139] sm:$0xff]
      %v5751 = vld [vmem:[#allocation3 + $0x141] sm:$0xff]
      %v5752 = vld [vmem:[#allocation3 + $0x151] sm:$0xff]
      %v5753 = vld [vmem:[#allocation3 + $0x159] sm:$0xff]
      %v5754 = vld [vmem:[#allocation3 + $0x169] sm:$0xff]
      %v5755 = vld [vmem:[#allocation3 + $0x171] sm:$0xff]
      %v5756 = vld [vmem:[#allocation3 + $0x2] sm:$0xff]
      %v5757 = vld [vmem:[#allocation3 + $0xa] sm:$0xff]
      %v5758 = vld [vmem:[#allocation3 + $0x1a] sm:$0xff]
      %v5759 = vld [vmem:[#allocation3 + $0x22] sm:$0xff]
      %v5760 = vld [vmem:[#allocation3 + $0x32] sm:$0xff]
      %v5761 = vld [vmem:[#allocation3 + $0x3a] sm:$0xff]
      %v5762 = vld [vmem:[#allocation3 + $0x4a] sm:$0xff]
      %v5763 = vld [vmem:[#allocation3 + $0x52] sm:$0xff]
      %v5764 = vld [vmem:[#allocation3 + $0x62] sm:$0xff]
      %v5765 = vld [vmem:[#allocation3 + $0x6a] sm:$0xff]
      %v5766 = vld [vmem:[#allocation3 + $0x7a] sm:$0xff]
      %v5767 = vld [vmem:[#allocation3 + $0x82] sm:$0xff]
      %v5768 = vld [vmem:[#allocation3 + $0x92] sm:$0xff]
      %v5769 = vld [vmem:[#allocation3 + $0x9a] sm:$0xff]
      %v5770 = vld [vmem:[#allocation3 + $0xaa] sm:$0xff]
      %v5771 = vld [vmem:[#allocation3 + $0xb2] sm:$0xff]
      %v5772 = vld [vmem:[#allocation3 + $0xc2] sm:$0xff]
      %v5773 = vld [vmem:[#allocation3 + $0xca] sm:$0xff]
      %v5774 = vld [vmem:[#allocation3 + $0xda] sm:$0xff]
      %v5775 = vld [vmem:[#allocation3 + $0xe2] sm:$0xff]
      %v5776 = vld [vmem:[#allocation3 + $0xf2] sm:$0xff]
      %v5777 = vld [vmem:[#allocation3 + $0xfa] sm:$0xff]
      %v5778 = vld [vmem:[#allocation3 + $0x10a] sm:$0xff]
      %v5779 = vld [vmem:[#allocation3 + $0x112] sm:$0xff]
      %v5780 = vld [vmem:[#allocation3 + $0x122] sm:$0xff]
      %v5781 = vld [vmem:[#allocation3 + $0x12a] sm:$0xff]
      %v5782 = vld [vmem:[#allocation3 + $0x13a] sm:$0xff]
      %v5783 = vld [vmem:[#allocation3 + $0x142] sm:$0xff]
      %v5784 = vld [vmem:[#allocation3 + $0x152] sm:$0xff]
      %v5785 = vld [vmem:[#allocation3 + $0x15a] sm:$0xff]
      %v5786 = vld [vmem:[#allocation3 + $0x16a] sm:$0xff]
      %v5787 = vld [vmem:[#allocation3 + $0x172] sm:$0xff]
      %v5788 = vld [vmem:[%s5659] sm:$0xff]
      %v5789 = vld [vmem:[%s5659 + $0x8] sm:$0xff]
      %v5790 = vld [vmem:[%s5659 + $0x18] sm:$0xff]
      %v5791 = vld [vmem:[%s5659 + $0x20] sm:$0xff]
      %v5792 = vld [vmem:[%s5659 + $0x30] sm:$0xff]
      %v5793 = vld [vmem:[%s5659 + $0x38] sm:$0xff]
      %v5794 = vld [vmem:[%s5659 + $0x48] sm:$0xff]
      %v5795 = vld [vmem:[%s5659 + $0x50] sm:$0xff]
      %v5796 = vld [vmem:[%s5659 + $0x60] sm:$0xff]
      %v5797 = vld [vmem:[%s5659 + $0x68] sm:$0xff]
      %v5798 = vld [vmem:[%s5659 + $0x78] sm:$0xff]
      %v5799 = vld [vmem:[%s5659 + $0x80] sm:$0xff]
      %v5800 = vld [vmem:[%s5659 + $0x90] sm:$0xff]
      %v5801 = vld [vmem:[%s5659 + $0x98] sm:$0xff]
      %v5802 = vld [vmem:[%s5659 + $0xa8] sm:$0xff]
      %v5803 = vld [vmem:[%s5659 + $0xb0] sm:$0xff]
      %v5804 = vld [vmem:[%s5659 + $0xc0] sm:$0xff]
      %v5805 = vld [vmem:[%s5659 + $0xc8] sm:$0xff]
      %v5806 = vld [vmem:[%s5659 + $0xd8] sm:$0xff]
      %v5807 = vld [vmem:[%s5659 + $0xe0] sm:$0xff]
      %v5808 = vld [vmem:[%s5659 + $0xf0] sm:$0xff]
      %v5809 = vld [vmem:[%s5659 + $0xf8] sm:$0xff]
      %v5810 = vld [vmem:[%s5659 + $0x108] sm:$0xff]
      %v5811 = vld [vmem:[%s5659 + $0x110] sm:$0xff]
      %v5812 = vld [vmem:[%s5659 + $0x120] sm:$0xff]
      %v5813 = vld [vmem:[%s5659 + $0x128] sm:$0xff]
      %v5814 = vld [vmem:[%s5659 + $0x138] sm:$0xff]
      %v5815 = vld [vmem:[%s5659 + $0x140] sm:$0xff]
      %v5816 = vld [vmem:[%s5659 + $0x150] sm:$0xff]
      %v5817 = vld [vmem:[%s5659 + $0x158] sm:$0xff]
      %v5818 = vld [vmem:[%s5659 + $0x168] sm:$0xff]
      %v5819 = vld [vmem:[%s5659 + $0x170] sm:$0xff]
      %v5820 = vld [vmem:[%s5659 + $0x1] sm:$0xff]
      %v5821 = vld [vmem:[%s5659 + $0x9] sm:$0xff]
      %v5822 = vld [vmem:[%s5659 + $0x19] sm:$0xff]
      %v5823 = vld [vmem:[%s5659 + $0x21] sm:$0xff]
      %v5824 = vld [vmem:[%s5659 + $0x31] sm:$0xff]
      %v5825 = vld [vmem:[%s5659 + $0x39] sm:$0xff]
      %v5826 = vld [vmem:[%s5659 + $0x49] sm:$0xff]
      %v5827 = vld [vmem:[%s5659 + $0x51] sm:$0xff]
      %v5828 = vld [vmem:[%s5659 + $0x61] sm:$0xff]
      %v5829 = vld [vmem:[%s5659 + $0x69] sm:$0xff]
      %v5830 = vld [vmem:[%s5659 + $0x79] sm:$0xff]
      %v5831 = vld [vmem:[%s5659 + $0x81] sm:$0xff]
      %v5832 = vld [vmem:[%s5659 + $0x91] sm:$0xff]
      %v5833 = vld [vmem:[%s5659 + $0x99] sm:$0xff]
      %v5834 = vld [vmem:[%s5659 + $0xa9] sm:$0xff]
      %v5835 = vld [vmem:[%s5659 + $0xb1] sm:$0xff]
      %v5836 = vld [vmem:[%s5659 + $0xc1] sm:$0xff]
      %v5837 = vld [vmem:[%s5659 + $0xc9] sm:$0xff]
      %v5838 = vld [vmem:[%s5659 + $0xd9] sm:$0xff]
      %v5839 = vld [vmem:[%s5659 + $0xe1] sm:$0xff]
      %v5840 = vld [vmem:[%s5659 + $0xf1] sm:$0xff]
      %v5841 = vld [vmem:[%s5659 + $0xf9] sm:$0xff]
      %v5842 = vld [vmem:[%s5659 + $0x109] sm:$0xff]
      %v5843 = vld [vmem:[%s5659 + $0x111] sm:$0xff]
      %v5844 = vld [vmem:[%s5659 + $0x121] sm:$0xff]
      %v5845 = vld [vmem:[%s5659 + $0x129] sm:$0xff]
      %v5846 = vld [vmem:[%s5659 + $0x139] sm:$0xff]
      %v5847 = vld [vmem:[%s5659 + $0x141] sm:$0xff]
      %v5848 = vld [vmem:[%s5659 + $0x151] sm:$0xff]
      %v5849 = vld [vmem:[%s5659 + $0x159] sm:$0xff]
      %v5850 = vld [vmem:[%s5659 + $0x169] sm:$0xff]
      %v5851 = vld [vmem:[%s5659 + $0x171] sm:$0xff]
      %v5852 = vld [vmem:[%s5659 + $0x2] sm:$0xff]
      %v5853 = vld [vmem:[%s5659 + $0xa] sm:$0xff]
      %v5854 = vld [vmem:[%s5659 + $0x1a] sm:$0xff]
      %v5855 = vld [vmem:[%s5659 + $0x22] sm:$0xff]
      %v5856 = vld [vmem:[%s5659 + $0x32] sm:$0xff]
      %v5857 = vld [vmem:[%s5659 + $0x3a] sm:$0xff]
      %v5858 = vld [vmem:[%s5659 + $0x4a] sm:$0xff]
      %v5859 = vld [vmem:[%s5659 + $0x52] sm:$0xff]
      %v5860 = vld [vmem:[%s5659 + $0x62] sm:$0xff]
      %v5861 = vld [vmem:[%s5659 + $0x6a] sm:$0xff]
      %v5862 = vld [vmem:[%s5659 + $0x7a] sm:$0xff]
      %v5863 = vld [vmem:[%s5659 + $0x82] sm:$0xff]
      %v5864 = vld [vmem:[%s5659 + $0x92] sm:$0xff]
      %v5865 = vld [vmem:[%s5659 + $0x9a] sm:$0xff]
      %v5866 = vld [vmem:[%s5659 + $0xaa] sm:$0xff]
      %v5867 = vld [vmem:[%s5659 + $0xb2] sm:$0xff]
      %v5868 = vld [vmem:[%s5659 + $0xc2] sm:$0xff]
      %v5869 = vld [vmem:[%s5659 + $0xca] sm:$0xff]
      %v5870 = vld [vmem:[%s5659 + $0xda] sm:$0xff]
      %v5871 = vld [vmem:[%s5659 + $0xe2] sm:$0xff]
      %v5872 = vld [vmem:[%s5659 + $0xf2] sm:$0xff]
      %v5873 = vld [vmem:[%s5659 + $0xfa] sm:$0xff]
      %v5874 = vld [vmem:[%s5659 + $0x10a] sm:$0xff]
      %v5875 = vld [vmem:[%s5659 + $0x112] sm:$0xff]
      %v5876 = vld [vmem:[%s5659 + $0x122] sm:$0xff]
      %v5877 = vld [vmem:[%s5659 + $0x12a] sm:$0xff]
      %v5878 = vld [vmem:[%s5659 + $0x13a] sm:$0xff]
      %v5879 = vld [vmem:[%s5659 + $0x142] sm:$0xff]
      %v5880 = vld [vmem:[%s5659 + $0x152] sm:$0xff]
      %v5881 = vld [vmem:[%s5659 + $0x15a] sm:$0xff]
      %v5882 = vld [vmem:[%s5659 + $0x16a] sm:$0xff]
      %v5883 = vld [vmem:[%s5659 + $0x172] sm:$0xff]
      %s5884 = scalar_lea.vmem [#allocation3], 48
      %v5885 = vld [vmem:[%s5884] sm:$0xff]
      %v5886 = vld [vmem:[%s5884 + $0x8] sm:$0xff]
      %v5887 = vld [vmem:[%s5884 + $0x18] sm:$0xff]
      %v5888 = vld [vmem:[%s5884 + $0x20] sm:$0xff]
      %v5889 = vld [vmem:[%s5884 + $0x30] sm:$0xff]
      %v5890 = vld [vmem:[%s5884 + $0x38] sm:$0xff]
      %v5891 = vld [vmem:[%s5884 + $0x48] sm:$0xff]
      %v5892 = vld [vmem:[%s5884 + $0x50] sm:$0xff]
      %v5893 = vld [vmem:[%s5884 + $0x60] sm:$0xff]
      %v5894 = vld [vmem:[%s5884 + $0x68] sm:$0xff]
      %v5895 = vld [vmem:[%s5884 + $0x78] sm:$0xff]
      %v5896 = vld [vmem:[%s5884 + $0x80] sm:$0xff]
      %v5897 = vld [vmem:[%s5884 + $0x90] sm:$0xff]
      %v5898 = vld [vmem:[%s5884 + $0x98] sm:$0xff]
      %v5899 = vld [vmem:[%s5884 + $0xa8] sm:$0xff]
      %v5900 = vld [vmem:[%s5884 + $0xb0] sm:$0xff]
      %v5901 = vld [vmem:[%s5884 + $0xc0] sm:$0xff]
      %v5902 = vld [vmem:[%s5884 + $0xc8] sm:$0xff]
      %v5903 = vld [vmem:[%s5884 + $0xd8] sm:$0xff]
      %v5904 = vld [vmem:[%s5884 + $0xe0] sm:$0xff]
      %v5905 = vld [vmem:[%s5884 + $0xf0] sm:$0xff]
      %v5906 = vld [vmem:[%s5884 + $0xf8] sm:$0xff]
      %v5907 = vld [vmem:[%s5884 + $0x108] sm:$0xff]
      %v5908 = vld [vmem:[%s5884 + $0x110] sm:$0xff]
      %v5909 = vld [vmem:[%s5884 + $0x120] sm:$0xff]
      %v5910 = vld [vmem:[%s5884 + $0x128] sm:$0xff]
      %v5911 = vld [vmem:[%s5884 + $0x138] sm:$0xff]
      %v5912 = vld [vmem:[%s5884 + $0x140] sm:$0xff]
      %v5913 = vld [vmem:[%s5884 + $0x150] sm:$0xff]
      %v5914 = vld [vmem:[%s5884 + $0x158] sm:$0xff]
      %v5915 = vld [vmem:[%s5884 + $0x168] sm:$0xff]
      %v5916 = vld [vmem:[%s5884 + $0x170] sm:$0xff]
      %v5917 = vld [vmem:[%s5884 + $0x1] sm:$0xff]
      %v5918 = vld [vmem:[%s5884 + $0x9] sm:$0xff]
      %v5919 = vld [vmem:[%s5884 + $0x19] sm:$0xff]
      %v5920 = vld [vmem:[%s5884 + $0x21] sm:$0xff]
      %v5921 = vld [vmem:[%s5884 + $0x31] sm:$0xff]
      %v5922 = vld [vmem:[%s5884 + $0x39] sm:$0xff]
      %v5923 = vld [vmem:[%s5884 + $0x49] sm:$0xff]
      %v5924 = vld [vmem:[%s5884 + $0x51] sm:$0xff]
      %v5925 = vld [vmem:[%s5884 + $0x61] sm:$0xff]
      %v5926 = vld [vmem:[%s5884 + $0x69] sm:$0xff]
      %v5927 = vld [vmem:[%s5884 + $0x79] sm:$0xff]
      %v5928 = vld [vmem:[%s5884 + $0x81] sm:$0xff]
      %v5929 = vld [vmem:[%s5884 + $0x91] sm:$0xff]
      %v5930 = vld [vmem:[%s5884 + $0x99] sm:$0xff]
      %v5931 = vld [vmem:[%s5884 + $0xa9] sm:$0xff]
      %v5932 = vld [vmem:[%s5884 + $0xb1] sm:$0xff]
      %v5933 = vld [vmem:[%s5884 + $0xc1] sm:$0xff]
      %v5934 = vld [vmem:[%s5884 + $0xc9] sm:$0xff]
      %v5935 = vld [vmem:[%s5884 + $0xd9] sm:$0xff]
      %v5936 = vld [vmem:[%s5884 + $0xe1] sm:$0xff]
      %v5937 = vld [vmem:[%s5884 + $0xf1] sm:$0xff]
      %v5938 = vld [vmem:[%s5884 + $0xf9] sm:$0xff]
      %v5939 = vld [vmem:[%s5884 + $0x109] sm:$0xff]
      %v5940 = vld [vmem:[%s5884 + $0x111] sm:$0xff]
      %v5941 = vld [vmem:[%s5884 + $0x121] sm:$0xff]
      %v5942 = vld [vmem:[%s5884 + $0x129] sm:$0xff]
      %v5943 = vld [vmem:[%s5884 + $0x139] sm:$0xff]
      %v5944 = vld [vmem:[%s5884 + $0x141] sm:$0xff]
      %v5945 = vld [vmem:[%s5884 + $0x151] sm:$0xff]
      %v5946 = vld [vmem:[%s5884 + $0x159] sm:$0xff]
      %v5947 = vld [vmem:[%s5884 + $0x169] sm:$0xff]
      %v5948 = vld [vmem:[%s5884 + $0x171] sm:$0xff]
      %v5949 = vld [vmem:[%s5884 + $0x2] sm:$0xff]
      %v5950 = vld [vmem:[%s5884 + $0xa] sm:$0xff]
      %v5951 = vld [vmem:[%s5884 + $0x1a] sm:$0xff]
      %v5952 = vld [vmem:[%s5884 + $0x22] sm:$0xff]
      %v5953 = vld [vmem:[%s5884 + $0x32] sm:$0xff]
      %v5954 = vld [vmem:[%s5884 + $0x3a] sm:$0xff]
      %v5955 = vld [vmem:[%s5884 + $0x4a] sm:$0xff]
      %v5956 = vld [vmem:[%s5884 + $0x52] sm:$0xff]
      %v5957 = vld [vmem:[%s5884 + $0x62] sm:$0xff]
      %v5958 = vld [vmem:[%s5884 + $0x6a] sm:$0xff]
      %v5959 = vld [vmem:[%s5884 + $0x7a] sm:$0xff]
      %v5960 = vld [vmem:[%s5884 + $0x82] sm:$0xff]
      %v5961 = vld [vmem:[%s5884 + $0x92] sm:$0xff]
      %v5962 = vld [vmem:[%s5884 + $0x9a] sm:$0xff]
      %v5963 = vld [vmem:[%s5884 + $0xaa] sm:$0xff]
      %v5964 = vld [vmem:[%s5884 + $0xb2] sm:$0xff]
      %v5965 = vld [vmem:[%s5884 + $0xc2] sm:$0xff]
      %v5966 = vld [vmem:[%s5884 + $0xca] sm:$0xff]
      %v5967 = vld [vmem:[%s5884 + $0xda] sm:$0xff]
      %v5968 = vld [vmem:[%s5884 + $0xe2] sm:$0xff]
      %v5969 = vld [vmem:[%s5884 + $0xf2] sm:$0xff]
      %v5970 = vld [vmem:[%s5884 + $0xfa] sm:$0xff]
      %v5971 = vld [vmem:[%s5884 + $0x10a] sm:$0xff]
      %v5972 = vld [vmem:[%s5884 + $0x112] sm:$0xff]
      %v5973 = vld [vmem:[%s5884 + $0x122] sm:$0xff]
      %v5974 = vld [vmem:[%s5884 + $0x12a] sm:$0xff]
      %v5975 = vld [vmem:[%s5884 + $0x13a] sm:$0xff]
      %v5976 = vld [vmem:[%s5884 + $0x142] sm:$0xff]
      %v5977 = vld [vmem:[%s5884 + $0x152] sm:$0xff]
      %v5978 = vld [vmem:[%s5884 + $0x15a] sm:$0xff]
      %v5979 = vld [vmem:[%s5884 + $0x16a] sm:$0xff]
      %v5980 = vld [vmem:[%s5884 + $0x172] sm:$0xff]
      %6013 = vrot.lane.b32.xlu0 %v5724, 16
      %v6014 = vpop.permute.xlu0 %6013
      %6015 = vrot.lane.b32.xlu0 %v5725, 16
      %v6016 = vpop.permute.xlu0 %6015
      %6017 = vrot.lane.b32.xlu0 %v5726, 16
      %v6018 = vpop.permute.xlu0 %6017
      %6019 = vrot.lane.b32.xlu0 %v5727, 16
      %v6020 = vpop.permute.xlu0 %6019
      %6021 = vrot.lane.b32.xlu0 %v5728, 16
      %v6022 = vpop.permute.xlu0 %6021
      %6023 = vrot.lane.b32.xlu0 %v5729, 16
      %v6024 = vpop.permute.xlu0 %6023
      %6025 = vrot.lane.b32.xlu0 %v5730, 16
      %v6026 = vpop.permute.xlu0 %6025
      %6027 = vrot.lane.b32.xlu0 %v5731, 16
      %v6028 = vpop.permute.xlu0 %6027
      %6029 = vrot.lane.b32.xlu0 %v5732, 16
      %v6030 = vpop.permute.xlu0 %6029
      %6031 = vrot.lane.b32.xlu0 %v5733, 16
      %v6032 = vpop.permute.xlu0 %6031
      %6033 = vrot.lane.b32.xlu0 %v5734, 16
      %v6034 = vpop.permute.xlu0 %6033
      %6035 = vrot.lane.b32.xlu0 %v5735, 16
      %v6036 = vpop.permute.xlu0 %6035
      %6037 = vrot.lane.b32.xlu0 %v5736, 16
      %v6038 = vpop.permute.xlu0 %6037
      %6039 = vrot.lane.b32.xlu0 %v5737, 16
      %v6040 = vpop.permute.xlu0 %6039
      %6041 = vrot.lane.b32.xlu0 %v5738, 16
      %v6042 = vpop.permute.xlu0 %6041
      %6043 = vrot.lane.b32.xlu0 %v5739, 16
      %v6044 = vpop.permute.xlu0 %6043
      %6045 = vrot.lane.b32.xlu0 %v5740, 16
      %v6046 = vpop.permute.xlu0 %6045
      %6047 = vrot.lane.b32.xlu0 %v5741, 16
      %v6048 = vpop.permute.xlu0 %6047
      %6049 = vrot.lane.b32.xlu0 %v5742, 16
      %v6050 = vpop.permute.xlu0 %6049
      %6051 = vrot.lane.b32.xlu0 %v5743, 16
      %v6052 = vpop.permute.xlu0 %6051
      %6053 = vrot.lane.b32.xlu0 %v5744, 16
      %v6054 = vpop.permute.xlu0 %6053
      %6055 = vrot.lane.b32.xlu0 %v5745, 16
      %v6056 = vpop.permute.xlu0 %6055
      %6057 = vrot.lane.b32.xlu0 %v5746, 16
      %v6058 = vpop.permute.xlu0 %6057
      %6059 = vrot.lane.b32.xlu0 %v5747, 16
      %v6060 = vpop.permute.xlu0 %6059
      %6061 = vrot.lane.b32.xlu0 %v5748, 16
      %v6062 = vpop.permute.xlu0 %6061
      %6063 = vrot.lane.b32.xlu0 %v5749, 16
      %v6064 = vpop.permute.xlu0 %6063
      %6065 = vrot.lane.b32.xlu0 %v5750, 16
      %v6066 = vpop.permute.xlu0 %6065
      %6067 = vrot.lane.b32.xlu0 %v5751, 16
      %v6068 = vpop.permute.xlu0 %6067
      %6069 = vrot.lane.b32.xlu0 %v5752, 16
      %v6070 = vpop.permute.xlu0 %6069
      %6071 = vrot.lane.b32.xlu0 %v5753, 16
      %v6072 = vpop.permute.xlu0 %6071
      %6073 = vrot.lane.b32.xlu0 %v5754, 16
      %v6074 = vpop.permute.xlu0 %6073
      %6075 = vrot.lane.b32.xlu0 %v5755, 16
      %v6076 = vpop.permute.xlu0 %6075
      %6141 = vrot.lane.b32.xlu0 %v5756, 32
      %v6142 = vpop.permute.xlu0 %6141
      %6143 = vrot.lane.b32.xlu0 %v5757, 32
      %v6144 = vpop.permute.xlu0 %6143
      %6145 = vrot.lane.b32.xlu0 %v5758, 32
      %v6146 = vpop.permute.xlu0 %6145
      %6147 = vrot.lane.b32.xlu0 %v5759, 32
      %v6148 = vpop.permute.xlu0 %6147
      %6149 = vrot.lane.b32.xlu0 %v5760, 32
      %v6150 = vpop.permute.xlu0 %6149
      %6151 = vrot.lane.b32.xlu0 %v5761, 32
      %v6152 = vpop.permute.xlu0 %6151
      %6153 = vrot.lane.b32.xlu0 %v5762, 32
      %v6154 = vpop.permute.xlu0 %6153
      %6155 = vrot.lane.b32.xlu0 %v5763, 32
      %v6156 = vpop.permute.xlu0 %6155
      %6157 = vrot.lane.b32.xlu0 %v5764, 32
      %v6158 = vpop.permute.xlu0 %6157
      %6159 = vrot.lane.b32.xlu0 %v5765, 32
      %v6160 = vpop.permute.xlu0 %6159
      %6161 = vrot.lane.b32.xlu0 %v5766, 32
      %v6162 = vpop.permute.xlu0 %6161
      %6163 = vrot.lane.b32.xlu0 %v5767, 32
      %v6164 = vpop.permute.xlu0 %6163
      %6165 = vrot.lane.b32.xlu0 %v5768, 32
      %v6166 = vpop.permute.xlu0 %6165
      %6167 = vrot.lane.b32.xlu0 %v5769, 32
      %v6168 = vpop.permute.xlu0 %6167
      %6169 = vrot.lane.b32.xlu0 %v5770, 32
      %v6170 = vpop.permute.xlu0 %6169
      %6171 = vrot.lane.b32.xlu0 %v5771, 32
      %v6172 = vpop.permute.xlu0 %6171
      %6173 = vrot.lane.b32.xlu0 %v5772, 32
      %v6174 = vpop.permute.xlu0 %6173
      %6175 = vrot.lane.b32.xlu0 %v5773, 32
      %v6176 = vpop.permute.xlu0 %6175
      %6177 = vrot.lane.b32.xlu0 %v5774, 32
      %v6178 = vpop.permute.xlu0 %6177
      %6179 = vrot.lane.b32.xlu0 %v5775, 32
      %v6180 = vpop.permute.xlu0 %6179
      %6181 = vrot.lane.b32.xlu0 %v5776, 32
      %v6182 = vpop.permute.xlu0 %6181
      %6183 = vrot.lane.b32.xlu0 %v5777, 32
      %v6184 = vpop.permute.xlu0 %6183
      %6185 = vrot.lane.b32.xlu0 %v5778, 32
      %v6186 = vpop.permute.xlu0 %6185
      %6187 = vrot.lane.b32.xlu0 %v5779, 32
      %v6188 = vpop.permute.xlu0 %6187
      %6189 = vrot.lane.b32.xlu0 %v5780, 32
      %v6190 = vpop.permute.xlu0 %6189
      %6191 = vrot.lane.b32.xlu0 %v5781, 32
      %v6192 = vpop.permute.xlu0 %6191
      %6193 = vrot.lane.b32.xlu0 %v5782, 32
      %v6194 = vpop.permute.xlu0 %6193
      %6195 = vrot.lane.b32.xlu0 %v5783, 32
      %v6196 = vpop.permute.xlu0 %6195
      %6197 = vrot.lane.b32.xlu0 %v5784, 32
      %v6198 = vpop.permute.xlu0 %6197
      %6199 = vrot.lane.b32.xlu0 %v5785, 32
      %v6200 = vpop.permute.xlu0 %6199
      %6201 = vrot.lane.b32.xlu0 %v5786, 32
      %v6202 = vpop.permute.xlu0 %6201
      %6203 = vrot.lane.b32.xlu0 %v5787, 32
      %v6204 = vpop.permute.xlu0 %6203
      %6269 = vrot.lane.b32.xlu0 %v5788, 48
      %v6270 = vpop.permute.xlu0 %6269
      %6271 = vrot.lane.b32.xlu0 %v5789, 48
      %v6272 = vpop.permute.xlu0 %6271
      %6273 = vrot.lane.b32.xlu0 %v5790, 48
      %v6274 = vpop.permute.xlu0 %6273
      %6275 = vrot.lane.b32.xlu0 %v5791, 48
      %v6276 = vpop.permute.xlu0 %6275
      %6277 = vrot.lane.b32.xlu0 %v5792, 48
      %v6278 = vpop.permute.xlu0 %6277
      %6279 = vrot.lane.b32.xlu0 %v5793, 48
      %v6280 = vpop.permute.xlu0 %6279
      %6281 = vrot.lane.b32.xlu0 %v5794, 48
      %v6282 = vpop.permute.xlu0 %6281
      %6283 = vrot.lane.b32.xlu0 %v5795, 48
      %v6284 = vpop.permute.xlu0 %6283
      %6285 = vrot.lane.b32.xlu0 %v5796, 48
      %v6286 = vpop.permute.xlu0 %6285
      %6287 = vrot.lane.b32.xlu0 %v5797, 48
      %v6288 = vpop.permute.xlu0 %6287
      %6289 = vrot.lane.b32.xlu0 %v5798, 48
      %v6290 = vpop.permute.xlu0 %6289
      %6291 = vrot.lane.b32.xlu0 %v5799, 48
      %v6292 = vpop.permute.xlu0 %6291
      %6293 = vrot.lane.b32.xlu0 %v5800, 48
      %v6294 = vpop.permute.xlu0 %6293
      %6295 = vrot.lane.b32.xlu0 %v5801, 48
      %v6296 = vpop.permute.xlu0 %6295
      %6297 = vrot.lane.b32.xlu0 %v5802, 48
      %v6298 = vpop.permute.xlu0 %6297
      %6299 = vrot.lane.b32.xlu0 %v5803, 48
      %v6300 = vpop.permute.xlu0 %6299
      %6301 = vrot.lane.b32.xlu0 %v5804, 48
      %v6302 = vpop.permute.xlu0 %6301
      %6303 = vrot.lane.b32.xlu0 %v5805, 48
      %v6304 = vpop.permute.xlu0 %6303
      %6305 = vrot.lane.b32.xlu0 %v5806, 48
      %v6306 = vpop.permute.xlu0 %6305
      %6307 = vrot.lane.b32.xlu0 %v5807, 48
      %v6308 = vpop.permute.xlu0 %6307
      %6309 = vrot.lane.b32.xlu0 %v5808, 48
      %v6310 = vpop.permute.xlu0 %6309
      %6311 = vrot.lane.b32.xlu0 %v5809, 48
      %v6312 = vpop.permute.xlu0 %6311
      %6313 = vrot.lane.b32.xlu0 %v5810, 48
      %v6314 = vpop.permute.xlu0 %6313
      %6315 = vrot.lane.b32.xlu0 %v5811, 48
      %v6316 = vpop.permute.xlu0 %6315
      %6317 = vrot.lane.b32.xlu0 %v5812, 48
      %v6318 = vpop.permute.xlu0 %6317
      %6319 = vrot.lane.b32.xlu0 %v5813, 48
      %v6320 = vpop.permute.xlu0 %6319
      %6321 = vrot.lane.b32.xlu0 %v5814, 48
      %v6322 = vpop.permute.xlu0 %6321
      %6323 = vrot.lane.b32.xlu0 %v5815, 48
      %v6324 = vpop.permute.xlu0 %6323
      %6325 = vrot.lane.b32.xlu0 %v5816, 48
      %v6326 = vpop.permute.xlu0 %6325
      %6327 = vrot.lane.b32.xlu0 %v5817, 48
      %v6328 = vpop.permute.xlu0 %6327
      %6329 = vrot.lane.b32.xlu0 %v5818, 48
      %v6330 = vpop.permute.xlu0 %6329
      %6331 = vrot.lane.b32.xlu0 %v5819, 48
      %v6332 = vpop.permute.xlu0 %6331
      %6397 = vrot.lane.b32.xlu0 %v5820, 64
      %v6398 = vpop.permute.xlu0 %6397
      %6399 = vrot.lane.b32.xlu0 %v5821, 64
      %v6400 = vpop.permute.xlu0 %6399
      %6401 = vrot.lane.b32.xlu0 %v5822, 64
      %v6402 = vpop.permute.xlu0 %6401
      %6403 = vrot.lane.b32.xlu0 %v5823, 64
      %v6404 = vpop.permute.xlu0 %6403
      %6405 = vrot.lane.b32.xlu0 %v5824, 64
      %v6406 = vpop.permute.xlu0 %6405
      %6407 = vrot.lane.b32.xlu0 %v5825, 64
      %v6408 = vpop.permute.xlu0 %6407
      %6409 = vrot.lane.b32.xlu0 %v5826, 64
      %v6410 = vpop.permute.xlu0 %6409
      %6411 = vrot.lane.b32.xlu0 %v5827, 64
      %v6412 = vpop.permute.xlu0 %6411
      %6413 = vrot.lane.b32.xlu0 %v5828, 64
      %v6414 = vpop.permute.xlu0 %6413
      %6415 = vrot.lane.b32.xlu0 %v5829, 64
      %v6416 = vpop.permute.xlu0 %6415
      %6417 = vrot.lane.b32.xlu0 %v5830, 64
      %v6418 = vpop.permute.xlu0 %6417
      %6419 = vrot.lane.b32.xlu0 %v5831, 64
      %v6420 = vpop.permute.xlu0 %6419
      %6421 = vrot.lane.b32.xlu0 %v5832, 64
      %v6422 = vpop.permute.xlu0 %6421
      %6423 = vrot.lane.b32.xlu0 %v5833, 64
      %v6424 = vpop.permute.xlu0 %6423
      %6425 = vrot.lane.b32.xlu0 %v5834, 64
      %v6426 = vpop.permute.xlu0 %6425
      %6427 = vrot.lane.b32.xlu0 %v5835, 64
      %v6428 = vpop.permute.xlu0 %6427
      %6429 = vrot.lane.b32.xlu0 %v5836, 64
      %v6430 = vpop.permute.xlu0 %6429
      %6431 = vrot.lane.b32.xlu0 %v5837, 64
      %v6432 = vpop.permute.xlu0 %6431
      %6433 = vrot.lane.b32.xlu0 %v5838, 64
      %v6434 = vpop.permute.xlu0 %6433
      %6435 = vrot.lane.b32.xlu0 %v5839, 64
      %v6436 = vpop.permute.xlu0 %6435
      %6437 = vrot.lane.b32.xlu0 %v5840, 64
      %v6438 = vpop.permute.xlu0 %6437
      %6439 = vrot.lane.b32.xlu0 %v5841, 64
      %v6440 = vpop.permute.xlu0 %6439
      %6441 = vrot.lane.b32.xlu0 %v5842, 64
      %v6442 = vpop.permute.xlu0 %6441
      %6443 = vrot.lane.b32.xlu0 %v5843, 64
      %v6444 = vpop.permute.xlu0 %6443
      %6445 = vrot.lane.b32.xlu0 %v5844, 64
      %v6446 = vpop.permute.xlu0 %6445
      %6447 = vrot.lane.b32.xlu0 %v5845, 64
      %v6448 = vpop.permute.xlu0 %6447
      %6449 = vrot.lane.b32.xlu0 %v5846, 64
      %v6450 = vpop.permute.xlu0 %6449
      %6451 = vrot.lane.b32.xlu0 %v5847, 64
      %v6452 = vpop.permute.xlu0 %6451
      %6453 = vrot.lane.b32.xlu0 %v5848, 64
      %v6454 = vpop.permute.xlu0 %6453
      %6455 = vrot.lane.b32.xlu0 %v5849, 64
      %v6456 = vpop.permute.xlu0 %6455
      %6457 = vrot.lane.b32.xlu0 %v5850, 64
      %v6458 = vpop.permute.xlu0 %6457
      %6459 = vrot.lane.b32.xlu0 %v5851, 64
      %v6460 = vpop.permute.xlu0 %6459
      %6525 = vrot.lane.b32.xlu0 %v5852, 80
      %v6526 = vpop.permute.xlu0 %6525
      %6527 = vrot.lane.b32.xlu0 %v5853, 80
      %v6528 = vpop.permute.xlu0 %6527
      %6529 = vrot.lane.b32.xlu0 %v5854, 80
      %v6530 = vpop.permute.xlu0 %6529
      %6531 = vrot.lane.b32.xlu0 %v5855, 80
      %v6532 = vpop.permute.xlu0 %6531
      %6533 = vrot.lane.b32.xlu0 %v5856, 80
      %v6534 = vpop.permute.xlu0 %6533
      %6535 = vrot.lane.b32.xlu0 %v5857, 80
      %v6536 = vpop.permute.xlu0 %6535
      %6537 = vrot.lane.b32.xlu0 %v5858, 80
      %v6538 = vpop.permute.xlu0 %6537
      %6539 = vrot.lane.b32.xlu0 %v5859, 80
      %v6540 = vpop.permute.xlu0 %6539
      %6541 = vrot.lane.b32.xlu0 %v5860, 80
      %v6542 = vpop.permute.xlu0 %6541
      %6543 = vrot.lane.b32.xlu0 %v5861, 80
      %v6544 = vpop.permute.xlu0 %6543
      %6545 = vrot.lane.b32.xlu0 %v5862, 80
      %v6546 = vpop.permute.xlu0 %6545
      %6547 = vrot.lane.b32.xlu0 %v5863, 80
      %v6548 = vpop.permute.xlu0 %6547
      %6549 = vrot.lane.b32.xlu0 %v5864, 80
      %v6550 = vpop.permute.xlu0 %6549
      %6551 = vrot.lane.b32.xlu0 %v5865, 80
      %v6552 = vpop.permute.xlu0 %6551
      %6553 = vrot.lane.b32.xlu0 %v5866, 80
      %v6554 = vpop.permute.xlu0 %6553
      %6555 = vrot.lane.b32.xlu0 %v5867, 80
      %v6556 = vpop.permute.xlu0 %6555
      %6557 = vrot.lane.b32.xlu0 %v5868, 80
      %v6558 = vpop.permute.xlu0 %6557
      %6559 = vrot.lane.b32.xlu0 %v5869, 80
      %v6560 = vpop.permute.xlu0 %6559
      %6561 = vrot.lane.b32.xlu0 %v5870, 80
      %v6562 = vpop.permute.xlu0 %6561
      %6563 = vrot.lane.b32.xlu0 %v5871, 80
      %v6564 = vpop.permute.xlu0 %6563
      %6565 = vrot.lane.b32.xlu0 %v5872, 80
      %v6566 = vpop.permute.xlu0 %6565
      %6567 = vrot.lane.b32.xlu0 %v5873, 80
      %v6568 = vpop.permute.xlu0 %6567
      %6569 = vrot.lane.b32.xlu0 %v5874, 80
      %v6570 = vpop.permute.xlu0 %6569
      %6571 = vrot.lane.b32.xlu0 %v5875, 80
      %v6572 = vpop.permute.xlu0 %6571
      %6573 = vrot.lane.b32.xlu0 %v5876, 80
      %v6574 = vpop.permute.xlu0 %6573
      %6575 = vrot.lane.b32.xlu0 %v5877, 80
      %v6576 = vpop.permute.xlu0 %6575
      %6577 = vrot.lane.b32.xlu0 %v5878, 80
      %v6578 = vpop.permute.xlu0 %6577
      %6579 = vrot.lane.b32.xlu0 %v5879, 80
      %v6580 = vpop.permute.xlu0 %6579
      %6581 = vrot.lane.b32.xlu0 %v5880, 80
      %v6582 = vpop.permute.xlu0 %6581
      %6583 = vrot.lane.b32.xlu0 %v5881, 80
      %v6584 = vpop.permute.xlu0 %6583
      %6585 = vrot.lane.b32.xlu0 %v5882, 80
      %v6586 = vpop.permute.xlu0 %6585
      %6587 = vrot.lane.b32.xlu0 %v5883, 80
      %v6588 = vpop.permute.xlu0 %6587
      %6653 = vrot.lane.b32.xlu0 %v5885, 96
      %v6654 = vpop.permute.xlu0 %6653
      %6655 = vrot.lane.b32.xlu0 %v5886, 96
      %v6656 = vpop.permute.xlu0 %6655
      %6657 = vrot.lane.b32.xlu0 %v5887, 96
      %v6658 = vpop.permute.xlu0 %6657
      %6659 = vrot.lane.b32.xlu0 %v5888, 96
      %v6660 = vpop.permute.xlu0 %6659
      %6661 = vrot.lane.b32.xlu0 %v5889, 96
      %v6662 = vpop.permute.xlu0 %6661
      %6663 = vrot.lane.b32.xlu0 %v5890, 96
      %v6664 = vpop.permute.xlu0 %6663
      %6665 = vrot.lane.b32.xlu0 %v5891, 96
      %v6666 = vpop.permute.xlu0 %6665
      %6667 = vrot.lane.b32.xlu0 %v5892, 96
      %v6668 = vpop.permute.xlu0 %6667
      %6669 = vrot.lane.b32.xlu0 %v5893, 96
      %v6670 = vpop.permute.xlu0 %6669
      %6671 = vrot.lane.b32.xlu0 %v5894, 96
      %v6672 = vpop.permute.xlu0 %6671
      %6673 = vrot.lane.b32.xlu0 %v5895, 96
      %v6674 = vpop.permute.xlu0 %6673
      %6675 = vrot.lane.b32.xlu0 %v5896, 96
      %v6676 = vpop.permute.xlu0 %6675
      %6677 = vrot.lane.b32.xlu0 %v5897, 96
      %v6678 = vpop.permute.xlu0 %6677
      %6679 = vrot.lane.b32.xlu0 %v5898, 96
      %v6680 = vpop.permute.xlu0 %6679
      %6681 = vrot.lane.b32.xlu0 %v5899, 96
      %v6682 = vpop.permute.xlu0 %6681
      %6683 = vrot.lane.b32.xlu0 %v5900, 96
      %v6684 = vpop.permute.xlu0 %6683
      %6685 = vrot.lane.b32.xlu0 %v5901, 96
      %v6686 = vpop.permute.xlu0 %6685
      %6687 = vrot.lane.b32.xlu0 %v5902, 96
      %v6688 = vpop.permute.xlu0 %6687
      %6689 = vrot.lane.b32.xlu0 %v5903, 96
      %v6690 = vpop.permute.xlu0 %6689
      %6691 = vrot.lane.b32.xlu0 %v5904, 96
      %v6692 = vpop.permute.xlu0 %6691
      %6693 = vrot.lane.b32.xlu0 %v5905, 96
      %v6694 = vpop.permute.xlu0 %6693
      %6695 = vrot.lane.b32.xlu0 %v5906, 96
      %v6696 = vpop.permute.xlu0 %6695
      %6697 = vrot.lane.b32.xlu0 %v5907, 96
      %v6698 = vpop.permute.xlu0 %6697
      %6699 = vrot.lane.b32.xlu0 %v5908, 96
      %v6700 = vpop.permute.xlu0 %6699
      %6701 = vrot.lane.b32.xlu0 %v5909, 96
      %v6702 = vpop.permute.xlu0 %6701
      %6703 = vrot.lane.b32.xlu0 %v5910, 96
      %v6704 = vpop.permute.xlu0 %6703
      %6705 = vrot.lane.b32.xlu0 %v5911, 96
      %v6706 = vpop.permute.xlu0 %6705
      %6707 = vrot.lane.b32.xlu0 %v5912, 96
      %v6708 = vpop.permute.xlu0 %6707
      %6709 = vrot.lane.b32.xlu0 %v5913, 96
      %v6710 = vpop.permute.xlu0 %6709
      %6711 = vrot.lane.b32.xlu0 %v5914, 96
      %v6712 = vpop.permute.xlu0 %6711
      %6713 = vrot.lane.b32.xlu0 %v5915, 96
      %v6714 = vpop.permute.xlu0 %6713
      %6715 = vrot.lane.b32.xlu0 %v5916, 96
      %v6716 = vpop.permute.xlu0 %6715
      %6781 = vrot.lane.b32.xlu0 %v5917, 112
      %v6782 = vpop.permute.xlu0 %6781
      %6783 = vrot.lane.b32.xlu0 %v5918, 112
      %v6784 = vpop.permute.xlu0 %6783
      %6785 = vrot.lane.b32.xlu0 %v5919, 112
      %v6786 = vpop.permute.xlu0 %6785
      %6787 = vrot.lane.b32.xlu0 %v5920, 112
      %v6788 = vpop.permute.xlu0 %6787
      %6789 = vrot.lane.b32.xlu0 %v5921, 112
      %v6790 = vpop.permute.xlu0 %6789
      %6791 = vrot.lane.b32.xlu0 %v5922, 112
      %v6792 = vpop.permute.xlu0 %6791
      %6793 = vrot.lane.b32.xlu0 %v5923, 112
      %v6794 = vpop.permute.xlu0 %6793
      %6795 = vrot.lane.b32.xlu0 %v5924, 112
      %v6796 = vpop.permute.xlu0 %6795
      %6797 = vrot.lane.b32.xlu0 %v5925, 112
      %v6798 = vpop.permute.xlu0 %6797
      %6799 = vrot.lane.b32.xlu0 %v5926, 112
      %v6800 = vpop.permute.xlu0 %6799
      %6801 = vrot.lane.b32.xlu0 %v5927, 112
      %v6802 = vpop.permute.xlu0 %6801
      %6803 = vrot.lane.b32.xlu0 %v5928, 112
      %v6804 = vpop.permute.xlu0 %6803
      %6805 = vrot.lane.b32.xlu0 %v5929, 112
      %v6806 = vpop.permute.xlu0 %6805
      %6807 = vrot.lane.b32.xlu0 %v5930, 112
      %v6808 = vpop.permute.xlu0 %6807
      %6809 = vrot.lane.b32.xlu0 %v5931, 112
      %v6810 = vpop.permute.xlu0 %6809
      %6811 = vrot.lane.b32.xlu0 %v5932, 112
      %v6812 = vpop.permute.xlu0 %6811
      %6813 = vrot.lane.b32.xlu0 %v5933, 112
      %v6814 = vpop.permute.xlu0 %6813
      %6815 = vrot.lane.b32.xlu0 %v5934, 112
      %v6816 = vpop.permute.xlu0 %6815
      %6817 = vrot.lane.b32.xlu0 %v5935, 112
      %v6818 = vpop.permute.xlu0 %6817
      %6819 = vrot.lane.b32.xlu0 %v5936, 112
      %v6820 = vpop.permute.xlu0 %6819
      %6821 = vrot.lane.b32.xlu0 %v5937, 112
      %v6822 = vpop.permute.xlu0 %6821
      %6823 = vrot.lane.b32.xlu0 %v5938, 112
      %v6824 = vpop.permute.xlu0 %6823
      %6825 = vrot.lane.b32.xlu0 %v5939, 112
      %v6826 = vpop.permute.xlu0 %6825
      %6827 = vrot.lane.b32.xlu0 %v5940, 112
      %v6828 = vpop.permute.xlu0 %6827
      %6829 = vrot.lane.b32.xlu0 %v5941, 112
      %v6830 = vpop.permute.xlu0 %6829
      %6831 = vrot.lane.b32.xlu0 %v5942, 112
      %v6832 = vpop.permute.xlu0 %6831
      %6833 = vrot.lane.b32.xlu0 %v5943, 112
      %v6834 = vpop.permute.xlu0 %6833
      %6835 = vrot.lane.b32.xlu0 %v5944, 112
      %v6836 = vpop.permute.xlu0 %6835
      %6837 = vrot.lane.b32.xlu0 %v5945, 112
      %v6838 = vpop.permute.xlu0 %6837
      %6839 = vrot.lane.b32.xlu0 %v5946, 112
      %v6840 = vpop.permute.xlu0 %6839
      %6841 = vrot.lane.b32.xlu0 %v5947, 112
      %v6842 = vpop.permute.xlu0 %6841
      %6843 = vrot.lane.b32.xlu0 %v5948, 112
      %v6844 = vpop.permute.xlu0 %6843
      %v6877 = vsel %vm299, %v5692, %v6014
      %v6878 = vsel %vm299, %v5693, %v6016
      %v6879 = vsel %vm299, %v5694, %v6018
      %v6880 = vsel %vm299, %v5695, %v6020
      %v6881 = vsel %vm299, %v5696, %v6022
      %v6882 = vsel %vm299, %v5697, %v6024
      %v6883 = vsel %vm299, %v5698, %v6026
      %v6884 = vsel %vm299, %v5699, %v6028
      %v6885 = vsel %vm299, %v5700, %v6030
      %v6886 = vsel %vm299, %v5701, %v6032
      %v6887 = vsel %vm299, %v5702, %v6034
      %v6888 = vsel %vm299, %v5703, %v6036
      %v6889 = vsel %vm299, %v5704, %v6038
      %v6890 = vsel %vm299, %v5705, %v6040
      %v6891 = vsel %vm299, %v5706, %v6042
      %v6892 = vsel %vm299, %v5707, %v6044
      %v6893 = vsel %vm299, %v5708, %v6046
      %v6894 = vsel %vm299, %v5709, %v6048
      %v6895 = vsel %vm299, %v5710, %v6050
      %v6896 = vsel %vm299, %v5711, %v6052
      %v6897 = vsel %vm299, %v5712, %v6054
      %v6898 = vsel %vm299, %v5713, %v6056
      %v6899 = vsel %vm299, %v5714, %v6058
      %v6900 = vsel %vm299, %v5715, %v6060
      %v6901 = vsel %vm299, %v5716, %v6062
      %v6902 = vsel %vm299, %v5717, %v6064
      %v6903 = vsel %vm299, %v5718, %v6066
      %v6904 = vsel %vm299, %v5719, %v6068
      %v6905 = vsel %vm299, %v5720, %v6070
      %v6906 = vsel %vm299, %v5721, %v6072
      %v6907 = vsel %vm299, %v5722, %v6074
      %v6908 = vsel %vm299, %v5723, %v6076
      %v6909 = vsel %vm3887, %v6877, %v6142
      %v6910 = vsel %vm3887, %v6878, %v6144
      %v6911 = vsel %vm3887, %v6879, %v6146
      %v6912 = vsel %vm3887, %v6880, %v6148
      %v6913 = vsel %vm3887, %v6881, %v6150
      %v6914 = vsel %vm3887, %v6882, %v6152
      %v6915 = vsel %vm3887, %v6883, %v6154
      %v6916 = vsel %vm3887, %v6884, %v6156
      %v6917 = vsel %vm3887, %v6885, %v6158
      %v6918 = vsel %vm3887, %v6886, %v6160
      %v6919 = vsel %vm3887, %v6887, %v6162
      %v6920 = vsel %vm3887, %v6888, %v6164
      %v6921 = vsel %vm3887, %v6889, %v6166
      %v6922 = vsel %vm3887, %v6890, %v6168
      %v6923 = vsel %vm3887, %v6891, %v6170
      %v6924 = vsel %vm3887, %v6892, %v6172
      %v6925 = vsel %vm3887, %v6893, %v6174
      %v6926 = vsel %vm3887, %v6894, %v6176
      %v6927 = vsel %vm3887, %v6895, %v6178
      %v6928 = vsel %vm3887, %v6896, %v6180
      %v6929 = vsel %vm3887, %v6897, %v6182
      %v6930 = vsel %vm3887, %v6898, %v6184
      %v6931 = vsel %vm3887, %v6899, %v6186
      %v6932 = vsel %vm3887, %v6900, %v6188
      %v6933 = vsel %vm3887, %v6901, %v6190
      %v6934 = vsel %vm3887, %v6902, %v6192
      %v6935 = vsel %vm3887, %v6903, %v6194
      %v6936 = vsel %vm3887, %v6904, %v6196
      %v6937 = vsel %vm3887, %v6905, %v6198
      %v6938 = vsel %vm3887, %v6906, %v6200
      %v6939 = vsel %vm3887, %v6907, %v6202
      %v6940 = vsel %vm3887, %v6908, %v6204
      %v6941 = vsel %vm3953, %v6909, %v6270
      %v6942 = vsel %vm3953, %v6910, %v6272
      %v6943 = vsel %vm3953, %v6911, %v6274
      %v6944 = vsel %vm3953, %v6912, %v6276
      %v6945 = vsel %vm3953, %v6913, %v6278
      %v6946 = vsel %vm3953, %v6914, %v6280
      %v6947 = vsel %vm3953, %v6915, %v6282
      %v6948 = vsel %vm3953, %v6916, %v6284
      %v6949 = vsel %vm3953, %v6917, %v6286
      %v6950 = vsel %vm3953, %v6918, %v6288
      %v6951 = vsel %vm3953, %v6919, %v6290
      %v6952 = vsel %vm3953, %v6920, %v6292
      %v6953 = vsel %vm3953, %v6921, %v6294
      %v6954 = vsel %vm3953, %v6922, %v6296
      %v6955 = vsel %vm3953, %v6923, %v6298
      %v6956 = vsel %vm3953, %v6924, %v6300
      %v6957 = vsel %vm3953, %v6925, %v6302
      %v6958 = vsel %vm3953, %v6926, %v6304
      %v6959 = vsel %vm3953, %v6927, %v6306
      %v6960 = vsel %vm3953, %v6928, %v6308
      %v6961 = vsel %vm3953, %v6929, %v6310
      %v6962 = vsel %vm3953, %v6930, %v6312
      %v6963 = vsel %vm3953, %v6931, %v6314
      %v6964 = vsel %vm3953, %v6932, %v6316
      %v6965 = vsel %vm3953, %v6933, %v6318
      %v6966 = vsel %vm3953, %v6934, %v6320
      %v6967 = vsel %vm3953, %v6935, %v6322
      %v6968 = vsel %vm3953, %v6936, %v6324
      %v6969 = vsel %vm3953, %v6937, %v6326
      %v6970 = vsel %vm3953, %v6938, %v6328
      %v6971 = vsel %vm3953, %v6939, %v6330
      %v6972 = vsel %vm3953, %v6940, %v6332
      %v6973 = vsel %vm4019, %v6941, %v6398
      %v6974 = vsel %vm4019, %v6942, %v6400
      %v6975 = vsel %vm4019, %v6943, %v6402
      %v6976 = vsel %vm4019, %v6944, %v6404
      %v6977 = vsel %vm4019, %v6945, %v6406
      %v6978 = vsel %vm4019, %v6946, %v6408
      %v6979 = vsel %vm4019, %v6947, %v6410
      %v6980 = vsel %vm4019, %v6948, %v6412
      %v6981 = vsel %vm4019, %v6949, %v6414
      %v6982 = vsel %vm4019, %v6950, %v6416
      %v6983 = vsel %vm4019, %v6951, %v6418
      %v6984 = vsel %vm4019, %v6952, %v6420
      %v6985 = vsel %vm4019, %v6953, %v6422
      %v6986 = vsel %vm4019, %v6954, %v6424
      %v6987 = vsel %vm4019, %v6955, %v6426
      %v6988 = vsel %vm4019, %v6956, %v6428
      %v6989 = vsel %vm4019, %v6957, %v6430
      %v6990 = vsel %vm4019, %v6958, %v6432
      %v6991 = vsel %vm4019, %v6959, %v6434
      %v6992 = vsel %vm4019, %v6960, %v6436
      %v6993 = vsel %vm4019, %v6961, %v6438
      %v6994 = vsel %vm4019, %v6962, %v6440
      %v6995 = vsel %vm4019, %v6963, %v6442
      %v6996 = vsel %vm4019, %v6964, %v6444
      %v6997 = vsel %vm4019, %v6965, %v6446
      %v6998 = vsel %vm4019, %v6966, %v6448
      %v6999 = vsel %vm4019, %v6967, %v6450
      %v7000 = vsel %vm4019, %v6968, %v6452
      %v7001 = vsel %vm4019, %v6969, %v6454
      %v7002 = vsel %vm4019, %v6970, %v6456
      %v7003 = vsel %vm4019, %v6971, %v6458
      %v7004 = vsel %vm4019, %v6972, %v6460
      %v7005 = vsel %vm4085, %v6973, %v6526
      %v7006 = vsel %vm4085, %v6974, %v6528
      %v7007 = vsel %vm4085, %v6975, %v6530
      %v7008 = vsel %vm4085, %v6976, %v6532
      %v7009 = vsel %vm4085, %v6977, %v6534
      %v7010 = vsel %vm4085, %v6978, %v6536
      %v7011 = vsel %vm4085, %v6979, %v6538
      %v7012 = vsel %vm4085, %v6980, %v6540
      %v7013 = vsel %vm4085, %v6981, %v6542
      %v7014 = vsel %vm4085, %v6982, %v6544
      %v7015 = vsel %vm4085, %v6983, %v6546
      %v7016 = vsel %vm4085, %v6984, %v6548
      %v7017 = vsel %vm4085, %v6985, %v6550
      %v7018 = vsel %vm4085, %v6986, %v6552
      %v7019 = vsel %vm4085, %v6987, %v6554
      %v7020 = vsel %vm4085, %v6988, %v6556
      %v7021 = vsel %vm4085, %v6989, %v6558
      %v7022 = vsel %vm4085, %v6990, %v6560
      %v7023 = vsel %vm4085, %v6991, %v6562
      %v7024 = vsel %vm4085, %v6992, %v6564
      %v7025 = vsel %vm4085, %v6993, %v6566
      %v7026 = vsel %vm4085, %v6994, %v6568
      %v7027 = vsel %vm4085, %v6995, %v6570
      %v7028 = vsel %vm4085, %v6996, %v6572
      %v7029 = vsel %vm4085, %v6997, %v6574
      %v7030 = vsel %vm4085, %v6998, %v6576
      %v7031 = vsel %vm4085, %v6999, %v6578
      %v7032 = vsel %vm4085, %v7000, %v6580
      %v7033 = vsel %vm4085, %v7001, %v6582
      %v7034 = vsel %vm4085, %v7002, %v6584
      %v7035 = vsel %vm4085, %v7003, %v6586
      %v7036 = vsel %vm4085, %v7004, %v6588
      %v7037 = vsel %vm4151, %v7005, %v6654
      %v7038 = vsel %vm4151, %v7006, %v6656
      %v7039 = vsel %vm4151, %v7007, %v6658
      %v7040 = vsel %vm4151, %v7008, %v6660
      %v7041 = vsel %vm4151, %v7009, %v6662
      %v7042 = vsel %vm4151, %v7010, %v6664
      %v7043 = vsel %vm4151, %v7011, %v6666
      %v7044 = vsel %vm4151, %v7012, %v6668
      %v7045 = vsel %vm4151, %v7013, %v6670
      %v7046 = vsel %vm4151, %v7014, %v6672
      %v7047 = vsel %vm4151, %v7015, %v6674
      %v7048 = vsel %vm4151, %v7016, %v6676
      %v7049 = vsel %vm4151, %v7017, %v6678
      %v7050 = vsel %vm4151, %v7018, %v6680
      %v7051 = vsel %vm4151, %v7019, %v6682
      %v7052 = vsel %vm4151, %v7020, %v6684
      %v7053 = vsel %vm4151, %v7021, %v6686
      %v7054 = vsel %vm4151, %v7022, %v6688
      %v7055 = vsel %vm4151, %v7023, %v6690
      %v7056 = vsel %vm4151, %v7024, %v6692
      %v7057 = vsel %vm4151, %v7025, %v6694
      %v7058 = vsel %vm4151, %v7026, %v6696
      %v7059 = vsel %vm4151, %v7027, %v6698
      %v7060 = vsel %vm4151, %v7028, %v6700
      %v7061 = vsel %vm4151, %v7029, %v6702
      %v7062 = vsel %vm4151, %v7030, %v6704
      %v7063 = vsel %vm4151, %v7031, %v6706
      %v7064 = vsel %vm4151, %v7032, %v6708
      %v7065 = vsel %vm4151, %v7033, %v6710
      %v7066 = vsel %vm4151, %v7034, %v6712
      %v7067 = vsel %vm4151, %v7035, %v6714
      %v7068 = vsel %vm4151, %v7036, %v6716
      %v7069 = vsel %vm4217, %v7037, %v6782
      %v7070 = vsel %vm4217, %v7038, %v6784
      %v7071 = vsel %vm4217, %v7039, %v6786
      %v7072 = vsel %vm4217, %v7040, %v6788
      %v7073 = vsel %vm4217, %v7041, %v6790
      %v7074 = vsel %vm4217, %v7042, %v6792
      %v7075 = vsel %vm4217, %v7043, %v6794
      %v7076 = vsel %vm4217, %v7044, %v6796
      %v7077 = vsel %vm4217, %v7045, %v6798
      %v7078 = vsel %vm4217, %v7046, %v6800
      %v7079 = vsel %vm4217, %v7047, %v6802
      %v7080 = vsel %vm4217, %v7048, %v6804
      %v7081 = vsel %vm4217, %v7049, %v6806
      %v7082 = vsel %vm4217, %v7050, %v6808
      %v7083 = vsel %vm4217, %v7051, %v6810
      %v7084 = vsel %vm4217, %v7052, %v6812
      %v7085 = vsel %vm4217, %v7053, %v6814
      %v7086 = vsel %vm4217, %v7054, %v6816
      %v7087 = vsel %vm4217, %v7055, %v6818
      %v7088 = vsel %vm4217, %v7056, %v6820
      %v7089 = vsel %vm4217, %v7057, %v6822
      %v7090 = vsel %vm4217, %v7058, %v6824
      %v7091 = vsel %vm4217, %v7059, %v6826
      %v7092 = vsel %vm4217, %v7060, %v6828
      %v7093 = vsel %vm4217, %v7061, %v6830
      %v7094 = vsel %vm4217, %v7062, %v6832
      %v7095 = vsel %vm4217, %v7063, %v6834
      %v7096 = vsel %vm4217, %v7064, %v6836
      %v7097 = vsel %vm4217, %v7065, %v6838
      %v7098 = vsel %vm4217, %v7066, %v6840
      %v7099 = vsel %vm4217, %v7067, %v6842
      %v7100 = vsel %vm4217, %v7068, %v6844
      %v7101 = vld [vmem:[%s3] sm:$0xff]
      %v7102 = vld [vmem:[%s3 + $0x8] sm:$0xff]
      %v7103 = vld [vmem:[%s3 + $0x10] sm:$0xff]
      %v7104 = vld [vmem:[%s3 + $0x18] sm:$0xff]
      %v7105 = vld [vmem:[%s3 + $0x20] sm:$0xff]
      %v7106 = vld [vmem:[%s3 + $0x28] sm:$0xff]
      %v7107 = vld [vmem:[%s3 + $0x30] sm:$0xff]
      %v7108 = vld [vmem:[%s3 + $0x38] sm:$0xff]
      %v7109 = vld [vmem:[%s3 + $0x40] sm:$0xff]
      %v7110 = vld [vmem:[%s3 + $0x48] sm:$0xff]
      %v7111 = vld [vmem:[%s3 + $0x50] sm:$0xff]
      %v7112 = vld [vmem:[%s3 + $0x58] sm:$0xff]
      %v7113 = vld [vmem:[%s3 + $0x60] sm:$0xff]
      %v7114 = vld [vmem:[%s3 + $0x68] sm:$0xff]
      %v7115 = vld [vmem:[%s3 + $0x70] sm:$0xff]
      %v7116 = vld [vmem:[%s3 + $0x78] sm:$0xff]
      %v7117 = vld [vmem:[%s3 + $0x80] sm:$0xff]
      %v7118 = vld [vmem:[%s3 + $0x88] sm:$0xff]
      %v7119 = vld [vmem:[%s3 + $0x90] sm:$0xff]
      %v7120 = vld [vmem:[%s3 + $0x98] sm:$0xff]
      %v7121 = vld [vmem:[%s3 + $0xa0] sm:$0xff]
      %v7122 = vld [vmem:[%s3 + $0xa8] sm:$0xff]
      %v7123 = vld [vmem:[%s3 + $0xb0] sm:$0xff]
      %v7124 = vld [vmem:[%s3 + $0xb8] sm:$0xff]
      %v7125 = vld [vmem:[%s3 + $0xc0] sm:$0xff]
      %v7126 = vlaneseq
      %v7127 = vshrl.u32 %v7126, 7
      %v7128 = vsub.s32 0, %v7127
      %v7129 = vrot.slane %v290, %v7128
      %v7131 = vsel %vm4052, %v5531, 0
      %v7134 = vsel %vm4052, %v5532, 0
      %v7137 = vsel %vm4052, %v5533, 0
      %v7140 = vsel %vm4052, %v5534, 0
      %v7143 = vsel %vm4052, %v5535, 0
      %v7146 = vsel %vm4052, %v5536, 0
      %v7149 = vsel %vm4052, %v5537, 0
      %v7152 = vsel %vm4052, %v5538, 0
      %v7155 = vsel %vm4052, %v5539, 0
      %v7158 = vsel %vm4052, %v5540, 0
      %v7161 = vsel %vm4052, %v5541, 0
      %v7164 = vsel %vm4052, %v5542, 0
      %v7167 = vsel %vm4052, %v5543, 0
      %v7170 = vsel %vm4052, %v5544, 0
      %v7173 = vsel %vm4052, %v5545, 0
      %v7176 = vsel %vm4052, %v5546, 0
      %v7179 = vsel %vm4052, %v5547, 0
      %v7182 = vsel %vm4052, %v5548, 0
      %v7185 = vsel %vm4052, %v5549, 0
      %v7188 = vsel %vm4052, %v5550, 0
      %v7191 = vsel %vm4052, %v5551, 0
      %v7194 = vsel %vm4052, %v5552, 0
      %v7197 = vsel %vm4052, %v5553, 0
      %v7200 = vsel %vm4052, %v5554, 0
      %v7203 = vsel %vm4052, %v5555, 0
      %v7206 = vsel %vm4052, %v5556, 0
      %v7209 = vsel %vm4052, %v5557, 0
      %v7212 = vsel %vm4052, %v5558, 0
      %v7215 = vsel %vm4052, %v5559, 0
      %v7218 = vsel %vm4052, %v5560, 0
      %v7221 = vsel %vm4052, %v5561, 0
      %v7224 = vsel %vm4052, %v5562, 0
      %7226 = vmatprep.subr.mxu0 0.0
      %7227 = vmatpush1.msra.mxu0 %v7101
      %7228 = vmatprep.subr.mxu0 0.0
      %7229 = vmatpush1.msra.mxu0 %v7102
      %7230 = vmatprep.subr.mxu0 0.0
      %7231 = vmatpush1.msra.mxu0 %v7103
      %7232 = vmatprep.subr.mxu0 0.0
      %7233 = vmatpush1.msra.mxu0 %v7104
      %7234 = vmatprep.subr.mxu0 0.0
      %7235 = vmatpush1.msra.mxu0 %v7105
      %7236 = vmatprep.subr.mxu0 0.0
      %7237 = vmatpush1.msra.mxu0 %v7106
      %7238 = vmatprep.subr.mxu0 0.0
      %7239 = vmatpush1.msra.mxu0 %v7107
      %7240 = vmatprep.subr.mxu0 0.0
      %7241 = vmatpush1.msra.mxu0 %v7108
      %7242 = vmatprep.subr.mxu0 0.0
      %7243 = vmatpush1.msra.mxu0 %v7109
      %7244 = vmatprep.subr.mxu0 0.0
      %7245 = vmatpush1.msra.mxu0 %v7110
      %7246 = vmatprep.subr.mxu0 0.0
      %7247 = vmatpush1.msra.mxu0 %v7111
      %7248 = vmatprep.subr.mxu0 0.0
      %7249 = vmatpush1.msra.mxu0 %v7112
      %7250 = vmatprep.subr.mxu0 0.0
      %7251 = vmatpush1.msra.mxu0 %v7113
      %7252 = vmatprep.subr.mxu0 0.0
      %7253 = vmatpush1.msra.mxu0 %v7114
      %7254 = vmatprep.subr.mxu0 0.0
      %7255 = vmatpush1.msra.mxu0 %v7115
      %7256 = vmatprep.subr.mxu0 0.0
      %7257 = vmatpush1.msra.mxu0 %v7116
      %7258 = vmatprep.subr.mxu0 0.0
      %7259 = vmatpush1.msra.mxu0 %v7117
      %7260 = vmatprep.subr.mxu0 0.0
      %7261 = vmatpush1.msra.mxu0 %v7118
      %7262 = vmatprep.subr.mxu0 0.0
      %7263 = vmatpush1.msra.mxu0 %v7119
      %7264 = vmatprep.subr.mxu0 0.0
      %7265 = vmatpush1.msra.mxu0 %v7120
      %7266 = vmatprep.subr.mxu0 0.0
      %7267 = vmatpush1.msra.mxu0 %v7121
      %7268 = vmatprep.subr.mxu0 0.0
      %7269 = vmatpush1.msra.mxu0 %v7122
      %7270 = vmatprep.subr.mxu0 0.0
      %7271 = vmatpush1.msra.mxu0 %v7123
      %7272 = vmatprep.subr.mxu0 0.0
      %7273 = vmatpush1.msra.mxu0 %v7124
      %7274 = vmatprep.subr.mxu0 0.0
      %7275 = vmatpush1.msra.mxu0 %v7125
      %7276 = vmatprep.subr.mxu0 0.0
      %7277 = vmatpush1.msra.mxu0 0.0
      %7278 = vmatprep.subr.mxu0 0.0
      %7279 = vmatpush1.msra.mxu0 0.0
      %7280 = vmatprep.subr.mxu0 0.0
      %7281 = vmatpush1.msra.mxu0 0.0
      %7282 = vmatprep.subr.mxu0 0.0
      %7283 = vmatpush1.msra.mxu0 0.0
      %7284 = vmatprep.subr.mxu0 0.0
      %7285 = vmatpush1.msra.mxu0 0.0
      %7286 = vmatprep.subr.mxu0 0.0
      %7287 = vmatpush1.msra.mxu0 0.0
      %7288 = vmatprep.subr.mxu0 0.0
      %7289 = vmatpush1.msra.mxu0 0.0
      %7290 = vmatprep.mubr.f32.mxu0 %v7131
      %7291 = vmatmul.mubr.f32.gmra.mrb[0].mxu0 %v4251
      %v7292 = vpop.f32.mrb[0].mxu0
      %v7293 = vadd.f32 %v7129, %v7292
      %v7294 = vpop.f32.mrb[0].mxu0
      %7295 = vmatprep.mubr.f32.mxu0 %v7134
      %7296 = vmatmul.mubr.f32.gmra.mrb[0].mxu0 %v4252
      %v7297 = vpop.f32.mrb[0].mxu0
      %v7298 = vadd.f32 %v7129, %v7297
      %v7299 = vpop.f32.mrb[0].mxu0
      %7300 = vmatprep.mubr.f32.mxu0 %v7137
      %7301 = vmatmul.mubr.f32.gmra.mrb[0].mxu0 %v4253
      %v7302 = vpop.f32.mrb[0].mxu0
      %v7303 = vadd.f32 %v7129, %v7302
      %v7304 = vpop.f32.mrb[0].mxu0
      %7305 = vmatprep.mubr.f32.mxu0 %v7140
      %7306 = vmatmul.mubr.f32.gmra.mrb[0].mxu0 %v4254
      %v7307 = vpop.f32.mrb[0].mxu0
      %v7308 = vadd.f32 %v7129, %v7307
      %v7309 = vpop.f32.mrb[0].mxu0
      %7310 = vmatprep.mubr.f32.mxu0 %v7143
      %7311 = vmatmul.mubr.f32.gmra.mrb[0].mxu0 %v4255
      %v7312 = vpop.f32.mrb[0].mxu0
      %v7313 = vadd.f32 %v7129, %v7312
      %v7314 = vpop.f32.mrb[0].mxu0
      %7315 = vmatprep.mubr.f32.mxu0 %v7146
      %7316 = vmatmul.mubr.f32.gmra.mrb[0].mxu0 %v4256
      %v7317 = vpop.f32.mrb[0].mxu0
      %v7318 = vadd.f32 %v7129, %v7317
      %v7319 = vpop.f32.mrb[0].mxu0
      %7320 = vmatprep.mubr.f32.mxu0 %v7149
      %7321 = vmatmul.mubr.f32.gmra.mrb[0].mxu0 %v4257
      %v7322 = vpop.f32.mrb[0].mxu0
      %v7323 = vadd.f32 %v7129, %v7322
      %v7324 = vpop.f32.mrb[0].mxu0
      %7325 = vmatprep.mubr.f32.mxu0 %v7152
      %7326 = vmatmul.mubr.f32.gmra.mrb[0].mxu0 %v4258
      %v7327 = vpop.f32.mrb[0].mxu0
      %v7328 = vadd.f32 %v7129, %v7327
      %v7329 = vpop.f32.mrb[0].mxu0
      %7330 = vmatprep.mubr.f32.mxu0 %v7155
      %7331 = vmatmul.mubr.f32.gmra.mrb[0].mxu0 %v4259
      %v7332 = vpop.f32.mrb[0].mxu0
      %v7333 = vadd.f32 %v7129, %v7332
      %v7334 = vpop.f32.mrb[0].mxu0
      %7335 = vmatprep.mubr.f32.mxu0 %v7158
      %7336 = vmatmul.mubr.f32.gmra.mrb[0].mxu0 %v4260
      %v7337 = vpop.f32.mrb[0].mxu0
      %v7338 = vadd.f32 %v7129, %v7337
      %v7339 = vpop.f32.mrb[0].mxu0
      %7340 = vmatprep.mubr.f32.mxu0 %v7161
      %7341 = vmatmul.mubr.f32.gmra.mrb[0].mxu0 %v4261
      %v7342 = vpop.f32.mrb[0].mxu0
      %v7343 = vadd.f32 %v7129, %v7342
      %v7344 = vpop.f32.mrb[0].mxu0
      %7345 = vmatprep.mubr.f32.mxu0 %v7164
      %7346 = vmatmul.mubr.f32.gmra.mrb[0].mxu0 %v4262
      %v7347 = vpop.f32.mrb[0].mxu0
      %v7348 = vadd.f32 %v7129, %v7347
      %v7349 = vpop.f32.mrb[0].mxu0
      %7350 = vmatprep.mubr.f32.mxu0 %v7167
      %7351 = vmatmul.mubr.f32.gmra.mrb[0].mxu0 %v4263
      %v7352 = vpop.f32.mrb[0].mxu0
      %v7353 = vadd.f32 %v7129, %v7352
      %v7354 = vpop.f32.mrb[0].mxu0
      %7355 = vmatprep.mubr.f32.mxu0 %v7170
      %7356 = vmatmul.mubr.f32.gmra.mrb[0].mxu0 %v4264
      %v7357 = vpop.f32.mrb[0].mxu0
      %v7358 = vadd.f32 %v7129, %v7357
      %v7359 = vpop.f32.mrb[0].mxu0
      %7360 = vmatprep.mubr.f32.mxu0 %v7173
      %7361 = vmatmul.mubr.f32.gmra.mrb[0].mxu0 %v4265
      %v7362 = vpop.f32.mrb[0].mxu0
      %v7363 = vadd.f32 %v7129, %v7362
      %v7364 = vpop.f32.mrb[0].mxu0
      %7365 = vmatprep.mubr.f32.mxu0 %v7176
      %7366 = vmatmul.mubr.f32.gmra.mrb[0].mxu0 %v4266
      %v7367 = vpop.f32.mrb[0].mxu0
      %v7368 = vadd.f32 %v7129, %v7367
      %v7369 = vpop.f32.mrb[0].mxu0
      %7370 = vmatprep.mubr.f32.mxu0 %v7179
      %7371 = vmatmul.mubr.f32.gmra.mrb[0].mxu0 %v4267
      %v7372 = vpop.f32.mrb[0].mxu0
      %v7373 = vadd.f32 %v7129, %v7372
      %v7374 = vpop.f32.mrb[0].mxu0
      %7375 = vmatprep.mubr.f32.mxu0 %v7182
      %7376 = vmatmul.mubr.f32.gmra.mrb[0].mxu0 %v4268
      %v7377 = vpop.f32.mrb[0].mxu0
      %v7378 = vadd.f32 %v7129, %v7377
      %v7379 = vpop.f32.mrb[0].mxu0
      %7380 = vmatprep.mubr.f32.mxu0 %v7185
      %7381 = vmatmul.mubr.f32.gmra.mrb[0].mxu0 %v4269
      %v7382 = vpop.f32.mrb[0].mxu0
      %v7383 = vadd.f32 %v7129, %v7382
      %v7384 = vpop.f32.mrb[0].mxu0
      %7385 = vmatprep.mubr.f32.mxu0 %v7188
      %7386 = vmatmul.mubr.f32.gmra.mrb[0].mxu0 %v4270
      %v7387 = vpop.f32.mrb[0].mxu0
      %v7388 = vadd.f32 %v7129, %v7387
      %v7389 = vpop.f32.mrb[0].mxu0
      %7390 = vmatprep.mubr.f32.mxu0 %v7191
      %7391 = vmatmul.mubr.f32.gmra.mrb[0].mxu0 %v4271
      %v7392 = vpop.f32.mrb[0].mxu0
      %v7393 = vadd.f32 %v7129, %v7392
      %v7394 = vpop.f32.mrb[0].mxu0
      %7395 = vmatprep.mubr.f32.mxu0 %v7194
      %7396 = vmatmul.mubr.f32.gmra.mrb[0].mxu0 %v4272
      %v7397 = vpop.f32.mrb[0].mxu0
      %v7398 = vadd.f32 %v7129, %v7397
      %v7399 = vpop.f32.mrb[0].mxu0
      %7400 = vmatprep.mubr.f32.mxu0 %v7197
      %7401 = vmatmul.mubr.f32.gmra.mrb[0].mxu0 %v4273
      %v7402 = vpop.f32.mrb[0].mxu0
      %v7403 = vadd.f32 %v7129, %v7402
      %v7404 = vpop.f32.mrb[0].mxu0
      %7405 = vmatprep.mubr.f32.mxu0 %v7200
      %7406 = vmatmul.mubr.f32.gmra.mrb[0].mxu0 %v4274
      %v7407 = vpop.f32.mrb[0].mxu0
      %v7408 = vadd.f32 %v7129, %v7407
      %v7409 = vpop.f32.mrb[0].mxu0
      %7410 = vmatprep.mubr.f32.mxu0 %v7203
      %7411 = vmatmul.mubr.f32.gmra.mrb[0].mxu0 %v4275
      %v7412 = vpop.f32.mrb[0].mxu0
      %v7413 = vadd.f32 %v7129, %v7412
      %v7414 = vpop.f32.mrb[0].mxu0
      %7415 = vmatprep.mubr.f32.mxu0 %v7206
      %7416 = vmatmul.mubr.f32.gmra.mrb[0].mxu0 %v4276
      %v7417 = vpop.f32.mrb[0].mxu0
      %v7418 = vadd.f32 %v7129, %v7417
      %v7419 = vpop.f32.mrb[0].mxu0
      %7420 = vmatprep.mubr.f32.mxu0 %v7209
      %7421 = vmatmul.mubr.f32.gmra.mrb[0].mxu0 %v4277
      %v7422 = vpop.f32.mrb[0].mxu0
      %v7423 = vadd.f32 %v7129, %v7422
      %v7424 = vpop.f32.mrb[0].mxu0
      %7425 = vmatprep.mubr.f32.mxu0 %v7212
      %7426 = vmatmul.mubr.f32.gmra.mrb[0].mxu0 %v4278
      %v7427 = vpop.f32.mrb[0].mxu0
      %v7428 = vadd.f32 %v7129, %v7427
      %v7429 = vpop.f32.mrb[0].mxu0
      %7430 = vmatprep.mubr.f32.mxu0 %v7215
      %7431 = vmatmul.mubr.f32.gmra.mrb[0].mxu0 %v4279
      %v7432 = vpop.f32.mrb[0].mxu0
      %v7433 = vadd.f32 %v7129, %v7432
      %v7434 = vpop.f32.mrb[0].mxu0
      %7435 = vmatprep.mubr.f32.mxu0 %v7218
      %7436 = vmatmul.mubr.f32.gmra.mrb[0].mxu0 %v4280
      %v7437 = vpop.f32.mrb[0].mxu0
      %v7438 = vadd.f32 %v7129, %v7437
      %v7439 = vpop.f32.mrb[0].mxu0
      %7440 = vmatprep.mubr.f32.mxu0 %v7221
      %7441 = vmatmul.mubr.f32.gmra.mrb[0].mxu0 %v4281
      %v7442 = vpop.f32.mrb[0].mxu0
      %v7443 = vadd.f32 %v7129, %v7442
      %v7444 = vpop.f32.mrb[0].mxu0
      %7445 = vmatprep.mubr.f32.mxu0 %v7224
      %7446 = vmatmul.mubr.f32.gmra.mrb[0].mxu0 %v4282
      %v7447 = vpop.f32.mrb[0].mxu0
      %v7448 = vadd.f32 %v7129, %v7447
      %v7449 = vpop.f32.mrb[0].mxu0
      %7450 = vdwg.mxu0
      %v7451 = vmax.f32 %v7293, 0.0
      %v7452 = vmax.f32 %v7298, 0.0
      %v7453 = vmax.f32 %v7303, 0.0
      %v7454 = vmax.f32 %v7308, 0.0
      %v7455 = vmax.f32 %v7313, 0.0
      %v7456 = vmax.f32 %v7318, 0.0
      %v7457 = vmax.f32 %v7323, 0.0
      %v7458 = vmax.f32 %v7328, 0.0
      %v7459 = vmax.f32 %v7333, 0.0
      %v7460 = vmax.f32 %v7338, 0.0
      %v7461 = vmax.f32 %v7343, 0.0
      %v7462 = vmax.f32 %v7348, 0.0
      %v7463 = vmax.f32 %v7353, 0.0
      %v7464 = vmax.f32 %v7358, 0.0
      %v7465 = vmax.f32 %v7363, 0.0
      %v7466 = vmax.f32 %v7368, 0.0
      %v7467 = vmax.f32 %v7373, 0.0
      %v7468 = vmax.f32 %v7378, 0.0
      %v7469 = vmax.f32 %v7383, 0.0
      %v7470 = vmax.f32 %v7388, 0.0
      %v7471 = vmax.f32 %v7393, 0.0
      %v7472 = vmax.f32 %v7398, 0.0
      %v7473 = vmax.f32 %v7403, 0.0
      %v7474 = vmax.f32 %v7408, 0.0
      %v7475 = vmax.f32 %v7413, 0.0
      %v7476 = vmax.f32 %v7418, 0.0
      %v7477 = vmax.f32 %v7423, 0.0
      %v7478 = vmax.f32 %v7428, 0.0
      %v7479 = vmax.f32 %v7433, 0.0
      %v7480 = vmax.f32 %v7438, 0.0
      %v7481 = vmax.f32 %v7443, 0.0
      %v7482 = vmax.f32 %v7448, 0.0
      %v7483 = vld [vmem:[%s4] sm:$0xff]
      %v7484 = vld [vmem:[%s4 + $0x8] sm:$0xff]
      %v7485 = vld [vmem:[%s4 + $0x10] sm:$0xff]
      %v7486 = vld [vmem:[%s4 + $0x18] sm:$0xff]
      %v7487 = vld [vmem:[%s4 + $0x20] sm:$0xff]
      %v7488 = vld [vmem:[%s4 + $0x28] sm:$0xff]
      %v7489 = vld [vmem:[%s4 + $0x30] sm:$0xff]
      %v7490 = vld [vmem:[%s4 + $0x38] sm:$0xff]
      %v7491 = vld [vmem:[%s4 + $0x40] sm:$0xff]
      %v7492 = vld [vmem:[%s4 + $0x48] sm:$0xff]
      %v7493 = vld [vmem:[%s4 + $0x50] sm:$0xff]
      %v7494 = vld [vmem:[%s4 + $0x58] sm:$0xff]
      %v7495 = vld [vmem:[%s4 + $0x60] sm:$0xff]
      %v7496 = vld [vmem:[%s4 + $0x68] sm:$0xff]
      %v7497 = vld [vmem:[%s4 + $0x70] sm:$0xff]
      %v7498 = vld [vmem:[%s4 + $0x78] sm:$0xff]
      %v7499 = vld [vmem:[%s4 + $0x80] sm:$0xff]
      %v7500 = vld [vmem:[%s4 + $0x88] sm:$0xff]
      %v7501 = vlaneseq
      %v7502 = vshrl.u32 %v7501, 7
      %v7503 = vsub.s32 0, %v7502
      %v7504 = vrot.slane %v291, %v7503
      %v7506 = vsel %vm299, %v5949, 0
      %v7509 = vsel %vm299, %v5950, 0
      %v7512 = vsel %vm299, %v5951, 0
      %v7515 = vsel %vm299, %v5952, 0
      %v7518 = vsel %vm299, %v5953, 0
      %v7521 = vsel %vm299, %v5954, 0
      %v7524 = vsel %vm299, %v5955, 0
      %v7527 = vsel %vm299, %v5956, 0
      %v7530 = vsel %vm299, %v5957, 0
      %v7533 = vsel %vm299, %v5958, 0
      %v7536 = vsel %vm299, %v5959, 0
      %v7539 = vsel %vm299, %v5960, 0
      %v7542 = vsel %vm299, %v5961, 0
      %v7545 = vsel %vm299, %v5962, 0
      %v7548 = vsel %vm299, %v5963, 0
      %v7551 = vsel %vm299, %v5964, 0
      %v7554 = vsel %vm299, %v5965, 0
      %v7557 = vsel %vm299, %v5966, 0
      %v7560 = vsel %vm299, %v5967, 0
      %v7563 = vsel %vm299, %v5968, 0
      %v7566 = vsel %vm299, %v5969, 0
      %v7569 = vsel %vm299, %v5970, 0
      %v7572 = vsel %vm299, %v5971, 0
      %v7575 = vsel %vm299, %v5972, 0
      %v7578 = vsel %vm299, %v5973, 0
      %v7581 = vsel %vm299, %v5974, 0
      %v7584 = vsel %vm299, %v5975, 0
      %v7587 = vsel %vm299, %v5976, 0
      %v7590 = vsel %vm299, %v5977, 0
      %v7593 = vsel %vm299, %v5978, 0
      %v7596 = vsel %vm299, %v5979, 0
      %v7599 = vsel %vm299, %v5980, 0
      %7601 = vmatprep.subr.mxu0 0.0
      %7602 = vmatpush1.msra.mxu0 %v7483
      %7603 = vmatprep.subr.mxu0 0.0
      %7604 = vmatpush1.msra.mxu0 %v7484
      %7605 = vmatprep.subr.mxu0 0.0
      %7606 = vmatpush1.msra.mxu0 %v7485
      %7607 = vmatprep.subr.mxu0 0.0
      %7608 = vmatpush1.msra.mxu0 %v7486
      %7609 = vmatprep.subr.mxu0 0.0
      %7610 = vmatpush1.msra.mxu0 %v7487
      %7611 = vmatprep.subr.mxu0 0.0
      %7612 = vmatpush1.msra.mxu0 %v7488
      %7613 = vmatprep.subr.mxu0 0.0
      %7614 = vmatpush1.msra.mxu0 %v7489
      %7615 = vmatprep.subr.mxu0 0.0
      %7616 = vmatpush1.msra.mxu0 %v7490
      %7617 = vmatprep.subr.mxu0 0.0
      %7618 = vmatpush1.msra.mxu0 %v7491
      %7619 = vmatprep.subr.mxu0 0.0
      %7620 = vmatpush1.msra.mxu0 %v7492
      %7621 = vmatprep.subr.mxu0 0.0
      %7622 = vmatpush1.msra.mxu0 %v7493
      %7623 = vmatprep.subr.mxu0 0.0
      %7624 = vmatpush1.msra.mxu0 %v7494
      %7625 = vmatprep.subr.mxu0 0.0
      %7626 = vmatpush1.msra.mxu0 %v7495
      %7627 = vmatprep.subr.mxu0 0.0
      %7628 = vmatpush1.msra.mxu0 %v7496
      %7629 = vmatprep.subr.mxu0 0.0
      %7630 = vmatpush1.msra.mxu0 %v7497
      %7631 = vmatprep.subr.mxu0 0.0
      %7632 = vmatpush1.msra.mxu0 %v7498
      %7633 = vmatprep.subr.mxu0 0.0
      %7634 = vmatpush1.msra.mxu0 %v7499
      %7635 = vmatprep.subr.mxu0 0.0
      %7636 = vmatpush1.msra.mxu0 %v7500
      %7637 = vmatprep.subr.mxu0 0.0
      %7638 = vmatpush1.msra.mxu0 0.0
      %7639 = vmatprep.subr.mxu0 0.0
      %7640 = vmatpush1.msra.mxu0 0.0
      %7641 = vmatprep.subr.mxu0 0.0
      %7642 = vmatpush1.msra.mxu0 0.0
      %7643 = vmatprep.subr.mxu0 0.0
      %7644 = vmatpush1.msra.mxu0 0.0
      %7645 = vmatprep.subr.mxu0 0.0
      %7646 = vmatpush1.msra.mxu0 0.0
      %7647 = vmatprep.subr.mxu0 0.0
      %7648 = vmatpush1.msra.mxu0 0.0
      %7649 = vmatprep.subr.mxu0 0.0
      %7650 = vmatpush1.msra.mxu0 0.0
      %7651 = vmatprep.subr.mxu0 0.0
      %7652 = vmatpush1.msra.mxu0 0.0
      %7653 = vmatprep.subr.mxu0 0.0
      %7654 = vmatpush1.msra.mxu0 0.0
      %7655 = vmatprep.subr.mxu0 0.0
      %7656 = vmatpush1.msra.mxu0 0.0
      %7657 = vmatprep.subr.mxu0 0.0
      %7658 = vmatpush1.msra.mxu0 0.0
      %7659 = vmatprep.subr.mxu0 0.0
      %7660 = vmatpush1.msra.mxu0 0.0
      %7661 = vmatprep.subr.mxu0 0.0
      %7662 = vmatpush1.msra.mxu0 0.0
      %7663 = vmatprep.subr.mxu0 0.0
      %7664 = vmatpush1.msra.mxu0 0.0
      %7665 = vmatprep.mubr.f32.mxu0 %v7506
      %7666 = vmatmul.mubr.f32.gmra.mrb[0].mxu0 %v7069
      %v7667 = vpop.f32.mrb[0].mxu0
      %v7668 = vadd.f32 %v7504, %v7667
      %v7669 = vpop.f32.mrb[0].mxu0
      %7670 = vmatprep.mubr.f32.mxu0 %v7509
      %7671 = vmatmul.mubr.f32.gmra.mrb[0].mxu0 %v7070
      %v7672 = vpop.f32.mrb[0].mxu0
      %v7673 = vadd.f32 %v7504, %v7672
      %v7674 = vpop.f32.mrb[0].mxu0
      %7675 = vmatprep.mubr.f32.mxu0 %v7512
      %7676 = vmatmul.mubr.f32.gmra.mrb[0].mxu0 %v7071
      %v7677 = vpop.f32.mrb[0].mxu0
      %v7678 = vadd.f32 %v7504, %v7677
      %v7679 = vpop.f32.mrb[0].mxu0
      %7680 = vmatprep.mubr.f32.mxu0 %v7515
      %7681 = vmatmul.mubr.f32.gmra.mrb[0].mxu0 %v7072
      %v7682 = vpop.f32.mrb[0].mxu0
      %v7683 = vadd.f32 %v7504, %v7682
      %v7684 = vpop.f32.mrb[0].mxu0
      %7685 = vmatprep.mubr.f32.mxu0 %v7518
      %7686 = vmatmul.mubr.f32.gmra.mrb[0].mxu0 %v7073
      %v7687 = vpop.f32.mrb[0].mxu0
      %v7688 = vadd.f32 %v7504, %v7687
      %v7689 = vpop.f32.mrb[0].mxu0
      %7690 = vmatprep.mubr.f32.mxu0 %v7521
      %7691 = vmatmul.mubr.f32.gmra.mrb[0].mxu0 %v7074
      %v7692 = vpop.f32.mrb[0].mxu0
      %v7693 = vadd.f32 %v7504, %v7692
      %v7694 = vpop.f32.mrb[0].mxu0
      %7695 = vmatprep.mubr.f32.mxu0 %v7524
      %7696 = vmatmul.mubr.f32.gmra.mrb[0].mxu0 %v7075
      %v7697 = vpop.f32.mrb[0].mxu0
      %v7698 = vadd.f32 %v7504, %v7697
      %v7699 = vpop.f32.mrb[0].mxu0
      %7700 = vmatprep.mubr.f32.mxu0 %v7527
      %7701 = vmatmul.mubr.f32.gmra.mrb[0].mxu0 %v7076
      %v7702 = vpop.f32.mrb[0].mxu0
      %v7703 = vadd.f32 %v7504, %v7702
      %v7704 = vpop.f32.mrb[0].mxu0
      %7705 = vmatprep.mubr.f32.mxu0 %v7530
      %7706 = vmatmul.mubr.f32.gmra.mrb[0].mxu0 %v7077
      %v7707 = vpop.f32.mrb[0].mxu0
      %v7708 = vadd.f32 %v7504, %v7707
      %v7709 = vpop.f32.mrb[0].mxu0
      %7710 = vmatprep.mubr.f32.mxu0 %v7533
      %7711 = vmatmul.mubr.f32.gmra.mrb[0].mxu0 %v7078
      %v7712 = vpop.f32.mrb[0].mxu0
      %v7713 = vadd.f32 %v7504, %v7712
      %v7714 = vpop.f32.mrb[0].mxu0
      %7715 = vmatprep.mubr.f32.mxu0 %v7536
      %7716 = vmatmul.mubr.f32.gmra.mrb[0].mxu0 %v7079
      %v7717 = vpop.f32.mrb[0].mxu0
      %v7718 = vadd.f32 %v7504, %v7717
      %v7719 = vpop.f32.mrb[0].mxu0
      %7720 = vmatprep.mubr.f32.mxu0 %v7539
      %7721 = vmatmul.mubr.f32.gmra.mrb[0].mxu0 %v7080
      %v7722 = vpop.f32.mrb[0].mxu0
      %v7723 = vadd.f32 %v7504, %v7722
      %v7724 = vpop.f32.mrb[0].mxu0
      %7725 = vmatprep.mubr.f32.mxu0 %v7542
      %7726 = vmatmul.mubr.f32.gmra.mrb[0].mxu0 %v7081
      %v7727 = vpop.f32.mrb[0].mxu0
      %v7728 = vadd.f32 %v7504, %v7727
      %v7729 = vpop.f32.mrb[0].mxu0
      %7730 = vmatprep.mubr.f32.mxu0 %v7545
      %7731 = vmatmul.mubr.f32.gmra.mrb[0].mxu0 %v7082
      %v7732 = vpop.f32.mrb[0].mxu0
      %v7733 = vadd.f32 %v7504, %v7732
      %v7734 = vpop.f32.mrb[0].mxu0
      %7735 = vmatprep.mubr.f32.mxu0 %v7548
      %7736 = vmatmul.mubr.f32.gmra.mrb[0].mxu0 %v7083
      %v7737 = vpop.f32.mrb[0].mxu0
      %v7738 = vadd.f32 %v7504, %v7737
      %v7739 = vpop.f32.mrb[0].mxu0
      %7740 = vmatprep.mubr.f32.mxu0 %v7551
      %7741 = vmatmul.mubr.f32.gmra.mrb[0].mxu0 %v7084
      %v7742 = vpop.f32.mrb[0].mxu0
      %v7743 = vadd.f32 %v7504, %v7742
      %v7744 = vpop.f32.mrb[0].mxu0
      %7745 = vmatprep.mubr.f32.mxu0 %v7554
      %7746 = vmatmul.mubr.f32.gmra.mrb[0].mxu0 %v7085
      %v7747 = vpop.f32.mrb[0].mxu0
      %v7748 = vadd.f32 %v7504, %v7747
      %v7749 = vpop.f32.mrb[0].mxu0
      %7750 = vmatprep.mubr.f32.mxu0 %v7557
      %7751 = vmatmul.mubr.f32.gmra.mrb[0].mxu0 %v7086
      %v7752 = vpop.f32.mrb[0].mxu0
      %v7753 = vadd.f32 %v7504, %v7752
      %v7754 = vpop.f32.mrb[0].mxu0
      %7755 = vmatprep.mubr.f32.mxu0 %v7560
      %7756 = vmatmul.mubr.f32.gmra.mrb[0].mxu0 %v7087
      %v7757 = vpop.f32.mrb[0].mxu0
      %v7758 = vadd.f32 %v7504, %v7757
      %v7759 = vpop.f32.mrb[0].mxu0
      %7760 = vmatprep.mubr.f32.mxu0 %v7563
      %7761 = vmatmul.mubr.f32.gmra.mrb[0].mxu0 %v7088
      %v7762 = vpop.f32.mrb[0].mxu0
      %v7763 = vadd.f32 %v7504, %v7762
      %v7764 = vpop.f32.mrb[0].mxu0
      %7765 = vmatprep.mubr.f32.mxu0 %v7566
      %7766 = vmatmul.mubr.f32.gmra.mrb[0].mxu0 %v7089
      %v7767 = vpop.f32.mrb[0].mxu0
      %v7768 = vadd.f32 %v7504, %v7767
      %v7769 = vpop.f32.mrb[0].mxu0
      %7770 = vmatprep.mubr.f32.mxu0 %v7569
      %7771 = vmatmul.mubr.f32.gmra.mrb[0].mxu0 %v7090
      %v7772 = vpop.f32.mrb[0].mxu0
      %v7773 = vadd.f32 %v7504, %v7772
      %v7774 = vpop.f32.mrb[0].mxu0
      %7775 = vmatprep.mubr.f32.mxu0 %v7572
      %7776 = vmatmul.mubr.f32.gmra.mrb[0].mxu0 %v7091
      %v7777 = vpop.f32.mrb[0].mxu0
      %v7778 = vadd.f32 %v7504, %v7777
      %v7779 = vpop.f32.mrb[0].mxu0
      %7780 = vmatprep.mubr.f32.mxu0 %v7575
      %7781 = vmatmul.mubr.f32.gmra.mrb[0].mxu0 %v7092
      %v7782 = vpop.f32.mrb[0].mxu0
      %v7783 = vadd.f32 %v7504, %v7782
      %v7784 = vpop.f32.mrb[0].mxu0
      %7785 = vmatprep.mubr.f32.mxu0 %v7578
      %7786 = vmatmul.mubr.f32.gmra.mrb[0].mxu0 %v7093
      %v7787 = vpop.f32.mrb[0].mxu0
      %v7788 = vadd.f32 %v7504, %v7787
      %v7789 = vpop.f32.mrb[0].mxu0
      %7790 = vmatprep.mubr.f32.mxu0 %v7581
      %7791 = vmatmul.mubr.f32.gmra.mrb[0].mxu0 %v7094
      %v7792 = vpop.f32.mrb[0].mxu0
      %v7793 = vadd.f32 %v7504, %v7792
      %v7794 = vpop.f32.mrb[0].mxu0
      %7795 = vmatprep.mubr.f32.mxu0 %v7584
      %7796 = vmatmul.mubr.f32.gmra.mrb[0].mxu0 %v7095
      %v7797 = vpop.f32.mrb[0].mxu0
      %v7798 = vadd.f32 %v7504, %v7797
      %v7799 = vpop.f32.mrb[0].mxu0
      %7800 = vmatprep.mubr.f32.mxu0 %v7587
      %7801 = vmatmul.mubr.f32.gmra.mrb[0].mxu0 %v7096
      %v7802 = vpop.f32.mrb[0].mxu0
      %v7803 = vadd.f32 %v7504, %v7802
      %v7804 = vpop.f32.mrb[0].mxu0
      %7805 = vmatprep.mubr.f32.mxu0 %v7590
      %7806 = vmatmul.mubr.f32.gmra.mrb[0].mxu0 %v7097
      %v7807 = vpop.f32.mrb[0].mxu0
      %v7808 = vadd.f32 %v7504, %v7807
      %v7809 = vpop.f32.mrb[0].mxu0
      %7810 = vmatprep.mubr.f32.mxu0 %v7593
      %7811 = vmatmul.mubr.f32.gmra.mrb[0].mxu0 %v7098
      %v7812 = vpop.f32.mrb[0].mxu0
      %v7813 = vadd.f32 %v7504, %v7812
      %v7814 = vpop.f32.mrb[0].mxu0
      %7815 = vmatprep.mubr.f32.mxu0 %v7596
      %7816 = vmatmul.mubr.f32.gmra.mrb[0].mxu0 %v7099
      %v7817 = vpop.f32.mrb[0].mxu0
      %v7818 = vadd.f32 %v7504, %v7817
      %v7819 = vpop.f32.mrb[0].mxu0
      %7820 = vmatprep.mubr.f32.mxu0 %v7599
      %7821 = vmatmul.mubr.f32.gmra.mrb[0].mxu0 %v7100
      %v7822 = vpop.f32.mrb[0].mxu0
      %v7823 = vadd.f32 %v7504, %v7822
      %v7824 = vpop.f32.mrb[0].mxu0
      %7825 = vdwg.mxu0
      %v7826 = vmax.f32 %v7668, 0.0
      %v7827 = vmax.f32 %v7673, 0.0
      %v7828 = vmax.f32 %v7678, 0.0
      %v7829 = vmax.f32 %v7683, 0.0
      %v7830 = vmax.f32 %v7688, 0.0
      %v7831 = vmax.f32 %v7693, 0.0
      %v7832 = vmax.f32 %v7698, 0.0
      %v7833 = vmax.f32 %v7703, 0.0
      %v7834 = vmax.f32 %v7708, 0.0
      %v7835 = vmax.f32 %v7713, 0.0
      %v7836 = vmax.f32 %v7718, 0.0
      %v7837 = vmax.f32 %v7723, 0.0
      %v7838 = vmax.f32 %v7728, 0.0
      %v7839 = vmax.f32 %v7733, 0.0
      %v7840 = vmax.f32 %v7738, 0.0
      %v7841 = vmax.f32 %v7743, 0.0
      %v7842 = vmax.f32 %v7748, 0.0
      %v7843 = vmax.f32 %v7753, 0.0
      %v7844 = vmax.f32 %v7758, 0.0
      %v7845 = vmax.f32 %v7763, 0.0
      %v7846 = vmax.f32 %v7768, 0.0
      %v7847 = vmax.f32 %v7773, 0.0
      %v7848 = vmax.f32 %v7778, 0.0
      %v7849 = vmax.f32 %v7783, 0.0
      %v7850 = vmax.f32 %v7788, 0.0
      %v7851 = vmax.f32 %v7793, 0.0
      %v7852 = vmax.f32 %v7798, 0.0
      %v7853 = vmax.f32 %v7803, 0.0
      %v7854 = vmax.f32 %v7808, 0.0
      %v7855 = vmax.f32 %v7813, 0.0
      %v7856 = vmax.f32 %v7818, 0.0
      %v7857 = vmax.f32 %v7823, 0.0
      %7890 = vrot.lane.b32.xlu0 %v7826, 8
      %v7891 = vpop.permute.xlu0 %7890
      %7892 = vrot.lane.b32.xlu0 %v7827, 8
      %v7893 = vpop.permute.xlu0 %7892
      %7894 = vrot.lane.b32.xlu0 %v7828, 8
      %v7895 = vpop.permute.xlu0 %7894
      %7896 = vrot.lane.b32.xlu0 %v7829, 8
      %v7897 = vpop.permute.xlu0 %7896
      %7898 = vrot.lane.b32.xlu0 %v7830, 8
      %v7899 = vpop.permute.xlu0 %7898
      %7900 = vrot.lane.b32.xlu0 %v7831, 8
      %v7901 = vpop.permute.xlu0 %7900
      %7902 = vrot.lane.b32.xlu0 %v7832, 8
      %v7903 = vpop.permute.xlu0 %7902
      %7904 = vrot.lane.b32.xlu0 %v7833, 8
      %v7905 = vpop.permute.xlu0 %7904
      %7906 = vrot.lane.b32.xlu0 %v7834, 8
      %v7907 = vpop.permute.xlu0 %7906
      %7908 = vrot.lane.b32.xlu0 %v7835, 8
      %v7909 = vpop.permute.xlu0 %7908
      %7910 = vrot.lane.b32.xlu0 %v7836, 8
      %v7911 = vpop.permute.xlu0 %7910
      %7912 = vrot.lane.b32.xlu0 %v7837, 8
      %v7913 = vpop.permute.xlu0 %7912
      %7914 = vrot.lane.b32.xlu0 %v7838, 8
      %v7915 = vpop.permute.xlu0 %7914
      %7916 = vrot.lane.b32.xlu0 %v7839, 8
      %v7917 = vpop.permute.xlu0 %7916
      %7918 = vrot.lane.b32.xlu0 %v7840, 8
      %v7919 = vpop.permute.xlu0 %7918
      %7920 = vrot.lane.b32.xlu0 %v7841, 8
      %v7921 = vpop.permute.xlu0 %7920
      %7922 = vrot.lane.b32.xlu0 %v7842, 8
      %v7923 = vpop.permute.xlu0 %7922
      %7924 = vrot.lane.b32.xlu0 %v7843, 8
      %v7925 = vpop.permute.xlu0 %7924
      %7926 = vrot.lane.b32.xlu0 %v7844, 8
      %v7927 = vpop.permute.xlu0 %7926
      %7928 = vrot.lane.b32.xlu0 %v7845, 8
      %v7929 = vpop.permute.xlu0 %7928
      %7930 = vrot.lane.b32.xlu0 %v7846, 8
      %v7931 = vpop.permute.xlu0 %7930
      %7932 = vrot.lane.b32.xlu0 %v7847, 8
      %v7933 = vpop.permute.xlu0 %7932
      %7934 = vrot.lane.b32.xlu0 %v7848, 8
      %v7935 = vpop.permute.xlu0 %7934
      %7936 = vrot.lane.b32.xlu0 %v7849, 8
      %v7937 = vpop.permute.xlu0 %7936
      %7938 = vrot.lane.b32.xlu0 %v7850, 8
      %v7939 = vpop.permute.xlu0 %7938
      %7940 = vrot.lane.b32.xlu0 %v7851, 8
      %v7941 = vpop.permute.xlu0 %7940
      %7942 = vrot.lane.b32.xlu0 %v7852, 8
      %v7943 = vpop.permute.xlu0 %7942
      %7944 = vrot.lane.b32.xlu0 %v7853, 8
      %v7945 = vpop.permute.xlu0 %7944
      %7946 = vrot.lane.b32.xlu0 %v7854, 8
      %v7947 = vpop.permute.xlu0 %7946
      %7948 = vrot.lane.b32.xlu0 %v7855, 8
      %v7949 = vpop.permute.xlu0 %7948
      %7950 = vrot.lane.b32.xlu0 %v7856, 8
      %v7951 = vpop.permute.xlu0 %7950
      %7952 = vrot.lane.b32.xlu0 %v7857, 8
      %v7953 = vpop.permute.xlu0 %7952
      %v7986 = vsel %vm789, %v7451, %v7891
      %v7987 = vsel %vm789, %v7452, %v7893
      %v7988 = vsel %vm789, %v7453, %v7895
      %v7989 = vsel %vm789, %v7454, %v7897
      %v7990 = vsel %vm789, %v7455, %v7899
      %v7991 = vsel %vm789, %v7456, %v7901
      %v7992 = vsel %vm789, %v7457, %v7903
      %v7993 = vsel %vm789, %v7458, %v7905
      %v7994 = vsel %vm789, %v7459, %v7907
      %v7995 = vsel %vm789, %v7460, %v7909
      %v7996 = vsel %vm789, %v7461, %v7911
      %v7997 = vsel %vm789, %v7462, %v7913
      %v7998 = vsel %vm789, %v7463, %v7915
      %v7999 = vsel %vm789, %v7464, %v7917
      %v8000 = vsel %vm789, %v7465, %v7919
      %v8001 = vsel %vm789, %v7466, %v7921
      %v8002 = vsel %vm789, %v7467, %v7923
      %v8003 = vsel %vm789, %v7468, %v7925
      %v8004 = vsel %vm789, %v7469, %v7927
      %v8005 = vsel %vm789, %v7470, %v7929
      %v8006 = vsel %vm789, %v7471, %v7931
      %v8007 = vsel %vm789, %v7472, %v7933
      %v8008 = vsel %vm789, %v7473, %v7935
      %v8009 = vsel %vm789, %v7474, %v7937
      %v8010 = vsel %vm789, %v7475, %v7939
      %v8011 = vsel %vm789, %v7476, %v7941
      %v8012 = vsel %vm789, %v7477, %v7943
      %v8013 = vsel %vm789, %v7478, %v7945
      %v8014 = vsel %vm789, %v7479, %v7947
      %v8015 = vsel %vm789, %v7480, %v7949
      %v8016 = vsel %vm789, %v7481, %v7951
      %v8017 = vsel %vm789, %v7482, %v7953
      %v8018 = vld [vmem:[%s5] sm:$0xff]
      %v8019 = vld [vmem:[%s5 + $0x8] sm:$0xff]
      %v8020 = vld [vmem:[%s5 + $0x10] sm:$0xff]
      %v8021 = vlaneseq
      %v8022 = vshrl.u32 %v8021, 7
      %v8023 = vsub.s32 0, %v8022
      %v8024 = vrot.slane %v292, %v8023
      %v8026 = vsel %vm3854, %v7986, 0
      %v8029 = vsel %vm3854, %v7987, 0
      %v8032 = vsel %vm3854, %v7988, 0
      %v8035 = vsel %vm3854, %v7989, 0
      %v8038 = vsel %vm3854, %v7990, 0
      %v8041 = vsel %vm3854, %v7991, 0
      %v8044 = vsel %vm3854, %v7992, 0
      %v8047 = vsel %vm3854, %v7993, 0
      %v8050 = vsel %vm3854, %v7994, 0
      %v8053 = vsel %vm3854, %v7995, 0
      %v8056 = vsel %vm3854, %v7996, 0
      %v8059 = vsel %vm3854, %v7997, 0
      %v8062 = vsel %vm3854, %v7998, 0
      %v8065 = vsel %vm3854, %v7999, 0
      %v8068 = vsel %vm3854, %v8000, 0
      %v8071 = vsel %vm3854, %v8001, 0
      %v8074 = vsel %vm3854, %v8002, 0
      %v8077 = vsel %vm3854, %v8003, 0
      %v8080 = vsel %vm3854, %v8004, 0
      %v8083 = vsel %vm3854, %v8005, 0
      %v8086 = vsel %vm3854, %v8006, 0
      %v8089 = vsel %vm3854, %v8007, 0
      %v8092 = vsel %vm3854, %v8008, 0
      %v8095 = vsel %vm3854, %v8009, 0
      %v8098 = vsel %vm3854, %v8010, 0
      %v8101 = vsel %vm3854, %v8011, 0
      %v8104 = vsel %vm3854, %v8012, 0
      %v8107 = vsel %vm3854, %v8013, 0
      %v8110 = vsel %vm3854, %v8014, 0
      %v8113 = vsel %vm3854, %v8015, 0
      %v8116 = vsel %vm3854, %v8016, 0
      %v8119 = vsel %vm3854, %v8017, 0
      %8121 = vmatprep.subr.mxu0 0.0
      %8122 = vmatpush1.msra.mxu0 %v8018
      %8123 = vmatprep.subr.mxu0 0.0
      %8124 = vmatpush1.msra.mxu0 %v8019
      %8125 = vmatprep.subr.mxu0 0.0
      %8126 = vmatpush1.msra.mxu0 %v8020
      %8127 = vmatprep.subr.mxu0 0.0
      %8128 = vmatpush1.msra.mxu0 0.0
      %8129 = vmatprep.subr.mxu0 0.0
      %8130 = vmatpush1.msra.mxu0 0.0
      %8131 = vmatprep.subr.mxu0 0.0
      %8132 = vmatpush1.msra.mxu0 0.0
      %8133 = vmatprep.subr.mxu0 0.0
      %8134 = vmatpush1.msra.mxu0 0.0
      %8135 = vmatprep.subr.mxu0 0.0
      %8136 = vmatpush1.msra.mxu0 0.0
      %8137 = vmatprep.subr.mxu0 0.0
      %8138 = vmatpush1.msra.mxu0 0.0
      %8139 = vmatprep.subr.mxu0 0.0
      %8140 = vmatpush1.msra.mxu0 0.0
      %8141 = vmatprep.subr.mxu0 0.0
      %8142 = vmatpush1.msra.mxu0 0.0
      %8143 = vmatprep.subr.mxu0 0.0
      %8144 = vmatpush1.msra.mxu0 0.0
      %8145 = vmatprep.subr.mxu0 0.0
      %8146 = vmatpush1.msra.mxu0 0.0
      %8147 = vmatprep.subr.mxu0 0.0
      %8148 = vmatpush1.msra.mxu0 0.0
      %8149 = vmatprep.subr.mxu0 0.0
      %8150 = vmatpush1.msra.mxu0 0.0
      %8151 = vmatprep.subr.mxu0 0.0
      %8152 = vmatpush1.msra.mxu0 0.0
      %8153 = vmatprep.subr.mxu0 0.0
      %8154 = vmatpush1.msra.mxu0 0.0
      %8155 = vmatprep.subr.mxu0 0.0
      %8156 = vmatpush1.msra.mxu0 0.0
      %8157 = vmatprep.subr.mxu0 0.0
      %8158 = vmatpush1.msra.mxu0 0.0
      %8159 = vmatprep.subr.mxu0 0.0
      %8160 = vmatpush1.msra.mxu0 0.0
      %8161 = vmatprep.subr.mxu0 0.0
      %8162 = vmatpush1.msra.mxu0 0.0
      %8163 = vmatprep.subr.mxu0 0.0
      %8164 = vmatpush1.msra.mxu0 0.0
      %8165 = vmatprep.subr.mxu0 0.0
      %8166 = vmatpush1.msra.mxu0 0.0
      %8167 = vmatprep.subr.mxu0 0.0
      %8168 = vmatpush1.msra.mxu0 0.0
      %8169 = vmatprep.subr.mxu0 0.0
      %8170 = vmatpush1.msra.mxu0 0.0
      %8171 = vmatprep.subr.mxu0 0.0
      %8172 = vmatpush1.msra.mxu0 0.0
      %8173 = vmatprep.subr.mxu0 0.0
      %8174 = vmatpush1.msra.mxu0 0.0
      %8175 = vmatprep.subr.mxu0 0.0
      %8176 = vmatpush1.msra.mxu0 0.0
      %8177 = vmatprep.subr.mxu0 0.0
      %8178 = vmatpush1.msra.mxu0 0.0
      %8179 = vmatprep.subr.mxu0 0.0
      %8180 = vmatpush1.msra.mxu0 0.0
      %8181 = vmatprep.subr.mxu0 0.0
      %8182 = vmatpush1.msra.mxu0 0.0
      %8183 = vmatprep.subr.mxu0 0.0
      %8184 = vmatpush1.msra.mxu0 0.0
      %8185 = vmatprep.mubr.f32.mxu0 0.0
      %8186 = vmatmul.mubr.f32.gmra.mrb[0].mxu0 %v8026
      %v8187 = vpop.f32.mrb[0].mxu0
      %v8188 = vadd.f32 %v8024, %v8187
      %v8189 = vpop.f32.mrb[0].mxu0
      %8190 = vmatprep.mubr.f32.mxu0 0.0
      %8191 = vmatmul.mubr.f32.gmra.mrb[0].mxu0 %v8029
      %v8192 = vpop.f32.mrb[0].mxu0
      %v8193 = vadd.f32 %v8024, %v8192
      %v8194 = vpop.f32.mrb[0].mxu0
      %8195 = vmatprep.mubr.f32.mxu0 0.0
      %8196 = vmatmul.mubr.f32.gmra.mrb[0].mxu0 %v8032
      %v8197 = vpop.f32.mrb[0].mxu0
      %v8198 = vadd.f32 %v8024, %v8197
      %v8199 = vpop.f32.mrb[0].mxu0
      %8200 = vmatprep.mubr.f32.mxu0 0.0
      %8201 = vmatmul.mubr.f32.gmra.mrb[0].mxu0 %v8035
      %v8202 = vpop.f32.mrb[0].mxu0
      %v8203 = vadd.f32 %v8024, %v8202
      %v8204 = vpop.f32.mrb[0].mxu0
      %8205 = vmatprep.mubr.f32.mxu0 0.0
      %8206 = vmatmul.mubr.f32.gmra.mrb[0].mxu0 %v8038
      %v8207 = vpop.f32.mrb[0].mxu0
      %v8208 = vadd.f32 %v8024, %v8207
      %v8209 = vpop.f32.mrb[0].mxu0
      %8210 = vmatprep.mubr.f32.mxu0 0.0
      %8211 = vmatmul.mubr.f32.gmra.mrb[0].mxu0 %v8041
      %v8212 = vpop.f32.mrb[0].mxu0
      %v8213 = vadd.f32 %v8024, %v8212
      %v8214 = vpop.f32.mrb[0].mxu0
      %8215 = vmatprep.mubr.f32.mxu0 0.0
      %8216 = vmatmul.mubr.f32.gmra.mrb[0].mxu0 %v8044
      %v8217 = vpop.f32.mrb[0].mxu0
      %v8218 = vadd.f32 %v8024, %v8217
      %v8219 = vpop.f32.mrb[0].mxu0
      %8220 = vmatprep.mubr.f32.mxu0 0.0
      %8221 = vmatmul.mubr.f32.gmra.mrb[0].mxu0 %v8047
      %v8222 = vpop.f32.mrb[0].mxu0
      %v8223 = vadd.f32 %v8024, %v8222
      %v8224 = vpop.f32.mrb[0].mxu0
      %8225 = vmatprep.mubr.f32.mxu0 0.0
      %8226 = vmatmul.mubr.f32.gmra.mrb[0].mxu0 %v8050
      %v8227 = vpop.f32.mrb[0].mxu0
      %v8228 = vadd.f32 %v8024, %v8227
      %v8229 = vpop.f32.mrb[0].mxu0
      %8230 = vmatprep.mubr.f32.mxu0 0.0
      %8231 = vmatmul.mubr.f32.gmra.mrb[0].mxu0 %v8053
      %v8232 = vpop.f32.mrb[0].mxu0
      %v8233 = vadd.f32 %v8024, %v8232
      %v8234 = vpop.f32.mrb[0].mxu0
      %8235 = vmatprep.mubr.f32.mxu0 0.0
      %8236 = vmatmul.mubr.f32.gmra.mrb[0].mxu0 %v8056
      %v8237 = vpop.f32.mrb[0].mxu0
      %v8238 = vadd.f32 %v8024, %v8237
      %v8239 = vpop.f32.mrb[0].mxu0
      %8240 = vmatprep.mubr.f32.mxu0 0.0
      %8241 = vmatmul.mubr.f32.gmra.mrb[0].mxu0 %v8059
      %v8242 = vpop.f32.mrb[0].mxu0
      %v8243 = vadd.f32 %v8024, %v8242
      %v8244 = vpop.f32.mrb[0].mxu0
      %8245 = vmatprep.mubr.f32.mxu0 0.0
      %8246 = vmatmul.mubr.f32.gmra.mrb[0].mxu0 %v8062
      %v8247 = vpop.f32.mrb[0].mxu0
      %v8248 = vadd.f32 %v8024, %v8247
      %v8249 = vpop.f32.mrb[0].mxu0
      %8250 = vmatprep.mubr.f32.mxu0 0.0
      %8251 = vmatmul.mubr.f32.gmra.mrb[0].mxu0 %v8065
      %v8252 = vpop.f32.mrb[0].mxu0
      %v8253 = vadd.f32 %v8024, %v8252
      %v8254 = vpop.f32.mrb[0].mxu0
      %8255 = vmatprep.mubr.f32.mxu0 0.0
      %8256 = vmatmul.mubr.f32.gmra.mrb[0].mxu0 %v8068
      %v8257 = vpop.f32.mrb[0].mxu0
      %v8258 = vadd.f32 %v8024, %v8257
      %v8259 = vpop.f32.mrb[0].mxu0
      %8260 = vmatprep.mubr.f32.mxu0 0.0
      %8261 = vmatmul.mubr.f32.gmra.mrb[0].mxu0 %v8071
      %v8262 = vpop.f32.mrb[0].mxu0
      %v8263 = vadd.f32 %v8024, %v8262
      %v8264 = vpop.f32.mrb[0].mxu0
      %8265 = vmatprep.mubr.f32.mxu0 0.0
      %8266 = vmatmul.mubr.f32.gmra.mrb[0].mxu0 %v8074
      %v8267 = vpop.f32.mrb[0].mxu0
      %v8268 = vadd.f32 %v8024, %v8267
      %v8269 = vpop.f32.mrb[0].mxu0
      %8270 = vmatprep.mubr.f32.mxu0 0.0
      %8271 = vmatmul.mubr.f32.gmra.mrb[0].mxu0 %v8077
      %v8272 = vpop.f32.mrb[0].mxu0
      %v8273 = vadd.f32 %v8024, %v8272
      %v8274 = vpop.f32.mrb[0].mxu0
      %8275 = vmatprep.mubr.f32.mxu0 0.0
      %8276 = vmatmul.mubr.f32.gmra.mrb[0].mxu0 %v8080
      %v8277 = vpop.f32.mrb[0].mxu0
      %v8278 = vadd.f32 %v8024, %v8277
      %v8279 = vpop.f32.mrb[0].mxu0
      %8280 = vmatprep.mubr.f32.mxu0 0.0
      %8281 = vmatmul.mubr.f32.gmra.mrb[0].mxu0 %v8083
      %v8282 = vpop.f32.mrb[0].mxu0
      %v8283 = vadd.f32 %v8024, %v8282
      %v8284 = vpop.f32.mrb[0].mxu0
      %8285 = vmatprep.mubr.f32.mxu0 0.0
      %8286 = vmatmul.mubr.f32.gmra.mrb[0].mxu0 %v8086
      %v8287 = vpop.f32.mrb[0].mxu0
      %v8288 = vadd.f32 %v8024, %v8287
      %v8289 = vpop.f32.mrb[0].mxu0
      %8290 = vmatprep.mubr.f32.mxu0 0.0
      %8291 = vmatmul.mubr.f32.gmra.mrb[0].mxu0 %v8089
      %v8292 = vpop.f32.mrb[0].mxu0
      %v8293 = vadd.f32 %v8024, %v8292
      %v8294 = vpop.f32.mrb[0].mxu0
      %8295 = vmatprep.mubr.f32.mxu0 0.0
      %8296 = vmatmul.mubr.f32.gmra.mrb[0].mxu0 %v8092
      %v8297 = vpop.f32.mrb[0].mxu0
      %v8298 = vadd.f32 %v8024, %v8297
      %v8299 = vpop.f32.mrb[0].mxu0
      %8300 = vmatprep.mubr.f32.mxu0 0.0
      %8301 = vmatmul.mubr.f32.gmra.mrb[0].mxu0 %v8095
      %v8302 = vpop.f32.mrb[0].mxu0
      %v8303 = vadd.f32 %v8024, %v8302
      %v8304 = vpop.f32.mrb[0].mxu0
      %8305 = vmatprep.mubr.f32.mxu0 0.0
      %8306 = vmatmul.mubr.f32.gmra.mrb[0].mxu0 %v8098
      %v8307 = vpop.f32.mrb[0].mxu0
      %v8308 = vadd.f32 %v8024, %v8307
      %v8309 = vpop.f32.mrb[0].mxu0
      %8310 = vmatprep.mubr.f32.mxu0 0.0
      %8311 = vmatmul.mubr.f32.gmra.mrb[0].mxu0 %v8101
      %v8312 = vpop.f32.mrb[0].mxu0
      %v8313 = vadd.f32 %v8024, %v8312
      %v8314 = vpop.f32.mrb[0].mxu0
      %8315 = vmatprep.mubr.f32.mxu0 0.0
      %8316 = vmatmul.mubr.f32.gmra.mrb[0].mxu0 %v8104
      %v8317 = vpop.f32.mrb[0].mxu0
      %v8318 = vadd.f32 %v8024, %v8317
      %v8319 = vpop.f32.mrb[0].mxu0
      %8320 = vmatprep.mubr.f32.mxu0 0.0
      %8321 = vmatmul.mubr.f32.gmra.mrb[0].mxu0 %v8107
      %v8322 = vpop.f32.mrb[0].mxu0
      %v8323 = vadd.f32 %v8024, %v8322
      %v8324 = vpop.f32.mrb[0].mxu0
      %8325 = vmatprep.mubr.f32.mxu0 0.0
      %8326 = vmatmul.mubr.f32.gmra.mrb[0].mxu0 %v8110
      %v8327 = vpop.f32.mrb[0].mxu0
      %v8328 = vadd.f32 %v8024, %v8327
      %v8329 = vpop.f32.mrb[0].mxu0
      %8330 = vmatprep.mubr.f32.mxu0 0.0
      %8331 = vmatmul.mubr.f32.gmra.mrb[0].mxu0 %v8113
      %v8332 = vpop.f32.mrb[0].mxu0
      %v8333 = vadd.f32 %v8024, %v8332
      %v8334 = vpop.f32.mrb[0].mxu0
      %8335 = vmatprep.mubr.f32.mxu0 0.0
      %8336 = vmatmul.mubr.f32.gmra.mrb[0].mxu0 %v8116
      %v8337 = vpop.f32.mrb[0].mxu0
      %v8338 = vadd.f32 %v8024, %v8337
      %v8339 = vpop.f32.mrb[0].mxu0
      %8340 = vmatprep.mubr.f32.mxu0 0.0
      %8341 = vmatmul.mubr.f32.gmra.mrb[0].mxu0 %v8119
      %v8342 = vpop.f32.mrb[0].mxu0
      %v8343 = vadd.f32 %v8024, %v8342
      %v8344 = vpop.f32.mrb[0].mxu0
      %8345 = vdwg.mxu0
      %v8346 = vmax.f32 %v8188, 0.0
      %v8347 = vmax.f32 %v8193, 0.0
      %v8348 = vmax.f32 %v8198, 0.0
      %v8349 = vmax.f32 %v8203, 0.0
      %v8350 = vmax.f32 %v8208, 0.0
      %v8351 = vmax.f32 %v8213, 0.0
      %v8352 = vmax.f32 %v8218, 0.0
      %v8353 = vmax.f32 %v8223, 0.0
      %v8354 = vmax.f32 %v8228, 0.0
      %v8355 = vmax.f32 %v8233, 0.0
      %v8356 = vmax.f32 %v8238, 0.0
      %v8357 = vmax.f32 %v8243, 0.0
      %v8358 = vmax.f32 %v8248, 0.0
      %v8359 = vmax.f32 %v8253, 0.0
      %v8360 = vmax.f32 %v8258, 0.0
      %v8361 = vmax.f32 %v8263, 0.0
      %v8362 = vmax.f32 %v8268, 0.0
      %v8363 = vmax.f32 %v8273, 0.0
      %v8364 = vmax.f32 %v8278, 0.0
      %v8365 = vmax.f32 %v8283, 0.0
      %v8366 = vmax.f32 %v8288, 0.0
      %v8367 = vmax.f32 %v8293, 0.0
      %v8368 = vmax.f32 %v8298, 0.0
      %v8369 = vmax.f32 %v8303, 0.0
      %v8370 = vmax.f32 %v8308, 0.0
      %v8371 = vmax.f32 %v8313, 0.0
      %v8372 = vmax.f32 %v8318, 0.0
      %v8373 = vmax.f32 %v8323, 0.0
      %v8374 = vmax.f32 %v8328, 0.0
      %v8375 = vmax.f32 %v8333, 0.0
      %v8376 = vmax.f32 %v8338, 0.0
      %v8377 = vmax.f32 %v8343, 0.0
      %v8378 = vadd.f32 %v757, %v8346
      %v8379 = vadd.f32 %v758, %v8347
      %v8380 = vadd.f32 %v759, %v8348
      %v8381 = vadd.f32 %v760, %v8349
      %v8382 = vadd.f32 %v761, %v8350
      %v8383 = vadd.f32 %v762, %v8351
      %v8384 = vadd.f32 %v763, %v8352
      %v8385 = vadd.f32 %v764, %v8353
      %v8386 = vadd.f32 %v765, %v8354
      %v8387 = vadd.f32 %v766, %v8355
      %v8388 = vadd.f32 %v767, %v8356
      %v8389 = vadd.f32 %v768, %v8357
      %v8390 = vadd.f32 %v769, %v8358
      %v8391 = vadd.f32 %v770, %v8359
      %v8392 = vadd.f32 %v771, %v8360
      %v8393 = vadd.f32 %v772, %v8361
      %v8394 = vadd.f32 %v773, %v8362
      %v8395 = vadd.f32 %v774, %v8363
      %v8396 = vadd.f32 %v775, %v8364
      %v8397 = vadd.f32 %v776, %v8365
      %v8398 = vadd.f32 %v777, %v8366
      %v8399 = vadd.f32 %v778, %v8367
      %v8400 = vadd.f32 %v779, %v8368
      %v8401 = vadd.f32 %v780, %v8369
      %v8402 = vadd.f32 %v781, %v8370
      %v8403 = vadd.f32 %v782, %v8371
      %v8404 = vadd.f32 %v783, %v8372
      %v8405 = vadd.f32 %v784, %v8373
      %v8406 = vadd.f32 %v785, %v8374
      %v8407 = vadd.f32 %v786, %v8375
      %v8408 = vadd.f32 %v787, %v8376
      %v8409 = vadd.f32 %v788, %v8377
      %8442 = vrot.lane.b32.xlu0 %v8346, 112
      %v8443 = vpop.permute.xlu0 %8442
      %8444 = vrot.lane.b32.xlu0 %v8347, 112
      %v8445 = vpop.permute.xlu0 %8444
      %8446 = vrot.lane.b32.xlu0 %v8348, 112
      %v8447 = vpop.permute.xlu0 %8446
      %8448 = vrot.lane.b32.xlu0 %v8349, 112
      %v8449 = vpop.permute.xlu0 %8448
      %8450 = vrot.lane.b32.xlu0 %v8350, 112
      %v8451 = vpop.permute.xlu0 %8450
      %8452 = vrot.lane.b32.xlu0 %v8351, 112
      %v8453 = vpop.permute.xlu0 %8452
      %8454 = vrot.lane.b32.xlu0 %v8352, 112
      %v8455 = vpop.permute.xlu0 %8454
      %8456 = vrot.lane.b32.xlu0 %v8353, 112
      %v8457 = vpop.permute.xlu0 %8456
      %8458 = vrot.lane.b32.xlu0 %v8354, 112
      %v8459 = vpop.permute.xlu0 %8458
      %8460 = vrot.lane.b32.xlu0 %v8355, 112
      %v8461 = vpop.permute.xlu0 %8460
      %8462 = vrot.lane.b32.xlu0 %v8356, 112
      %v8463 = vpop.permute.xlu0 %8462
      %8464 = vrot.lane.b32.xlu0 %v8357, 112
      %v8465 = vpop.permute.xlu0 %8464
      %8466 = vrot.lane.b32.xlu0 %v8358, 112
      %v8467 = vpop.permute.xlu0 %8466
      %8468 = vrot.lane.b32.xlu0 %v8359, 112
      %v8469 = vpop.permute.xlu0 %8468
      %8470 = vrot.lane.b32.xlu0 %v8360, 112
      %v8471 = vpop.permute.xlu0 %8470
      %8472 = vrot.lane.b32.xlu0 %v8361, 112
      %v8473 = vpop.permute.xlu0 %8472
      %8474 = vrot.lane.b32.xlu0 %v8362, 112
      %v8475 = vpop.permute.xlu0 %8474
      %8476 = vrot.lane.b32.xlu0 %v8363, 112
      %v8477 = vpop.permute.xlu0 %8476
      %8478 = vrot.lane.b32.xlu0 %v8364, 112
      %v8479 = vpop.permute.xlu0 %8478
      %8480 = vrot.lane.b32.xlu0 %v8365, 112
      %v8481 = vpop.permute.xlu0 %8480
      %8482 = vrot.lane.b32.xlu0 %v8366, 112
      %v8483 = vpop.permute.xlu0 %8482
      %8484 = vrot.lane.b32.xlu0 %v8367, 112
      %v8485 = vpop.permute.xlu0 %8484
      %8486 = vrot.lane.b32.xlu0 %v8368, 112
      %v8487 = vpop.permute.xlu0 %8486
      %8488 = vrot.lane.b32.xlu0 %v8369, 112
      %v8489 = vpop.permute.xlu0 %8488
      %8490 = vrot.lane.b32.xlu0 %v8370, 112
      %v8491 = vpop.permute.xlu0 %8490
      %8492 = vrot.lane.b32.xlu0 %v8371, 112
      %v8493 = vpop.permute.xlu0 %8492
      %8494 = vrot.lane.b32.xlu0 %v8372, 112
      %v8495 = vpop.permute.xlu0 %8494
      %8496 = vrot.lane.b32.xlu0 %v8373, 112
      %v8497 = vpop.permute.xlu0 %8496
      %8498 = vrot.lane.b32.xlu0 %v8374, 112
      %v8499 = vpop.permute.xlu0 %8498
      %8500 = vrot.lane.b32.xlu0 %v8375, 112
      %v8501 = vpop.permute.xlu0 %8500
      %8502 = vrot.lane.b32.xlu0 %v8376, 112
      %v8503 = vpop.permute.xlu0 %8502
      %8504 = vrot.lane.b32.xlu0 %v8377, 112
      %v8505 = vpop.permute.xlu0 %8504
      %v8538 = vadd.f32 %v8378, %v8443
      %v8539 = vadd.f32 %v8379, %v8445
      %v8540 = vadd.f32 %v8380, %v8447
      %v8541 = vadd.f32 %v8381, %v8449
      %v8542 = vadd.f32 %v8382, %v8451
      %v8543 = vadd.f32 %v8383, %v8453
      %v8544 = vadd.f32 %v8384, %v8455
      %v8545 = vadd.f32 %v8385, %v8457
      %v8546 = vadd.f32 %v8386, %v8459
      %v8547 = vadd.f32 %v8387, %v8461
      %v8548 = vadd.f32 %v8388, %v8463
      %v8549 = vadd.f32 %v8389, %v8465
      %v8550 = vadd.f32 %v8390, %v8467
      %v8551 = vadd.f32 %v8391, %v8469
      %v8552 = vadd.f32 %v8392, %v8471
      %v8553 = vadd.f32 %v8393, %v8473
      %v8554 = vadd.f32 %v8394, %v8475
      %v8555 = vadd.f32 %v8395, %v8477
      %v8556 = vadd.f32 %v8396, %v8479
      %v8557 = vadd.f32 %v8397, %v8481
      %v8558 = vadd.f32 %v8398, %v8483
      %v8559 = vadd.f32 %v8399, %v8485
      %v8560 = vadd.f32 %v8400, %v8487
      %v8561 = vadd.f32 %v8401, %v8489
      %v8562 = vadd.f32 %v8402, %v8491
      %v8563 = vadd.f32 %v8403, %v8493
      %v8564 = vadd.f32 %v8404, %v8495
      %v8565 = vadd.f32 %v8405, %v8497
      %v8566 = vadd.f32 %v8406, %v8499
      %v8567 = vadd.f32 %v8407, %v8501
      %v8568 = vadd.f32 %v8408, %v8503
      %v8569 = vadd.f32 %v8409, %v8505
      %8570 = vst.msk [vmem:[%s253] sm:$0xff] %vm299, %v8538
      %8571 = vst.msk [vmem:[%s253 + $0x8] sm:$0xff] %vm299, %v8539
      %8572 = vst.msk [vmem:[%s253 + $0x10] sm:$0xff] %vm299, %v8540
      %8573 = vst.msk [vmem:[%s253 + $0x18] sm:$0xff] %vm299, %v8541
      %8574 = vst.msk [vmem:[%s253 + $0x20] sm:$0xff] %vm299, %v8542
      %8575 = vst.msk [vmem:[%s253 + $0x28] sm:$0xff] %vm299, %v8543
      %8576 = vst.msk [vmem:[%s253 + $0x30] sm:$0xff] %vm299, %v8544
      %8577 = vst.msk [vmem:[%s253 + $0x38] sm:$0xff] %vm299, %v8545
      %8578 = vst.msk [vmem:[%s253 + $0x40] sm:$0xff] %vm299, %v8546
      %8579 = vst.msk [vmem:[%s253 + $0x48] sm:$0xff] %vm299, %v8547
      %8580 = vst.msk [vmem:[%s253 + $0x50] sm:$0xff] %vm299, %v8548
      %8581 = vst.msk [vmem:[%s253 + $0x58] sm:$0xff] %vm299, %v8549
      %8582 = vst.msk [vmem:[%s253 + $0x60] sm:$0xff] %vm299, %v8550
      %8583 = vst.msk [vmem:[%s253 + $0x68] sm:$0xff] %vm299, %v8551
      %8584 = vst.msk [vmem:[%s253 + $0x70] sm:$0xff] %vm299, %v8552
      %8585 = vst.msk [vmem:[%s253 + $0x78] sm:$0xff] %vm299, %v8553
      %8586 = vst.msk [vmem:[%s253 + $0x80] sm:$0xff] %vm299, %v8554
      %8587 = vst.msk [vmem:[%s253 + $0x88] sm:$0xff] %vm299, %v8555
      %8588 = vst.msk [vmem:[%s253 + $0x90] sm:$0xff] %vm299, %v8556
      %8589 = vst.msk [vmem:[%s253 + $0x98] sm:$0xff] %vm299, %v8557
      %8590 = vst.msk [vmem:[%s253 + $0xa0] sm:$0xff] %vm299, %v8558
      %8591 = vst.msk [vmem:[%s253 + $0xa8] sm:$0xff] %vm299, %v8559
      %8592 = vst.msk [vmem:[%s253 + $0xb0] sm:$0xff] %vm299, %v8560
      %8593 = vst.msk [vmem:[%s253 + $0xb8] sm:$0xff] %vm299, %v8561
      %8594 = vst.msk [vmem:[%s253 + $0xc0] sm:$0xff] %vm299, %v8562
      %8595 = vst.msk [vmem:[%s253 + $0xc8] sm:$0xff] %vm299, %v8563
      %8596 = vst.msk [vmem:[%s253 + $0xd0] sm:$0xff] %vm299, %v8564
      %8597 = vst.msk [vmem:[%s253 + $0xd8] sm:$0xff] %vm299, %v8565
      %8598 = vst.msk [vmem:[%s253 + $0xe0] sm:$0xff] %vm299, %v8566
      %8599 = vst.msk [vmem:[%s253 + $0xe8] sm:$0xff] %vm299, %v8567
      %8600 = vst.msk [vmem:[%s253 + $0xf0] sm:$0xff] %vm299, %v8568
      %8601 = vst.msk [vmem:[%s253 + $0xf8] sm:$0xff] %vm299, %v8569
      %s8602 = smul.u32 32, %s17
      %p8603 = scmp.lt.s32.totalorder %s8602, 63
      %s8604 = scalar_select %p8603, %s8602, 63
      %s8605 = smul.addr %s8604, 8
      %s8606 = scalar_lea.vmem %s6, %s8605
      // Predicated region
      $region45: #{tpu_custom_call.1} parent=43 // pred_check
        %p8607 = pneg %p166
      $region46: #{tpu_custom_call.1} parent=43 // pred_check_branch
        %8609 = sbr.rel (%p8607) target = $region48
      $region47: #{tpu_custom_call.1} parent=43 // pred_region
        %s8610 = smul.u32 32, %s17
      $region48: #{tpu_custom_call.1} parent=43 // pred_fallthru
        _
    $region44: #{tpu_custom_call.1} parent=5 // pred_fallthru
      _
    %p8611 = scmp.le.s32.totalorder 2, %s12
    // Predicated region
    $region49: #{tpu_custom_call.1} parent=5 // pred_check
      %p8612 = pneg %p8611
    $region50: #{tpu_custom_call.1} parent=5 // pred_check_branch
      %8614 = sbr.rel (%p8612) target = $region52
    $region51: #{tpu_custom_call.1} parent=5 // pred_region
      %s8615 = ssub.s32 %s12, 2
      // Predicated region
      $region53: #{tpu_custom_call.1} parent=51 // pred_check
        %p8616 = pneg %p172
      $region54: #{tpu_custom_call.1} parent=51 // pred_check_branch
        %8618 = sbr.rel (%p8616) target = $region56
      $region55: #{tpu_custom_call.1} parent=51 // pred_region
        %s8619 = smul.u32 32, %s18
        %p8620 = scmp.lt.s32.totalorder %s8619, 63
        %s8621 = scalar_select %p8620, %s8619, 63
        %s8622 = smul.addr %s8621, 8
        %s8623 = scalar_lea.vmem %s6, %s8622
      $region56: #{tpu_custom_call.1} parent=51 // pred_fallthru
        _
    $region52: #{tpu_custom_call.1} parent=5 // pred_fallthru
      _
  $region6: #{tpu_custom_call.1} parent=0 // loop_footer
    %s16 = sadd.s32 1, %s12
  $region7: #{tpu_custom_call.1} parent=0 // loop_footer_branch
    %11 = sbr.rel target = $region3
  $region8: #{tpu_custom_call.1} parent=0 // loop_exit
    _

</llo_original>
